<compile_context>
chip_gen: v7x
topology: tpu7x:2x2x1
jax: 0.10.0
libtpu: 0.0.40
codegen_flags: <defaults>
</compile_context>

<pallas_src>
import functools

import jax
import jax.numpy as jnp
import numpy as np
from jax import lax
from jax.experimental import pallas as pl
from jax.experimental.pallas import tpu as pltpu

_LANE = 128


def _round_up(x, m):
    return (x + m - 1) // m * m


def _choose_tt(T, tt):
    """Largest time tile <= requested that divides T (avoids T % tt asserts)."""
    tt = max(1, min(int(tt), int(T)))
    while T % tt:
        tt -= 1
    return tt


# --------------------------- single-buffer probe --------------------------------
@functools.lru_cache(maxsize=1)
def _single_buffer_supported():
    """Probe whether BlockSpec(pipeline_mode=pl.Buffered(1)) lowers on this build.

    Grid-invariant weights don't need double buffering; single-buffering halves
    their VMEM footprint.  Fall back gracefully if unsupported.
    """
    try:
        def k(x_ref, o_ref):
            o_ref[...] = x_ref[...] + 1.0

        out = pl.pallas_call(
            k,
            out_shape=jax.ShapeDtypeStruct((8, 128), jnp.float32),
            grid=(2,),
            in_specs=[pl.BlockSpec((8, 128), lambda i: (0, 0),
                                   pipeline_mode=pl.Buffered(buffer_count=1))],
            out_specs=pl.BlockSpec((8, 128), lambda i: (0, 0)),
        )(jnp.zeros((8, 128), jnp.float32))
        jax.block_until_ready(out)
        return True
    except Exception:
        return False


# ----------------------------- weight packing -----------------------------------
def _pack_gate_weight(w, rows_p, hp):
    """torch (4H, rows) -> (rows_p, 4*hp); gate blocks [i|f|g|o], each hp wide."""
    four_h, rows = w.shape
    H = four_h // 4
    a = w.T.reshape(rows, 4, H)
    a = jnp.pad(a, ((0, rows_p - rows), (0, 0), (0, hp - H)))
    return a.reshape(rows_p, 4 * hp)


def pack_params(params, fc_w, fc_b, hidden_size, *, compute_dtype=jnp.bfloat16):
    """One-time weight transform (do this OUTSIDE the jitted forward).

    bf16 is the default compute dtype: MXU-native on all generations and halves
    resident-weight VMEM (required for large H on v7x).  Use float32 to match
    PyTorch numerics bit-for-bit-ish.
    """
    H = hidden_size
    hp = _round_up(H, _LANE)
    packed = []
    for l, (wih, whh) in enumerate(params):
        din = wih.shape[1]
        dinp = _round_up(din, _LANE) if l == 0 else hp
        wx = _pack_gate_weight(wih, dinp, hp).astype(compute_dtype)
        wh = _pack_gate_weight(whh, hp, hp).astype(compute_dtype)
        packed.append((wx, wh))
    O = fc_w.shape[0]
    op = _round_up(O, _LANE)
    fcw_p = jnp.pad(fc_w.T, ((0, hp - H), (0, op - O))).astype(compute_dtype)
    fcb_p = jnp.pad(fc_b, (0, op - O)).reshape(1, op).astype(jnp.float32)
    return tuple(packed), fcw_p, fcb_p


# ----------------------------- fused LSTM kernel --------------------------------
def _make_kernel(*, num_layers, hp, tt):
    nw = 2 * num_layers

    def kernel(x_ref, *args):
        w_refs = args[:nw]                       # wx0, wh0, wx1, wh1, ...
        fcw_ref = args[nw]
        fcb_ref = args[nw + 1]
        y_ref = args[nw + 2]
        hN_ref = args[nw + 3]
        cN_ref = args[nw + 4]
        h_sc = args[nw + 5:nw + 5 + num_layers]              # compute dtype
        c_sc = args[nw + 5 + num_layers:nw + 5 + 2 * num_layers]  # f32
        htop_sc = args[nw + 5 + 2 * num_layers]              # (tt, bp, hp) compute

        @pl.when(pl.program_id(0) == 0)
        def _():
            for l in range(num_layers):
                h_sc[l][...] = jnp.zeros_like(h_sc[l])
                c_sc[l][...] = jnp.zeros_like(c_sc[l])

        def step(s, carry):
            inp = x_ref[s]                                   # (bp, dinp)
            for l in range(num_layers):
                wx_ref = w_refs[2 * l]
                wh_ref = w_refs[2 * l + 1]
                h_prev = h_sc[l][...]                        # matmul LHS dtype
                c_prev = c_sc[l][...]                        # f32 cell state
                # Two dots accumulated in f32 — no per-step lane-axis concat.
                gates = (jnp.dot(inp, wx_ref[...],
                                 preferred_element_type=jnp.float32)
                         + jnp.dot(h_prev, wh_ref[...],
                                   preferred_element_type=jnp.float32))
                i_g = jax.nn.sigmoid(gates[:, 0 * hp:1 * hp])
                f_g = jax.nn.sigmoid(gates[:, 1 * hp:2 * hp])
                g_g = jnp.tanh(gates[:, 2 * hp:3 * hp])
                o_g = jax.nn.sigmoid(gates[:, 3 * hp:4 * hp])
                c_new = f_g * c_prev + i_g * g_g             # f32
                h_new = (o_g * jnp.tanh(c_new)).astype(h_sc[l].dtype)
                h_sc[l][...] = h_new
                c_sc[l][...] = c_new
                inp = h_new
            # Stash top-layer h; FC head runs once per grid step, batched.
            htop_sc[s] = inp
            return carry

        # NOTE: at large hp (>=1024) prefer unroll=2/4 to limit vreg pressure.
        lax.fori_loop(0, tt, step, 0, unroll=True)

        # Batched FC head: one (tt*bp, hp) @ (hp, op) MXU call per grid step,
        # bias broadcast hoisted out of the timestep loop.
        tt_, bp_, hp_ = htop_sc.shape
        op_ = y_ref.shape[-1]
        ht = htop_sc[...].reshape(tt_ * bp_, hp_)
        y = (jnp.dot(ht, fcw_ref[...], preferred_element_type=jnp.float32)
             + fcb_ref[...])
        y_ref[...] = y.reshape(tt_, bp_, op_).astype(y_ref.dtype)

        # h_n / c_n are constant-index output blocks: valid data is written only
        # on the last grid step; earlier iterations the buffers intentionally
        # hold garbage (single HBM writeback happens after the final step).
        @pl.when(pl.program_id(0) == pl.num_programs(0) - 1)
        def _():
            for l in range(num_layers):
                hN_ref[l] = h_sc[l][...].astype(hN_ref.dtype)
                cN_ref[l] = c_sc[l][...].astype(cN_ref.dtype)

    return kernel


def _const_spec(shape, single_buffer):
    idx = lambda t: (0,) * len(shape)
    if single_buffer:
        return pl.BlockSpec(shape, idx, pipeline_mode=pl.Buffered(buffer_count=1))
    return pl.BlockSpec(shape, idx)


def _vmem_limit_bytes(ws_flat, fcw_p, fcb_p, *, tt, bp, dinp, hp, op,
                      num_layers, y_dtype, single_buffer):
    cds = jnp.dtype(ws_flat[0].dtype).itemsize
    yds = jnp.dtype(y_dtype).itemsize
    wbuf = 1 if single_buffer else 2
    weight = sum(int(np.prod(w.shape)) * jnp.dtype(w.dtype).itemsize
                 for w in ws_flat)
    weight += int(np.prod(fcw_p.shape)) * jnp.dtype(fcw_p.dtype).itemsize
    weight += int(np.prod(fcb_p.shape)) * jnp.dtype(fcb_p.dtype).itemsize
    weight *= wbuf
    x_b = 2 * tt * bp * dinp * cds                 # double-buffered input tile
    y_b = 2 * tt * bp * op * yds                   # double-buffered output tile
    hn_b = 2 * 2 * num_layers * bp * hp * 4        # hN + cN output blocks
    scratch = num_layers * bp * hp * (cds + 4) + tt * bp * hp * cds
    total = weight + x_b + y_b + hn_b + scratch
    budget = int(total * 1.25) + (2 << 20)         # headroom + Mosaic internals
    return max(16 << 20, min(budget, 110 << 20))


def _lstm_fused_call(x_p, ws_flat, fcw_p, fcb_p, *, num_layers, hp, bp, dinp,
                     op, tt, y_dtype, single_buffer):
    T = x_p.shape[0]
    gsteps = T // tt
    cdt = ws_flat[0].dtype
    kernel = _make_kernel(num_layers=num_layers, hp=hp, tt=tt)

    in_specs = [pl.BlockSpec((tt, bp, dinp), lambda t: (t, 0, 0))]
    for w in ws_flat:                               # grid-invariant, VMEM-resident
        in_specs.append(_const_spec(w.shape, single_buffer))
    in_specs.append(_const_spec(fcw_p.shape, single_buffer))
    in_specs.append(_const_spec(fcb_p.shape, single_buffer))

    out_specs = [
        pl.BlockSpec((tt, bp, op), lambda t: (t, 0, 0)),
        pl.BlockSpec((num_layers, bp, hp), lambda t: (0, 0, 0)),
        pl.BlockSpec((num_layers, bp, hp), lambda t: (0, 0, 0)),
    ]
    out_shape = (jax.ShapeDtypeStruct((T, bp, op), y_dtype),
                 jax.ShapeDtypeStruct((num_layers, bp, hp), jnp.float32),
                 jax.ShapeDtypeStruct((num_layers, bp, hp), jnp.float32))
    scratch = ([pltpu.VMEM((bp, hp), cdt) for _ in range(num_layers)]       # h
               + [pltpu.VMEM((bp, hp), jnp.float32) for _ in range(num_layers)]  # c
               + [pltpu.VMEM((tt, bp, hp), cdt)])                           # h_top

    vmem_budget = _vmem_limit_bytes(
        ws_flat, fcw_p, fcb_p, tt=tt, bp=bp, dinp=dinp, hp=hp, op=op,
        num_layers=num_layers, y_dtype=y_dtype, single_buffer=single_buffer)

    return pl.pallas_call(
        kernel,
        out_shape=out_shape,
        grid_spec=pltpu.PrefetchScalarGridSpec(
            num_scalar_prefetch=0,
            grid=(gsteps,),
            in_specs=in_specs,
            out_specs=out_specs,
            scratch_shapes=scratch),
        compiler_params=pltpu.CompilerParams(
            dimension_semantics=("arbitrary",),   # time axis is serial
            vmem_limit_bytes=vmem_budget),
    )(x_p, *ws_flat, fcw_p, fcb_p)


# --------------------------------- forward --------------------------------------
@functools.partial(jax.jit,
                   static_argnames=("hidden_size", "output_size", "tt",
                                    "y_dtype", "single_buffer"))
def _lstm_forward_jit(x, packed_ws, fcw_p, fcb_p, *, hidden_size, output_size,
                      tt, y_dtype, single_buffer):
    T, B, D = x.shape
    H = hidden_size
    hp, op = fcw_p.shape
    num_layers = len(packed_ws)
    ws_flat = tuple(w for pair in packed_ws for w in pair)
    dinp = packed_ws[0][0].shape[0]
    cdt = ws_flat[0].dtype
    sub = 8 * (4 // jnp.dtype(cdt).itemsize)       # 8 for f32, 16 for bf16
    bp = _round_up(max(B, sub), sub)
    tt_eff = _choose_tt(T, tt)

    x_p = jnp.pad(x, ((0, 0), (0, bp - B), (0, dinp - D))).astype(cdt)
    y_p, hN, cN = _lstm_fused_call(
        x_p, ws_flat, fcw_p, fcb_p,
        num_layers=num_layers, hp=hp, bp=bp, dinp=dinp, op=op,
        tt=tt_eff, y_dtype=y_dtype, single_buffer=single_buffer)

    y = y_p[:, :B, :output_size]
    h_n = hN[:, :B, :H]
    c_n = cN[:, :B, :H]
    return y, (h_n, c_n)


def lstm_forward(x, packed_ws, fcw_p, fcb_p, *, hidden_size, output_size,
                 tt=8, y_dtype=jnp.float32):
    """x: (T, B, D) time-major (batch_first=False). Returns (y, (h_n, c_n)).

    TODO(synk): non-zero initial (h0, c0) not supported; zeros assumed
    (matches the torch module's default state=None path).
    """
    single_buffer = _single_buffer_supported()     # probed OUTSIDE the jit
    return _lstm_forward_jit(x, packed_ws, fcw_p, fcb_p,
                             hidden_size=hidden_size, output_size=output_size,
                             tt=tt, y_dtype=y_dtype, single_buffer=single_buffer)


# ------------------------------ pure-JAX reference -------------------------------
def lstm_ref(x, params, fc_w, fc_b, num_layers, H):
    T, B, _ = x.shape
    inp = x
    h_n, c_n = [], []
    for l in range(num_layers):
        wih, whh = params[l]
        h = jnp.zeros((B, H), jnp.float32)
        c = jnp.zeros((B, H), jnp.float32)
        outs = []
        for t in range(T):
            gates = inp[t] @ wih.T + h @ whh.T
            i, f, g, o = jnp.split(gates, 4, axis=-1)
            i = jax.nn.sigmoid(i)
            f = jax.nn.sigmoid(f)
            g = jnp.tanh(g)
            o = jax.nn.sigmoid(o)
            c = f * c + i * g
            h = o * jnp.tanh(c)
            outs.append(h)
        inp = jnp.stack(outs)
        h_n.append(h)
        c_n.append(c)
    y = inp @ fc_w.T + fc_b
    return y, (jnp.stack(h_n), jnp.stack(c_n))


if __name__ == "__main__":
    input_size, hidden_size, num_layers, output_size = 4, 10, 2, 2
    T, B = 16, 2
    TT = 8  # timesteps per grid step (auto-reduced to a divisor of T)

    key = jax.random.PRNGKey(0)
    k = 1.0 / np.sqrt(hidden_size)
    keys = jax.random.split(key, 2 * num_layers + 3)

    params = []
    for l in range(num_layers):
        d_in = input_size if l == 0 else hidden_size
        wih = jax.random.uniform(keys[2 * l], (4 * hidden_size, d_in),
                                 jnp.float32, -k, k)
        whh = jax.random.uniform(keys[2 * l + 1], (4 * hidden_size, hidden_size),
                                 jnp.float32, -k, k)
        params.append((wih, whh))
    fc_w = jax.random.uniform(keys[-3], (output_size, hidden_size),
                              jnp.float32, -k, k)
    fc_b = jax.random.uniform(keys[-2], (output_size,), jnp.float32, -k, k)
    x = jax.random.normal(keys[-1], (T, B, input_size), jnp.float32)
    params = tuple(tuple(p) for p in params)

    y_ref, (h_ref, c_ref) = lstm_ref(x, params, fc_w, fc_b,
                                     num_layers, hidden_size)

    # --- f32 path (matches PyTorch numerics) ---
    pw, fcw_p, fcb_p = pack_params(params, fc_w, fc_b, hidden_size,
                                   compute_dtype=jnp.float32)
    y, (h_n, c_n) = lstm_forward(x, pw, fcw_p, fcb_p,
                                 hidden_size=hidden_size,
                                 output_size=output_size, tt=TT)
    jax.block_until_ready((y, h_n, c_n))
    np.testing.assert_allclose(np.asarray(y), np.asarray(y_ref),
                               rtol=1e-5, atol=1e-5)
    np.testing.assert_allclose(np.asarray(h_n), np.asarray(h_ref),
                               rtol=1e-5, atol=1e-5)
    np.testing.assert_allclose(np.asarray(c_n), np.asarray(c_ref),
                               rtol=1e-5, atol=1e-5)

    # --- bf16 compute path (MXU-native; f32 accumulation + f32 gate math) ---
    # NOTE: 5e-2 tolerance is load-bearing for the bf16 path (x / h / weights
    # rounded to bf16 per step; cell state c stays f32 so error doesn't compound).
    pw16, fcw16, fcb16 = pack_params(params, fc_w, fc_b, hidden_size,
                                     compute_dtype=jnp.bfloat16)
    y16, (h16, c16) = lstm_forward(x, pw16, fcw16, fcb16,
                                   hidden_size=hidden_size,
                                   output_size=output_size, tt=TT)
    jax.block_until_ready((y16, h16, c16))
    np.testing.assert_allclose(np.asarray(y16), np.asarray(y_ref),
                               rtol=5e-2, atol=5e-2)
    np.testing.assert_allclose(np.asarray(h16), np.asarray(h_ref),
                               rtol=5e-2, atol=5e-2)
    np.testing.assert_allclose(np.asarray(c16), np.asarray(c_ref),
                               rtol=5e-2, atol=5e-2)

    assert y.shape == (T, B, output_size)
    assert h_n.shape == (num_layers, B, hidden_size)
    assert c_n.shape == (num_layers, B, hidden_size)
    print("KERNEL_OK")
</pallas_src>

<mosaic_0001>
module attributes {stable_mosaic.version = 11 : i64} {
  func.func @k(%arg0: i32, %arg1: memref<8x128xf32, #tpu.memory_space<vmem>>, %arg2: memref<8x128xf32, #tpu.memory_space<vmem>>) attributes {dimension_semantics = [#tpu.dimension_semantics<arbitrary>], iteration_bounds = array<i64: 2>, scalar_prefetch = 0 : i64, scratch_operands = 0 : i64, tpu.core_type = #tpu.core_type<tc>, window_params = [{pipeline_mode = #tpu.pipeline_mode<synchronous>, transform_indices = @transform_0, window_bounds = array<i64: 8, 128>}, {pipeline_mode = #tpu.pipeline_mode<synchronous>, transform_indices = @transform_1, window_bounds = array<i64: 8, 128>}]} {
    %c0 = arith.constant 0 : index
    %c0_0 = arith.constant 0 : index
    %0 = vector.load %arg1[%c0, %c0_0] : memref<8x128xf32, #tpu.memory_space<vmem>>, vector<8x128xf32>
    %cst = arith.constant 1.000000e+00 : f32
    %1 = vector.broadcast %cst : f32 to vector<8x128xf32>
    %2 = arith.addf %0, %1 : vector<8x128xf32>
    %c0_1 = arith.constant 0 : index
    %c0_2 = arith.constant 0 : index
    %3 = vector.load %arg2[%c0_1, %c0_2] : memref<8x128xf32, #tpu.memory_space<vmem>>, vector<8x128xf32>
    tpu.vector_store %arg2[%c0_1, %c0_2], %2 {strides = array<i32>} : memref<8x128xf32, #tpu.memory_space<vmem>>, vector<8x128xf32>,
    return
  }
  func.func @transform_0(%arg0: i32) -> (i32, i32) {
    %c0_i32 = arith.constant 0 : i32
    %c0_i32_0 = arith.constant 0 : i32
    %c0_i32_1 = arith.constant 0 : i32
    return %c0_i32, %c0_i32_0 : i32, i32
  }
  func.func @transform_1(%arg0: i32) -> (i32, i32) {
    %c0_i32 = arith.constant 0 : i32
    %c0_i32_0 = arith.constant 0 : i32
    %c0_i32_1 = arith.constant 0 : i32
    return %c0_i32, %c0_i32_0 : i32, i32
  }
}

module attributes {stable_mosaic.version = 11 : i64} {
  func.func @kernel(%arg0: i32, %arg1: memref<8x8x128xf32, #tpu.memory_space<vmem>>, %arg2: memref<128x512xf32, #tpu.memory_space<vmem>>, %arg3: memref<128x512xf32, #tpu.memory_space<vmem>>, %arg4: memref<128x512xf32, #tpu.memory_space<vmem>>, %arg5: memref<128x512xf32, #tpu.memory_space<vmem>>, %arg6: memref<128x128xf32, #tpu.memory_space<vmem>>, %arg7: memref<1x128xf32, #tpu.memory_space<vmem>>, %arg8: memref<8x8x128xf32, #tpu.memory_space<vmem>>, %arg9: memref<2x8x128xf32, #tpu.memory_space<vmem>>, %arg10: memref<2x8x128xf32, #tpu.memory_space<vmem>>, %arg11: memref<8x128xf32, #tpu.memory_space<vmem>>, %arg12: memref<8x128xf32, #tpu.memory_space<vmem>>, %arg13: memref<8x128xf32, #tpu.memory_space<vmem>>, %arg14: memref<8x128xf32, #tpu.memory_space<vmem>>, %arg15: memref<8x8x128xf32, #tpu.memory_space<vmem>>) attributes {dimension_semantics = [#tpu.dimension_semantics<arbitrary>], iteration_bounds = array<i64: 2>, scalar_prefetch = 0 : i64, scratch_operands = 5 : i64, tpu.core_type = #tpu.core_type<tc>, window_params = [{transform_indices = @transform_0, window_bounds = array<i64: 8, 8, 128>}, {pipeline_mode = #tpu.pipeline_mode<synchronous>, transform_indices = @transform_1, window_bounds = array<i64: 128, 512>}, {pipeline_mode = #tpu.pipeline_mode<synchronous>, transform_indices = @transform_2, window_bounds = array<i64: 128, 512>}, {pipeline_mode = #tpu.pipeline_mode<synchronous>, transform_indices = @transform_3, window_bounds = array<i64: 128, 512>}, {pipeline_mode = #tpu.pipeline_mode<synchronous>, transform_indices = @transform_4, window_bounds = array<i64: 128, 512>}, {pipeline_mode = #tpu.pipeline_mode<synchronous>, transform_indices = @transform_5, window_bounds = array<i64: 128, 128>}, {pipeline_mode = #tpu.pipeline_mode<synchronous>, transform_indices = @transform_6, window_bounds = array<i64: 1, 128>}, {transform_indices = @transform_7, window_bounds = array<i64: 8, 8, 128>}, {pipeline_mode = #tpu.pipeline_mode<synchronous>, transform_indices = @transform_8, window_bounds = array<i64: 2, 8, 128>}, {pipeline_mode = #tpu.pipeline_mode<synchronous>, transform_indices = @transform_9, window_bounds = array<i64: 2, 8, 128>}]} {
    %c0_i32 = arith.constant 0 : i32
    %0 = arith.cmpi eq, %arg0, %c0_i32 : i32
    %1 = arith.extui %0 : i1 to i32
    %c0_i32_0 = arith.constant 0 : i32
    %2 = arith.cmpi ne, %1, %c0_i32_0 : i32
    scf.if %2 {
      %cst_317 = arith.constant 0.000000e+00 : f32
      %615 = vector.broadcast %cst_317 : f32 to vector<8x128xf32>
      %c0_318 = arith.constant 0 : index
      %c0_319 = arith.constant 0 : index
      %616 = vector.load %arg11[%c0_318, %c0_319] : memref<8x128xf32, #tpu.memory_space<vmem>>, vector<8x128xf32>
      tpu.vector_store %arg11[%c0_318, %c0_319], %615 {strides = array<i32>} : memref<8x128xf32, #tpu.memory_space<vmem>>, vector<8x128xf32>,
      %cst_320 = arith.constant 0.000000e+00 : f32
      %617 = vector.broadcast %cst_320 : f32 to vector<8x128xf32>
      %c0_321 = arith.constant 0 : index
      %c0_322 = arith.constant 0 : index
      %618 = vector.load %arg13[%c0_321, %c0_322] : memref<8x128xf32, #tpu.memory_space<vmem>>, vector<8x128xf32>
      tpu.vector_store %arg13[%c0_321, %c0_322], %617 {strides = array<i32>} : memref<8x128xf32, #tpu.memory_space<vmem>>, vector<8x128xf32>,
      %cst_323 = arith.constant 0.000000e+00 : f32
      %619 = vector.broadcast %cst_323 : f32 to vector<8x128xf32>
      %c0_324 = arith.constant 0 : index
      %c0_325 = arith.constant 0 : index
      %620 = vector.load %arg12[%c0_324, %c0_325] : memref<8x128xf32, #tpu.memory_space<vmem>>, vector<8x128xf32>
      tpu.vector_store %arg12[%c0_324, %c0_325], %619 {strides = array<i32>} : memref<8x128xf32, #tpu.memory_space<vmem>>, vector<8x128xf32>,
      %cst_326 = arith.constant 0.000000e+00 : f32
      %621 = vector.broadcast %cst_326 : f32 to vector<8x128xf32>
      %c0_327 = arith.constant 0 : index
      %c0_328 = arith.constant 0 : index
      %622 = vector.load %arg14[%c0_327, %c0_328] : memref<8x128xf32, #tpu.memory_space<vmem>>, vector<8x128xf32>
      tpu.vector_store %arg14[%c0_327, %c0_328], %621 {strides = array<i32>} : memref<8x128xf32, #tpu.memory_space<vmem>>, vector<8x128xf32>,
    } else {
    }
    %c0_i32_1 = arith.constant 0 : i32
    %3 = arith.index_cast %c0_i32_1 : i32 to index
    %c0 = arith.constant 0 : index
    %c0_2 = arith.constant 0 : index
    %4 = vector.load %arg1[%3, %c0, %c0_2] : memref<8x8x128xf32, #tpu.memory_space<vmem>>, vector<1x8x128xf32>
    %5 = vector.shape_cast %4 : vector<1x8x128xf32> to vector<8x128xf32>
    %c0_3 = arith.constant 0 : index
    %c0_4 = arith.constant 0 : index
    %6 = vector.load %arg11[%c0_3, %c0_4] : memref<8x128xf32, #tpu.memory_space<vmem>>, vector<8x128xf32>
    %c0_5 = arith.constant 0 : index
    %c0_6 = arith.constant 0 : index
    %7 = vector.load %arg13[%c0_5, %c0_6] : memref<8x128xf32, #tpu.memory_space<vmem>>, vector<8x128xf32>
    %c0_7 = arith.constant 0 : index
    %c0_8 = arith.constant 0 : index
    %8 = vector.load %arg2[%c0_7, %c0_8] : memref<128x512xf32, #tpu.memory_space<vmem>>, vector<128x512xf32>
    %cst = arith.constant dense<0.000000e+00> : vector<8x512xf32>
    %9 = tpu.matmul %5, %8, %cst {dimension_numbers = #tpu.dot_dimension_numbers<[1], [0], [0], [1], [0, 0, 1, 1], [], []>} : vector<8x128xf32>, vector<128x512xf32>, vector<8x512xf32> -> vector<8x512xf32>
    %c0_9 = arith.constant 0 : index
    %c0_10 = arith.constant 0 : index
    %10 = vector.load %arg3[%c0_9, %c0_10] : memref<128x512xf32, #tpu.memory_space<vmem>>, vector<128x512xf32>
    %cst_11 = arith.constant dense<0.000000e+00> : vector<8x512xf32>
    %11 = tpu.matmul %6, %10, %cst_11 {dimension_numbers = #tpu.dot_dimension_numbers<[1], [0], [0], [1], [0, 0, 1, 1], [], []>} : vector<8x128xf32>, vector<128x512xf32>, vector<8x512xf32> -> vector<8x512xf32>
    %12 = arith.addf %9, %11 : vector<8x512xf32>
    %13 = vector.extract_strided_slice %12 {offsets = [0, 0], sizes = [8, 128], strides = [1, 1]} : vector<8x512xf32> to vector<8x128xf32>
    %14 = arith.negf %13 : vector<8x128xf32>
    %15 = math.exp %14 : vector<8x128xf32>
    %cst_12 = arith.constant 1.000000e+00 : f32
    %16 = vector.broadcast %cst_12 : f32 to vector<8x128xf32>
    %17 = arith.addf %16, %15 : vector<8x128xf32>
    %18 = arith.divf %16, %17 : vector<8x128xf32>
    %19 = vector.extract_strided_slice %12 {offsets = [0, 128], sizes = [8, 128], strides = [1, 1]} : vector<8x512xf32> to vector<8x128xf32>
    %20 = arith.negf %19 : vector<8x128xf32>
    %21 = math.exp %20 : vector<8x128xf32>
    %cst_13 = arith.constant 1.000000e+00 : f32
    %22 = vector.broadcast %cst_13 : f32 to vector<8x128xf32>
    %23 = arith.addf %22, %21 : vector<8x128xf32>
    %24 = arith.divf %22, %23 : vector<8x128xf32>
    %25 = vector.extract_strided_slice %12 {offsets = [0, 256], sizes = [8, 128], strides = [1, 1]} : vector<8x512xf32> to vector<8x128xf32>
    %26 = math.tanh %25 : vector<8x128xf32>
    %27 = vector.extract_strided_slice %12 {offsets = [0, 384], sizes = [8, 128], strides = [1, 1]} : vector<8x512xf32> to vector<8x128xf32>
    %28 = arith.negf %27 : vector<8x128xf32>
    %29 = math.exp %28 : vector<8x128xf32>
    %cst_14 = arith.constant 1.000000e+00 : f32
    %30 = vector.broadcast %cst_14 : f32 to vector<8x128xf32>
    %31 = arith.addf %30, %29 : vector<8x128xf32>
    %32 = arith.divf %30, %31 : vector<8x128xf32>
    %33 = arith.mulf %24, %7 : vector<8x128xf32>
    %34 = arith.mulf %18, %26 : vector<8x128xf32>
    %35 = arith.addf %33, %34 : vector<8x128xf32>
    %36 = math.tanh %35 : vector<8x128xf32>
    %37 = arith.mulf %32, %36 : vector<8x128xf32>
    %c0_15 = arith.constant 0 : index
    %c0_16 = arith.constant 0 : index
    %38 = vector.load %arg11[%c0_15, %c0_16] : memref<8x128xf32, #tpu.memory_space<vmem>>, vector<8x128xf32>
    tpu.vector_store %arg11[%c0_15, %c0_16], %37 {strides = array<i32>} : memref<8x128xf32, #tpu.memory_space<vmem>>, vector<8x128xf32>,
    %c0_17 = arith.constant 0 : index
    %c0_18 = arith.constant 0 : index
    %39 = vector.load %arg13[%c0_17, %c0_18] : memref<8x128xf32, #tpu.memory_space<vmem>>, vector<8x128xf32>
    tpu.vector_store %arg13[%c0_17, %c0_18], %35 {strides = array<i32>} : memref<8x128xf32, #tpu.memory_space<vmem>>, vector<8x128xf32>,
    %c0_19 = arith.constant 0 : index
    %c0_20 = arith.constant 0 : index
    %40 = vector.load %arg12[%c0_19, %c0_20] : memref<8x128xf32, #tpu.memory_space<vmem>>, vector<8x128xf32>
    %c0_21 = arith.constant 0 : index
    %c0_22 = arith.constant 0 : index
    %41 = vector.load %arg14[%c0_21, %c0_22] : memref<8x128xf32, #tpu.memory_space<vmem>>, vector<8x128xf32>
    %c0_23 = arith.constant 0 : index
    %c0_24 = arith.constant 0 : index
    %42 = vector.load %arg4[%c0_23, %c0_24] : memref<128x512xf32, #tpu.memory_space<vmem>>, vector<128x512xf32>
    %cst_25 = arith.constant dense<0.000000e+00> : vector<8x512xf32>
    %43 = tpu.matmul %37, %42, %cst_25 {dimension_numbers = #tpu.dot_dimension_numbers<[1], [0], [0], [1], [0, 0, 1, 1], [], []>} : vector<8x128xf32>, vector<128x512xf32>, vector<8x512xf32> -> vector<8x512xf32>
    %c0_26 = arith.constant 0 : index
    %c0_27 = arith.constant 0 : index
    %44 = vector.load %arg5[%c0_26, %c0_27] : memref<128x512xf32, #tpu.memory_space<vmem>>, vector<128x512xf32>
    %cst_28 = arith.constant dense<0.000000e+00> : vector<8x512xf32>
    %45 = tpu.matmul %40, %44, %cst_28 {dimension_numbers = #tpu.dot_dimension_numbers<[1], [0], [0], [1], [0, 0, 1, 1], [], []>} : vector<8x128xf32>, vector<128x512xf32>, vector<8x512xf32> -> vector<8x512xf32>
    %46 = arith.addf %43, %45 : vector<8x512xf32>
    %47 = vector.extract_strided_slice %46 {offsets = [0, 0], sizes = [8, 128], strides = [1, 1]} : vector<8x512xf32> to vector<8x128xf32>
    %48 = arith.negf %47 : vector<8x128xf32>
    %49 = math.exp %48 : vector<8x128xf32>
    %cst_29 = arith.constant 1.000000e+00 : f32
    %50 = vector.broadcast %cst_29 : f32 to vector<8x128xf32>
    %51 = arith.addf %50, %49 : vector<8x128xf32>
    %52 = arith.divf %50, %51 : vector<8x128xf32>
    %53 = vector.extract_strided_slice %46 {offsets = [0, 128], sizes = [8, 128], strides = [1, 1]} : vector<8x512xf32> to vector<8x128xf32>
    %54 = arith.negf %53 : vector<8x128xf32>
    %55 = math.exp %54 : vector<8x128xf32>
    %cst_30 = arith.constant 1.000000e+00 : f32
    %56 = vector.broadcast %cst_30 : f32 to vector<8x128xf32>
    %57 = arith.addf %56, %55 : vector<8x128xf32>
    %58 = arith.divf %56, %57 : vector<8x128xf32>
    %59 = vector.extract_strided_slice %46 {offsets = [0, 256], sizes = [8, 128], strides = [1, 1]} : vector<8x512xf32> to vector<8x128xf32>
    %60 = math.tanh %59 : vector<8x128xf32>
    %61 = vector.extract_strided_slice %46 {offsets = [0, 384], sizes = [8, 128], strides = [1, 1]} : vector<8x512xf32> to vector<8x128xf32>
    %62 = arith.negf %61 : vector<8x128xf32>
    %63 = math.exp %62 : vector<8x128xf32>
    %cst_31 = arith.constant 1.000000e+00 : f32
    %64 = vector.broadcast %cst_31 : f32 to vector<8x128xf32>
    %65 = arith.addf %64, %63 : vector<8x128xf32>
    %66 = arith.divf %64, %65 : vector<8x128xf32>
    %67 = arith.mulf %58, %41 : vector<8x128xf32>
    %68 = arith.mulf %52, %60 : vector<8x128xf32>
    %69 = arith.addf %67, %68 : vector<8x128xf32>
    %70 = math.tanh %69 : vector<8x128xf32>
    %71 = arith.mulf %66, %70 : vector<8x128xf32>
    %c0_32 = arith.constant 0 : index
    %c0_33 = arith.constant 0 : index
    %72 = vector.load %arg12[%c0_32, %c0_33] : memref<8x128xf32, #tpu.memory_space<vmem>>, vector<8x128xf32>
    tpu.vector_store %arg12[%c0_32, %c0_33], %71 {strides = array<i32>} : memref<8x128xf32, #tpu.memory_space<vmem>>, vector<8x128xf32>,
    %c0_34 = arith.constant 0 : index
    %c0_35 = arith.constant 0 : index
    %73 = vector.load %arg14[%c0_34, %c0_35] : memref<8x128xf32, #tpu.memory_space<vmem>>, vector<8x128xf32>
    tpu.vector_store %arg14[%c0_34, %c0_35], %69 {strides = array<i32>} : memref<8x128xf32, #tpu.memory_space<vmem>>, vector<8x128xf32>,
    %74 = arith.index_cast %c0_i32_1 : i32 to index
    %c0_36 = arith.constant 0 : index
    %c0_37 = arith.constant 0 : index
    %75 = vector.load %arg15[%74, %c0_36, %c0_37] : memref<8x8x128xf32, #tpu.memory_space<vmem>>, vector<1x8x128xf32>
    %76 = vector.shape_cast %75 : vector<1x8x128xf32> to vector<8x128xf32>
    %77 = vector.shape_cast %71 : vector<8x128xf32> to vector<1x8x128xf32>
    tpu.vector_store %arg15[%74, %c0_36, %c0_37], %77 {strides = array<i32>} : memref<8x8x128xf32, #tpu.memory_space<vmem>>, vector<1x8x128xf32>,
    %c1_i32 = arith.constant 1 : i32
    %78 = arith.index_cast %c1_i32 : i32 to index
    %c0_38 = arith.constant 0 : index
    %c0_39 = arith.constant 0 : index
    %79 = vector.load %arg1[%78, %c0_38, %c0_39] : memref<8x8x128xf32, #tpu.memory_space<vmem>>, vector<1x8x128xf32>
    %80 = vector.shape_cast %79 : vector<1x8x128xf32> to vector<8x128xf32>
    %c0_40 = arith.constant 0 : index
    %c0_41 = arith.constant 0 : index
    %81 = vector.load %arg11[%c0_40, %c0_41] : memref<8x128xf32, #tpu.memory_space<vmem>>, vector<8x128xf32>
    %c0_42 = arith.constant 0 : index
    %c0_43 = arith.constant 0 : index
    %82 = vector.load %arg13[%c0_42, %c0_43] : memref<8x128xf32, #tpu.memory_space<vmem>>, vector<8x128xf32>
    %c0_44 = arith.constant 0 : index
    %c0_45 = arith.constant 0 : index
    %83 = vector.load %arg2[%c0_44, %c0_45] : memref<128x512xf32, #tpu.memory_space<vmem>>, vector<128x512xf32>
    %cst_46 = arith.constant dense<0.000000e+00> : vector<8x512xf32>
    %84 = tpu.matmul %80, %83, %cst_46 {dimension_numbers = #tpu.dot_dimension_numbers<[1], [0], [0], [1], [0, 0, 1, 1], [], []>} : vector<8x128xf32>, vector<128x512xf32>, vector<8x512xf32> -> vector<8x512xf32>
    %c0_47 = arith.constant 0 : index
    %c0_48 = arith.constant 0 : index
    %85 = vector.load %arg3[%c0_47, %c0_48] : memref<128x512xf32, #tpu.memory_space<vmem>>, vector<128x512xf32>
    %cst_49 = arith.constant dense<0.000000e+00> : vector<8x512xf32>
    %86 = tpu.matmul %81, %85, %cst_49 {dimension_numbers = #tpu.dot_dimension_numbers<[1], [0], [0], [1], [0, 0, 1, 1], [], []>} : vector<8x128xf32>, vector<128x512xf32>, vector<8x512xf32> -> vector<8x512xf32>
    %87 = arith.addf %84, %86 : vector<8x512xf32>
    %88 = vector.extract_strided_slice %87 {offsets = [0, 0], sizes = [8, 128], strides = [1, 1]} : vector<8x512xf32> to vector<8x128xf32>
    %89 = arith.negf %88 : vector<8x128xf32>
    %90 = math.exp %89 : vector<8x128xf32>
    %cst_50 = arith.constant 1.000000e+00 : f32
    %91 = vector.broadcast %cst_50 : f32 to vector<8x128xf32>
    %92 = arith.addf %91, %90 : vector<8x128xf32>
    %93 = arith.divf %91, %92 : vector<8x128xf32>
    %94 = vector.extract_strided_slice %87 {offsets = [0, 128], sizes = [8, 128], strides = [1, 1]} : vector<8x512xf32> to vector<8x128xf32>
    %95 = arith.negf %94 : vector<8x128xf32>
    %96 = math.exp %95 : vector<8x128xf32>
    %cst_51 = arith.constant 1.000000e+00 : f32
    %97 = vector.broadcast %cst_51 : f32 to vector<8x128xf32>
    %98 = arith.addf %97, %96 : vector<8x128xf32>
    %99 = arith.divf %97, %98 : vector<8x128xf32>
    %100 = vector.extract_strided_slice %87 {offsets = [0, 256], sizes = [8, 128], strides = [1, 1]} : vector<8x512xf32> to vector<8x128xf32>
    %101 = math.tanh %100 : vector<8x128xf32>
    %102 = vector.extract_strided_slice %87 {offsets = [0, 384], sizes = [8, 128], strides = [1, 1]} : vector<8x512xf32> to vector<8x128xf32>
    %103 = arith.negf %102 : vector<8x128xf32>
    %104 = math.exp %103 : vector<8x128xf32>
    %cst_52 = arith.constant 1.000000e+00 : f32
    %105 = vector.broadcast %cst_52 : f32 to vector<8x128xf32>
    %106 = arith.addf %105, %104 : vector<8x128xf32>
    %107 = arith.divf %105, %106 : vector<8x128xf32>
    %108 = arith.mulf %99, %82 : vector<8x128xf32>
    %109 = arith.mulf %93, %101 : vector<8x128xf32>
    %110 = arith.addf %108, %109 : vector<8x128xf32>
    %111 = math.tanh %110 : vector<8x128xf32>
    %112 = arith.mulf %107, %111 : vector<8x128xf32>
    %c0_53 = arith.constant 0 : index
    %c0_54 = arith.constant 0 : index
    %113 = vector.load %arg11[%c0_53, %c0_54] : memref<8x128xf32, #tpu.memory_space<vmem>>, vector<8x128xf32>
    tpu.vector_store %arg11[%c0_53, %c0_54], %112 {strides = array<i32>} : memref<8x128xf32, #tpu.memory_space<vmem>>, vector<8x128xf32>,
    %c0_55 = arith.constant 0 : index
    %c0_56 = arith.constant 0 : index
    %114 = vector.load %arg13[%c0_55, %c0_56] : memref<8x128xf32, #tpu.memory_space<vmem>>, vector<8x128xf32>
    tpu.vector_store %arg13[%c0_55, %c0_56], %110 {strides = array<i32>} : memref<8x128xf32, #tpu.memory_space<vmem>>, vector<8x128xf32>,
    %c0_57 = arith.constant 0 : index
    %c0_58 = arith.constant 0 : index
    %115 = vector.load %arg12[%c0_57, %c0_58] : memref<8x128xf32, #tpu.memory_space<vmem>>, vector<8x128xf32>
    %c0_59 = arith.constant 0 : index
    %c0_60 = arith.constant 0 : index
    %116 = vector.load %arg14[%c0_59, %c0_60] : memref<8x128xf32, #tpu.memory_space<vmem>>, vector<8x128xf32>
    %c0_61 = arith.constant 0 : index
    %c0_62 = arith.constant 0 : index
    %117 = vector.load %arg4[%c0_61, %c0_62] : memref<128x512xf32, #tpu.memory_space<vmem>>, vector<128x512xf32>
    %cst_63 = arith.constant dense<0.000000e+00> : vector<8x512xf32>
    %118 = tpu.matmul %112, %117, %cst_63 {dimension_numbers = #tpu.dot_dimension_numbers<[1], [0], [0], [1], [0, 0, 1, 1], [], []>} : vector<8x128xf32>, vector<128x512xf32>, vector<8x512xf32> -> vector<8x512xf32>
    %c0_64 = arith.constant 0 : index
    %c0_65 = arith.constant 0 : index
    %119 = vector.load %arg5[%c0_64, %c0_65] : memref<128x512xf32, #tpu.memory_space<vmem>>, vector<128x512xf32>
    %cst_66 = arith.constant dense<0.000000e+00> : vector<8x512xf32>
    %120 = tpu.matmul %115, %119, %cst_66 {dimension_numbers = #tpu.dot_dimension_numbers<[1], [0], [0], [1], [0, 0, 1, 1], [], []>} : vector<8x128xf32>, vector<128x512xf32>, vector<8x512xf32> -> vector<8x512xf32>
    %121 = arith.addf %118, %120 : vector<8x512xf32>
    %122 = vector.extract_strided_slice %121 {offsets = [0, 0], sizes = [8, 128], strides = [1, 1]} : vector<8x512xf32> to vector<8x128xf32>
    %123 = arith.negf %122 : vector<8x128xf32>
    %124 = math.exp %123 : vector<8x128xf32>
    %cst_67 = arith.constant 1.000000e+00 : f32
    %125 = vector.broadcast %cst_67 : f32 to vector<8x128xf32>
    %126 = arith.addf %125, %124 : vector<8x128xf32>
    %127 = arith.divf %125, %126 : vector<8x128xf32>
    %128 = vector.extract_strided_slice %121 {offsets = [0, 128], sizes = [8, 128], strides = [1, 1]} : vector<8x512xf32> to vector<8x128xf32>
    %129 = arith.negf %128 : vector<8x128xf32>
    %130 = math.exp %129 : vector<8x128xf32>
    %cst_68 = arith.constant 1.000000e+00 : f32
    %131 = vector.broadcast %cst_68 : f32 to vector<8x128xf32>
    %132 = arith.addf %131, %130 : vector<8x128xf32>
    %133 = arith.divf %131, %132 : vector<8x128xf32>
    %134 = vector.extract_strided_slice %121 {offsets = [0, 256], sizes = [8, 128], strides = [1, 1]} : vector<8x512xf32> to vector<8x128xf32>
    %135 = math.tanh %134 : vector<8x128xf32>
    %136 = vector.extract_strided_slice %121 {offsets = [0, 384], sizes = [8, 128], strides = [1, 1]} : vector<8x512xf32> to vector<8x128xf32>
    %137 = arith.negf %136 : vector<8x128xf32>
    %138 = math.exp %137 : vector<8x128xf32>
    %cst_69 = arith.constant 1.000000e+00 : f32
    %139 = vector.broadcast %cst_69 : f32 to vector<8x128xf32>
    %140 = arith.addf %139, %138 : vector<8x128xf32>
    %141 = arith.divf %139, %140 : vector<8x128xf32>
    %142 = arith.mulf %133, %116 : vector<8x128xf32>
    %143 = arith.mulf %127, %135 : vector<8x128xf32>
    %144 = arith.addf %142, %143 : vector<8x128xf32>
    %145 = math.tanh %144 : vector<8x128xf32>
    %146 = arith.mulf %141, %145 : vector<8x128xf32>
    %c0_70 = arith.constant 0 : index
    %c0_71 = arith.constant 0 : index
    %147 = vector.load %arg12[%c0_70, %c0_71] : memref<8x128xf32, #tpu.memory_space<vmem>>, vector<8x128xf32>
    tpu.vector_store %arg12[%c0_70, %c0_71], %146 {strides = array<i32>} : memref<8x128xf32, #tpu.memory_space<vmem>>, vector<8x128xf32>,
    %c0_72 = arith.constant 0 : index
    %c0_73 = arith.constant 0 : index
    %148 = vector.load %arg14[%c0_72, %c0_73] : memref<8x128xf32, #tpu.memory_space<vmem>>, vector<8x128xf32>
    tpu.vector_store %arg14[%c0_72, %c0_73], %144 {strides = array<i32>} : memref<8x128xf32, #tpu.memory_space<vmem>>, vector<8x128xf32>,
    %149 = arith.index_cast %c1_i32 : i32 to index
    %c0_74 = arith.constant 0 : index
    %c0_75 = arith.constant 0 : index
    %150 = vector.load %arg15[%149, %c0_74, %c0_75] : memref<8x8x128xf32, #tpu.memory_space<vmem>>, vector<1x8x128xf32>
    %151 = vector.shape_cast %150 : vector<1x8x128xf32> to vector<8x128xf32>
    %152 = vector.shape_cast %146 : vector<8x128xf32> to vector<1x8x128xf32>
    tpu.vector_store %arg15[%149, %c0_74, %c0_75], %152 {strides = array<i32>} : memref<8x8x128xf32, #tpu.memory_space<vmem>>, vector<1x8x128xf32>,
    %c2_i32 = arith.constant 2 : i32
    %153 = arith.index_cast %c2_i32 : i32 to index
    %c0_76 = arith.constant 0 : index
    %c0_77 = arith.constant 0 : index
    %154 = vector.load %arg1[%153, %c0_76, %c0_77] : memref<8x8x128xf32, #tpu.memory_space<vmem>>, vector<1x8x128xf32>
    %155 = vector.shape_cast %154 : vector<1x8x128xf32> to vector<8x128xf32>
    %c0_78 = arith.constant 0 : index
    %c0_79 = arith.constant 0 : index
    %156 = vector.load %arg11[%c0_78, %c0_79] : memref<8x128xf32, #tpu.memory_space<vmem>>, vector<8x128xf32>
    %c0_80 = arith.constant 0 : index
    %c0_81 = arith.constant 0 : index
    %157 = vector.load %arg13[%c0_80, %c0_81] : memref<8x128xf32, #tpu.memory_space<vmem>>, vector<8x128xf32>
    %c0_82 = arith.constant 0 : index
    %c0_83 = arith.constant 0 : index
    %158 = vector.load %arg2[%c0_82, %c0_83] : memref<128x512xf32, #tpu.memory_space<vmem>>, vector<128x512xf32>
    %cst_84 = arith.constant dense<0.000000e+00> : vector<8x512xf32>
    %159 = tpu.matmul %155, %158, %cst_84 {dimension_numbers = #tpu.dot_dimension_numbers<[1], [0], [0], [1], [0, 0, 1, 1], [], []>} : vector<8x128xf32>, vector<128x512xf32>, vector<8x512xf32> -> vector<8x512xf32>
    %c0_85 = arith.constant 0 : index
    %c0_86 = arith.constant 0 : index
    %160 = vector.load %arg3[%c0_85, %c0_86] : memref<128x512xf32, #tpu.memory_space<vmem>>, vector<128x512xf32>
    %cst_87 = arith.constant dense<0.000000e+00> : vector<8x512xf32>
    %161 = tpu.matmul %156, %160, %cst_87 {dimension_numbers = #tpu.dot_dimension_numbers<[1], [0], [0], [1], [0, 0, 1, 1], [], []>} : vector<8x128xf32>, vector<128x512xf32>, vector<8x512xf32> -> vector<8x512xf32>
    %162 = arith.addf %159, %161 : vector<8x512xf32>
    %163 = vector.extract_strided_slice %162 {offsets = [0, 0], sizes = [8, 128], strides = [1, 1]} : vector<8x512xf32> to vector<8x128xf32>
    %164 = arith.negf %163 : vector<8x128xf32>
    %165 = math.exp %164 : vector<8x128xf32>
    %cst_88 = arith.constant 1.000000e+00 : f32
    %166 = vector.broadcast %cst_88 : f32 to vector<8x128xf32>
    %167 = arith.addf %166, %165 : vector<8x128xf32>
    %168 = arith.divf %166, %167 : vector<8x128xf32>
    %169 = vector.extract_strided_slice %162 {offsets = [0, 128], sizes = [8, 128], strides = [1, 1]} : vector<8x512xf32> to vector<8x128xf32>
    %170 = arith.negf %169 : vector<8x128xf32>
    %171 = math.exp %170 : vector<8x128xf32>
    %cst_89 = arith.constant 1.000000e+00 : f32
    %172 = vector.broadcast %cst_89 : f32 to vector<8x128xf32>
    %173 = arith.addf %172, %171 : vector<8x128xf32>
    %174 = arith.divf %172, %173 : vector<8x128xf32>
    %175 = vector.extract_strided_slice %162 {offsets = [0, 256], sizes = [8, 128], strides = [1, 1]} : vector<8x512xf32> to vector<8x128xf32>
    %176 = math.tanh %175 : vector<8x128xf32>
    %177 = vector.extract_strided_slice %162 {offsets = [0, 384], sizes = [8, 128], strides = [1, 1]} : vector<8x512xf32> to vector<8x128xf32>
    %178 = arith.negf %177 : vector<8x128xf32>
    %179 = math.exp %178 : vector<8x128xf32>
    %cst_90 = arith.constant 1.000000e+00 : f32
    %180 = vector.broadcast %cst_90 : f32 to vector<8x128xf32>
    %181 = arith.addf %180, %179 : vector<8x128xf32>
    %182 = arith.divf %180, %181 : vector<8x128xf32>
    %183 = arith.mulf %174, %157 : vector<8x128xf32>
    %184 = arith.mulf %168, %176 : vector<8x128xf32>
    %185 = arith.addf %183, %184 : vector<8x128xf32>
    %186 = math.tanh %185 : vector<8x128xf32>
    %187 = arith.mulf %182, %186 : vector<8x128xf32>
    %c0_91 = arith.constant 0 : index
    %c0_92 = arith.constant 0 : index
    %188 = vector.load %arg11[%c0_91, %c0_92] : memref<8x128xf32, #tpu.memory_space<vmem>>, vector<8x128xf32>
    tpu.vector_store %arg11[%c0_91, %c0_92], %187 {strides = array<i32>} : memref<8x128xf32, #tpu.memory_space<vmem>>, vector<8x128xf32>,
    %c0_93 = arith.constant 0 : index
    %c0_94 = arith.constant 0 : index
    %189 = vector.load %arg13[%c0_93, %c0_94] : memref<8x128xf32, #tpu.memory_space<vmem>>, vector<8x128xf32>
    tpu.vector_store %arg13[%c0_93, %c0_94], %185 {strides = array<i32>} : memref<8x128xf32, #tpu.memory_space<vmem>>, vector<8x128xf32>,
    %c0_95 = arith.constant 0 : index
    %c0_96 = arith.constant 0 : index
    %190 = vector.load %arg12[%c0_95, %c0_96] : memref<8x128xf32, #tpu.memory_space<vmem>>, vector<8x128xf32>
    %c0_97 = arith.constant 0 : index
    %c0_98 = arith.constant 0 : index
    %191 = vector.load %arg14[%c0_97, %c0_98] : memref<8x128xf32, #tpu.memory_space<vmem>>, vector<8x128xf32>
    %c0_99 = arith.constant 0 : index
    %c0_100 = arith.constant 0 : index
    %192 = vector.load %arg4[%c0_99, %c0_100] : memref<128x512xf32, #tpu.memory_space<vmem>>, vector<128x512xf32>
    %cst_101 = arith.constant dense<0.000000e+00> : vector<8x512xf32>
    %193 = tpu.matmul %187, %192, %cst_101 {dimension_numbers = #tpu.dot_dimension_numbers<[1], [0], [0], [1], [0, 0, 1, 1], [], []>} : vector<8x128xf32>, vector<128x512xf32>, vector<8x512xf32> -> vector<8x512xf32>
    %c0_102 = arith.constant 0 : index
    %c0_103 = arith.constant 0 : index
    %194 = vector.load %arg5[%c0_102, %c0_103] : memref<128x512xf32, #tpu.memory_space<vmem>>, vector<128x512xf32>
    %cst_104 = arith.constant dense<0.000000e+00> : vector<8x512xf32>
    %195 = tpu.matmul %190, %194, %cst_104 {dimension_numbers = #tpu.dot_dimension_numbers<[1], [0], [0], [1], [0, 0, 1, 1], [], []>} : vector<8x128xf32>, vector<128x512xf32>, vector<8x512xf32> -> vector<8x512xf32>
    %196 = arith.addf %193, %195 : vector<8x512xf32>
    %197 = vector.extract_strided_slice %196 {offsets = [0, 0], sizes = [8, 128], strides = [1, 1]} : vector<8x512xf32> to vector<8x128xf32>
    %198 = arith.negf %197 : vector<8x128xf32>
    %199 = math.exp %198 : vector<8x128xf32>
    %cst_105 = arith.constant 1.000000e+00 : f32
    %200 = vector.broadcast %cst_105 : f32 to vector<8x128xf32>
    %201 = arith.addf %200, %199 : vector<8x128xf32>
    %202 = arith.divf %200, %201 : vector<8x128xf32>
    %203 = vector.extract_strided_slice %196 {offsets = [0, 128], sizes = [8, 128], strides = [1, 1]} : vector<8x512xf32> to vector<8x128xf32>
    %204 = arith.negf %203 : vector<8x128xf32>
    %205 = math.exp %204 : vector<8x128xf32>
    %cst_106 = arith.constant 1.000000e+00 : f32
    %206 = vector.broadcast %cst_106 : f32 to vector<8x128xf32>
    %207 = arith.addf %206, %205 : vector<8x128xf32>
    %208 = arith.divf %206, %207 : vector<8x128xf32>
    %209 = vector.extract_strided_slice %196 {offsets = [0, 256], sizes = [8, 128], strides = [1, 1]} : vector<8x512xf32> to vector<8x128xf32>
    %210 = math.tanh %209 : vector<8x128xf32>
    %211 = vector.extract_strided_slice %196 {offsets = [0, 384], sizes = [8, 128], strides = [1, 1]} : vector<8x512xf32> to vector<8x128xf32>
    %212 = arith.negf %211 : vector<8x128xf32>
    %213 = math.exp %212 : vector<8x128xf32>
    %cst_107 = arith.constant 1.000000e+00 : f32
    %214 = vector.broadcast %cst_107 : f32 to vector<8x128xf32>
    %215 = arith.addf %214, %213 : vector<8x128xf32>
    %216 = arith.divf %214, %215 : vector<8x128xf32>
    %217 = arith.mulf %208, %191 : vector<8x128xf32>
    %218 = arith.mulf %202, %210 : vector<8x128xf32>
    %219 = arith.addf %217, %218 : vector<8x128xf32>
    %220 = math.tanh %219 : vector<8x128xf32>
    %221 = arith.mulf %216, %220 : vector<8x128xf32>
    %c0_108 = arith.constant 0 : index
    %c0_109 = arith.constant 0 : index
    %222 = vector.load %arg12[%c0_108, %c0_109] : memref<8x128xf32, #tpu.memory_space<vmem>>, vector<8x128xf32>
    tpu.vector_store %arg12[%c0_108, %c0_109], %221 {strides = array<i32>} : memref<8x128xf32, #tpu.memory_space<vmem>>, vector<8x128xf32>,
    %c0_110 = arith.constant 0 : index
    %c0_111 = arith.constant 0 : index
    %223 = vector.load %arg14[%c0_110, %c0_111] : memref<8x128xf32, #tpu.memory_space<vmem>>, vector<8x128xf32>
    tpu.vector_store %arg14[%c0_110, %c0_111], %219 {strides = array<i32>} : memref<8x128xf32, #tpu.memory_space<vmem>>, vector<8x128xf32>,
    %224 = arith.index_cast %c2_i32 : i32 to index
    %c0_112 = arith.constant 0 : index
    %c0_113 = arith.constant 0 : index
    %225 = vector.load %arg15[%224, %c0_112, %c0_113] : memref<8x8x128xf32, #tpu.memory_space<vmem>>, vector<1x8x128xf32>
    %226 = vector.shape_cast %225 : vector<1x8x128xf32> to vector<8x128xf32>
    %227 = vector.shape_cast %221 : vector<8x128xf32> to vector<1x8x128xf32>
    tpu.vector_store %arg15[%224, %c0_112, %c0_113], %227 {strides = array<i32>} : memref<8x8x128xf32, #tpu.memory_space<vmem>>, vector<1x8x128xf32>,
    %c3_i32 = arith.constant 3 : i32
    %228 = arith.index_cast %c3_i32 : i32 to index
    %c0_114 = arith.constant 0 : index
    %c0_115 = arith.constant 0 : index
    %229 = vector.load %arg1[%228, %c0_114, %c0_115] : memref<8x8x128xf32, #tpu.memory_space<vmem>>, vector<1x8x128xf32>
    %230 = vector.shape_cast %229 : vector<1x8x128xf32> to vector<8x128xf32>
    %c0_116 = arith.constant 0 : index
    %c0_117 = arith.constant 0 : index
    %231 = vector.load %arg11[%c0_116, %c0_117] : memref<8x128xf32, #tpu.memory_space<vmem>>, vector<8x128xf32>
    %c0_118 = arith.constant 0 : index
    %c0_119 = arith.constant 0 : index
    %232 = vector.load %arg13[%c0_118, %c0_119] : memref<8x128xf32, #tpu.memory_space<vmem>>, vector<8x128xf32>
    %c0_120 = arith.constant 0 : index
    %c0_121 = arith.constant 0 : index
    %233 = vector.load %arg2[%c0_120, %c0_121] : memref<128x512xf32, #tpu.memory_space<vmem>>, vector<128x512xf32>
    %cst_122 = arith.constant dense<0.000000e+00> : vector<8x512xf32>
    %234 = tpu.matmul %230, %233, %cst_122 {dimension_numbers = #tpu.dot_dimension_numbers<[1], [0], [0], [1], [0, 0, 1, 1], [], []>} : vector<8x128xf32>, vector<128x512xf32>, vector<8x512xf32> -> vector<8x512xf32>
    %c0_123 = arith.constant 0 : index
    %c0_124 = arith.constant 0 : index
    %235 = vector.load %arg3[%c0_123, %c0_124] : memref<128x512xf32, #tpu.memory_space<vmem>>, vector<128x512xf32>
    %cst_125 = arith.constant dense<0.000000e+00> : vector<8x512xf32>
    %236 = tpu.matmul %231, %235, %cst_125 {dimension_numbers = #tpu.dot_dimension_numbers<[1], [0], [0], [1], [0, 0, 1, 1], [], []>} : vector<8x128xf32>, vector<128x512xf32>, vector<8x512xf32> -> vector<8x512xf32>
    %237 = arith.addf %234, %236 : vector<8x512xf32>
    %238 = vector.extract_strided_slice %237 {offsets = [0, 0], sizes = [8, 128], strides = [1, 1]} : vector<8x512xf32> to vector<8x128xf32>
    %239 = arith.negf %238 : vector<8x128xf32>
    %240 = math.exp %239 : vector<8x128xf32>
    %cst_126 = arith.constant 1.000000e+00 : f32
    %241 = vector.broadcast %cst_126 : f32 to vector<8x128xf32>
    %242 = arith.addf %241, %240 : vector<8x128xf32>
    %243 = arith.divf %241, %242 : vector<8x128xf32>
    %244 = vector.extract_strided_slice %237 {offsets = [0, 128], sizes = [8, 128], strides = [1, 1]} : vector<8x512xf32> to vector<8x128xf32>
    %245 = arith.negf %244 : vector<8x128xf32>
    %246 = math.exp %245 : vector<8x128xf32>
    %cst_127 = arith.constant 1.000000e+00 : f32
    %247 = vector.broadcast %cst_127 : f32 to vector<8x128xf32>
    %248 = arith.addf %247, %246 : vector<8x128xf32>
    %249 = arith.divf %247, %248 : vector<8x128xf32>
    %250 = vector.extract_strided_slice %237 {offsets = [0, 256], sizes = [8, 128], strides = [1, 1]} : vector<8x512xf32> to vector<8x128xf32>
    %251 = math.tanh %250 : vector<8x128xf32>
    %252 = vector.extract_strided_slice %237 {offsets = [0, 384], sizes = [8, 128], strides = [1, 1]} : vector<8x512xf32> to vector<8x128xf32>
    %253 = arith.negf %252 : vector<8x128xf32>
    %254 = math.exp %253 : vector<8x128xf32>
    %cst_128 = arith.constant 1.000000e+00 : f32
    %255 = vector.broadcast %cst_128 : f32 to vector<8x128xf32>
    %256 = arith.addf %255, %254 : vector<8x128xf32>
    %257 = arith.divf %255, %256 : vector<8x128xf32>
    %258 = arith.mulf %249, %232 : vector<8x128xf32>
    %259 = arith.mulf %243, %251 : vector<8x128xf32>
    %260 = arith.addf %258, %259 : vector<8x128xf32>
    %261 = math.tanh %260 : vector<8x128xf32>
    %262 = arith.mulf %257, %261 : vector<8x128xf32>
    %c0_129 = arith.constant 0 : index
    %c0_130 = arith.constant 0 : index
    %263 = vector.load %arg11[%c0_129, %c0_130] : memref<8x128xf32, #tpu.memory_space<vmem>>, vector<8x128xf32>
    tpu.vector_store %arg11[%c0_129, %c0_130], %262 {strides = array<i32>} : memref<8x128xf32, #tpu.memory_space<vmem>>, vector<8x128xf32>,
    %c0_131 = arith.constant 0 : index
    %c0_132 = arith.constant 0 : index
    %264 = vector.load %arg13[%c0_131, %c0_132] : memref<8x128xf32, #tpu.memory_space<vmem>>, vector<8x128xf32>
    tpu.vector_store %arg13[%c0_131, %c0_132], %260 {strides = array<i32>} : memref<8x128xf32, #tpu.memory_space<vmem>>, vector<8x128xf32>,
    %c0_133 = arith.constant 0 : index
    %c0_134 = arith.constant 0 : index
    %265 = vector.load %arg12[%c0_133, %c0_134] : memref<8x128xf32, #tpu.memory_space<vmem>>, vector<8x128xf32>
    %c0_135 = arith.constant 0 : index
    %c0_136 = arith.constant 0 : index
    %266 = vector.load %arg14[%c0_135, %c0_136] : memref<8x128xf32, #tpu.memory_space<vmem>>, vector<8x128xf32>
    %c0_137 = arith.constant 0 : index
    %c0_138 = arith.constant 0 : index
    %267 = vector.load %arg4[%c0_137, %c0_138] : memref<128x512xf32, #tpu.memory_space<vmem>>, vector<128x512xf32>
    %cst_139 = arith.constant dense<0.000000e+00> : vector<8x512xf32>
    %268 = tpu.matmul %262, %267, %cst_139 {dimension_numbers = #tpu.dot_dimension_numbers<[1], [0], [0], [1], [0, 0, 1, 1], [], []>} : vector<8x128xf32>, vector<128x512xf32>, vector<8x512xf32> -> vector<8x512xf32>
    %c0_140 = arith.constant 0 : index
    %c0_141 = arith.constant 0 : index
    %269 = vector.load %arg5[%c0_140, %c0_141] : memref<128x512xf32, #tpu.memory_space<vmem>>, vector<128x512xf32>
    %cst_142 = arith.constant dense<0.000000e+00> : vector<8x512xf32>
    %270 = tpu.matmul %265, %269, %cst_142 {dimension_numbers = #tpu.dot_dimension_numbers<[1], [0], [0], [1], [0, 0, 1, 1], [], []>} : vector<8x128xf32>, vector<128x512xf32>, vector<8x512xf32> -> vector<8x512xf32>
    %271 = arith.addf %268, %270 : vector<8x512xf32>
    %272 = vector.extract_strided_slice %271 {offsets = [0, 0], sizes = [8, 128], strides = [1, 1]} : vector<8x512xf32> to vector<8x128xf32>
    %273 = arith.negf %272 : vector<8x128xf32>
    %274 = math.exp %273 : vector<8x128xf32>
    %cst_143 = arith.constant 1.000000e+00 : f32
    %275 = vector.broadcast %cst_143 : f32 to vector<8x128xf32>
    %276 = arith.addf %275, %274 : vector<8x128xf32>
    %277 = arith.divf %275, %276 : vector<8x128xf32>
    %278 = vector.extract_strided_slice %271 {offsets = [0, 128], sizes = [8, 128], strides = [1, 1]} : vector<8x512xf32> to vector<8x128xf32>
    %279 = arith.negf %278 : vector<8x128xf32>
    %280 = math.exp %279 : vector<8x128xf32>
    %cst_144 = arith.constant 1.000000e+00 : f32
    %281 = vector.broadcast %cst_144 : f32 to vector<8x128xf32>
    %282 = arith.addf %281, %280 : vector<8x128xf32>
    %283 = arith.divf %281, %282 : vector<8x128xf32>
    %284 = vector.extract_strided_slice %271 {offsets = [0, 256], sizes = [8, 128], strides = [1, 1]} : vector<8x512xf32> to vector<8x128xf32>
    %285 = math.tanh %284 : vector<8x128xf32>
    %286 = vector.extract_strided_slice %271 {offsets = [0, 384], sizes = [8, 128], strides = [1, 1]} : vector<8x512xf32> to vector<8x128xf32>
    %287 = arith.negf %286 : vector<8x128xf32>
    %288 = math.exp %287 : vector<8x128xf32>
    %cst_145 = arith.constant 1.000000e+00 : f32
    %289 = vector.broadcast %cst_145 : f32 to vector<8x128xf32>
    %290 = arith.addf %289, %288 : vector<8x128xf32>
    %291 = arith.divf %289, %290 : vector<8x128xf32>
    %292 = arith.mulf %283, %266 : vector<8x128xf32>
    %293 = arith.mulf %277, %285 : vector<8x128xf32>
    %294 = arith.addf %292, %293 : vector<8x128xf32>
    %295 = math.tanh %294 : vector<8x128xf32>
    %296 = arith.mulf %291, %295 : vector<8x128xf32>
    %c0_146 = arith.constant 0 : index
    %c0_147 = arith.constant 0 : index
    %297 = vector.load %arg12[%c0_146, %c0_147] : memref<8x128xf32, #tpu.memory_space<vmem>>, vector<8x128xf32>
    tpu.vector_store %arg12[%c0_146, %c0_147], %296 {strides = array<i32>} : memref<8x128xf32, #tpu.memory_space<vmem>>, vector<8x128xf32>,
    %c0_148 = arith.constant 0 : index
    %c0_149 = arith.constant 0 : index
    %298 = vector.load %arg14[%c0_148, %c0_149] : memref<8x128xf32, #tpu.memory_space<vmem>>, vector<8x128xf32>
    tpu.vector_store %arg14[%c0_148, %c0_149], %294 {strides = array<i32>} : memref<8x128xf32, #tpu.memory_space<vmem>>, vector<8x128xf32>,
    %299 = arith.index_cast %c3_i32 : i32 to index
    %c0_150 = arith.constant 0 : index
    %c0_151 = arith.constant 0 : index
    %300 = vector.load %arg15[%299, %c0_150, %c0_151] : memref<8x8x128xf32, #tpu.memory_space<vmem>>, vector<1x8x128xf32>
    %301 = vector.shape_cast %300 : vector<1x8x128xf32> to vector<8x128xf32>
    %302 = vector.shape_cast %296 : vector<8x128xf32> to vector<1x8x128xf32>
    tpu.vector_store %arg15[%299, %c0_150, %c0_151], %302 {strides = array<i32>} : memref<8x8x128xf32, #tpu.memory_space<vmem>>, vector<1x8x128xf32>,
    %c4_i32 = arith.constant 4 : i32
    %303 = arith.index_cast %c4_i32 : i32 to index
    %c0_152 = arith.constant 0 : index
    %c0_153 = arith.constant 0 : index
    %304 = vector.load %arg1[%303, %c0_152, %c0_153] : memref<8x8x128xf32, #tpu.memory_space<vmem>>, vector<1x8x128xf32>
    %305 = vector.shape_cast %304 : vector<1x8x128xf32> to vector<8x128xf32>
    %c0_154 = arith.constant 0 : index
    %c0_155 = arith.constant 0 : index
    %306 = vector.load %arg11[%c0_154, %c0_155] : memref<8x128xf32, #tpu.memory_space<vmem>>, vector<8x128xf32>
    %c0_156 = arith.constant 0 : index
    %c0_157 = arith.constant 0 : index
    %307 = vector.load %arg13[%c0_156, %c0_157] : memref<8x128xf32, #tpu.memory_space<vmem>>, vector<8x128xf32>
    %c0_158 = arith.constant 0 : index
    %c0_159 = arith.constant 0 : index
    %308 = vector.load %arg2[%c0_158, %c0_159] : memref<128x512xf32, #tpu.memory_space<vmem>>, vector<128x512xf32>
    %cst_160 = arith.constant dense<0.000000e+00> : vector<8x512xf32>
    %309 = tpu.matmul %305, %308, %cst_160 {dimension_numbers = #tpu.dot_dimension_numbers<[1], [0], [0], [1], [0, 0, 1, 1], [], []>} : vector<8x128xf32>, vector<128x512xf32>, vector<8x512xf32> -> vector<8x512xf32>
    %c0_161 = arith.constant 0 : index
    %c0_162 = arith.constant 0 : index
    %310 = vector.load %arg3[%c0_161, %c0_162] : memref<128x512xf32, #tpu.memory_space<vmem>>, vector<128x512xf32>
    %cst_163 = arith.constant dense<0.000000e+00> : vector<8x512xf32>
    %311 = tpu.matmul %306, %310, %cst_163 {dimension_numbers = #tpu.dot_dimension_numbers<[1], [0], [0], [1], [0, 0, 1, 1], [], []>} : vector<8x128xf32>, vector<128x512xf32>, vector<8x512xf32> -> vector<8x512xf32>
    %312 = arith.addf %309, %311 : vector<8x512xf32>
    %313 = vector.extract_strided_slice %312 {offsets = [0, 0], sizes = [8, 128], strides = [1, 1]} : vector<8x512xf32> to vector<8x128xf32>
    %314 = arith.negf %313 : vector<8x128xf32>
    %315 = math.exp %314 : vector<8x128xf32>
    %cst_164 = arith.constant 1.000000e+00 : f32
    %316 = vector.broadcast %cst_164 : f32 to vector<8x128xf32>
    %317 = arith.addf %316, %315 : vector<8x128xf32>
    %318 = arith.divf %316, %317 : vector<8x128xf32>
    %319 = vector.extract_strided_slice %312 {offsets = [0, 128], sizes = [8, 128], strides = [1, 1]} : vector<8x512xf32> to vector<8x128xf32>
    %320 = arith.negf %319 : vector<8x128xf32>
    %321 = math.exp %320 : vector<8x128xf32>
    %cst_165 = arith.constant 1.000000e+00 : f32
    %322 = vector.broadcast %cst_165 : f32 to vector<8x128xf32>
    %323 = arith.addf %322, %321 : vector<8x128xf32>
    %324 = arith.divf %322, %323 : vector<8x128xf32>
    %325 = vector.extract_strided_slice %312 {offsets = [0, 256], sizes = [8, 128], strides = [1, 1]} : vector<8x512xf32> to vector<8x128xf32>
    %326 = math.tanh %325 : vector<8x128xf32>
    %327 = vector.extract_strided_slice %312 {offsets = [0, 384], sizes = [8, 128], strides = [1, 1]} : vector<8x512xf32> to vector<8x128xf32>
    %328 = arith.negf %327 : vector<8x128xf32>
    %329 = math.exp %328 : vector<8x128xf32>
    %cst_166 = arith.constant 1.000000e+00 : f32
    %330 = vector.broadcast %cst_166 : f32 to vector<8x128xf32>
    %331 = arith.addf %330, %329 : vector<8x128xf32>
    %332 = arith.divf %330, %331 : vector<8x128xf32>
    %333 = arith.mulf %324, %307 : vector<8x128xf32>
    %334 = arith.mulf %318, %326 : vector<8x128xf32>
    %335 = arith.addf %333, %334 : vector<8x128xf32>
    %336 = math.tanh %335 : vector<8x128xf32>
    %337 = arith.mulf %332, %336 : vector<8x128xf32>
    %c0_167 = arith.constant 0 : index
    %c0_168 = arith.constant 0 : index
    %338 = vector.load %arg11[%c0_167, %c0_168] : memref<8x128xf32, #tpu.memory_space<vmem>>, vector<8x128xf32>
    tpu.vector_store %arg11[%c0_167, %c0_168], %337 {strides = array<i32>} : memref<8x128xf32, #tpu.memory_space<vmem>>, vector<8x128xf32>,
    %c0_169 = arith.constant 0 : index
    %c0_170 = arith.constant 0 : index
    %339 = vector.load %arg13[%c0_169, %c0_170] : memref<8x128xf32, #tpu.memory_space<vmem>>, vector<8x128xf32>
    tpu.vector_store %arg13[%c0_169, %c0_170], %335 {strides = array<i32>} : memref<8x128xf32, #tpu.memory_space<vmem>>, vector<8x128xf32>,
    %c0_171 = arith.constant 0 : index
    %c0_172 = arith.constant 0 : index
    %340 = vector.load %arg12[%c0_171, %c0_172] : memref<8x128xf32, #tpu.memory_space<vmem>>, vector<8x128xf32>
    %c0_173 = arith.constant 0 : index
    %c0_174 = arith.constant 0 : index
    %341 = vector.load %arg14[%c0_173, %c0_174] : memref<8x128xf32, #tpu.memory_space<vmem>>, vector<8x128xf32>
    %c0_175 = arith.constant 0 : index
    %c0_176 = arith.constant 0 : index
    %342 = vector.load %arg4[%c0_175, %c0_176] : memref<128x512xf32, #tpu.memory_space<vmem>>, vector<128x512xf32>
    %cst_177 = arith.constant dense<0.000000e+00> : vector<8x512xf32>
    %343 = tpu.matmul %337, %342, %cst_177 {dimension_numbers = #tpu.dot_dimension_numbers<[1], [0], [0], [1], [0, 0, 1, 1], [], []>} : vector<8x128xf32>, vector<128x512xf32>, vector<8x512xf32> -> vector<8x512xf32>
    %c0_178 = arith.constant 0 : index
    %c0_179 = arith.constant 0 : index
    %344 = vector.load %arg5[%c0_178, %c0_179] : memref<128x512xf32, #tpu.memory_space<vmem>>, vector<128x512xf32>
    %cst_180 = arith.constant dense<0.000000e+00> : vector<8x512xf32>
    %345 = tpu.matmul %340, %344, %cst_180 {dimension_numbers = #tpu.dot_dimension_numbers<[1], [0], [0], [1], [0, 0, 1, 1], [], []>} : vector<8x128xf32>, vector<128x512xf32>, vector<8x512xf32> -> vector<8x512xf32>
    %346 = arith.addf %343, %345 : vector<8x512xf32>
    %347 = vector.extract_strided_slice %346 {offsets = [0, 0], sizes = [8, 128], strides = [1, 1]} : vector<8x512xf32> to vector<8x128xf32>
    %348 = arith.negf %347 : vector<8x128xf32>
    %349 = math.exp %348 : vector<8x128xf32>
    %cst_181 = arith.constant 1.000000e+00 : f32
    %350 = vector.broadcast %cst_181 : f32 to vector<8x128xf32>
    %351 = arith.addf %350, %349 : vector<8x128xf32>
    %352 = arith.divf %350, %351 : vector<8x128xf32>
    %353 = vector.extract_strided_slice %346 {offsets = [0, 128], sizes = [8, 128], strides = [1, 1]} : vector<8x512xf32> to vector<8x128xf32>
    %354 = arith.negf %353 : vector<8x128xf32>
    %355 = math.exp %354 : vector<8x128xf32>
    %cst_182 = arith.constant 1.000000e+00 : f32
    %356 = vector.broadcast %cst_182 : f32 to vector<8x128xf32>
    %357 = arith.addf %356, %355 : vector<8x128xf32>
    %358 = arith.divf %356, %357 : vector<8x128xf32>
    %359 = vector.extract_strided_slice %346 {offsets = [0, 256], sizes = [8, 128], strides = [1, 1]} : vector<8x512xf32> to vector<8x128xf32>
    %360 = math.tanh %359 : vector<8x128xf32>
    %361 = vector.extract_strided_slice %346 {offsets = [0, 384], sizes = [8, 128], strides = [1, 1]} : vector<8x512xf32> to vector<8x128xf32>
    %362 = arith.negf %361 : vector<8x128xf32>
    %363 = math.exp %362 : vector<8x128xf32>
    %cst_183 = arith.constant 1.000000e+00 : f32
    %364 = vector.broadcast %cst_183 : f32 to vector<8x128xf32>
    %365 = arith.addf %364, %363 : vector<8x128xf32>
    %366 = arith.divf %364, %365 : vector<8x128xf32>
    %367 = arith.mulf %358, %341 : vector<8x128xf32>
    %368 = arith.mulf %352, %360 : vector<8x128xf32>
    %369 = arith.addf %367, %368 : vector<8x128xf32>
    %370 = math.tanh %369 : vector<8x128xf32>
    %371 = arith.mulf %366, %370 : vector<8x128xf32>
    %c0_184 = arith.constant 0 : index
    %c0_185 = arith.constant 0 : index
    %372 = vector.load %arg12[%c0_184, %c0_185] : memref<8x128xf32, #tpu.memory_space<vmem>>, vector<8x128xf32>
    tpu.vector_store %arg12[%c0_184, %c0_185], %371 {strides = array<i32>} : memref<8x128xf32, #tpu.memory_space<vmem>>, vector<8x128xf32>,
    %c0_186 = arith.constant 0 : index
    %c0_187 = arith.constant 0 : index
    %373 = vector.load %arg14[%c0_186, %c0_187] : memref<8x128xf32, #tpu.memory_space<vmem>>, vector<8x128xf32>
    tpu.vector_store %arg14[%c0_186, %c0_187], %369 {strides = array<i32>} : memref<8x128xf32, #tpu.memory_space<vmem>>, vector<8x128xf32>,
    %374 = arith.index_cast %c4_i32 : i32 to index
    %c0_188 = arith.constant 0 : index
    %c0_189 = arith.constant 0 : index
    %375 = vector.load %arg15[%374, %c0_188, %c0_189] : memref<8x8x128xf32, #tpu.memory_space<vmem>>, vector<1x8x128xf32>
    %376 = vector.shape_cast %375 : vector<1x8x128xf32> to vector<8x128xf32>
    %377 = vector.shape_cast %371 : vector<8x128xf32> to vector<1x8x128xf32>
    tpu.vector_store %arg15[%374, %c0_188, %c0_189], %377 {strides = array<i32>} : memref<8x8x128xf32, #tpu.memory_space<vmem>>, vector<1x8x128xf32>,
    %c5_i32 = arith.constant 5 : i32
    %378 = arith.index_cast %c5_i32 : i32 to index
    %c0_190 = arith.constant 0 : index
    %c0_191 = arith.constant 0 : index
    %379 = vector.load %arg1[%378, %c0_190, %c0_191] : memref<8x8x128xf32, #tpu.memory_space<vmem>>, vector<1x8x128xf32>
    %380 = vector.shape_cast %379 : vector<1x8x128xf32> to vector<8x128xf32>
    %c0_192 = arith.constant 0 : index
    %c0_193 = arith.constant 0 : index
    %381 = vector.load %arg11[%c0_192, %c0_193] : memref<8x128xf32, #tpu.memory_space<vmem>>, vector<8x128xf32>
    %c0_194 = arith.constant 0 : index
    %c0_195 = arith.constant 0 : index
    %382 = vector.load %arg13[%c0_194, %c0_195] : memref<8x128xf32, #tpu.memory_space<vmem>>, vector<8x128xf32>
    %c0_196 = arith.constant 0 : index
    %c0_197 = arith.constant 0 : index
    %383 = vector.load %arg2[%c0_196, %c0_197] : memref<128x512xf32, #tpu.memory_space<vmem>>, vector<128x512xf32>
    %cst_198 = arith.constant dense<0.000000e+00> : vector<8x512xf32>
    %384 = tpu.matmul %380, %383, %cst_198 {dimension_numbers = #tpu.dot_dimension_numbers<[1], [0], [0], [1], [0, 0, 1, 1], [], []>} : vector<8x128xf32>, vector<128x512xf32>, vector<8x512xf32> -> vector<8x512xf32>
    %c0_199 = arith.constant 0 : index
    %c0_200 = arith.constant 0 : index
    %385 = vector.load %arg3[%c0_199, %c0_200] : memref<128x512xf32, #tpu.memory_space<vmem>>, vector<128x512xf32>
    %cst_201 = arith.constant dense<0.000000e+00> : vector<8x512xf32>
    %386 = tpu.matmul %381, %385, %cst_201 {dimension_numbers = #tpu.dot_dimension_numbers<[1], [0], [0], [1], [0, 0, 1, 1], [], []>} : vector<8x128xf32>, vector<128x512xf32>, vector<8x512xf32> -> vector<8x512xf32>
    %387 = arith.addf %384, %386 : vector<8x512xf32>
    %388 = vector.extract_strided_slice %387 {offsets = [0, 0], sizes = [8, 128], strides = [1, 1]} : vector<8x512xf32> to vector<8x128xf32>
    %389 = arith.negf %388 : vector<8x128xf32>
    %390 = math.exp %389 : vector<8x128xf32>
    %cst_202 = arith.constant 1.000000e+00 : f32
    %391 = vector.broadcast %cst_202 : f32 to vector<8x128xf32>
    %392 = arith.addf %391, %390 : vector<8x128xf32>
    %393 = arith.divf %391, %392 : vector<8x128xf32>
    %394 = vector.extract_strided_slice %387 {offsets = [0, 128], sizes = [8, 128], strides = [1, 1]} : vector<8x512xf32> to vector<8x128xf32>
    %395 = arith.negf %394 : vector<8x128xf32>
    %396 = math.exp %395 : vector<8x128xf32>
    %cst_203 = arith.constant 1.000000e+00 : f32
    %397 = vector.broadcast %cst_203 : f32 to vector<8x128xf32>
    %398 = arith.addf %397, %396 : vector<8x128xf32>
    %399 = arith.divf %397, %398 : vector<8x128xf32>
    %400 = vector.extract_strided_slice %387 {offsets = [0, 256], sizes = [8, 128], strides = [1, 1]} : vector<8x512xf32> to vector<8x128xf32>
    %401 = math.tanh %400 : vector<8x128xf32>
    %402 = vector.extract_strided_slice %387 {offsets = [0, 384], sizes = [8, 128], strides = [1, 1]} : vector<8x512xf32> to vector<8x128xf32>
    %403 = arith.negf %402 : vector<8x128xf32>
    %404 = math.exp %403 : vector<8x128xf32>
    %cst_204 = arith.constant 1.000000e+00 : f32
    %405 = vector.broadcast %cst_204 : f32 to vector<8x128xf32>
    %406 = arith.addf %405, %404 : vector<8x128xf32>
    %407 = arith.divf %405, %406 : vector<8x128xf32>
    %408 = arith.mulf %399, %382 : vector<8x128xf32>
    %409 = arith.mulf %393, %401 : vector<8x128xf32>
    %410 = arith.addf %408, %409 : vector<8x128xf32>
    %411 = math.tanh %410 : vector<8x128xf32>
    %412 = arith.mulf %407, %411 : vector<8x128xf32>
    %c0_205 = arith.constant 0 : index
    %c0_206 = arith.constant 0 : index
    %413 = vector.load %arg11[%c0_205, %c0_206] : memref<8x128xf32, #tpu.memory_space<vmem>>, vector<8x128xf32>
    tpu.vector_store %arg11[%c0_205, %c0_206], %412 {strides = array<i32>} : memref<8x128xf32, #tpu.memory_space<vmem>>, vector<8x128xf32>,
    %c0_207 = arith.constant 0 : index
    %c0_208 = arith.constant 0 : index
    %414 = vector.load %arg13[%c0_207, %c0_208] : memref<8x128xf32, #tpu.memory_space<vmem>>, vector<8x128xf32>
    tpu.vector_store %arg13[%c0_207, %c0_208], %410 {strides = array<i32>} : memref<8x128xf32, #tpu.memory_space<vmem>>, vector<8x128xf32>,
    %c0_209 = arith.constant 0 : index
    %c0_210 = arith.constant 0 : index
    %415 = vector.load %arg12[%c0_209, %c0_210] : memref<8x128xf32, #tpu.memory_space<vmem>>, vector<8x128xf32>
    %c0_211 = arith.constant 0 : index
    %c0_212 = arith.constant 0 : index
    %416 = vector.load %arg14[%c0_211, %c0_212] : memref<8x128xf32, #tpu.memory_space<vmem>>, vector<8x128xf32>
    %c0_213 = arith.constant 0 : index
    %c0_214 = arith.constant 0 : index
    %417 = vector.load %arg4[%c0_213, %c0_214] : memref<128x512xf32, #tpu.memory_space<vmem>>, vector<128x512xf32>
    %cst_215 = arith.constant dense<0.000000e+00> : vector<8x512xf32>
    %418 = tpu.matmul %412, %417, %cst_215 {dimension_numbers = #tpu.dot_dimension_numbers<[1], [0], [0], [1], [0, 0, 1, 1], [], []>} : vector<8x128xf32>, vector<128x512xf32>, vector<8x512xf32> -> vector<8x512xf32>
    %c0_216 = arith.constant 0 : index
    %c0_217 = arith.constant 0 : index
    %419 = vector.load %arg5[%c0_216, %c0_217] : memref<128x512xf32, #tpu.memory_space<vmem>>, vector<128x512xf32>
    %cst_218 = arith.constant dense<0.000000e+00> : vector<8x512xf32>
    %420 = tpu.matmul %415, %419, %cst_218 {dimension_numbers = #tpu.dot_dimension_numbers<[1], [0], [0], [1], [0, 0, 1, 1], [], []>} : vector<8x128xf32>, vector<128x512xf32>, vector<8x512xf32> -> vector<8x512xf32>
    %421 = arith.addf %418, %420 : vector<8x512xf32>
    %422 = vector.extract_strided_slice %421 {offsets = [0, 0], sizes = [8, 128], strides = [1, 1]} : vector<8x512xf32> to vector<8x128xf32>
    %423 = arith.negf %422 : vector<8x128xf32>
    %424 = math.exp %423 : vector<8x128xf32>
    %cst_219 = arith.constant 1.000000e+00 : f32
    %425 = vector.broadcast %cst_219 : f32 to vector<8x128xf32>
    %426 = arith.addf %425, %424 : vector<8x128xf32>
    %427 = arith.divf %425, %426 : vector<8x128xf32>
    %428 = vector.extract_strided_slice %421 {offsets = [0, 128], sizes = [8, 128], strides = [1, 1]} : vector<8x512xf32> to vector<8x128xf32>
    %429 = arith.negf %428 : vector<8x128xf32>
    %430 = math.exp %429 : vector<8x128xf32>
    %cst_220 = arith.constant 1.000000e+00 : f32
    %431 = vector.broadcast %cst_220 : f32 to vector<8x128xf32>
    %432 = arith.addf %431, %430 : vector<8x128xf32>
    %433 = arith.divf %431, %432 : vector<8x128xf32>
    %434 = vector.extract_strided_slice %421 {offsets = [0, 256], sizes = [8, 128], strides = [1, 1]} : vector<8x512xf32> to vector<8x128xf32>
    %435 = math.tanh %434 : vector<8x128xf32>
    %436 = vector.extract_strided_slice %421 {offsets = [0, 384], sizes = [8, 128], strides = [1, 1]} : vector<8x512xf32> to vector<8x128xf32>
    %437 = arith.negf %436 : vector<8x128xf32>
    %438 = math.exp %437 : vector<8x128xf32>
    %cst_221 = arith.constant 1.000000e+00 : f32
    %439 = vector.broadcast %cst_221 : f32 to vector<8x128xf32>
    %440 = arith.addf %439, %438 : vector<8x128xf32>
    %441 = arith.divf %439, %440 : vector<8x128xf32>
    %442 = arith.mulf %433, %416 : vector<8x128xf32>
    %443 = arith.mulf %427, %435 : vector<8x128xf32>
    %444 = arith.addf %442, %443 : vector<8x128xf32>
    %445 = math.tanh %444 : vector<8x128xf32>
    %446 = arith.mulf %441, %445 : vector<8x128xf32>
    %c0_222 = arith.constant 0 : index
    %c0_223 = arith.constant 0 : index
    %447 = vector.load %arg12[%c0_222, %c0_223] : memref<8x128xf32, #tpu.memory_space<vmem>>, vector<8x128xf32>
    tpu.vector_store %arg12[%c0_222, %c0_223], %446 {strides = array<i32>} : memref<8x128xf32, #tpu.memory_space<vmem>>, vector<8x128xf32>,
    %c0_224 = arith.constant 0 : index
    %c0_225 = arith.constant 0 : index
    %448 = vector.load %arg14[%c0_224, %c0_225] : memref<8x128xf32, #tpu.memory_space<vmem>>, vector<8x128xf32>
    tpu.vector_store %arg14[%c0_224, %c0_225], %444 {strides = array<i32>} : memref<8x128xf32, #tpu.memory_space<vmem>>, vector<8x128xf32>,
    %449 = arith.index_cast %c5_i32 : i32 to index
    %c0_226 = arith.constant 0 : index
    %c0_227 = arith.constant 0 : index
    %450 = vector.load %arg15[%449, %c0_226, %c0_227] : memref<8x8x128xf32, #tpu.memory_space<vmem>>, vector<1x8x128xf32>
    %451 = vector.shape_cast %450 : vector<1x8x128xf32> to vector<8x128xf32>
    %452 = vector.shape_cast %446 : vector<8x128xf32> to vector<1x8x128xf32>
    tpu.vector_store %arg15[%449, %c0_226, %c0_227], %452 {strides = array<i32>} : memref<8x8x128xf32, #tpu.memory_space<vmem>>, vector<1x8x128xf32>,
    %c6_i32 = arith.constant 6 : i32
    %453 = arith.index_cast %c6_i32 : i32 to index
    %c0_228 = arith.constant 0 : index
    %c0_229 = arith.constant 0 : index
    %454 = vector.load %arg1[%453, %c0_228, %c0_229] : memref<8x8x128xf32, #tpu.memory_space<vmem>>, vector<1x8x128xf32>
    %455 = vector.shape_cast %454 : vector<1x8x128xf32> to vector<8x128xf32>
    %c0_230 = arith.constant 0 : index
    %c0_231 = arith.constant 0 : index
    %456 = vector.load %arg11[%c0_230, %c0_231] : memref<8x128xf32, #tpu.memory_space<vmem>>, vector<8x128xf32>
    %c0_232 = arith.constant 0 : index
    %c0_233 = arith.constant 0 : index
    %457 = vector.load %arg13[%c0_232, %c0_233] : memref<8x128xf32, #tpu.memory_space<vmem>>, vector<8x128xf32>
    %c0_234 = arith.constant 0 : index
    %c0_235 = arith.constant 0 : index
    %458 = vector.load %arg2[%c0_234, %c0_235] : memref<128x512xf32, #tpu.memory_space<vmem>>, vector<128x512xf32>
    %cst_236 = arith.constant dense<0.000000e+00> : vector<8x512xf32>
    %459 = tpu.matmul %455, %458, %cst_236 {dimension_numbers = #tpu.dot_dimension_numbers<[1], [0], [0], [1], [0, 0, 1, 1], [], []>} : vector<8x128xf32>, vector<128x512xf32>, vector<8x512xf32> -> vector<8x512xf32>
    %c0_237 = arith.constant 0 : index
    %c0_238 = arith.constant 0 : index
    %460 = vector.load %arg3[%c0_237, %c0_238] : memref<128x512xf32, #tpu.memory_space<vmem>>, vector<128x512xf32>
    %cst_239 = arith.constant dense<0.000000e+00> : vector<8x512xf32>
    %461 = tpu.matmul %456, %460, %cst_239 {dimension_numbers = #tpu.dot_dimension_numbers<[1], [0], [0], [1], [0, 0, 1, 1], [], []>} : vector<8x128xf32>, vector<128x512xf32>, vector<8x512xf32> -> vector<8x512xf32>
    %462 = arith.addf %459, %461 : vector<8x512xf32>
    %463 = vector.extract_strided_slice %462 {offsets = [0, 0], sizes = [8, 128], strides = [1, 1]} : vector<8x512xf32> to vector<8x128xf32>
    %464 = arith.negf %463 : vector<8x128xf32>
    %465 = math.exp %464 : vector<8x128xf32>
    %cst_240 = arith.constant 1.000000e+00 : f32
    %466 = vector.broadcast %cst_240 : f32 to vector<8x128xf32>
    %467 = arith.addf %466, %465 : vector<8x128xf32>
    %468 = arith.divf %466, %467 : vector<8x128xf32>
    %469 = vector.extract_strided_slice %462 {offsets = [0, 128], sizes = [8, 128], strides = [1, 1]} : vector<8x512xf32> to vector<8x128xf32>
    %470 = arith.negf %469 : vector<8x128xf32>
    %471 = math.exp %470 : vector<8x128xf32>
    %cst_241 = arith.constant 1.000000e+00 : f32
    %472 = vector.broadcast %cst_241 : f32 to vector<8x128xf32>
    %473 = arith.addf %472, %471 : vector<8x128xf32>
    %474 = arith.divf %472, %473 : vector<8x128xf32>
    %475 = vector.extract_strided_slice %462 {offsets = [0, 256], sizes = [8, 128], strides = [1, 1]} : vector<8x512xf32> to vector<8x128xf32>
    %476 = math.tanh %475 : vector<8x128xf32>
    %477 = vector.extract_strided_slice %462 {offsets = [0, 384], sizes = [8, 128], strides = [1, 1]} : vector<8x512xf32> to vector<8x128xf32>
    %478 = arith.negf %477 : vector<8x128xf32>
    %479 = math.exp %478 : vector<8x128xf32>
    %cst_242 = arith.constant 1.000000e+00 : f32
    %480 = vector.broadcast %cst_242 : f32 to vector<8x128xf32>
    %481 = arith.addf %480, %479 : vector<8x128xf32>
    %482 = arith.divf %480, %481 : vector<8x128xf32>
    %483 = arith.mulf %474, %457 : vector<8x128xf32>
    %484 = arith.mulf %468, %476 : vector<8x128xf32>
    %485 = arith.addf %483, %484 : vector<8x128xf32>
    %486 = math.tanh %485 : vector<8x128xf32>
    %487 = arith.mulf %482, %486 : vector<8x128xf32>
    %c0_243 = arith.constant 0 : index
    %c0_244 = arith.constant 0 : index
    %488 = vector.load %arg11[%c0_243, %c0_244] : memref<8x128xf32, #tpu.memory_space<vmem>>, vector<8x128xf32>
    tpu.vector_store %arg11[%c0_243, %c0_244], %487 {strides = array<i32>} : memref<8x128xf32, #tpu.memory_space<vmem>>, vector<8x128xf32>,
    %c0_245 = arith.constant 0 : index
    %c0_246 = arith.constant 0 : index
    %489 = vector.load %arg13[%c0_245, %c0_246] : memref<8x128xf32, #tpu.memory_space<vmem>>, vector<8x128xf32>
    tpu.vector_store %arg13[%c0_245, %c0_246], %485 {strides = array<i32>} : memref<8x128xf32, #tpu.memory_space<vmem>>, vector<8x128xf32>,
    %c0_247 = arith.constant 0 : index
    %c0_248 = arith.constant 0 : index
    %490 = vector.load %arg12[%c0_247, %c0_248] : memref<8x128xf32, #tpu.memory_space<vmem>>, vector<8x128xf32>
    %c0_249 = arith.constant 0 : index
    %c0_250 = arith.constant 0 : index
    %491 = vector.load %arg14[%c0_249, %c0_250] : memref<8x128xf32, #tpu.memory_space<vmem>>, vector<8x128xf32>
    %c0_251 = arith.constant 0 : index
    %c0_252 = arith.constant 0 : index
    %492 = vector.load %arg4[%c0_251, %c0_252] : memref<128x512xf32, #tpu.memory_space<vmem>>, vector<128x512xf32>
    %cst_253 = arith.constant dense<0.000000e+00> : vector<8x512xf32>
    %493 = tpu.matmul %487, %492, %cst_253 {dimension_numbers = #tpu.dot_dimension_numbers<[1], [0], [0], [1], [0, 0, 1, 1], [], []>} : vector<8x128xf32>, vector<128x512xf32>, vector<8x512xf32> -> vector<8x512xf32>
    %c0_254 = arith.constant 0 : index
    %c0_255 = arith.constant 0 : index
    %494 = vector.load %arg5[%c0_254, %c0_255] : memref<128x512xf32, #tpu.memory_space<vmem>>, vector<128x512xf32>
    %cst_256 = arith.constant dense<0.000000e+00> : vector<8x512xf32>
    %495 = tpu.matmul %490, %494, %cst_256 {dimension_numbers = #tpu.dot_dimension_numbers<[1], [0], [0], [1], [0, 0, 1, 1], [], []>} : vector<8x128xf32>, vector<128x512xf32>, vector<8x512xf32> -> vector<8x512xf32>
    %496 = arith.addf %493, %495 : vector<8x512xf32>
    %497 = vector.extract_strided_slice %496 {offsets = [0, 0], sizes = [8, 128], strides = [1, 1]} : vector<8x512xf32> to vector<8x128xf32>
    %498 = arith.negf %497 : vector<8x128xf32>
    %499 = math.exp %498 : vector<8x128xf32>
    %cst_257 = arith.constant 1.000000e+00 : f32
    %500 = vector.broadcast %cst_257 : f32 to vector<8x128xf32>
    %501 = arith.addf %500, %499 : vector<8x128xf32>
    %502 = arith.divf %500, %501 : vector<8x128xf32>
    %503 = vector.extract_strided_slice %496 {offsets = [0, 128], sizes = [8, 128], strides = [1, 1]} : vector<8x512xf32> to vector<8x128xf32>
    %504 = arith.negf %503 : vector<8x128xf32>
    %505 = math.exp %504 : vector<8x128xf32>
    %cst_258 = arith.constant 1.000000e+00 : f32
    %506 = vector.broadcast %cst_258 : f32 to vector<8x128xf32>
    %507 = arith.addf %506, %505 : vector<8x128xf32>
    %508 = arith.divf %506, %507 : vector<8x128xf32>
    %509 = vector.extract_strided_slice %496 {offsets = [0, 256], sizes = [8, 128], strides = [1, 1]} : vector<8x512xf32> to vector<8x128xf32>
    %510 = math.tanh %509 : vector<8x128xf32>
    %511 = vector.extract_strided_slice %496 {offsets = [0, 384], sizes = [8, 128], strides = [1, 1]} : vector<8x512xf32> to vector<8x128xf32>
    %512 = arith.negf %511 : vector<8x128xf32>
    %513 = math.exp %512 : vector<8x128xf32>
    %cst_259 = arith.constant 1.000000e+00 : f32
    %514 = vector.broadcast %cst_259 : f32 to vector<8x128xf32>
    %515 = arith.addf %514, %513 : vector<8x128xf32>
    %516 = arith.divf %514, %515 : vector<8x128xf32>
    %517 = arith.mulf %508, %491 : vector<8x128xf32>
    %518 = arith.mulf %502, %510 : vector<8x128xf32>
    %519 = arith.addf %517, %518 : vector<8x128xf32>
    %520 = math.tanh %519 : vector<8x128xf32>
    %521 = arith.mulf %516, %520 : vector<8x128xf32>
    %c0_260 = arith.constant 0 : index
    %c0_261 = arith.constant 0 : index
    %522 = vector.load %arg12[%c0_260, %c0_261] : memref<8x128xf32, #tpu.memory_space<vmem>>, vector<8x128xf32>
    tpu.vector_store %arg12[%c0_260, %c0_261], %521 {strides = array<i32>} : memref<8x128xf32, #tpu.memory_space<vmem>>, vector<8x128xf32>,
    %c0_262 = arith.constant 0 : index
    %c0_263 = arith.constant 0 : index
    %523 = vector.load %arg14[%c0_262, %c0_263] : memref<8x128xf32, #tpu.memory_space<vmem>>, vector<8x128xf32>
    tpu.vector_store %arg14[%c0_262, %c0_263], %519 {strides = array<i32>} : memref<8x128xf32, #tpu.memory_space<vmem>>, vector<8x128xf32>,
    %524 = arith.index_cast %c6_i32 : i32 to index
    %c0_264 = arith.constant 0 : index
    %c0_265 = arith.constant 0 : index
    %525 = vector.load %arg15[%524, %c0_264, %c0_265] : memref<8x8x128xf32, #tpu.memory_space<vmem>>, vector<1x8x128xf32>
    %526 = vector.shape_cast %525 : vector<1x8x128xf32> to vector<8x128xf32>
    %527 = vector.shape_cast %521 : vector<8x128xf32> to vector<1x8x128xf32>
    tpu.vector_store %arg15[%524, %c0_264, %c0_265], %527 {strides = array<i32>} : memref<8x8x128xf32, #tpu.memory_space<vmem>>, vector<1x8x128xf32>,
    %c7_i32 = arith.constant 7 : i32
    %528 = arith.index_cast %c7_i32 : i32 to index
    %c0_266 = arith.constant 0 : index
    %c0_267 = arith.constant 0 : index
    %529 = vector.load %arg1[%528, %c0_266, %c0_267] : memref<8x8x128xf32, #tpu.memory_space<vmem>>, vector<1x8x128xf32>
    %530 = vector.shape_cast %529 : vector<1x8x128xf32> to vector<8x128xf32>
    %c0_268 = arith.constant 0 : index
    %c0_269 = arith.constant 0 : index
    %531 = vector.load %arg11[%c0_268, %c0_269] : memref<8x128xf32, #tpu.memory_space<vmem>>, vector<8x128xf32>
    %c0_270 = arith.constant 0 : index
    %c0_271 = arith.constant 0 : index
    %532 = vector.load %arg13[%c0_270, %c0_271] : memref<8x128xf32, #tpu.memory_space<vmem>>, vector<8x128xf32>
    %c0_272 = arith.constant 0 : index
    %c0_273 = arith.constant 0 : index
    %533 = vector.load %arg2[%c0_272, %c0_273] : memref<128x512xf32, #tpu.memory_space<vmem>>, vector<128x512xf32>
    %cst_274 = arith.constant dense<0.000000e+00> : vector<8x512xf32>
    %534 = tpu.matmul %530, %533, %cst_274 {dimension_numbers = #tpu.dot_dimension_numbers<[1], [0], [0], [1], [0, 0, 1, 1], [], []>} : vector<8x128xf32>, vector<128x512xf32>, vector<8x512xf32> -> vector<8x512xf32>
    %c0_275 = arith.constant 0 : index
    %c0_276 = arith.constant 0 : index
    %535 = vector.load %arg3[%c0_275, %c0_276] : memref<128x512xf32, #tpu.memory_space<vmem>>, vector<128x512xf32>
    %cst_277 = arith.constant dense<0.000000e+00> : vector<8x512xf32>
    %536 = tpu.matmul %531, %535, %cst_277 {dimension_numbers = #tpu.dot_dimension_numbers<[1], [0], [0], [1], [0, 0, 1, 1], [], []>} : vector<8x128xf32>, vector<128x512xf32>, vector<8x512xf32> -> vector<8x512xf32>
    %537 = arith.addf %534, %536 : vector<8x512xf32>
    %538 = vector.extract_strided_slice %537 {offsets = [0, 0], sizes = [8, 128], strides = [1, 1]} : vector<8x512xf32> to vector<8x128xf32>
    %539 = arith.negf %538 : vector<8x128xf32>
    %540 = math.exp %539 : vector<8x128xf32>
    %cst_278 = arith.constant 1.000000e+00 : f32
    %541 = vector.broadcast %cst_278 : f32 to vector<8x128xf32>
    %542 = arith.addf %541, %540 : vector<8x128xf32>
    %543 = arith.divf %541, %542 : vector<8x128xf32>
    %544 = vector.extract_strided_slice %537 {offsets = [0, 128], sizes = [8, 128], strides = [1, 1]} : vector<8x512xf32> to vector<8x128xf32>
    %545 = arith.negf %544 : vector<8x128xf32>
    %546 = math.exp %545 : vector<8x128xf32>
    %cst_279 = arith.constant 1.000000e+00 : f32
    %547 = vector.broadcast %cst_279 : f32 to vector<8x128xf32>
    %548 = arith.addf %547, %546 : vector<8x128xf32>
    %549 = arith.divf %547, %548 : vector<8x128xf32>
    %550 = vector.extract_strided_slice %537 {offsets = [0, 256], sizes = [8, 128], strides = [1, 1]} : vector<8x512xf32> to vector<8x128xf32>
    %551 = math.tanh %550 : vector<8x128xf32>
    %552 = vector.extract_strided_slice %537 {offsets = [0, 384], sizes = [8, 128], strides = [1, 1]} : vector<8x512xf32> to vector<8x128xf32>
    %553 = arith.negf %552 : vector<8x128xf32>
    %554 = math.exp %553 : vector<8x128xf32>
    %cst_280 = arith.constant 1.000000e+00 : f32
    %555 = vector.broadcast %cst_280 : f32 to vector<8x128xf32>
    %556 = arith.addf %555, %554 : vector<8x128xf32>
    %557 = arith.divf %555, %556 : vector<8x128xf32>
    %558 = arith.mulf %549, %532 : vector<8x128xf32>
    %559 = arith.mulf %543, %551 : vector<8x128xf32>
    %560 = arith.addf %558, %559 : vector<8x128xf32>
    %561 = math.tanh %560 : vector<8x128xf32>
    %562 = arith.mulf %557, %561 : vector<8x128xf32>
    %c0_281 = arith.constant 0 : index
    %c0_282 = arith.constant 0 : index
    %563 = vector.load %arg11[%c0_281, %c0_282] : memref<8x128xf32, #tpu.memory_space<vmem>>, vector<8x128xf32>
    tpu.vector_store %arg11[%c0_281, %c0_282], %562 {strides = array<i32>} : memref<8x128xf32, #tpu.memory_space<vmem>>, vector<8x128xf32>,
    %c0_283 = arith.constant 0 : index
    %c0_284 = arith.constant 0 : index
    %564 = vector.load %arg13[%c0_283, %c0_284] : memref<8x128xf32, #tpu.memory_space<vmem>>, vector<8x128xf32>
    tpu.vector_store %arg13[%c0_283, %c0_284], %560 {strides = array<i32>} : memref<8x128xf32, #tpu.memory_space<vmem>>, vector<8x128xf32>,
    %c0_285 = arith.constant 0 : index
    %c0_286 = arith.constant 0 : index
    %565 = vector.load %arg12[%c0_285, %c0_286] : memref<8x128xf32, #tpu.memory_space<vmem>>, vector<8x128xf32>
    %c0_287 = arith.constant 0 : index
    %c0_288 = arith.constant 0 : index
    %566 = vector.load %arg14[%c0_287, %c0_288] : memref<8x128xf32, #tpu.memory_space<vmem>>, vector<8x128xf32>
    %c0_289 = arith.constant 0 : index
    %c0_290 = arith.constant 0 : index
    %567 = vector.load %arg4[%c0_289, %c0_290] : memref<128x512xf32, #tpu.memory_space<vmem>>, vector<128x512xf32>
    %cst_291 = arith.constant dense<0.000000e+00> : vector<8x512xf32>
    %568 = tpu.matmul %562, %567, %cst_291 {dimension_numbers = #tpu.dot_dimension_numbers<[1], [0], [0], [1], [0, 0, 1, 1], [], []>} : vector<8x128xf32>, vector<128x512xf32>, vector<8x512xf32> -> vector<8x512xf32>
    %c0_292 = arith.constant 0 : index
    %c0_293 = arith.constant 0 : index
    %569 = vector.load %arg5[%c0_292, %c0_293] : memref<128x512xf32, #tpu.memory_space<vmem>>, vector<128x512xf32>
    %cst_294 = arith.constant dense<0.000000e+00> : vector<8x512xf32>
    %570 = tpu.matmul %565, %569, %cst_294 {dimension_numbers = #tpu.dot_dimension_numbers<[1], [0], [0], [1], [0, 0, 1, 1], [], []>} : vector<8x128xf32>, vector<128x512xf32>, vector<8x512xf32> -> vector<8x512xf32>
    %571 = arith.addf %568, %570 : vector<8x512xf32>
    %572 = vector.extract_strided_slice %571 {offsets = [0, 0], sizes = [8, 128], strides = [1, 1]} : vector<8x512xf32> to vector<8x128xf32>
    %573 = arith.negf %572 : vector<8x128xf32>
    %574 = math.exp %573 : vector<8x128xf32>
    %cst_295 = arith.constant 1.000000e+00 : f32
    %575 = vector.broadcast %cst_295 : f32 to vector<8x128xf32>
    %576 = arith.addf %575, %574 : vector<8x128xf32>
    %577 = arith.divf %575, %576 : vector<8x128xf32>
    %578 = vector.extract_strided_slice %571 {offsets = [0, 128], sizes = [8, 128], strides = [1, 1]} : vector<8x512xf32> to vector<8x128xf32>
    %579 = arith.negf %578 : vector<8x128xf32>
    %580 = math.exp %579 : vector<8x128xf32>
    %cst_296 = arith.constant 1.000000e+00 : f32
    %581 = vector.broadcast %cst_296 : f32 to vector<8x128xf32>
    %582 = arith.addf %581, %580 : vector<8x128xf32>
    %583 = arith.divf %581, %582 : vector<8x128xf32>
    %584 = vector.extract_strided_slice %571 {offsets = [0, 256], sizes = [8, 128], strides = [1, 1]} : vector<8x512xf32> to vector<8x128xf32>
    %585 = math.tanh %584 : vector<8x128xf32>
    %586 = vector.extract_strided_slice %571 {offsets = [0, 384], sizes = [8, 128], strides = [1, 1]} : vector<8x512xf32> to vector<8x128xf32>
    %587 = arith.negf %586 : vector<8x128xf32>
    %588 = math.exp %587 : vector<8x128xf32>
    %cst_297 = arith.constant 1.000000e+00 : f32
    %589 = vector.broadcast %cst_297 : f32 to vector<8x128xf32>
    %590 = arith.addf %589, %588 : vector<8x128xf32>
    %591 = arith.divf %589, %590 : vector<8x128xf32>
    %592 = arith.mulf %583, %566 : vector<8x128xf32>
    %593 = arith.mulf %577, %585 : vector<8x128xf32>
    %594 = arith.addf %592, %593 : vector<8x128xf32>
    %595 = math.tanh %594 : vector<8x128xf32>
    %596 = arith.mulf %591, %595 : vector<8x128xf32>
    %c0_298 = arith.constant 0 : index
    %c0_299 = arith.constant 0 : index
    %597 = vector.load %arg12[%c0_298, %c0_299] : memref<8x128xf32, #tpu.memory_space<vmem>>, vector<8x128xf32>
    tpu.vector_store %arg12[%c0_298, %c0_299], %596 {strides = array<i32>} : memref<8x128xf32, #tpu.memory_space<vmem>>, vector<8x128xf32>,
    %c0_300 = arith.constant 0 : index
    %c0_301 = arith.constant 0 : index
    %598 = vector.load %arg14[%c0_300, %c0_301] : memref<8x128xf32, #tpu.memory_space<vmem>>, vector<8x128xf32>
    tpu.vector_store %arg14[%c0_300, %c0_301], %594 {strides = array<i32>} : memref<8x128xf32, #tpu.memory_space<vmem>>, vector<8x128xf32>,
    %599 = arith.index_cast %c7_i32 : i32 to index
    %c0_302 = arith.constant 0 : index
    %c0_303 = arith.constant 0 : index
    %600 = vector.load %arg15[%599, %c0_302, %c0_303] : memref<8x8x128xf32, #tpu.memory_space<vmem>>, vector<1x8x128xf32>
    %601 = vector.shape_cast %600 : vector<1x8x128xf32> to vector<8x128xf32>
    %602 = vector.shape_cast %596 : vector<8x128xf32> to vector<1x8x128xf32>
    tpu.vector_store %arg15[%599, %c0_302, %c0_303], %602 {strides = array<i32>} : memref<8x8x128xf32, #tpu.memory_space<vmem>>, vector<1x8x128xf32>,
    %c8_i32 = arith.constant 8 : i32
    %c0_304 = arith.constant 0 : index
    %c0_305 = arith.constant 0 : index
    %c0_306 = arith.constant 0 : index
    %603 = vector.load %arg15[%c0_304, %c0_305, %c0_306] : memref<8x8x128xf32, #tpu.memory_space<vmem>>, vector<8x8x128xf32>
    %604 = vector.shape_cast %603 : vector<8x8x128xf32> to vector<64x128xf32>
    %c0_307 = arith.constant 0 : index
    %c0_308 = arith.constant 0 : index
    %605 = vector.load %arg6[%c0_307, %c0_308] : memref<128x128xf32, #tpu.memory_space<vmem>>, vector<128x128xf32>
    %cst_309 = arith.constant dense<0.000000e+00> : vector<64x128xf32>
    %606 = tpu.matmul %604, %605, %cst_309 {dimension_numbers = #tpu.dot_dimension_numbers<[1], [0], [0], [1], [0, 0, 1, 1], [], []>} : vector<64x128xf32>, vector<128x128xf32>, vector<64x128xf32> -> vector<64x128xf32>
    %c0_310 = arith.constant 0 : index
    %c0_311 = arith.constant 0 : index
    %607 = vector.load %arg7[%c0_310, %c0_311] : memref<1x128xf32, #tpu.memory_space<vmem>>, vector<1x128xf32>
    %608 = vector.broadcast %607 : vector<1x128xf32> to vector<64x128xf32>
    %609 = arith.addf %606, %608 : vector<64x128xf32>
    %610 = vector.shape_cast %609 : vector<64x128xf32> to vector<8x8x128xf32>
    %c0_312 = arith.constant 0 : index
    %c0_313 = arith.constant 0 : index
    %c0_314 = arith.constant 0 : index
    %611 = vector.load %arg8[%c0_312, %c0_313, %c0_314] : memref<8x8x128xf32, #tpu.memory_space<vmem>>, vector<8x8x128xf32>
    tpu.vector_store %arg8[%c0_312, %c0_313, %c0_314], %610 {strides = array<i32>} : memref<8x8x128xf32, #tpu.memory_space<vmem>>, vector<8x8x128xf32>,
    %c1_i32_315 = arith.constant 1 : i32
    %612 = arith.cmpi eq, %arg0, %c1_i32_315 : i32
    %613 = arith.extui %612 : i1 to i32
    %c0_i32_316 = arith.constant 0 : i32
    %614 = arith.cmpi ne, %613, %c0_i32_316 : i32
    scf.if %614 {
      %c0_317 = arith.constant 0 : index
      %c0_318 = arith.constant 0 : index
      %615 = vector.load %arg11[%c0_317, %c0_318] : memref<8x128xf32, #tpu.memory_space<vmem>>, vector<8x128xf32>
      %c0_319 = arith.constant 0 : index
      %c0_320 = arith.constant 0 : index
      %c0_321 = arith.constant 0 : index
      %616 = vector.load %arg9[%c0_319, %c0_320, %c0_321] : memref<2x8x128xf32, #tpu.memory_space<vmem>>, vector<1x8x128xf32>
      %617 = vector.shape_cast %616 : vector<1x8x128xf32> to vector<8x128xf32>
      %618 = vector.shape_cast %615 : vector<8x128xf32> to vector<1x8x128xf32>
      tpu.vector_store %arg9[%c0_319, %c0_320, %c0_321], %618 {strides = array<i32>} : memref<2x8x128xf32, #tpu.memory_space<vmem>>, vector<1x8x128xf32>,
      %c0_322 = arith.constant 0 : index
      %c0_323 = arith.constant 0 : index
      %619 = vector.load %arg13[%c0_322, %c0_323] : memref<8x128xf32, #tpu.memory_space<vmem>>, vector<8x128xf32>
      %c0_324 = arith.constant 0 : index
      %c0_325 = arith.constant 0 : index
      %c0_326 = arith.constant 0 : index
      %620 = vector.load %arg10[%c0_324, %c0_325, %c0_326] : memref<2x8x128xf32, #tpu.memory_space<vmem>>, vector<1x8x128xf32>
      %621 = vector.shape_cast %620 : vector<1x8x128xf32> to vector<8x128xf32>
      %622 = vector.shape_cast %619 : vector<8x128xf32> to vector<1x8x128xf32>
      tpu.vector_store %arg10[%c0_324, %c0_325, %c0_326], %622 {strides = array<i32>} : memref<2x8x128xf32, #tpu.memory_space<vmem>>, vector<1x8x128xf32>,
      %c0_327 = arith.constant 0 : index
      %c0_328 = arith.constant 0 : index
      %623 = vector.load %arg12[%c0_327, %c0_328] : memref<8x128xf32, #tpu.memory_space<vmem>>, vector<8x128xf32>
      %c1 = arith.constant 1 : index
      %c0_329 = arith.constant 0 : index
      %c0_330 = arith.constant 0 : index
      %624 = vector.load %arg9[%c1, %c0_329, %c0_330] : memref<2x8x128xf32, #tpu.memory_space<vmem>>, vector<1x8x128xf32>
      %625 = vector.shape_cast %624 : vector<1x8x128xf32> to vector<8x128xf32>
      %626 = vector.shape_cast %623 : vector<8x128xf32> to vector<1x8x128xf32>
      tpu.vector_store %arg9[%c1, %c0_329, %c0_330], %626 {strides = array<i32>} : memref<2x8x128xf32, #tpu.memory_space<vmem>>, vector<1x8x128xf32>,
      %c0_331 = arith.constant 0 : index
      %c0_332 = arith.constant 0 : index
      %627 = vector.load %arg14[%c0_331, %c0_332] : memref<8x128xf32, #tpu.memory_space<vmem>>, vector<8x128xf32>
      %c1_333 = arith.constant 1 : index
      %c0_334 = arith.constant 0 : index
      %c0_335 = arith.constant 0 : index
      %628 = vector.load %arg10[%c1_333, %c0_334, %c0_335] : memref<2x8x128xf32, #tpu.memory_space<vmem>>, vector<1x8x128xf32>
      %629 = vector.shape_cast %628 : vector<1x8x128xf32> to vector<8x128xf32>
      %630 = vector.shape_cast %627 : vector<8x128xf32> to vector<1x8x128xf32>
      tpu.vector_store %arg10[%c1_333, %c0_334, %c0_335], %630 {strides = array<i32>} : memref<2x8x128xf32, #tpu.memory_space<vmem>>, vector<1x8x128xf32>,
    } else {
    }
    return
  }
  func.func @transform_0(%arg0: i32) -> (i32, i32, i32) {
    %c0_i32 = arith.constant 0 : i32
    %c0_i32_0 = arith.constant 0 : i32
    %c0_i32_1 = arith.constant 0 : i32
    return %arg0, %c0_i32, %c0_i32_0 : i32, i32, i32
  }
  func.func @transform_1(%arg0: i32) -> (i32, i32) {
    %c0_i32 = arith.constant 0 : i32
    %c0_i32_0 = arith.constant 0 : i32
    %c0_i32_1 = arith.constant 0 : i32
    return %c0_i32, %c0_i32_0 : i32, i32
  }
  func.func @transform_2(%arg0: i32) -> (i32, i32) {
    %c0_i32 = arith.constant 0 : i32
    %c0_i32_0 = arith.constant 0 : i32
    %c0_i32_1 = arith.constant 0 : i32
    return %c0_i32, %c0_i32_0 : i32, i32
  }
  func.func @transform_3(%arg0: i32) -> (i32, i32) {
    %c0_i32 = arith.constant 0 : i32
    %c0_i32_0 = arith.constant 0 : i32
    %c0_i32_1 = arith.constant 0 : i32
    return %c0_i32, %c0_i32_0 : i32, i32
  }
  func.func @transform_4(%arg0: i32) -> (i32, i32) {
    %c0_i32 = arith.constant 0 : i32
    %c0_i32_0 = arith.constant 0 : i32
    %c0_i32_1 = arith.constant 0 : i32
    return %c0_i32, %c0_i32_0 : i32, i32
  }
  func.func @transform_5(%arg0: i32) -> (i32, i32) {
    %c0_i32 = arith.constant 0 : i32
    %c0_i32_0 = arith.constant 0 : i32
    %c0_i32_1 = arith.constant 0 : i32
    return %c0_i32, %c0_i32_0 : i32, i32
  }
  func.func @transform_6(%arg0: i32) -> (i32, i32) {
    %c0_i32 = arith.constant 0 : i32
    %c0_i32_0 = arith.constant 0 : i32
    %c0_i32_1 = arith.constant 0 : i32
    return %c0_i32, %c0_i32_0 : i32, i32
  }
  func.func @transform_7(%arg0: i32) -> (i32, i32, i32) {
    %c0_i32 = arith.constant 0 : i32
    %c0_i32_0 = arith.constant 0 : i32
    %c0_i32_1 = arith.constant 0 : i32
    return %arg0, %c0_i32, %c0_i32_0 : i32, i32, i32
  }
  func.func @transform_8(%arg0: i32) -> (i32, i32, i32) {
    %c0_i32 = arith.constant 0 : i32
    %c0_i32_0 = arith.constant 0 : i32
    %c0_i32_1 = arith.constant 0 : i32
    %c0_i32_2 = arith.constant 0 : i32
    return %c0_i32, %c0_i32_0, %c0_i32_1 : i32, i32, i32
  }
  func.func @transform_9(%arg0: i32) -> (i32, i32, i32) {
    %c0_i32 = arith.constant 0 : i32
    %c0_i32_0 = arith.constant 0 : i32
    %c0_i32_1 = arith.constant 0 : i32
    %c0_i32_2 = arith.constant 0 : i32
    return %c0_i32, %c0_i32_0, %c0_i32_1 : i32, i32, i32
  }
}

</mosaic_0001>

<llo_original>
// kernel: tpu_custom_call.1
$region0: #{tpu_custom_call.1}
  #allocation0 [shape = 'u32[]', space=smem, size = 0x4, offset = 0x4, fixed_abs, tag = 'smem constant byte address 0x4 - core index']
  #allocation1 [shape = 'u32[144,128]{1,0:T(1,128)}', space=vmem, size = 0x12000, scoped, tag = 'internal scratch']
  %s0 = inlined_call_operand.hbm [shape: f32[8,128], index: 0, kind: input, shape index: {}]
  %s1 = inlined_call_operand.hbm [shape: f32[8,128], index: 1, kind: output, shape index: {}]
  %s2 = sld [smem:[#allocation0]]
  $region41: #{tpu_custom_call.1} parent=0
    _
  %s4 = ssub.s32 1, %s2
  %s5 = scalar_select 0, %s4, %s2
  $region1: #{tpu_custom_call.1} parent=0
    #allocation2 [shape = 'u8[4096]{0}', space=vmem, size = 0x1000, scoped, tag = 'input window, operand 0, single buffered']
    #allocation3 [shape = 's32[2]{0}', space=sflag, size = 0x8, scoped, tag = 'scoped memory for tpu_custom_call.1']
    #allocation4 [shape = 's32[2]{0}', space=sflag, size = 0x8, scoped, tag = 'scoped memory for tpu_custom_call.1']
    #allocation5 [shape = 'u8[4096]{0}', space=vmem, size = 0x1000, scoped, tag = 'output window, operand 0, single buffered']
    %6 = vsyncpa [#allocation3], 0
    %7 = vsyncpa [#allocation4], 0
    loop: start=0, step=1, limit=4
    $region2: #{tpu_custom_call.1} parent=1 // loop_pre_header
      _
    $region3: #{tpu_custom_call.1} parent=1 // loop_header
      %s9 = sphi 0, %s13
      %p10 = scmp.ge.s32.totalorder %s9, 4
      %s17 = sphi 0, %s17
      %s19 = sphi 0, %s17
      %s20 = sphi 0, %s19
      %s34 = sphi 0, %s20
      %s38 = sphi 0, %s38
      %s40 = sphi 0, %s38
      %s41 = sphi 0, %s40
      %s55 = sphi 0, %s41
    $region4: #{tpu_custom_call.1} parent=1 // loop_header_branch
      %12 = sbr.rel (%p10) target = $region8
    $region5: #{tpu_custom_call.1} parent=1 // loop_body
      %s14 = ssub.s32 %s9, 1
      %s15 = ssub.s32 %s9, 2
      %s16 = sadd.s32 %s9, 1
      %s18 = sadd.s32 %s17, 1
      %p21 = scmp.eq.s32.totalorder %s9, 1
      %p22 = scmp.ne.s32.totalorder %s17, %s19
      %p23 = scmp.eq.s32.totalorder %s9, 0
      %p24 = por %p22, %p23
      %p25 = scmp.ne.s32.totalorder %s17, %s19
      %p26 = scmp.eq.s32.totalorder %s14, 1
      %p27 = por %p25, %p26
      %p28 = scmp.ne.s32.totalorder %s19, %s20
      %p29 = scmp.eq.s32.totalorder %s14, 0
      %p30 = por %p28, %p29
      %p31 = scmp.ne.s32.totalorder %s19, %s20
      %p32 = scmp.eq.s32.totalorder %s15, 1
      %p33 = por %p31, %p32
      %p35 = scmp.ne.s32.totalorder %s20, %s34
      %p36 = scmp.eq.s32.totalorder %s15, 0
      %p37 = por %p35, %p36
      %s39 = sadd.s32 %s38, 1
      %p42 = scmp.eq.s32.totalorder %s9, 1
      %p43 = scmp.ne.s32.totalorder %s38, %s40
      %p44 = scmp.eq.s32.totalorder %s9, 0
      %p45 = por %p43, %p44
      %p46 = scmp.ne.s32.totalorder %s38, %s40
      %p47 = scmp.eq.s32.totalorder %s14, 1
      %p48 = por %p46, %p47
      %p49 = scmp.ne.s32.totalorder %s40, %s41
      %p50 = scmp.eq.s32.totalorder %s14, 0
      %p51 = por %p49, %p50
      %p52 = scmp.ne.s32.totalorder %s40, %s41
      %p53 = scmp.eq.s32.totalorder %s15, 1
      %p54 = por %p52, %p53
      %p56 = scmp.ne.s32.totalorder %s41, %s55
      %p57 = scmp.eq.s32.totalorder %s15, 0
      %p58 = por %p56, %p57
      %p59 = scmp.le.s32.totalorder 1, %s9
      %p60 = scmp.lt.s32.totalorder %s9, 3
      %p61 = pnand %p59, %p60
      %p62 = pneg %p61
      // Predicated region
      $region9: #{tpu_custom_call.1} parent=5 // pred_check
        _
      $region10: #{tpu_custom_call.1} parent=5 // pred_check_branch
        %64 = sbr.rel (%p61) target = $region12
      $region11: #{tpu_custom_call.1} parent=5 // pred_region
        %s65 = ssub.s32 %s9, 1
        // Predicated region
        $region13: #{tpu_custom_call.1} parent=11 // pred_check
          %p66 = pneg %p30
        $region14: #{tpu_custom_call.1} parent=11 // pred_check_branch
          %68 = sbr.rel (%p66) target = $region16
        $region15: #{tpu_custom_call.1} parent=11 // pred_region
          %s70 = ssub.s32 128, 128
          %71 = vsyncadd [#allocation3], %s70
          %s73 = sshll.u32 [#allocation2], 4
          %s74 = int_to_ptr.vmem [resolvable:$true] %s73
          %76 = dma.hbm_to_vmem [thread:$0]  %s0, 128, %s74, [#allocation3]
        $region16: #{tpu_custom_call.1} parent=11 // pred_fallthru
          _
      $region12: #{tpu_custom_call.1} parent=5 // pred_fallthru
        _
      %p77 = scmp.lt.s32.totalorder %s9, 2
      // Predicated region
      $region17: #{tpu_custom_call.1} parent=5 // pred_check
        %p78 = pneg %p77
      $region18: #{tpu_custom_call.1} parent=5 // pred_check_branch
        %80 = sbr.rel (%p78) target = $region20
      $region19: #{tpu_custom_call.1} parent=5 // pred_region
        _
      $region20: #{tpu_custom_call.1} parent=5 // pred_fallthru
        _
      %p81 = scmp.le.s32.totalorder 1, %s9
      %p82 = scmp.lt.s32.totalorder %s9, 3
      %p83 = pnand %p81, %p82
      %p84 = pneg %p83
      // Predicated region
      $region21: #{tpu_custom_call.1} parent=5 // pred_check
        _
      $region22: #{tpu_custom_call.1} parent=5 // pred_check_branch
        %86 = sbr.rel (%p83) target = $region24
      $region23: #{tpu_custom_call.1} parent=5 // pred_region
        %s87 = ssub.s32 %s9, 1
        // Predicated region
        $region25: #{tpu_custom_call.1} parent=23 // pred_check
          %p88 = pneg %p30
        $region26: #{tpu_custom_call.1} parent=23 // pred_check_branch
          %90 = sbr.rel (%p88) target = $region28
        $region27: #{tpu_custom_call.1} parent=23 // pred_region
          %91 = dma.done [#allocation3], 128
        $region28: #{tpu_custom_call.1} parent=23 // pred_fallthru
          _
        %p92 = pneg %p30
        %p93 = pneg %p27
        %p94 = pneg %p51
        %p95 = pneg %p48
        %v96 = vld [vmem:[#allocation2] sm:$0xff]
        %v97 = vadd.f32 %v96, 1.0
        %98 = vst [vmem:[#allocation5] sm:$0xff] %v97
        // Predicated region
        $region29: #{tpu_custom_call.1} parent=23 // pred_check
          %p99 = pneg %p48
        $region30: #{tpu_custom_call.1} parent=23 // pred_check_branch
          %101 = sbr.rel (%p99) target = $region32
        $region31: #{tpu_custom_call.1} parent=23 // pred_region
          %s103 = ssub.s32 128, 128
          %104 = vsyncadd [#allocation4], %s103
          %s106 = sshll.u32 [#allocation5], 4
          %s107 = int_to_ptr.vmem [resolvable:$true] %s106
          %109 = dma.vmem_to_hbm [thread:$0]  %s107, 128, %s1, [#allocation4]
        $region32: #{tpu_custom_call.1} parent=23 // pred_fallthru
          _
        // Predicated region
        $region33: #{tpu_custom_call.1} parent=23 // pred_check
          %p110 = pneg %p48
        $region34: #{tpu_custom_call.1} parent=23 // pred_check_branch
          %112 = sbr.rel (%p110) target = $region36
        $region35: #{tpu_custom_call.1} parent=23 // pred_region
          %113 = dma.done [#allocation4], 128
        $region36: #{tpu_custom_call.1} parent=23 // pred_fallthru
          _
      $region24: #{tpu_custom_call.1} parent=5 // pred_fallthru
        _
      %p114 = scmp.le.s32.totalorder 2, %s9
      // Predicated region
      $region37: #{tpu_custom_call.1} parent=5 // pred_check
        %p115 = pneg %p114
      $region38: #{tpu_custom_call.1} parent=5 // pred_check_branch
        %117 = sbr.rel (%p115) target = $region40
      $region39: #{tpu_custom_call.1} parent=5 // pred_region
        %s118 = ssub.s32 %s9, 2
      $region40: #{tpu_custom_call.1} parent=5 // pred_fallthru
        _
    $region6: #{tpu_custom_call.1} parent=1 // loop_footer
      %s13 = sadd.s32 1, %s9
    $region7: #{tpu_custom_call.1} parent=1 // loop_footer_branch
      %8 = sbr.rel target = $region3
    $region8: #{tpu_custom_call.1} parent=1 // loop_exit
      _
    %119 = vsyncpa [#allocation3], 1
    %s120 = scalar_lea.sflag [#allocation3], 1
    %121 = vsyncpa %s120, 1
    %122 = vsyncpa [#allocation4], 1
    %s123 = scalar_lea.sflag [#allocation4], 1
    %124 = vsyncpa %s123, 1

// kernel: _lstm_forward_jit.1
$region0: #{_lstm_forward_jit.1}
  #allocation0 [shape = 'u32[]', space=smem, size = 0x4, offset = 0x4, fixed_abs, tag = 'smem constant byte address 0x4 - core index']
  #allocation1 [shape = 'u32[144,128]{1,0:T(1,128)}', space=vmem, size = 0x12000, scoped, tag = 'internal scratch']
  #allocation2 [shape = 'f32[8,128]{1,0:T(8,128)}', space=vmem, size = 0x1000, scoped, tag = 'scratch operand']
  #allocation3 [shape = 'f32[8,128]{1,0:T(8,128)}', space=vmem, size = 0x1000, scoped, tag = 'scratch operand']
  #allocation4 [shape = 'f32[8,128]{1,0:T(8,128)}', space=vmem, size = 0x1000, scoped, tag = 'scratch operand']
  #allocation5 [shape = 'f32[8,128]{1,0:T(8,128)}', space=vmem, size = 0x1000, scoped, tag = 'scratch operand']
  #allocation6 [shape = 'f32[8,8,128]{2,1,0:T(8,128)}', space=vmem, size = 0x8000, scoped, tag = 'scratch operand']
  %s0 = inlined_call_operand.vmem [shape: f32[16,8,128], index: 0, kind: input, shape index: {}]
  %s1 = inlined_call_operand.hbm [shape: f32[128,512], index: 1, kind: input, shape index: {}]
  %s2 = inlined_call_operand.hbm [shape: f32[128,512], index: 2, kind: input, shape index: {}]
  %s3 = inlined_call_operand.hbm [shape: f32[128,512], index: 3, kind: input, shape index: {}]
  %s4 = inlined_call_operand.hbm [shape: f32[128,512], index: 4, kind: input, shape index: {}]
  %s5 = inlined_call_operand.vmem [shape: f32[128,128], index: 5, kind: input, shape index: {}]
  %s6 = inlined_call_operand.vmem [shape: f32[1,128], index: 6, kind: input, shape index: {}]
  %s7 = inlined_call_operand.vmem [shape: f32[16,8,128], index: 7, kind: output, shape index: {0}]
  %s8 = inlined_call_operand.vmem [shape: f32[2,8,128], index: 8, kind: output, shape index: {1}]
  %s9 = inlined_call_operand.vmem [shape: f32[2,8,128], index: 9, kind: output, shape index: {2}]
  %10 = xla_tuple %s7, %s8, %s9
  %s11 = sld [smem:[#allocation0]]
  $region101: #{_lstm_forward_jit.1} parent=0
    _
  %s13 = ssub.s32 1, %s11
  %s14 = scalar_select 0, %s13, %s11
  $region1: #{_lstm_forward_jit.1} parent=0
    #allocation7 [shape = 'u8[262144]{0}', space=vmem, size = 0x40000, scoped, tag = 'input window, operand 1, single buffered']
    #allocation8 [shape = 's32[2]{0}', space=sflag, size = 0x8, scoped, tag = 'scoped memory for _lstm_forward_jit.1']
    #allocation9 [shape = 'u8[262144]{0}', space=vmem, size = 0x40000, scoped, tag = 'input window, operand 2, single buffered']
    #allocation10 [shape = 's32[1]{0}', space=sflag, size = 0x4, scoped, tag = 'scoped memory for _lstm_forward_jit.1']
    #allocation11 [shape = 'u8[262144]{0}', space=vmem, size = 0x40000, scoped, tag = 'input window, operand 3, single buffered']
    #allocation12 [shape = 'u8[262144]{0}', space=vmem, size = 0x40000, scoped, tag = 'input window, operand 4, single buffered']
    #allocation13 [shape = 's32[1]{0}', space=sflag, size = 0x4, scoped, tag = 'scoped memory for _lstm_forward_jit.1']
    %15 = vsyncpa [#allocation8], 0
    %16 = vsyncpa [#allocation10], 0
    %17 = vsyncpa [#allocation13], 0
    loop: start=0, step=1, limit=4
    $region2: #{_lstm_forward_jit.1} parent=1 // loop_pre_header
      _
    $region3: #{_lstm_forward_jit.1} parent=1 // loop_header
      %s19 = sphi 0, %s23
      %p20 = scmp.ge.s32.totalorder %s19, 4
      %s29 = sphi 0, %s31
      %s32 = sphi 0, %s29
      %s33 = sphi 0, %s32
      %s49 = sphi 0, %s33
      %s53 = sphi 0, %s53
      %s55 = sphi 0, %s53
      %s56 = sphi 0, %s55
      %s70 = sphi 0, %s56
      %s74 = sphi 0, %s74
      %s76 = sphi 0, %s74
      %s77 = sphi 0, %s76
      %s91 = sphi 0, %s77
      %s95 = sphi 0, %s95
      %s97 = sphi 0, %s95
      %s98 = sphi 0, %s97
      %s112 = sphi 0, %s98
      %s116 = sphi 0, %s116
      %s118 = sphi 0, %s116
      %s119 = sphi 0, %s118
      %s133 = sphi 0, %s119
      %s137 = sphi 0, %s137
      %s139 = sphi 0, %s137
      %s140 = sphi 0, %s139
      %s154 = sphi 0, %s140
      %s158 = sphi 0, %s158
      %s160 = sphi 0, %s158
      %s161 = sphi 0, %s160
      %s175 = sphi 0, %s161
      %s181 = sphi 0, %s183
      %s184 = sphi 0, %s181
      %s185 = sphi 0, %s184
      %s201 = sphi 0, %s185
      %s205 = sphi 0, %s205
      %s207 = sphi 0, %s205
      %s208 = sphi 0, %s207
      %s222 = sphi 0, %s208
      %s226 = sphi 0, %s226
      %s228 = sphi 0, %s226
      %s229 = sphi 0, %s228
      %s243 = sphi 0, %s229
    $region4: #{_lstm_forward_jit.1} parent=1 // loop_header_branch
      %22 = sbr.rel (%p20) target = $region8
    $region5: #{_lstm_forward_jit.1} parent=1 // loop_body
      %s24 = ssub.s32 %s19, 1
      %s25 = ssub.s32 %s19, 2
      %s26 = sadd.s32 %s19, 1
      %s27 = ssub.s32 %s19, %s26
      %p28 = scmp.eq.s32.totalorder %s27, 0
      %s30 = sadd.s32 %s29, 1
      %s31 = scalar_select %p28, %s29, %s30
      %p34 = pneg %p28
      %p35 = scmp.eq.s32.totalorder %s19, 1
      %p36 = por %p34, %p35
      %p37 = scmp.ne.s32.totalorder %s29, %s32
      %p38 = scmp.eq.s32.totalorder %s19, 0
      %p39 = por %p37, %p38
      %p40 = scmp.ne.s32.totalorder %s29, %s32
      %p41 = scmp.eq.s32.totalorder %s24, 1
      %p42 = por %p40, %p41
      %p43 = scmp.ne.s32.totalorder %s32, %s33
      %p44 = scmp.eq.s32.totalorder %s24, 0
      %p45 = por %p43, %p44
      %p46 = scmp.ne.s32.totalorder %s32, %s33
      %p47 = scmp.eq.s32.totalorder %s25, 1
      %p48 = por %p46, %p47
      %p50 = scmp.ne.s32.totalorder %s33, %s49
      %p51 = scmp.eq.s32.totalorder %s25, 0
      %p52 = por %p50, %p51
      %s54 = sadd.s32 %s53, 1
      %p57 = scmp.eq.s32.totalorder %s19, 1
      %p58 = scmp.ne.s32.totalorder %s53, %s55
      %p59 = scmp.eq.s32.totalorder %s19, 0
      %p60 = por %p58, %p59
      %p61 = scmp.ne.s32.totalorder %s53, %s55
      %p62 = scmp.eq.s32.totalorder %s24, 1
      %p63 = por %p61, %p62
      %p64 = scmp.ne.s32.totalorder %s55, %s56
      %p65 = scmp.eq.s32.totalorder %s24, 0
      %p66 = por %p64, %p65
      %p67 = scmp.ne.s32.totalorder %s55, %s56
      %p68 = scmp.eq.s32.totalorder %s25, 1
      %p69 = por %p67, %p68
      %p71 = scmp.ne.s32.totalorder %s56, %s70
      %p72 = scmp.eq.s32.totalorder %s25, 0
      %p73 = por %p71, %p72
      %s75 = sadd.s32 %s74, 1
      %p78 = scmp.eq.s32.totalorder %s19, 1
      %p79 = scmp.ne.s32.totalorder %s74, %s76
      %p80 = scmp.eq.s32.totalorder %s19, 0
      %p81 = por %p79, %p80
      %p82 = scmp.ne.s32.totalorder %s74, %s76
      %p83 = scmp.eq.s32.totalorder %s24, 1
      %p84 = por %p82, %p83
      %p85 = scmp.ne.s32.totalorder %s76, %s77
      %p86 = scmp.eq.s32.totalorder %s24, 0
      %p87 = por %p85, %p86
      %p88 = scmp.ne.s32.totalorder %s76, %s77
      %p89 = scmp.eq.s32.totalorder %s25, 1
      %p90 = por %p88, %p89
      %p92 = scmp.ne.s32.totalorder %s77, %s91
      %p93 = scmp.eq.s32.totalorder %s25, 0
      %p94 = por %p92, %p93
      %s96 = sadd.s32 %s95, 1
      %p99 = scmp.eq.s32.totalorder %s19, 1
      %p100 = scmp.ne.s32.totalorder %s95, %s97
      %p101 = scmp.eq.s32.totalorder %s19, 0
      %p102 = por %p100, %p101
      %p103 = scmp.ne.s32.totalorder %s95, %s97
      %p104 = scmp.eq.s32.totalorder %s24, 1
      %p105 = por %p103, %p104
      %p106 = scmp.ne.s32.totalorder %s97, %s98
      %p107 = scmp.eq.s32.totalorder %s24, 0
      %p108 = por %p106, %p107
      %p109 = scmp.ne.s32.totalorder %s97, %s98
      %p110 = scmp.eq.s32.totalorder %s25, 1
      %p111 = por %p109, %p110
      %p113 = scmp.ne.s32.totalorder %s98, %s112
      %p114 = scmp.eq.s32.totalorder %s25, 0
      %p115 = por %p113, %p114
      %s117 = sadd.s32 %s116, 1
      %p120 = scmp.eq.s32.totalorder %s19, 1
      %p121 = scmp.ne.s32.totalorder %s116, %s118
      %p122 = scmp.eq.s32.totalorder %s19, 0
      %p123 = por %p121, %p122
      %p124 = scmp.ne.s32.totalorder %s116, %s118
      %p125 = scmp.eq.s32.totalorder %s24, 1
      %p126 = por %p124, %p125
      %p127 = scmp.ne.s32.totalorder %s118, %s119
      %p128 = scmp.eq.s32.totalorder %s24, 0
      %p129 = por %p127, %p128
      %p130 = scmp.ne.s32.totalorder %s118, %s119
      %p131 = scmp.eq.s32.totalorder %s25, 1
      %p132 = por %p130, %p131
      %p134 = scmp.ne.s32.totalorder %s119, %s133
      %p135 = scmp.eq.s32.totalorder %s25, 0
      %p136 = por %p134, %p135
      %s138 = sadd.s32 %s137, 1
      %p141 = scmp.eq.s32.totalorder %s19, 1
      %p142 = scmp.ne.s32.totalorder %s137, %s139
      %p143 = scmp.eq.s32.totalorder %s19, 0
      %p144 = por %p142, %p143
      %p145 = scmp.ne.s32.totalorder %s137, %s139
      %p146 = scmp.eq.s32.totalorder %s24, 1
      %p147 = por %p145, %p146
      %p148 = scmp.ne.s32.totalorder %s139, %s140
      %p149 = scmp.eq.s32.totalorder %s24, 0
      %p150 = por %p148, %p149
      %p151 = scmp.ne.s32.totalorder %s139, %s140
      %p152 = scmp.eq.s32.totalorder %s25, 1
      %p153 = por %p151, %p152
      %p155 = scmp.ne.s32.totalorder %s140, %s154
      %p156 = scmp.eq.s32.totalorder %s25, 0
      %p157 = por %p155, %p156
      %s159 = sadd.s32 %s158, 1
      %p162 = scmp.eq.s32.totalorder %s19, 1
      %p163 = scmp.ne.s32.totalorder %s158, %s160
      %p164 = scmp.eq.s32.totalorder %s19, 0
      %p165 = por %p163, %p164
      %p166 = scmp.ne.s32.totalorder %s158, %s160
      %p167 = scmp.eq.s32.totalorder %s24, 1
      %p168 = por %p166, %p167
      %p169 = scmp.ne.s32.totalorder %s160, %s161
      %p170 = scmp.eq.s32.totalorder %s24, 0
      %p171 = por %p169, %p170
      %p172 = scmp.ne.s32.totalorder %s160, %s161
      %p173 = scmp.eq.s32.totalorder %s25, 1
      %p174 = por %p172, %p173
      %p176 = scmp.ne.s32.totalorder %s161, %s175
      %p177 = scmp.eq.s32.totalorder %s25, 0
      %p178 = por %p176, %p177
      %s179 = ssub.s32 %s19, %s26
      %p180 = scmp.eq.s32.totalorder %s179, 0
      %s182 = sadd.s32 %s181, 1
      %s183 = scalar_select %p180, %s181, %s182
      %p186 = pneg %p180
      %p187 = scmp.eq.s32.totalorder %s19, 1
      %p188 = por %p186, %p187
      %p189 = scmp.ne.s32.totalorder %s181, %s184
      %p190 = scmp.eq.s32.totalorder %s19, 0
      %p191 = por %p189, %p190
      %p192 = scmp.ne.s32.totalorder %s181, %s184
      %p193 = scmp.eq.s32.totalorder %s24, 1
      %p194 = por %p192, %p193
      %p195 = scmp.ne.s32.totalorder %s184, %s185
      %p196 = scmp.eq.s32.totalorder %s24, 0
      %p197 = por %p195, %p196
      %p198 = scmp.ne.s32.totalorder %s184, %s185
      %p199 = scmp.eq.s32.totalorder %s25, 1
      %p200 = por %p198, %p199
      %p202 = scmp.ne.s32.totalorder %s185, %s201
      %p203 = scmp.eq.s32.totalorder %s25, 0
      %p204 = por %p202, %p203
      %s206 = sadd.s32 %s205, 1
      %p209 = scmp.eq.s32.totalorder %s19, 1
      %p210 = scmp.ne.s32.totalorder %s205, %s207
      %p211 = scmp.eq.s32.totalorder %s19, 0
      %p212 = por %p210, %p211
      %p213 = scmp.ne.s32.totalorder %s205, %s207
      %p214 = scmp.eq.s32.totalorder %s24, 1
      %p215 = por %p213, %p214
      %p216 = scmp.ne.s32.totalorder %s207, %s208
      %p217 = scmp.eq.s32.totalorder %s24, 0
      %p218 = por %p216, %p217
      %p219 = scmp.ne.s32.totalorder %s207, %s208
      %p220 = scmp.eq.s32.totalorder %s25, 1
      %p221 = por %p219, %p220
      %p223 = scmp.ne.s32.totalorder %s208, %s222
      %p224 = scmp.eq.s32.totalorder %s25, 0
      %p225 = por %p223, %p224
      %s227 = sadd.s32 %s226, 1
      %p230 = scmp.eq.s32.totalorder %s19, 1
      %p231 = scmp.ne.s32.totalorder %s226, %s228
      %p232 = scmp.eq.s32.totalorder %s19, 0
      %p233 = por %p231, %p232
      %p234 = scmp.ne.s32.totalorder %s226, %s228
      %p235 = scmp.eq.s32.totalorder %s24, 1
      %p236 = por %p234, %p235
      %p237 = scmp.ne.s32.totalorder %s228, %s229
      %p238 = scmp.eq.s32.totalorder %s24, 0
      %p239 = por %p237, %p238
      %p240 = scmp.ne.s32.totalorder %s228, %s229
      %p241 = scmp.eq.s32.totalorder %s25, 1
      %p242 = por %p240, %p241
      %p244 = scmp.ne.s32.totalorder %s229, %s243
      %p245 = scmp.eq.s32.totalorder %s25, 0
      %p246 = por %p244, %p245
      %p247 = scmp.le.s32.totalorder 1, %s19
      %p248 = scmp.lt.s32.totalorder %s19, 3
      %p249 = pnand %p247, %p248
      %p250 = pneg %p249
      // Predicated region
      $region9: #{_lstm_forward_jit.1} parent=5 // pred_check
        _
      $region10: #{_lstm_forward_jit.1} parent=5 // pred_check_branch
        %252 = sbr.rel (%p249) target = $region12
      $region11: #{_lstm_forward_jit.1} parent=5 // pred_region
        %s253 = ssub.s32 %s19, 1
        // Predicated region
        $region13: #{_lstm_forward_jit.1} parent=11 // pred_check
          %p254 = pneg %p66
        $region14: #{_lstm_forward_jit.1} parent=11 // pred_check_branch
          %256 = sbr.rel (%p254) target = $region16
        $region15: #{_lstm_forward_jit.1} parent=11 // pred_region
          %s258 = ssub.s32 8192, 8192
          %259 = vsyncadd [#allocation8], %s258
          %s260 = sshll.u32 [#allocation7], 4
          %s261 = int_to_ptr.vmem [resolvable:$true] %s260
          %266 = dma.hbm_to_vmem [thread:$0]  %s1, 8192, %s261, [#allocation8], 512, 512, 32
        $region16: #{_lstm_forward_jit.1} parent=11 // pred_fallthru
          _
        // Predicated region
        $region17: #{_lstm_forward_jit.1} parent=11 // pred_check
          %p267 = pneg %p87
        $region18: #{_lstm_forward_jit.1} parent=11 // pred_check_branch
          %269 = sbr.rel (%p267) target = $region20
        $region19: #{_lstm_forward_jit.1} parent=11 // pred_region
          %s271 = ssub.s32 8192, 8192
          %272 = vsyncadd [#allocation10], %s271
          %s273 = sshll.u32 [#allocation9], 4
          %s274 = int_to_ptr.vmem [resolvable:$true] %s273
          %279 = dma.hbm_to_vmem [thread:$0]  %s2, 8192, %s274, [#allocation10], 512, 512, 32
        $region20: #{_lstm_forward_jit.1} parent=11 // pred_fallthru
          _
        // Predicated region
        $region21: #{_lstm_forward_jit.1} parent=11 // pred_check
          %p280 = pneg %p108
        $region22: #{_lstm_forward_jit.1} parent=11 // pred_check_branch
          %282 = sbr.rel (%p280) target = $region24
        $region23: #{_lstm_forward_jit.1} parent=11 // pred_region
          %s284 = ssub.s32 8192, 8192
          %285 = vsyncadd [#allocation10], %s284
          %s286 = sshll.u32 [#allocation11], 4
          %s287 = int_to_ptr.vmem [resolvable:$true] %s286
          %292 = dma.hbm_to_vmem [thread:$0]  %s3, 8192, %s287, [#allocation10], 512, 512, 32
        $region24: #{_lstm_forward_jit.1} parent=11 // pred_fallthru
          _
        // Predicated region
        $region25: #{_lstm_forward_jit.1} parent=11 // pred_check
          %p293 = pneg %p129
        $region26: #{_lstm_forward_jit.1} parent=11 // pred_check_branch
          %295 = sbr.rel (%p293) target = $region28
        $region27: #{_lstm_forward_jit.1} parent=11 // pred_region
          %s297 = ssub.s32 8192, 8192
          %298 = vsyncadd [#allocation13], %s297
          %s299 = sshll.u32 [#allocation12], 4
          %s300 = int_to_ptr.vmem [resolvable:$true] %s299
          %305 = dma.hbm_to_vmem [thread:$0]  %s4, 8192, %s300, [#allocation13], 512, 512, 32
        $region28: #{_lstm_forward_jit.1} parent=11 // pred_fallthru
          _
        // Predicated region
        $region29: #{_lstm_forward_jit.1} parent=11 // pred_check
          %p306 = pneg %p150
        $region30: #{_lstm_forward_jit.1} parent=11 // pred_check_branch
          %308 = sbr.rel (%p306) target = $region32
        $region31: #{_lstm_forward_jit.1} parent=11 // pred_region
          _
        $region32: #{_lstm_forward_jit.1} parent=11 // pred_fallthru
          _
        // Predicated region
        $region33: #{_lstm_forward_jit.1} parent=11 // pred_check
          %p309 = pneg %p171
        $region34: #{_lstm_forward_jit.1} parent=11 // pred_check_branch
          %311 = sbr.rel (%p309) target = $region36
        $region35: #{_lstm_forward_jit.1} parent=11 // pred_region
          _
        $region36: #{_lstm_forward_jit.1} parent=11 // pred_fallthru
          _
      $region12: #{_lstm_forward_jit.1} parent=5 // pred_fallthru
        _
      %p312 = scmp.lt.s32.totalorder %s19, 2
      // Predicated region
      $region37: #{_lstm_forward_jit.1} parent=5 // pred_check
        %p313 = pneg %p312
      $region38: #{_lstm_forward_jit.1} parent=5 // pred_check_branch
        %315 = sbr.rel (%p313) target = $region40
      $region39: #{_lstm_forward_jit.1} parent=5 // pred_region
        // Predicated region
        $region41: #{_lstm_forward_jit.1} parent=39 // pred_check
          %p316 = pneg %p39
        $region42: #{_lstm_forward_jit.1} parent=39 // pred_check_branch
          %318 = sbr.rel (%p316) target = $region44
        $region43: #{_lstm_forward_jit.1} parent=39 // pred_region
          %s319 = smul.u32 8, %s19
          %p320 = scmp.lt.s32.totalorder %s319, 15
          %s321 = scalar_select %p320, %s319, 15
          %s322 = smul.addr %s321, 8
          %s323 = scalar_lea.vmem %s0, %s322
          %s324 = smul.u32 8, %s19
        $region44: #{_lstm_forward_jit.1} parent=39 // pred_fallthru
          _
      $region40: #{_lstm_forward_jit.1} parent=5 // pred_fallthru
        _
      %p325 = scmp.le.s32.totalorder 1, %s19
      %p326 = scmp.lt.s32.totalorder %s19, 3
      %p327 = pnand %p325, %p326
      %p328 = pneg %p327
      // Predicated region
      $region45: #{_lstm_forward_jit.1} parent=5 // pred_check
        _
      $region46: #{_lstm_forward_jit.1} parent=5 // pred_check_branch
        %330 = sbr.rel (%p327) target = $region48
      $region47: #{_lstm_forward_jit.1} parent=5 // pred_region
        %s331 = ssub.s32 %s19, 1
        // Predicated region
        $region49: #{_lstm_forward_jit.1} parent=47 // pred_check
          %p332 = pneg %p66
        $region50: #{_lstm_forward_jit.1} parent=47 // pred_check_branch
          %334 = sbr.rel (%p332) target = $region52
        $region51: #{_lstm_forward_jit.1} parent=47 // pred_region
          %335 = dma.done [#allocation8], 8192
        $region52: #{_lstm_forward_jit.1} parent=47 // pred_fallthru
          _
        // Predicated region
        $region53: #{_lstm_forward_jit.1} parent=47 // pred_check
          %p336 = pneg %p87
        $region54: #{_lstm_forward_jit.1} parent=47 // pred_check_branch
          %338 = sbr.rel (%p336) target = $region56
        $region55: #{_lstm_forward_jit.1} parent=47 // pred_region
          %339 = dma.done [#allocation10], 8192
        $region56: #{_lstm_forward_jit.1} parent=47 // pred_fallthru
          _
        // Predicated region
        $region57: #{_lstm_forward_jit.1} parent=47 // pred_check
          %p340 = pneg %p108
        $region58: #{_lstm_forward_jit.1} parent=47 // pred_check_branch
          %342 = sbr.rel (%p340) target = $region60
        $region59: #{_lstm_forward_jit.1} parent=47 // pred_region
          %343 = dma.done [#allocation10], 8192
        $region60: #{_lstm_forward_jit.1} parent=47 // pred_fallthru
          _
        // Predicated region
        $region61: #{_lstm_forward_jit.1} parent=47 // pred_check
          %p344 = pneg %p129
        $region62: #{_lstm_forward_jit.1} parent=47 // pred_check_branch
          %346 = sbr.rel (%p344) target = $region64
        $region63: #{_lstm_forward_jit.1} parent=47 // pred_region
          %347 = dma.done [#allocation13], 8192
        $region64: #{_lstm_forward_jit.1} parent=47 // pred_fallthru
          _
        %s348 = smul.u32 8, %s24
        %p349 = scmp.lt.s32.totalorder %s348, 15
        %s350 = scalar_select %p349, %s348, 15
        %s351 = smul.addr %s350, 8
        %s352 = scalar_lea.vmem %s0, %s351
        %p353 = pneg %p45
        %p354 = pneg %p42
        %p355 = pneg %p66
        %p356 = pneg %p63
        %p357 = pneg %p87
        %p358 = pneg %p84
        %p359 = pneg %p108
        %p360 = pneg %p105
        %p361 = pneg %p129
        %p362 = pneg %p126
        %p363 = pneg %p150
        %p364 = pneg %p147
        %p365 = pneg %p171
        %p366 = pneg %p168
        %p367 = pneg %p197
        %p368 = pneg %p194
        %s369 = smul.u32 8, %s24
        %p370 = scmp.lt.s32.totalorder %s369, 15
        %s371 = scalar_select %p370, %s369, 15
        %s372 = smul.addr %s371, 8
        %s373 = scalar_lea.vmem %s7, %s372
        %p374 = pneg %p218
        %p375 = pneg %p215
        %p376 = pneg %p239
        %p377 = pneg %p236
        %s378 = smul.u32 8, %s24
        %p379 = scmp.lt.s32.totalorder %s378, 15
        %s380 = scalar_select %p379, %s378, 15
        %s381 = smul.addr %s380, 8
        %s382 = scalar_lea.vmem %s0, %s381
        %s383 = smul.u32 8, %s24
        %s384 = smul.u32 8, %s24
        %p385 = scmp.lt.s32.totalorder %s384, 15
        %s386 = scalar_select %p385, %s384, 15
        %s387 = smul.addr %s386, 8
        %s388 = scalar_lea.vmem %s7, %s387
        %s389 = smul.u32 8, %s24
        %p390 = scmp.eq.s32.totalorder %s24, 0
        // Predicated region
        $region65: #{_lstm_forward_jit.1} parent=47 // pred_check
          %p391 = pneg %p390
        $region66: #{_lstm_forward_jit.1} parent=47 // pred_check_branch
          %393 = sbr.rel (%p391) target = $region68
        $region67: #{_lstm_forward_jit.1} parent=47 // pred_region
          %394 = vst [vmem:[#allocation2] sm:$0xff] 0.0
          %395 = vst [vmem:[#allocation4] sm:$0xff] 0.0
          %396 = vst [vmem:[#allocation3] sm:$0xff] 0.0
          %397 = vst [vmem:[#allocation5] sm:$0xff] 0.0
        $region68: #{_lstm_forward_jit.1} parent=47 // pred_fallthru
          _
        %v398 = vld [vmem:[%s382] sm:$0xff]
        %v399 = vld [vmem:[#allocation2] sm:$0xff]
        %v400 = vld [vmem:[#allocation4] sm:$0xff]
        %v401 = vld [vmem:[#allocation7] sm:$0xff]
        %v402 = vld [vmem:[#allocation7 + $0x8] sm:$0xff]
        %v403 = vld [vmem:[#allocation7 + $0x10] sm:$0xff]
        %v404 = vld [vmem:[#allocation7 + $0x18] sm:$0xff]
        %v405 = vld [vmem:[#allocation7 + $0x20] sm:$0xff]
        %v406 = vld [vmem:[#allocation7 + $0x28] sm:$0xff]
        %v407 = vld [vmem:[#allocation7 + $0x30] sm:$0xff]
        %v408 = vld [vmem:[#allocation7 + $0x38] sm:$0xff]
        %v409 = vld [vmem:[#allocation7 + $0x40] sm:$0xff]
        %v410 = vld [vmem:[#allocation7 + $0x48] sm:$0xff]
        %v411 = vld [vmem:[#allocation7 + $0x50] sm:$0xff]
        %v412 = vld [vmem:[#allocation7 + $0x58] sm:$0xff]
        %v413 = vld [vmem:[#allocation7 + $0x60] sm:$0xff]
        %v414 = vld [vmem:[#allocation7 + $0x68] sm:$0xff]
        %v415 = vld [vmem:[#allocation7 + $0x70] sm:$0xff]
        %v416 = vld [vmem:[#allocation7 + $0x78] sm:$0xff]
        %v417 = vld [vmem:[#allocation7 + $0x80] sm:$0xff]
        %v418 = vld [vmem:[#allocation7 + $0x88] sm:$0xff]
        %v419 = vld [vmem:[#allocation7 + $0x90] sm:$0xff]
        %v420 = vld [vmem:[#allocation7 + $0x98] sm:$0xff]
        %v421 = vld [vmem:[#allocation7 + $0xa0] sm:$0xff]
        %v422 = vld [vmem:[#allocation7 + $0xa8] sm:$0xff]
        %v423 = vld [vmem:[#allocation7 + $0xb0] sm:$0xff]
        %v424 = vld [vmem:[#allocation7 + $0xb8] sm:$0xff]
        %v425 = vld [vmem:[#allocation7 + $0xc0] sm:$0xff]
        %v426 = vld [vmem:[#allocation7 + $0xc8] sm:$0xff]
        %v427 = vld [vmem:[#allocation7 + $0xd0] sm:$0xff]
        %v428 = vld [vmem:[#allocation7 + $0xd8] sm:$0xff]
        %v429 = vld [vmem:[#allocation7 + $0xe0] sm:$0xff]
        %v430 = vld [vmem:[#allocation7 + $0xe8] sm:$0xff]
        %v431 = vld [vmem:[#allocation7 + $0xf0] sm:$0xff]
        %v432 = vld [vmem:[#allocation7 + $0xf8] sm:$0xff]
        %v433 = vld [vmem:[#allocation7 + $0x100] sm:$0xff]
        %v434 = vld [vmem:[#allocation7 + $0x108] sm:$0xff]
        %v435 = vld [vmem:[#allocation7 + $0x110] sm:$0xff]
        %v436 = vld [vmem:[#allocation7 + $0x118] sm:$0xff]
        %v437 = vld [vmem:[#allocation7 + $0x120] sm:$0xff]
        %v438 = vld [vmem:[#allocation7 + $0x128] sm:$0xff]
        %v439 = vld [vmem:[#allocation7 + $0x130] sm:$0xff]
        %v440 = vld [vmem:[#allocation7 + $0x138] sm:$0xff]
        %v441 = vld [vmem:[#allocation7 + $0x140] sm:$0xff]
        %v442 = vld [vmem:[#allocation7 + $0x148] sm:$0xff]
        %v443 = vld [vmem:[#allocation7 + $0x150] sm:$0xff]
        %v444 = vld [vmem:[#allocation7 + $0x158] sm:$0xff]
        %v445 = vld [vmem:[#allocation7 + $0x160] sm:$0xff]
        %v446 = vld [vmem:[#allocation7 + $0x168] sm:$0xff]
        %v447 = vld [vmem:[#allocation7 + $0x170] sm:$0xff]
        %v448 = vld [vmem:[#allocation7 + $0x178] sm:$0xff]
        %v449 = vld [vmem:[#allocation7 + $0x180] sm:$0xff]
        %v450 = vld [vmem:[#allocation7 + $0x188] sm:$0xff]
        %v451 = vld [vmem:[#allocation7 + $0x190] sm:$0xff]
        %v452 = vld [vmem:[#allocation7 + $0x198] sm:$0xff]
        %v453 = vld [vmem:[#allocation7 + $0x1a0] sm:$0xff]
        %v454 = vld [vmem:[#allocation7 + $0x1a8] sm:$0xff]
        %v455 = vld [vmem:[#allocation7 + $0x1b0] sm:$0xff]
        %v456 = vld [vmem:[#allocation7 + $0x1b8] sm:$0xff]
        %v457 = vld [vmem:[#allocation7 + $0x1c0] sm:$0xff]
        %v458 = vld [vmem:[#allocation7 + $0x1c8] sm:$0xff]
        %v459 = vld [vmem:[#allocation7 + $0x1d0] sm:$0xff]
        %v460 = vld [vmem:[#allocation7 + $0x1d8] sm:$0xff]
        %v461 = vld [vmem:[#allocation7 + $0x1e0] sm:$0xff]
        %v462 = vld [vmem:[#allocation7 + $0x1e8] sm:$0xff]
        %v463 = vld [vmem:[#allocation7 + $0x1f0] sm:$0xff]
        %v464 = vld [vmem:[#allocation7 + $0x1f8] sm:$0xff]
        %v465 = vld [vmem:[#allocation9] sm:$0xff]
        %v466 = vld [vmem:[#allocation9 + $0x8] sm:$0xff]
        %v467 = vld [vmem:[#allocation9 + $0x10] sm:$0xff]
        %v468 = vld [vmem:[#allocation9 + $0x18] sm:$0xff]
        %v469 = vld [vmem:[#allocation9 + $0x20] sm:$0xff]
        %v470 = vld [vmem:[#allocation9 + $0x28] sm:$0xff]
        %v471 = vld [vmem:[#allocation9 + $0x30] sm:$0xff]
        %v472 = vld [vmem:[#allocation9 + $0x38] sm:$0xff]
        %v473 = vld [vmem:[#allocation9 + $0x40] sm:$0xff]
        %v474 = vld [vmem:[#allocation9 + $0x48] sm:$0xff]
        %v475 = vld [vmem:[#allocation9 + $0x50] sm:$0xff]
        %v476 = vld [vmem:[#allocation9 + $0x58] sm:$0xff]
        %v477 = vld [vmem:[#allocation9 + $0x60] sm:$0xff]
        %v478 = vld [vmem:[#allocation9 + $0x68] sm:$0xff]
        %v479 = vld [vmem:[#allocation9 + $0x70] sm:$0xff]
        %v480 = vld [vmem:[#allocation9 + $0x78] sm:$0xff]
        %v481 = vld [vmem:[#allocation9 + $0x80] sm:$0xff]
        %v482 = vld [vmem:[#allocation9 + $0x88] sm:$0xff]
        %v483 = vld [vmem:[#allocation9 + $0x90] sm:$0xff]
        %v484 = vld [vmem:[#allocation9 + $0x98] sm:$0xff]
        %v485 = vld [vmem:[#allocation9 + $0xa0] sm:$0xff]
        %v486 = vld [vmem:[#allocation9 + $0xa8] sm:$0xff]
        %v487 = vld [vmem:[#allocation9 + $0xb0] sm:$0xff]
        %v488 = vld [vmem:[#allocation9 + $0xb8] sm:$0xff]
        %v489 = vld [vmem:[#allocation9 + $0xc0] sm:$0xff]
        %v490 = vld [vmem:[#allocation9 + $0xc8] sm:$0xff]
        %v491 = vld [vmem:[#allocation9 + $0xd0] sm:$0xff]
        %v492 = vld [vmem:[#allocation9 + $0xd8] sm:$0xff]
        %v493 = vld [vmem:[#allocation9 + $0xe0] sm:$0xff]
        %v494 = vld [vmem:[#allocation9 + $0xe8] sm:$0xff]
        %v495 = vld [vmem:[#allocation9 + $0xf0] sm:$0xff]
        %v496 = vld [vmem:[#allocation9 + $0xf8] sm:$0xff]
        %v497 = vld [vmem:[#allocation9 + $0x100] sm:$0xff]
        %v498 = vld [vmem:[#allocation9 + $0x108] sm:$0xff]
        %v499 = vld [vmem:[#allocation9 + $0x110] sm:$0xff]
        %v500 = vld [vmem:[#allocation9 + $0x118] sm:$0xff]
        %v501 = vld [vmem:[#allocation9 + $0x120] sm:$0xff]
        %v502 = vld [vmem:[#allocation9 + $0x128] sm:$0xff]
        %v503 = vld [vmem:[#allocation9 + $0x130] sm:$0xff]
        %v504 = vld [vmem:[#allocation9 + $0x138] sm:$0xff]
        %v505 = vld [vmem:[#allocation9 + $0x140] sm:$0xff]
        %v506 = vld [vmem:[#allocation9 + $0x148] sm:$0xff]
        %v507 = vld [vmem:[#allocation9 + $0x150] sm:$0xff]
        %v508 = vld [vmem:[#allocation9 + $0x158] sm:$0xff]
        %v509 = vld [vmem:[#allocation9 + $0x160] sm:$0xff]
        %v510 = vld [vmem:[#allocation9 + $0x168] sm:$0xff]
        %v511 = vld [vmem:[#allocation9 + $0x170] sm:$0xff]
        %v512 = vld [vmem:[#allocation9 + $0x178] sm:$0xff]
        %v513 = vld [vmem:[#allocation9 + $0x180] sm:$0xff]
        %v514 = vld [vmem:[#allocation9 + $0x188] sm:$0xff]
        %v515 = vld [vmem:[#allocation9 + $0x190] sm:$0xff]
        %v516 = vld [vmem:[#allocation9 + $0x198] sm:$0xff]
        %v517 = vld [vmem:[#allocation9 + $0x1a0] sm:$0xff]
        %v518 = vld [vmem:[#allocation9 + $0x1a8] sm:$0xff]
        %v519 = vld [vmem:[#allocation9 + $0x1b0] sm:$0xff]
        %v520 = vld [vmem:[#allocation9 + $0x1b8] sm:$0xff]
        %v521 = vld [vmem:[#allocation9 + $0x1c0] sm:$0xff]
        %v522 = vld [vmem:[#allocation9 + $0x1c8] sm:$0xff]
        %v523 = vld [vmem:[#allocation9 + $0x1d0] sm:$0xff]
        %v524 = vld [vmem:[#allocation9 + $0x1d8] sm:$0xff]
        %v525 = vld [vmem:[#allocation9 + $0x1e0] sm:$0xff]
        %v526 = vld [vmem:[#allocation9 + $0x1e8] sm:$0xff]
        %v527 = vld [vmem:[#allocation9 + $0x1f0] sm:$0xff]
        %v528 = vld [vmem:[#allocation9 + $0x1f8] sm:$0xff]
        %529 = vmatprep.subr.mxu0 %v466
        %530 = vmatpush1.msra.mxu0 %v465
        %531 = vmatprep.subr.mxu0 %v470
        %532 = vmatpush1.msra.mxu0 %v469
        %533 = vmatprep.subr.mxu0 %v474
        %534 = vmatpush1.msra.mxu0 %v473
        %535 = vmatprep.subr.mxu0 %v478
        %536 = vmatpush1.msra.mxu0 %v477
        %537 = vmatprep.subr.mxu0 %v482
        %538 = vmatpush1.msra.mxu0 %v481
        %539 = vmatprep.subr.mxu0 %v486
        %540 = vmatpush1.msra.mxu0 %v485
        %541 = vmatprep.subr.mxu0 %v490
        %542 = vmatpush1.msra.mxu0 %v489
        %543 = vmatprep.subr.mxu0 %v494
        %544 = vmatpush1.msra.mxu0 %v493
        %545 = vmatprep.subr.mxu0 %v498
        %546 = vmatpush1.msra.mxu0 %v497
        %547 = vmatprep.subr.mxu0 %v502
        %548 = vmatpush1.msra.mxu0 %v501
        %549 = vmatprep.subr.mxu0 %v506
        %550 = vmatpush1.msra.mxu0 %v505
        %551 = vmatprep.subr.mxu0 %v510
        %552 = vmatpush1.msra.mxu0 %v509
        %553 = vmatprep.subr.mxu0 %v514
        %554 = vmatpush1.msra.mxu0 %v513
        %555 = vmatprep.subr.mxu0 %v518
        %556 = vmatpush1.msra.mxu0 %v517
        %557 = vmatprep.subr.mxu0 %v522
        %558 = vmatpush1.msra.mxu0 %v521
        %559 = vmatprep.subr.mxu0 %v526
        %560 = vmatpush1.msra.mxu0 %v525
        %561 = vmatprep.subr.mxu0 0.0
        %562 = vmatpush1.msra.mxu0 0.0
        %563 = vmatprep.subr.mxu0 0.0
        %564 = vmatpush1.msra.mxu0 0.0
        %565 = vmatprep.subr.mxu0 0.0
        %566 = vmatpush1.msra.mxu0 0.0
        %567 = vmatprep.subr.mxu0 0.0
        %568 = vmatpush1.msra.mxu0 0.0
        %569 = vmatprep.subr.mxu0 0.0
        %570 = vmatpush1.msra.mxu0 0.0
        %571 = vmatprep.subr.mxu0 0.0
        %572 = vmatpush1.msra.mxu0 0.0
        %573 = vmatprep.subr.mxu0 0.0
        %574 = vmatpush1.msra.mxu0 0.0
        %575 = vmatprep.subr.mxu0 0.0
        %576 = vmatpush1.msra.mxu0 0.0
        %577 = vmatprep.subr.mxu0 0.0
        %578 = vmatpush1.msra.mxu0 0.0
        %579 = vmatprep.subr.mxu0 0.0
        %580 = vmatpush1.msra.mxu0 0.0
        %581 = vmatprep.subr.mxu0 0.0
        %582 = vmatpush1.msra.mxu0 0.0
        %583 = vmatprep.subr.mxu0 0.0
        %584 = vmatpush1.msra.mxu0 0.0
        %585 = vmatprep.subr.mxu0 0.0
        %586 = vmatpush1.msra.mxu0 0.0
        %587 = vmatprep.subr.mxu0 0.0
        %588 = vmatpush1.msra.mxu0 0.0
        %589 = vmatprep.subr.mxu0 0.0
        %590 = vmatpush1.msra.mxu0 0.0
        %591 = vmatprep.subr.mxu0 0.0
        %592 = vmatpush1.msra.mxu0 0.0
        %593 = vmatprep.mubr.f32.mxu0 0.0
        %594 = vmatmul.mubr.f32.gmra.mrb[0].mxu0 %v399
        %v595 = vpop.f32.mrb[0].mxu0
        %v596 = vadd.f32 0.0, %v595
        %v597 = vpop.f32.mrb[0].mxu0
        %v598 = vadd.f32 0.0, %v597
        %599 = vdwg.mxu0
        %600 = vmatprep.subr.mxu0 %v468
        %601 = vmatpush1.msra.mxu0 %v467
        %602 = vmatprep.subr.mxu0 %v472
        %603 = vmatpush1.msra.mxu0 %v471
        %604 = vmatprep.subr.mxu0 %v476
        %605 = vmatpush1.msra.mxu0 %v475
        %606 = vmatprep.subr.mxu0 %v480
        %607 = vmatpush1.msra.mxu0 %v479
        %608 = vmatprep.subr.mxu0 %v484
        %609 = vmatpush1.msra.mxu0 %v483
        %610 = vmatprep.subr.mxu0 %v488
        %611 = vmatpush1.msra.mxu0 %v487
        %612 = vmatprep.subr.mxu0 %v492
        %613 = vmatpush1.msra.mxu0 %v491
        %614 = vmatprep.subr.mxu0 %v496
        %615 = vmatpush1.msra.mxu0 %v495
        %616 = vmatprep.subr.mxu0 %v500
        %617 = vmatpush1.msra.mxu0 %v499
        %618 = vmatprep.subr.mxu0 %v504
        %619 = vmatpush1.msra.mxu0 %v503
        %620 = vmatprep.subr.mxu0 %v508
        %621 = vmatpush1.msra.mxu0 %v507
        %622 = vmatprep.subr.mxu0 %v512
        %623 = vmatpush1.msra.mxu0 %v511
        %624 = vmatprep.subr.mxu0 %v516
        %625 = vmatpush1.msra.mxu0 %v515
        %626 = vmatprep.subr.mxu0 %v520
        %627 = vmatpush1.msra.mxu0 %v519
        %628 = vmatprep.subr.mxu0 %v524
        %629 = vmatpush1.msra.mxu0 %v523
        %630 = vmatprep.subr.mxu0 %v528
        %631 = vmatpush1.msra.mxu0 %v527
        %632 = vmatprep.subr.mxu0 0.0
        %633 = vmatpush1.msra.mxu0 0.0
        %634 = vmatprep.subr.mxu0 0.0
        %635 = vmatpush1.msra.mxu0 0.0
        %636 = vmatprep.subr.mxu0 0.0
        %637 = vmatpush1.msra.mxu0 0.0
        %638 = vmatprep.subr.mxu0 0.0
        %639 = vmatpush1.msra.mxu0 0.0
        %640 = vmatprep.subr.mxu0 0.0
        %641 = vmatpush1.msra.mxu0 0.0
        %642 = vmatprep.subr.mxu0 0.0
        %643 = vmatpush1.msra.mxu0 0.0
        %644 = vmatprep.subr.mxu0 0.0
        %645 = vmatpush1.msra.mxu0 0.0
        %646 = vmatprep.subr.mxu0 0.0
        %647 = vmatpush1.msra.mxu0 0.0
        %648 = vmatprep.subr.mxu0 0.0
        %649 = vmatpush1.msra.mxu0 0.0
        %650 = vmatprep.subr.mxu0 0.0
        %651 = vmatpush1.msra.mxu0 0.0
        %652 = vmatprep.subr.mxu0 0.0
        %653 = vmatpush1.msra.mxu0 0.0
        %654 = vmatprep.subr.mxu0 0.0
        %655 = vmatpush1.msra.mxu0 0.0
        %656 = vmatprep.subr.mxu0 0.0
        %657 = vmatpush1.msra.mxu0 0.0
        %658 = vmatprep.subr.mxu0 0.0
        %659 = vmatpush1.msra.mxu0 0.0
        %660 = vmatprep.subr.mxu0 0.0
        %661 = vmatpush1.msra.mxu0 0.0
        %662 = vmatprep.subr.mxu0 0.0
        %663 = vmatpush1.msra.mxu0 0.0
        %664 = vmatprep.mubr.f32.mxu0 0.0
        %665 = vmatmul.mubr.f32.gmra.mrb[0].mxu0 %v399
        %v666 = vpop.f32.mrb[0].mxu0
        %v667 = vadd.f32 0.0, %v666
        %v668 = vpop.f32.mrb[0].mxu0
        %v669 = vadd.f32 0.0, %v668
        %670 = vdwg.mxu0
        %671 = vmatprep.subr.mxu0 %v402
        %672 = vmatpush1.msra.mxu0 %v401
        %673 = vmatprep.subr.mxu0 %v406
        %674 = vmatpush1.msra.mxu0 %v405
        %675 = vmatprep.subr.mxu0 %v410
        %676 = vmatpush1.msra.mxu0 %v409
        %677 = vmatprep.subr.mxu0 %v414
        %678 = vmatpush1.msra.mxu0 %v413
        %679 = vmatprep.subr.mxu0 %v418
        %680 = vmatpush1.msra.mxu0 %v417
        %681 = vmatprep.subr.mxu0 %v422
        %682 = vmatpush1.msra.mxu0 %v421
        %683 = vmatprep.subr.mxu0 %v426
        %684 = vmatpush1.msra.mxu0 %v425
        %685 = vmatprep.subr.mxu0 %v430
        %686 = vmatpush1.msra.mxu0 %v429
        %687 = vmatprep.subr.mxu0 %v434
        %688 = vmatpush1.msra.mxu0 %v433
        %689 = vmatprep.subr.mxu0 %v438
        %690 = vmatpush1.msra.mxu0 %v437
        %691 = vmatprep.subr.mxu0 %v442
        %692 = vmatpush1.msra.mxu0 %v441
        %693 = vmatprep.subr.mxu0 %v446
        %694 = vmatpush1.msra.mxu0 %v445
        %695 = vmatprep.subr.mxu0 %v450
        %696 = vmatpush1.msra.mxu0 %v449
        %697 = vmatprep.subr.mxu0 %v454
        %698 = vmatpush1.msra.mxu0 %v453
        %699 = vmatprep.subr.mxu0 %v458
        %700 = vmatpush1.msra.mxu0 %v457
        %701 = vmatprep.subr.mxu0 %v462
        %702 = vmatpush1.msra.mxu0 %v461
        %703 = vmatprep.subr.mxu0 0.0
        %704 = vmatpush1.msra.mxu0 0.0
        %705 = vmatprep.subr.mxu0 0.0
        %706 = vmatpush1.msra.mxu0 0.0
        %707 = vmatprep.subr.mxu0 0.0
        %708 = vmatpush1.msra.mxu0 0.0
        %709 = vmatprep.subr.mxu0 0.0
        %710 = vmatpush1.msra.mxu0 0.0
        %711 = vmatprep.subr.mxu0 0.0
        %712 = vmatpush1.msra.mxu0 0.0
        %713 = vmatprep.subr.mxu0 0.0
        %714 = vmatpush1.msra.mxu0 0.0
        %715 = vmatprep.subr.mxu0 0.0
        %716 = vmatpush1.msra.mxu0 0.0
        %717 = vmatprep.subr.mxu0 0.0
        %718 = vmatpush1.msra.mxu0 0.0
        %719 = vmatprep.subr.mxu0 0.0
        %720 = vmatpush1.msra.mxu0 0.0
        %721 = vmatprep.subr.mxu0 0.0
        %722 = vmatpush1.msra.mxu0 0.0
        %723 = vmatprep.subr.mxu0 0.0
        %724 = vmatpush1.msra.mxu0 0.0
        %725 = vmatprep.subr.mxu0 0.0
        %726 = vmatpush1.msra.mxu0 0.0
        %727 = vmatprep.subr.mxu0 0.0
        %728 = vmatpush1.msra.mxu0 0.0
        %729 = vmatprep.subr.mxu0 0.0
        %730 = vmatpush1.msra.mxu0 0.0
        %731 = vmatprep.subr.mxu0 0.0
        %732 = vmatpush1.msra.mxu0 0.0
        %733 = vmatprep.subr.mxu0 0.0
        %734 = vmatpush1.msra.mxu0 0.0
        %735 = vmatprep.mubr.f32.mxu0 0.0
        %736 = vmatmul.mubr.f32.gmra.mrb[0].mxu0 %v398
        %v737 = vpop.f32.mrb[0].mxu0
        %v738 = vadd.f32 %v596, %v737
        %v739 = vpop.f32.mrb[0].mxu0
        %v740 = vadd.f32 %v598, %v739
        %741 = vdwg.mxu0
        %742 = vmatprep.subr.mxu0 %v404
        %743 = vmatpush1.msra.mxu0 %v403
        %744 = vmatprep.subr.mxu0 %v408
        %745 = vmatpush1.msra.mxu0 %v407
        %746 = vmatprep.subr.mxu0 %v412
        %747 = vmatpush1.msra.mxu0 %v411
        %748 = vmatprep.subr.mxu0 %v416
        %749 = vmatpush1.msra.mxu0 %v415
        %750 = vmatprep.subr.mxu0 %v420
        %751 = vmatpush1.msra.mxu0 %v419
        %752 = vmatprep.subr.mxu0 %v424
        %753 = vmatpush1.msra.mxu0 %v423
        %754 = vmatprep.subr.mxu0 %v428
        %755 = vmatpush1.msra.mxu0 %v427
        %756 = vmatprep.subr.mxu0 %v432
        %757 = vmatpush1.msra.mxu0 %v431
        %758 = vmatprep.subr.mxu0 %v436
        %759 = vmatpush1.msra.mxu0 %v435
        %760 = vmatprep.subr.mxu0 %v440
        %761 = vmatpush1.msra.mxu0 %v439
        %762 = vmatprep.subr.mxu0 %v444
        %763 = vmatpush1.msra.mxu0 %v443
        %764 = vmatprep.subr.mxu0 %v448
        %765 = vmatpush1.msra.mxu0 %v447
        %766 = vmatprep.subr.mxu0 %v452
        %767 = vmatpush1.msra.mxu0 %v451
        %768 = vmatprep.subr.mxu0 %v456
        %769 = vmatpush1.msra.mxu0 %v455
        %770 = vmatprep.subr.mxu0 %v460
        %771 = vmatpush1.msra.mxu0 %v459
        %772 = vmatprep.subr.mxu0 %v464
        %773 = vmatpush1.msra.mxu0 %v463
        %774 = vmatprep.subr.mxu0 0.0
        %775 = vmatpush1.msra.mxu0 0.0
        %776 = vmatprep.subr.mxu0 0.0
        %777 = vmatpush1.msra.mxu0 0.0
        %778 = vmatprep.subr.mxu0 0.0
        %779 = vmatpush1.msra.mxu0 0.0
        %780 = vmatprep.subr.mxu0 0.0
        %781 = vmatpush1.msra.mxu0 0.0
        %782 = vmatprep.subr.mxu0 0.0
        %783 = vmatpush1.msra.mxu0 0.0
        %784 = vmatprep.subr.mxu0 0.0
        %785 = vmatpush1.msra.mxu0 0.0
        %786 = vmatprep.subr.mxu0 0.0
        %787 = vmatpush1.msra.mxu0 0.0
        %788 = vmatprep.subr.mxu0 0.0
        %789 = vmatpush1.msra.mxu0 0.0
        %790 = vmatprep.subr.mxu0 0.0
        %791 = vmatpush1.msra.mxu0 0.0
        %792 = vmatprep.subr.mxu0 0.0
        %793 = vmatpush1.msra.mxu0 0.0
        %794 = vmatprep.subr.mxu0 0.0
        %795 = vmatpush1.msra.mxu0 0.0
        %796 = vmatprep.subr.mxu0 0.0
        %797 = vmatpush1.msra.mxu0 0.0
        %798 = vmatprep.subr.mxu0 0.0
        %799 = vmatpush1.msra.mxu0 0.0
        %800 = vmatprep.subr.mxu0 0.0
        %801 = vmatpush1.msra.mxu0 0.0
        %802 = vmatprep.subr.mxu0 0.0
        %803 = vmatpush1.msra.mxu0 0.0
        %804 = vmatprep.subr.mxu0 0.0
        %805 = vmatpush1.msra.mxu0 0.0
        %806 = vmatprep.mubr.f32.mxu0 0.0
        %807 = vmatmul.mubr.f32.gmra.mrb[0].mxu0 %v398
        %v808 = vpop.f32.mrb[0].mxu0
        %v809 = vadd.f32 %v667, %v808
        %v810 = vpop.f32.mrb[0].mxu0
        %v811 = vadd.f32 %v669, %v810
        %812 = vdwg.mxu0
        %v813 = vxor.u32 %v738, 2147483648
        %v814 = vmul.f32 %v813, 1.442695
        %v815 = vpow.pop %v814
        %v816 = vadd.f32 %v815, 1.0
        %v817 = vrcp.pop %v816
        %v818 = vmul.f32 1.0, %v817
        %v819 = vxor.u32 %v740, 2147483648
        %v820 = vmul.f32 %v819, 1.442695
        %v821 = vpow.pop %v820
        %v822 = vadd.f32 %v821, 1.0
        %v823 = vrcp.pop %v822
        %v824 = vmul.f32 1.0, %v823
        %v825 = vtanh.pop %v809
        %v826 = vxor.u32 %v811, 2147483648
        %v827 = vmul.f32 %v826, 1.442695
        %v828 = vpow.pop %v827
        %v829 = vadd.f32 %v828, 1.0
        %v830 = vrcp.pop %v829
        %v831 = vmul.f32 1.0, %v830
        %v832 = vmul.f32 %v824, %v400
        %v833 = vmul.f32 %v818, %v825
        %v834 = vadd.f32 %v832, %v833
        %v835 = vtanh.pop %v834
        %v836 = vmul.f32 %v831, %v835
        %837 = vst [vmem:[#allocation2] sm:$0xff] %v836
        %838 = vst [vmem:[#allocation4] sm:$0xff] %v834
        %v839 = vld [vmem:[#allocation3] sm:$0xff]
        %v840 = vld [vmem:[#allocation5] sm:$0xff]
        %v841 = vld [vmem:[#allocation11] sm:$0xff]
        %v842 = vld [vmem:[#allocation11 + $0x8] sm:$0xff]
        %v843 = vld [vmem:[#allocation11 + $0x10] sm:$0xff]
        %v844 = vld [vmem:[#allocation11 + $0x18] sm:$0xff]
        %v845 = vld [vmem:[#allocation11 + $0x20] sm:$0xff]
        %v846 = vld [vmem:[#allocation11 + $0x28] sm:$0xff]
        %v847 = vld [vmem:[#allocation11 + $0x30] sm:$0xff]
        %v848 = vld [vmem:[#allocation11 + $0x38] sm:$0xff]
        %v849 = vld [vmem:[#allocation11 + $0x40] sm:$0xff]
        %v850 = vld [vmem:[#allocation11 + $0x48] sm:$0xff]
        %v851 = vld [vmem:[#allocation11 + $0x50] sm:$0xff]
        %v852 = vld [vmem:[#allocation11 + $0x58] sm:$0xff]
        %v853 = vld [vmem:[#allocation11 + $0x60] sm:$0xff]
        %v854 = vld [vmem:[#allocation11 + $0x68] sm:$0xff]
        %v855 = vld [vmem:[#allocation11 + $0x70] sm:$0xff]
        %v856 = vld [vmem:[#allocation11 + $0x78] sm:$0xff]
        %v857 = vld [vmem:[#allocation11 + $0x80] sm:$0xff]
        %v858 = vld [vmem:[#allocation11 + $0x88] sm:$0xff]
        %v859 = vld [vmem:[#allocation11 + $0x90] sm:$0xff]
        %v860 = vld [vmem:[#allocation11 + $0x98] sm:$0xff]
        %v861 = vld [vmem:[#allocation11 + $0xa0] sm:$0xff]
        %v862 = vld [vmem:[#allocation11 + $0xa8] sm:$0xff]
        %v863 = vld [vmem:[#allocation11 + $0xb0] sm:$0xff]
        %v864 = vld [vmem:[#allocation11 + $0xb8] sm:$0xff]
        %v865 = vld [vmem:[#allocation11 + $0xc0] sm:$0xff]
        %v866 = vld [vmem:[#allocation11 + $0xc8] sm:$0xff]
        %v867 = vld [vmem:[#allocation11 + $0xd0] sm:$0xff]
        %v868 = vld [vmem:[#allocation11 + $0xd8] sm:$0xff]
        %v869 = vld [vmem:[#allocation11 + $0xe0] sm:$0xff]
        %v870 = vld [vmem:[#allocation11 + $0xe8] sm:$0xff]
        %v871 = vld [vmem:[#allocation11 + $0xf0] sm:$0xff]
        %v872 = vld [vmem:[#allocation11 + $0xf8] sm:$0xff]
        %v873 = vld [vmem:[#allocation11 + $0x100] sm:$0xff]
        %v874 = vld [vmem:[#allocation11 + $0x108] sm:$0xff]
        %v875 = vld [vmem:[#allocation11 + $0x110] sm:$0xff]
        %v876 = vld [vmem:[#allocation11 + $0x118] sm:$0xff]
        %v877 = vld [vmem:[#allocation11 + $0x120] sm:$0xff]
        %v878 = vld [vmem:[#allocation11 + $0x128] sm:$0xff]
        %v879 = vld [vmem:[#allocation11 + $0x130] sm:$0xff]
        %v880 = vld [vmem:[#allocation11 + $0x138] sm:$0xff]
        %v881 = vld [vmem:[#allocation11 + $0x140] sm:$0xff]
        %v882 = vld [vmem:[#allocation11 + $0x148] sm:$0xff]
        %v883 = vld [vmem:[#allocation11 + $0x150] sm:$0xff]
        %v884 = vld [vmem:[#allocation11 + $0x158] sm:$0xff]
        %v885 = vld [vmem:[#allocation11 + $0x160] sm:$0xff]
        %v886 = vld [vmem:[#allocation11 + $0x168] sm:$0xff]
        %v887 = vld [vmem:[#allocation11 + $0x170] sm:$0xff]
        %v888 = vld [vmem:[#allocation11 + $0x178] sm:$0xff]
        %v889 = vld [vmem:[#allocation11 + $0x180] sm:$0xff]
        %v890 = vld [vmem:[#allocation11 + $0x188] sm:$0xff]
        %v891 = vld [vmem:[#allocation11 + $0x190] sm:$0xff]
        %v892 = vld [vmem:[#allocation11 + $0x198] sm:$0xff]
        %v893 = vld [vmem:[#allocation11 + $0x1a0] sm:$0xff]
        %v894 = vld [vmem:[#allocation11 + $0x1a8] sm:$0xff]
        %v895 = vld [vmem:[#allocation11 + $0x1b0] sm:$0xff]
        %v896 = vld [vmem:[#allocation11 + $0x1b8] sm:$0xff]
        %v897 = vld [vmem:[#allocation11 + $0x1c0] sm:$0xff]
        %v898 = vld [vmem:[#allocation11 + $0x1c8] sm:$0xff]
        %v899 = vld [vmem:[#allocation11 + $0x1d0] sm:$0xff]
        %v900 = vld [vmem:[#allocation11 + $0x1d8] sm:$0xff]
        %v901 = vld [vmem:[#allocation11 + $0x1e0] sm:$0xff]
        %v902 = vld [vmem:[#allocation11 + $0x1e8] sm:$0xff]
        %v903 = vld [vmem:[#allocation11 + $0x1f0] sm:$0xff]
        %v904 = vld [vmem:[#allocation11 + $0x1f8] sm:$0xff]
        %v905 = vld [vmem:[#allocation12] sm:$0xff]
        %v906 = vld [vmem:[#allocation12 + $0x8] sm:$0xff]
        %v907 = vld [vmem:[#allocation12 + $0x10] sm:$0xff]
        %v908 = vld [vmem:[#allocation12 + $0x18] sm:$0xff]
        %v909 = vld [vmem:[#allocation12 + $0x20] sm:$0xff]
        %v910 = vld [vmem:[#allocation12 + $0x28] sm:$0xff]
        %v911 = vld [vmem:[#allocation12 + $0x30] sm:$0xff]
        %v912 = vld [vmem:[#allocation12 + $0x38] sm:$0xff]
        %v913 = vld [vmem:[#allocation12 + $0x40] sm:$0xff]
        %v914 = vld [vmem:[#allocation12 + $0x48] sm:$0xff]
        %v915 = vld [vmem:[#allocation12 + $0x50] sm:$0xff]
        %v916 = vld [vmem:[#allocation12 + $0x58] sm:$0xff]
        %v917 = vld [vmem:[#allocation12 + $0x60] sm:$0xff]
        %v918 = vld [vmem:[#allocation12 + $0x68] sm:$0xff]
        %v919 = vld [vmem:[#allocation12 + $0x70] sm:$0xff]
        %v920 = vld [vmem:[#allocation12 + $0x78] sm:$0xff]
        %v921 = vld [vmem:[#allocation12 + $0x80] sm:$0xff]
        %v922 = vld [vmem:[#allocation12 + $0x88] sm:$0xff]
        %v923 = vld [vmem:[#allocation12 + $0x90] sm:$0xff]
        %v924 = vld [vmem:[#allocation12 + $0x98] sm:$0xff]
        %v925 = vld [vmem:[#allocation12 + $0xa0] sm:$0xff]
        %v926 = vld [vmem:[#allocation12 + $0xa8] sm:$0xff]
        %v927 = vld [vmem:[#allocation12 + $0xb0] sm:$0xff]
        %v928 = vld [vmem:[#allocation12 + $0xb8] sm:$0xff]
        %v929 = vld [vmem:[#allocation12 + $0xc0] sm:$0xff]
        %v930 = vld [vmem:[#allocation12 + $0xc8] sm:$0xff]
        %v931 = vld [vmem:[#allocation12 + $0xd0] sm:$0xff]
        %v932 = vld [vmem:[#allocation12 + $0xd8] sm:$0xff]
        %v933 = vld [vmem:[#allocation12 + $0xe0] sm:$0xff]
        %v934 = vld [vmem:[#allocation12 + $0xe8] sm:$0xff]
        %v935 = vld [vmem:[#allocation12 + $0xf0] sm:$0xff]
        %v936 = vld [vmem:[#allocation12 + $0xf8] sm:$0xff]
        %v937 = vld [vmem:[#allocation12 + $0x100] sm:$0xff]
        %v938 = vld [vmem:[#allocation12 + $0x108] sm:$0xff]
        %v939 = vld [vmem:[#allocation12 + $0x110] sm:$0xff]
        %v940 = vld [vmem:[#allocation12 + $0x118] sm:$0xff]
        %v941 = vld [vmem:[#allocation12 + $0x120] sm:$0xff]
        %v942 = vld [vmem:[#allocation12 + $0x128] sm:$0xff]
        %v943 = vld [vmem:[#allocation12 + $0x130] sm:$0xff]
        %v944 = vld [vmem:[#allocation12 + $0x138] sm:$0xff]
        %v945 = vld [vmem:[#allocation12 + $0x140] sm:$0xff]
        %v946 = vld [vmem:[#allocation12 + $0x148] sm:$0xff]
        %v947 = vld [vmem:[#allocation12 + $0x150] sm:$0xff]
        %v948 = vld [vmem:[#allocation12 + $0x158] sm:$0xff]
        %v949 = vld [vmem:[#allocation12 + $0x160] sm:$0xff]
        %v950 = vld [vmem:[#allocation12 + $0x168] sm:$0xff]
        %v951 = vld [vmem:[#allocation12 + $0x170] sm:$0xff]
        %v952 = vld [vmem:[#allocation12 + $0x178] sm:$0xff]
        %v953 = vld [vmem:[#allocation12 + $0x180] sm:$0xff]
        %v954 = vld [vmem:[#allocation12 + $0x188] sm:$0xff]
        %v955 = vld [vmem:[#allocation12 + $0x190] sm:$0xff]
        %v956 = vld [vmem:[#allocation12 + $0x198] sm:$0xff]
        %v957 = vld [vmem:[#allocation12 + $0x1a0] sm:$0xff]
        %v958 = vld [vmem:[#allocation12 + $0x1a8] sm:$0xff]
        %v959 = vld [vmem:[#allocation12 + $0x1b0] sm:$0xff]
        %v960 = vld [vmem:[#allocation12 + $0x1b8] sm:$0xff]
        %v961 = vld [vmem:[#allocation12 + $0x1c0] sm:$0xff]
        %v962 = vld [vmem:[#allocation12 + $0x1c8] sm:$0xff]
        %v963 = vld [vmem:[#allocation12 + $0x1d0] sm:$0xff]
        %v964 = vld [vmem:[#allocation12 + $0x1d8] sm:$0xff]
        %v965 = vld [vmem:[#allocation12 + $0x1e0] sm:$0xff]
        %v966 = vld [vmem:[#allocation12 + $0x1e8] sm:$0xff]
        %v967 = vld [vmem:[#allocation12 + $0x1f0] sm:$0xff]
        %v968 = vld [vmem:[#allocation12 + $0x1f8] sm:$0xff]
        %969 = vmatprep.subr.mxu0 %v906
        %970 = vmatpush1.msra.mxu0 %v905
        %971 = vmatprep.subr.mxu0 %v910
        %972 = vmatpush1.msra.mxu0 %v909
        %973 = vmatprep.subr.mxu0 %v914
        %974 = vmatpush1.msra.mxu0 %v913
        %975 = vmatprep.subr.mxu0 %v918
        %976 = vmatpush1.msra.mxu0 %v917
        %977 = vmatprep.subr.mxu0 %v922
        %978 = vmatpush1.msra.mxu0 %v921
        %979 = vmatprep.subr.mxu0 %v926
        %980 = vmatpush1.msra.mxu0 %v925
        %981 = vmatprep.subr.mxu0 %v930
        %982 = vmatpush1.msra.mxu0 %v929
        %983 = vmatprep.subr.mxu0 %v934
        %984 = vmatpush1.msra.mxu0 %v933
        %985 = vmatprep.subr.mxu0 %v938
        %986 = vmatpush1.msra.mxu0 %v937
        %987 = vmatprep.subr.mxu0 %v942
        %988 = vmatpush1.msra.mxu0 %v941
        %989 = vmatprep.subr.mxu0 %v946
        %990 = vmatpush1.msra.mxu0 %v945
        %991 = vmatprep.subr.mxu0 %v950
        %992 = vmatpush1.msra.mxu0 %v949
        %993 = vmatprep.subr.mxu0 %v954
        %994 = vmatpush1.msra.mxu0 %v953
        %995 = vmatprep.subr.mxu0 %v958
        %996 = vmatpush1.msra.mxu0 %v957
        %997 = vmatprep.subr.mxu0 %v962
        %998 = vmatpush1.msra.mxu0 %v961
        %999 = vmatprep.subr.mxu0 %v966
        %1000 = vmatpush1.msra.mxu0 %v965
        %1001 = vmatprep.subr.mxu0 0.0
        %1002 = vmatpush1.msra.mxu0 0.0
        %1003 = vmatprep.subr.mxu0 0.0
        %1004 = vmatpush1.msra.mxu0 0.0
        %1005 = vmatprep.subr.mxu0 0.0
        %1006 = vmatpush1.msra.mxu0 0.0
        %1007 = vmatprep.subr.mxu0 0.0
        %1008 = vmatpush1.msra.mxu0 0.0
        %1009 = vmatprep.subr.mxu0 0.0
        %1010 = vmatpush1.msra.mxu0 0.0
        %1011 = vmatprep.subr.mxu0 0.0
        %1012 = vmatpush1.msra.mxu0 0.0
        %1013 = vmatprep.subr.mxu0 0.0
        %1014 = vmatpush1.msra.mxu0 0.0
        %1015 = vmatprep.subr.mxu0 0.0
        %1016 = vmatpush1.msra.mxu0 0.0
        %1017 = vmatprep.subr.mxu0 0.0
        %1018 = vmatpush1.msra.mxu0 0.0
        %1019 = vmatprep.subr.mxu0 0.0
        %1020 = vmatpush1.msra.mxu0 0.0
        %1021 = vmatprep.subr.mxu0 0.0
        %1022 = vmatpush1.msra.mxu0 0.0
        %1023 = vmatprep.subr.mxu0 0.0
        %1024 = vmatpush1.msra.mxu0 0.0
        %1025 = vmatprep.subr.mxu0 0.0
        %1026 = vmatpush1.msra.mxu0 0.0
        %1027 = vmatprep.subr.mxu0 0.0
        %1028 = vmatpush1.msra.mxu0 0.0
        %1029 = vmatprep.subr.mxu0 0.0
        %1030 = vmatpush1.msra.mxu0 0.0
        %1031 = vmatprep.subr.mxu0 0.0
        %1032 = vmatpush1.msra.mxu0 0.0
        %1033 = vmatprep.mubr.f32.mxu0 0.0
        %1034 = vmatmul.mubr.f32.gmra.mrb[0].mxu0 %v839
        %v1035 = vpop.f32.mrb[0].mxu0
        %v1036 = vadd.f32 0.0, %v1035
        %v1037 = vpop.f32.mrb[0].mxu0
        %v1038 = vadd.f32 0.0, %v1037
        %1039 = vdwg.mxu0
        %1040 = vmatprep.subr.mxu0 %v908
        %1041 = vmatpush1.msra.mxu0 %v907
        %1042 = vmatprep.subr.mxu0 %v912
        %1043 = vmatpush1.msra.mxu0 %v911
        %1044 = vmatprep.subr.mxu0 %v916
        %1045 = vmatpush1.msra.mxu0 %v915
        %1046 = vmatprep.subr.mxu0 %v920
        %1047 = vmatpush1.msra.mxu0 %v919
        %1048 = vmatprep.subr.mxu0 %v924
        %1049 = vmatpush1.msra.mxu0 %v923
        %1050 = vmatprep.subr.mxu0 %v928
        %1051 = vmatpush1.msra.mxu0 %v927
        %1052 = vmatprep.subr.mxu0 %v932
        %1053 = vmatpush1.msra.mxu0 %v931
        %1054 = vmatprep.subr.mxu0 %v936
        %1055 = vmatpush1.msra.mxu0 %v935
        %1056 = vmatprep.subr.mxu0 %v940
        %1057 = vmatpush1.msra.mxu0 %v939
        %1058 = vmatprep.subr.mxu0 %v944
        %1059 = vmatpush1.msra.mxu0 %v943
        %1060 = vmatprep.subr.mxu0 %v948
        %1061 = vmatpush1.msra.mxu0 %v947
        %1062 = vmatprep.subr.mxu0 %v952
        %1063 = vmatpush1.msra.mxu0 %v951
        %1064 = vmatprep.subr.mxu0 %v956
        %1065 = vmatpush1.msra.mxu0 %v955
        %1066 = vmatprep.subr.mxu0 %v960
        %1067 = vmatpush1.msra.mxu0 %v959
        %1068 = vmatprep.subr.mxu0 %v964
        %1069 = vmatpush1.msra.mxu0 %v963
        %1070 = vmatprep.subr.mxu0 %v968
        %1071 = vmatpush1.msra.mxu0 %v967
        %1072 = vmatprep.subr.mxu0 0.0
        %1073 = vmatpush1.msra.mxu0 0.0
        %1074 = vmatprep.subr.mxu0 0.0
        %1075 = vmatpush1.msra.mxu0 0.0
        %1076 = vmatprep.subr.mxu0 0.0
        %1077 = vmatpush1.msra.mxu0 0.0
        %1078 = vmatprep.subr.mxu0 0.0
        %1079 = vmatpush1.msra.mxu0 0.0
        %1080 = vmatprep.subr.mxu0 0.0
        %1081 = vmatpush1.msra.mxu0 0.0
        %1082 = vmatprep.subr.mxu0 0.0
        %1083 = vmatpush1.msra.mxu0 0.0
        %1084 = vmatprep.subr.mxu0 0.0
        %1085 = vmatpush1.msra.mxu0 0.0
        %1086 = vmatprep.subr.mxu0 0.0
        %1087 = vmatpush1.msra.mxu0 0.0
        %1088 = vmatprep.subr.mxu0 0.0
        %1089 = vmatpush1.msra.mxu0 0.0
        %1090 = vmatprep.subr.mxu0 0.0
        %1091 = vmatpush1.msra.mxu0 0.0
        %1092 = vmatprep.subr.mxu0 0.0
        %1093 = vmatpush1.msra.mxu0 0.0
        %1094 = vmatprep.subr.mxu0 0.0
        %1095 = vmatpush1.msra.mxu0 0.0
        %1096 = vmatprep.subr.mxu0 0.0
        %1097 = vmatpush1.msra.mxu0 0.0
        %1098 = vmatprep.subr.mxu0 0.0
        %1099 = vmatpush1.msra.mxu0 0.0
        %1100 = vmatprep.subr.mxu0 0.0
        %1101 = vmatpush1.msra.mxu0 0.0
        %1102 = vmatprep.subr.mxu0 0.0
        %1103 = vmatpush1.msra.mxu0 0.0
        %1104 = vmatprep.mubr.f32.mxu0 0.0
        %1105 = vmatmul.mubr.f32.gmra.mrb[0].mxu0 %v839
        %v1106 = vpop.f32.mrb[0].mxu0
        %v1107 = vadd.f32 0.0, %v1106
        %v1108 = vpop.f32.mrb[0].mxu0
        %v1109 = vadd.f32 0.0, %v1108
        %1110 = vdwg.mxu0
        %1111 = vmatprep.subr.mxu0 %v842
        %1112 = vmatpush1.msra.mxu0 %v841
        %1113 = vmatprep.subr.mxu0 %v846
        %1114 = vmatpush1.msra.mxu0 %v845
        %1115 = vmatprep.subr.mxu0 %v850
        %1116 = vmatpush1.msra.mxu0 %v849
        %1117 = vmatprep.subr.mxu0 %v854
        %1118 = vmatpush1.msra.mxu0 %v853
        %1119 = vmatprep.subr.mxu0 %v858
        %1120 = vmatpush1.msra.mxu0 %v857
        %1121 = vmatprep.subr.mxu0 %v862
        %1122 = vmatpush1.msra.mxu0 %v861
        %1123 = vmatprep.subr.mxu0 %v866
        %1124 = vmatpush1.msra.mxu0 %v865
        %1125 = vmatprep.subr.mxu0 %v870
        %1126 = vmatpush1.msra.mxu0 %v869
        %1127 = vmatprep.subr.mxu0 %v874
        %1128 = vmatpush1.msra.mxu0 %v873
        %1129 = vmatprep.subr.mxu0 %v878
        %1130 = vmatpush1.msra.mxu0 %v877
        %1131 = vmatprep.subr.mxu0 %v882
        %1132 = vmatpush1.msra.mxu0 %v881
        %1133 = vmatprep.subr.mxu0 %v886
        %1134 = vmatpush1.msra.mxu0 %v885
        %1135 = vmatprep.subr.mxu0 %v890
        %1136 = vmatpush1.msra.mxu0 %v889
        %1137 = vmatprep.subr.mxu0 %v894
        %1138 = vmatpush1.msra.mxu0 %v893
        %1139 = vmatprep.subr.mxu0 %v898
        %1140 = vmatpush1.msra.mxu0 %v897
        %1141 = vmatprep.subr.mxu0 %v902
        %1142 = vmatpush1.msra.mxu0 %v901
        %1143 = vmatprep.subr.mxu0 0.0
        %1144 = vmatpush1.msra.mxu0 0.0
        %1145 = vmatprep.subr.mxu0 0.0
        %1146 = vmatpush1.msra.mxu0 0.0
        %1147 = vmatprep.subr.mxu0 0.0
        %1148 = vmatpush1.msra.mxu0 0.0
        %1149 = vmatprep.subr.mxu0 0.0
        %1150 = vmatpush1.msra.mxu0 0.0
        %1151 = vmatprep.subr.mxu0 0.0
        %1152 = vmatpush1.msra.mxu0 0.0
        %1153 = vmatprep.subr.mxu0 0.0
        %1154 = vmatpush1.msra.mxu0 0.0
        %1155 = vmatprep.subr.mxu0 0.0
        %1156 = vmatpush1.msra.mxu0 0.0
        %1157 = vmatprep.subr.mxu0 0.0
        %1158 = vmatpush1.msra.mxu0 0.0
        %1159 = vmatprep.subr.mxu0 0.0
        %1160 = vmatpush1.msra.mxu0 0.0
        %1161 = vmatprep.subr.mxu0 0.0
        %1162 = vmatpush1.msra.mxu0 0.0
        %1163 = vmatprep.subr.mxu0 0.0
        %1164 = vmatpush1.msra.mxu0 0.0
        %1165 = vmatprep.subr.mxu0 0.0
        %1166 = vmatpush1.msra.mxu0 0.0
        %1167 = vmatprep.subr.mxu0 0.0
        %1168 = vmatpush1.msra.mxu0 0.0
        %1169 = vmatprep.subr.mxu0 0.0
        %1170 = vmatpush1.msra.mxu0 0.0
        %1171 = vmatprep.subr.mxu0 0.0
        %1172 = vmatpush1.msra.mxu0 0.0
        %1173 = vmatprep.subr.mxu0 0.0
        %1174 = vmatpush1.msra.mxu0 0.0
        %1175 = vmatprep.mubr.f32.mxu0 0.0
        %1176 = vmatmul.mubr.f32.gmra.mrb[0].mxu0 %v836
        %v1177 = vpop.f32.mrb[0].mxu0
        %v1178 = vadd.f32 %v1036, %v1177
        %v1179 = vpop.f32.mrb[0].mxu0
        %v1180 = vadd.f32 %v1038, %v1179
        %1181 = vdwg.mxu0
        %1182 = vmatprep.subr.mxu0 %v844
        %1183 = vmatpush1.msra.mxu0 %v843
        %1184 = vmatprep.subr.mxu0 %v848
        %1185 = vmatpush1.msra.mxu0 %v847
        %1186 = vmatprep.subr.mxu0 %v852
        %1187 = vmatpush1.msra.mxu0 %v851
        %1188 = vmatprep.subr.mxu0 %v856
        %1189 = vmatpush1.msra.mxu0 %v855
        %1190 = vmatprep.subr.mxu0 %v860
        %1191 = vmatpush1.msra.mxu0 %v859
        %1192 = vmatprep.subr.mxu0 %v864
        %1193 = vmatpush1.msra.mxu0 %v863
        %1194 = vmatprep.subr.mxu0 %v868
        %1195 = vmatpush1.msra.mxu0 %v867
        %1196 = vmatprep.subr.mxu0 %v872
        %1197 = vmatpush1.msra.mxu0 %v871
        %1198 = vmatprep.subr.mxu0 %v876
        %1199 = vmatpush1.msra.mxu0 %v875
        %1200 = vmatprep.subr.mxu0 %v880
        %1201 = vmatpush1.msra.mxu0 %v879
        %1202 = vmatprep.subr.mxu0 %v884
        %1203 = vmatpush1.msra.mxu0 %v883
        %1204 = vmatprep.subr.mxu0 %v888
        %1205 = vmatpush1.msra.mxu0 %v887
        %1206 = vmatprep.subr.mxu0 %v892
        %1207 = vmatpush1.msra.mxu0 %v891
        %1208 = vmatprep.subr.mxu0 %v896
        %1209 = vmatpush1.msra.mxu0 %v895
        %1210 = vmatprep.subr.mxu0 %v900
        %1211 = vmatpush1.msra.mxu0 %v899
        %1212 = vmatprep.subr.mxu0 %v904
        %1213 = vmatpush1.msra.mxu0 %v903
        %1214 = vmatprep.subr.mxu0 0.0
        %1215 = vmatpush1.msra.mxu0 0.0
        %1216 = vmatprep.subr.mxu0 0.0
        %1217 = vmatpush1.msra.mxu0 0.0
        %1218 = vmatprep.subr.mxu0 0.0
        %1219 = vmatpush1.msra.mxu0 0.0
        %1220 = vmatprep.subr.mxu0 0.0
        %1221 = vmatpush1.msra.mxu0 0.0
        %1222 = vmatprep.subr.mxu0 0.0
        %1223 = vmatpush1.msra.mxu0 0.0
        %1224 = vmatprep.subr.mxu0 0.0
        %1225 = vmatpush1.msra.mxu0 0.0
        %1226 = vmatprep.subr.mxu0 0.0
        %1227 = vmatpush1.msra.mxu0 0.0
        %1228 = vmatprep.subr.mxu0 0.0
        %1229 = vmatpush1.msra.mxu0 0.0
        %1230 = vmatprep.subr.mxu0 0.0
        %1231 = vmatpush1.msra.mxu0 0.0
        %1232 = vmatprep.subr.mxu0 0.0
        %1233 = vmatpush1.msra.mxu0 0.0
        %1234 = vmatprep.subr.mxu0 0.0
        %1235 = vmatpush1.msra.mxu0 0.0
        %1236 = vmatprep.subr.mxu0 0.0
        %1237 = vmatpush1.msra.mxu0 0.0
        %1238 = vmatprep.subr.mxu0 0.0
        %1239 = vmatpush1.msra.mxu0 0.0
        %1240 = vmatprep.subr.mxu0 0.0
        %1241 = vmatpush1.msra.mxu0 0.0
        %1242 = vmatprep.subr.mxu0 0.0
        %1243 = vmatpush1.msra.mxu0 0.0
        %1244 = vmatprep.subr.mxu0 0.0
        %1245 = vmatpush1.msra.mxu0 0.0
        %1246 = vmatprep.mubr.f32.mxu0 0.0
        %1247 = vmatmul.mubr.f32.gmra.mrb[0].mxu0 %v836
        %v1248 = vpop.f32.mrb[0].mxu0
        %v1249 = vadd.f32 %v1107, %v1248
        %v1250 = vpop.f32.mrb[0].mxu0
        %v1251 = vadd.f32 %v1109, %v1250
        %1252 = vdwg.mxu0
        %v1253 = vxor.u32 %v1178, 2147483648
        %v1254 = vmul.f32 %v1253, 1.442695
        %v1255 = vpow.pop %v1254
        %v1256 = vadd.f32 %v1255, 1.0
        %v1257 = vrcp.pop %v1256
        %v1258 = vmul.f32 1.0, %v1257
        %v1259 = vxor.u32 %v1180, 2147483648
        %v1260 = vmul.f32 %v1259, 1.442695
        %v1261 = vpow.pop %v1260
        %v1262 = vadd.f32 %v1261, 1.0
        %v1263 = vrcp.pop %v1262
        %v1264 = vmul.f32 1.0, %v1263
        %v1265 = vtanh.pop %v1249
        %v1266 = vxor.u32 %v1251, 2147483648
        %v1267 = vmul.f32 %v1266, 1.442695
        %v1268 = vpow.pop %v1267
        %v1269 = vadd.f32 %v1268, 1.0
        %v1270 = vrcp.pop %v1269
        %v1271 = vmul.f32 1.0, %v1270
        %v1272 = vmul.f32 %v1264, %v840
        %v1273 = vmul.f32 %v1258, %v1265
        %v1274 = vadd.f32 %v1272, %v1273
        %v1275 = vtanh.pop %v1274
        %v1276 = vmul.f32 %v1271, %v1275
        %1277 = vst [vmem:[#allocation3] sm:$0xff] %v1276
        %1278 = vst [vmem:[#allocation5] sm:$0xff] %v1274
        %1279 = vst [vmem:[#allocation6] sm:$0xff] %v1276
        %s1280 = scalar_lea.vmem %s382, 8
        %v1281 = vld [vmem:[%s1280] sm:$0xff]
        %v1282 = vld [vmem:[#allocation2] sm:$0xff]
        %v1283 = vld [vmem:[#allocation4] sm:$0xff]
        %v1284 = vld [vmem:[#allocation7] sm:$0xff]
        %v1285 = vld [vmem:[#allocation7 + $0x8] sm:$0xff]
        %v1286 = vld [vmem:[#allocation7 + $0x10] sm:$0xff]
        %v1287 = vld [vmem:[#allocation7 + $0x18] sm:$0xff]
        %v1288 = vld [vmem:[#allocation7 + $0x20] sm:$0xff]
        %v1289 = vld [vmem:[#allocation7 + $0x28] sm:$0xff]
        %v1290 = vld [vmem:[#allocation7 + $0x30] sm:$0xff]
        %v1291 = vld [vmem:[#allocation7 + $0x38] sm:$0xff]
        %v1292 = vld [vmem:[#allocation7 + $0x40] sm:$0xff]
        %v1293 = vld [vmem:[#allocation7 + $0x48] sm:$0xff]
        %v1294 = vld [vmem:[#allocation7 + $0x50] sm:$0xff]
        %v1295 = vld [vmem:[#allocation7 + $0x58] sm:$0xff]
        %v1296 = vld [vmem:[#allocation7 + $0x60] sm:$0xff]
        %v1297 = vld [vmem:[#allocation7 + $0x68] sm:$0xff]
        %v1298 = vld [vmem:[#allocation7 + $0x70] sm:$0xff]
        %v1299 = vld [vmem:[#allocation7 + $0x78] sm:$0xff]
        %v1300 = vld [vmem:[#allocation7 + $0x80] sm:$0xff]
        %v1301 = vld [vmem:[#allocation7 + $0x88] sm:$0xff]
        %v1302 = vld [vmem:[#allocation7 + $0x90] sm:$0xff]
        %v1303 = vld [vmem:[#allocation7 + $0x98] sm:$0xff]
        %v1304 = vld [vmem:[#allocation7 + $0xa0] sm:$0xff]
        %v1305 = vld [vmem:[#allocation7 + $0xa8] sm:$0xff]
        %v1306 = vld [vmem:[#allocation7 + $0xb0] sm:$0xff]
        %v1307 = vld [vmem:[#allocation7 + $0xb8] sm:$0xff]
        %v1308 = vld [vmem:[#allocation7 + $0xc0] sm:$0xff]
        %v1309 = vld [vmem:[#allocation7 + $0xc8] sm:$0xff]
        %v1310 = vld [vmem:[#allocation7 + $0xd0] sm:$0xff]
        %v1311 = vld [vmem:[#allocation7 + $0xd8] sm:$0xff]
        %v1312 = vld [vmem:[#allocation7 + $0xe0] sm:$0xff]
        %v1313 = vld [vmem:[#allocation7 + $0xe8] sm:$0xff]
        %v1314 = vld [vmem:[#allocation7 + $0xf0] sm:$0xff]
        %v1315 = vld [vmem:[#allocation7 + $0xf8] sm:$0xff]
        %v1316 = vld [vmem:[#allocation7 + $0x100] sm:$0xff]
        %v1317 = vld [vmem:[#allocation7 + $0x108] sm:$0xff]
        %v1318 = vld [vmem:[#allocation7 + $0x110] sm:$0xff]
        %v1319 = vld [vmem:[#allocation7 + $0x118] sm:$0xff]
        %v1320 = vld [vmem:[#allocation7 + $0x120] sm:$0xff]
        %v1321 = vld [vmem:[#allocation7 + $0x128] sm:$0xff]
        %v1322 = vld [vmem:[#allocation7 + $0x130] sm:$0xff]
        %v1323 = vld [vmem:[#allocation7 + $0x138] sm:$0xff]
        %v1324 = vld [vmem:[#allocation7 + $0x140] sm:$0xff]
        %v1325 = vld [vmem:[#allocation7 + $0x148] sm:$0xff]
        %v1326 = vld [vmem:[#allocation7 + $0x150] sm:$0xff]
        %v1327 = vld [vmem:[#allocation7 + $0x158] sm:$0xff]
        %v1328 = vld [vmem:[#allocation7 + $0x160] sm:$0xff]
        %v1329 = vld [vmem:[#allocation7 + $0x168] sm:$0xff]
        %v1330 = vld [vmem:[#allocation7 + $0x170] sm:$0xff]
        %v1331 = vld [vmem:[#allocation7 + $0x178] sm:$0xff]
        %v1332 = vld [vmem:[#allocation7 + $0x180] sm:$0xff]
        %v1333 = vld [vmem:[#allocation7 + $0x188] sm:$0xff]
        %v1334 = vld [vmem:[#allocation7 + $0x190] sm:$0xff]
        %v1335 = vld [vmem:[#allocation7 + $0x198] sm:$0xff]
        %v1336 = vld [vmem:[#allocation7 + $0x1a0] sm:$0xff]
        %v1337 = vld [vmem:[#allocation7 + $0x1a8] sm:$0xff]
        %v1338 = vld [vmem:[#allocation7 + $0x1b0] sm:$0xff]
        %v1339 = vld [vmem:[#allocation7 + $0x1b8] sm:$0xff]
        %v1340 = vld [vmem:[#allocation7 + $0x1c0] sm:$0xff]
        %v1341 = vld [vmem:[#allocation7 + $0x1c8] sm:$0xff]
        %v1342 = vld [vmem:[#allocation7 + $0x1d0] sm:$0xff]
        %v1343 = vld [vmem:[#allocation7 + $0x1d8] sm:$0xff]
        %v1344 = vld [vmem:[#allocation7 + $0x1e0] sm:$0xff]
        %v1345 = vld [vmem:[#allocation7 + $0x1e8] sm:$0xff]
        %v1346 = vld [vmem:[#allocation7 + $0x1f0] sm:$0xff]
        %v1347 = vld [vmem:[#allocation7 + $0x1f8] sm:$0xff]
        %v1348 = vld [vmem:[#allocation9] sm:$0xff]
        %v1349 = vld [vmem:[#allocation9 + $0x8] sm:$0xff]
        %v1350 = vld [vmem:[#allocation9 + $0x10] sm:$0xff]
        %v1351 = vld [vmem:[#allocation9 + $0x18] sm:$0xff]
        %v1352 = vld [vmem:[#allocation9 + $0x20] sm:$0xff]
        %v1353 = vld [vmem:[#allocation9 + $0x28] sm:$0xff]
        %v1354 = vld [vmem:[#allocation9 + $0x30] sm:$0xff]
        %v1355 = vld [vmem:[#allocation9 + $0x38] sm:$0xff]
        %v1356 = vld [vmem:[#allocation9 + $0x40] sm:$0xff]
        %v1357 = vld [vmem:[#allocation9 + $0x48] sm:$0xff]
        %v1358 = vld [vmem:[#allocation9 + $0x50] sm:$0xff]
        %v1359 = vld [vmem:[#allocation9 + $0x58] sm:$0xff]
        %v1360 = vld [vmem:[#allocation9 + $0x60] sm:$0xff]
        %v1361 = vld [vmem:[#allocation9 + $0x68] sm:$0xff]
        %v1362 = vld [vmem:[#allocation9 + $0x70] sm:$0xff]
        %v1363 = vld [vmem:[#allocation9 + $0x78] sm:$0xff]
        %v1364 = vld [vmem:[#allocation9 + $0x80] sm:$0xff]
        %v1365 = vld [vmem:[#allocation9 + $0x88] sm:$0xff]
        %v1366 = vld [vmem:[#allocation9 + $0x90] sm:$0xff]
        %v1367 = vld [vmem:[#allocation9 + $0x98] sm:$0xff]
        %v1368 = vld [vmem:[#allocation9 + $0xa0] sm:$0xff]
        %v1369 = vld [vmem:[#allocation9 + $0xa8] sm:$0xff]
        %v1370 = vld [vmem:[#allocation9 + $0xb0] sm:$0xff]
        %v1371 = vld [vmem:[#allocation9 + $0xb8] sm:$0xff]
        %v1372 = vld [vmem:[#allocation9 + $0xc0] sm:$0xff]
        %v1373 = vld [vmem:[#allocation9 + $0xc8] sm:$0xff]
        %v1374 = vld [vmem:[#allocation9 + $0xd0] sm:$0xff]
        %v1375 = vld [vmem:[#allocation9 + $0xd8] sm:$0xff]
        %v1376 = vld [vmem:[#allocation9 + $0xe0] sm:$0xff]
        %v1377 = vld [vmem:[#allocation9 + $0xe8] sm:$0xff]
        %v1378 = vld [vmem:[#allocation9 + $0xf0] sm:$0xff]
        %v1379 = vld [vmem:[#allocation9 + $0xf8] sm:$0xff]
        %v1380 = vld [vmem:[#allocation9 + $0x100] sm:$0xff]
        %v1381 = vld [vmem:[#allocation9 + $0x108] sm:$0xff]
        %v1382 = vld [vmem:[#allocation9 + $0x110] sm:$0xff]
        %v1383 = vld [vmem:[#allocation9 + $0x118] sm:$0xff]
        %v1384 = vld [vmem:[#allocation9 + $0x120] sm:$0xff]
        %v1385 = vld [vmem:[#allocation9 + $0x128] sm:$0xff]
        %v1386 = vld [vmem:[#allocation9 + $0x130] sm:$0xff]
        %v1387 = vld [vmem:[#allocation9 + $0x138] sm:$0xff]
        %v1388 = vld [vmem:[#allocation9 + $0x140] sm:$0xff]
        %v1389 = vld [vmem:[#allocation9 + $0x148] sm:$0xff]
        %v1390 = vld [vmem:[#allocation9 + $0x150] sm:$0xff]
        %v1391 = vld [vmem:[#allocation9 + $0x158] sm:$0xff]
        %v1392 = vld [vmem:[#allocation9 + $0x160] sm:$0xff]
        %v1393 = vld [vmem:[#allocation9 + $0x168] sm:$0xff]
        %v1394 = vld [vmem:[#allocation9 + $0x170] sm:$0xff]
        %v1395 = vld [vmem:[#allocation9 + $0x178] sm:$0xff]
        %v1396 = vld [vmem:[#allocation9 + $0x180] sm:$0xff]
        %v1397 = vld [vmem:[#allocation9 + $0x188] sm:$0xff]
        %v1398 = vld [vmem:[#allocation9 + $0x190] sm:$0xff]
        %v1399 = vld [vmem:[#allocation9 + $0x198] sm:$0xff]
        %v1400 = vld [vmem:[#allocation9 + $0x1a0] sm:$0xff]
        %v1401 = vld [vmem:[#allocation9 + $0x1a8] sm:$0xff]
        %v1402 = vld [vmem:[#allocation9 + $0x1b0] sm:$0xff]
        %v1403 = vld [vmem:[#allocation9 + $0x1b8] sm:$0xff]
        %v1404 = vld [vmem:[#allocation9 + $0x1c0] sm:$0xff]
        %v1405 = vld [vmem:[#allocation9 + $0x1c8] sm:$0xff]
        %v1406 = vld [vmem:[#allocation9 + $0x1d0] sm:$0xff]
        %v1407 = vld [vmem:[#allocation9 + $0x1d8] sm:$0xff]
        %v1408 = vld [vmem:[#allocation9 + $0x1e0] sm:$0xff]
        %v1409 = vld [vmem:[#allocation9 + $0x1e8] sm:$0xff]
        %v1410 = vld [vmem:[#allocation9 + $0x1f0] sm:$0xff]
        %v1411 = vld [vmem:[#allocation9 + $0x1f8] sm:$0xff]
        %1412 = vmatprep.subr.mxu0 %v1349
        %1413 = vmatpush1.msra.mxu0 %v1348
        %1414 = vmatprep.subr.mxu0 %v1353
        %1415 = vmatpush1.msra.mxu0 %v1352
        %1416 = vmatprep.subr.mxu0 %v1357
        %1417 = vmatpush1.msra.mxu0 %v1356
        %1418 = vmatprep.subr.mxu0 %v1361
        %1419 = vmatpush1.msra.mxu0 %v1360
        %1420 = vmatprep.subr.mxu0 %v1365
        %1421 = vmatpush1.msra.mxu0 %v1364
        %1422 = vmatprep.subr.mxu0 %v1369
        %1423 = vmatpush1.msra.mxu0 %v1368
        %1424 = vmatprep.subr.mxu0 %v1373
        %1425 = vmatpush1.msra.mxu0 %v1372
        %1426 = vmatprep.subr.mxu0 %v1377
        %1427 = vmatpush1.msra.mxu0 %v1376
        %1428 = vmatprep.subr.mxu0 %v1381
        %1429 = vmatpush1.msra.mxu0 %v1380
        %1430 = vmatprep.subr.mxu0 %v1385
        %1431 = vmatpush1.msra.mxu0 %v1384
        %1432 = vmatprep.subr.mxu0 %v1389
        %1433 = vmatpush1.msra.mxu0 %v1388
        %1434 = vmatprep.subr.mxu0 %v1393
        %1435 = vmatpush1.msra.mxu0 %v1392
        %1436 = vmatprep.subr.mxu0 %v1397
        %1437 = vmatpush1.msra.mxu0 %v1396
        %1438 = vmatprep.subr.mxu0 %v1401
        %1439 = vmatpush1.msra.mxu0 %v1400
        %1440 = vmatprep.subr.mxu0 %v1405
        %1441 = vmatpush1.msra.mxu0 %v1404
        %1442 = vmatprep.subr.mxu0 %v1409
        %1443 = vmatpush1.msra.mxu0 %v1408
        %1444 = vmatprep.subr.mxu0 0.0
        %1445 = vmatpush1.msra.mxu0 0.0
        %1446 = vmatprep.subr.mxu0 0.0
        %1447 = vmatpush1.msra.mxu0 0.0
        %1448 = vmatprep.subr.mxu0 0.0
        %1449 = vmatpush1.msra.mxu0 0.0
        %1450 = vmatprep.subr.mxu0 0.0
        %1451 = vmatpush1.msra.mxu0 0.0
        %1452 = vmatprep.subr.mxu0 0.0
        %1453 = vmatpush1.msra.mxu0 0.0
        %1454 = vmatprep.subr.mxu0 0.0
        %1455 = vmatpush1.msra.mxu0 0.0
        %1456 = vmatprep.subr.mxu0 0.0
        %1457 = vmatpush1.msra.mxu0 0.0
        %1458 = vmatprep.subr.mxu0 0.0
        %1459 = vmatpush1.msra.mxu0 0.0
        %1460 = vmatprep.subr.mxu0 0.0
        %1461 = vmatpush1.msra.mxu0 0.0
        %1462 = vmatprep.subr.mxu0 0.0
        %1463 = vmatpush1.msra.mxu0 0.0
        %1464 = vmatprep.subr.mxu0 0.0
        %1465 = vmatpush1.msra.mxu0 0.0
        %1466 = vmatprep.subr.mxu0 0.0
        %1467 = vmatpush1.msra.mxu0 0.0
        %1468 = vmatprep.subr.mxu0 0.0
        %1469 = vmatpush1.msra.mxu0 0.0
        %1470 = vmatprep.subr.mxu0 0.0
        %1471 = vmatpush1.msra.mxu0 0.0
        %1472 = vmatprep.subr.mxu0 0.0
        %1473 = vmatpush1.msra.mxu0 0.0
        %1474 = vmatprep.subr.mxu0 0.0
        %1475 = vmatpush1.msra.mxu0 0.0
        %1476 = vmatprep.mubr.f32.mxu0 0.0
        %1477 = vmatmul.mubr.f32.gmra.mrb[0].mxu0 %v1282
        %v1478 = vpop.f32.mrb[0].mxu0
        %v1479 = vadd.f32 0.0, %v1478
        %v1480 = vpop.f32.mrb[0].mxu0
        %v1481 = vadd.f32 0.0, %v1480
        %1482 = vdwg.mxu0
        %1483 = vmatprep.subr.mxu0 %v1351
        %1484 = vmatpush1.msra.mxu0 %v1350
        %1485 = vmatprep.subr.mxu0 %v1355
        %1486 = vmatpush1.msra.mxu0 %v1354
        %1487 = vmatprep.subr.mxu0 %v1359
        %1488 = vmatpush1.msra.mxu0 %v1358
        %1489 = vmatprep.subr.mxu0 %v1363
        %1490 = vmatpush1.msra.mxu0 %v1362
        %1491 = vmatprep.subr.mxu0 %v1367
        %1492 = vmatpush1.msra.mxu0 %v1366
        %1493 = vmatprep.subr.mxu0 %v1371
        %1494 = vmatpush1.msra.mxu0 %v1370
        %1495 = vmatprep.subr.mxu0 %v1375
        %1496 = vmatpush1.msra.mxu0 %v1374
        %1497 = vmatprep.subr.mxu0 %v1379
        %1498 = vmatpush1.msra.mxu0 %v1378
        %1499 = vmatprep.subr.mxu0 %v1383
        %1500 = vmatpush1.msra.mxu0 %v1382
        %1501 = vmatprep.subr.mxu0 %v1387
        %1502 = vmatpush1.msra.mxu0 %v1386
        %1503 = vmatprep.subr.mxu0 %v1391
        %1504 = vmatpush1.msra.mxu0 %v1390
        %1505 = vmatprep.subr.mxu0 %v1395
        %1506 = vmatpush1.msra.mxu0 %v1394
        %1507 = vmatprep.subr.mxu0 %v1399
        %1508 = vmatpush1.msra.mxu0 %v1398
        %1509 = vmatprep.subr.mxu0 %v1403
        %1510 = vmatpush1.msra.mxu0 %v1402
        %1511 = vmatprep.subr.mxu0 %v1407
        %1512 = vmatpush1.msra.mxu0 %v1406
        %1513 = vmatprep.subr.mxu0 %v1411
        %1514 = vmatpush1.msra.mxu0 %v1410
        %1515 = vmatprep.subr.mxu0 0.0
        %1516 = vmatpush1.msra.mxu0 0.0
        %1517 = vmatprep.subr.mxu0 0.0
        %1518 = vmatpush1.msra.mxu0 0.0
        %1519 = vmatprep.subr.mxu0 0.0
        %1520 = vmatpush1.msra.mxu0 0.0
        %1521 = vmatprep.subr.mxu0 0.0
        %1522 = vmatpush1.msra.mxu0 0.0
        %1523 = vmatprep.subr.mxu0 0.0
        %1524 = vmatpush1.msra.mxu0 0.0
        %1525 = vmatprep.subr.mxu0 0.0
        %1526 = vmatpush1.msra.mxu0 0.0
        %1527 = vmatprep.subr.mxu0 0.0
        %1528 = vmatpush1.msra.mxu0 0.0
        %1529 = vmatprep.subr.mxu0 0.0
        %1530 = vmatpush1.msra.mxu0 0.0
        %1531 = vmatprep.subr.mxu0 0.0
        %1532 = vmatpush1.msra.mxu0 0.0
        %1533 = vmatprep.subr.mxu0 0.0
        %1534 = vmatpush1.msra.mxu0 0.0
        %1535 = vmatprep.subr.mxu0 0.0
        %1536 = vmatpush1.msra.mxu0 0.0
        %1537 = vmatprep.subr.mxu0 0.0
        %1538 = vmatpush1.msra.mxu0 0.0
        %1539 = vmatprep.subr.mxu0 0.0
        %1540 = vmatpush1.msra.mxu0 0.0
        %1541 = vmatprep.subr.mxu0 0.0
        %1542 = vmatpush1.msra.mxu0 0.0
        %1543 = vmatprep.subr.mxu0 0.0
        %1544 = vmatpush1.msra.mxu0 0.0
        %1545 = vmatprep.subr.mxu0 0.0
        %1546 = vmatpush1.msra.mxu0 0.0
        %1547 = vmatprep.mubr.f32.mxu0 0.0
        %1548 = vmatmul.mubr.f32.gmra.mrb[0].mxu0 %v1282
        %v1549 = vpop.f32.mrb[0].mxu0
        %v1550 = vadd.f32 0.0, %v1549
        %v1551 = vpop.f32.mrb[0].mxu0
        %v1552 = vadd.f32 0.0, %v1551
        %1553 = vdwg.mxu0
        %1554 = vmatprep.subr.mxu0 %v1285
        %1555 = vmatpush1.msra.mxu0 %v1284
        %1556 = vmatprep.subr.mxu0 %v1289
        %1557 = vmatpush1.msra.mxu0 %v1288
        %1558 = vmatprep.subr.mxu0 %v1293
        %1559 = vmatpush1.msra.mxu0 %v1292
        %1560 = vmatprep.subr.mxu0 %v1297
        %1561 = vmatpush1.msra.mxu0 %v1296
        %1562 = vmatprep.subr.mxu0 %v1301
        %1563 = vmatpush1.msra.mxu0 %v1300
        %1564 = vmatprep.subr.mxu0 %v1305
        %1565 = vmatpush1.msra.mxu0 %v1304
        %1566 = vmatprep.subr.mxu0 %v1309
        %1567 = vmatpush1.msra.mxu0 %v1308
        %1568 = vmatprep.subr.mxu0 %v1313
        %1569 = vmatpush1.msra.mxu0 %v1312
        %1570 = vmatprep.subr.mxu0 %v1317
        %1571 = vmatpush1.msra.mxu0 %v1316
        %1572 = vmatprep.subr.mxu0 %v1321
        %1573 = vmatpush1.msra.mxu0 %v1320
        %1574 = vmatprep.subr.mxu0 %v1325
        %1575 = vmatpush1.msra.mxu0 %v1324
        %1576 = vmatprep.subr.mxu0 %v1329
        %1577 = vmatpush1.msra.mxu0 %v1328
        %1578 = vmatprep.subr.mxu0 %v1333
        %1579 = vmatpush1.msra.mxu0 %v1332
        %1580 = vmatprep.subr.mxu0 %v1337
        %1581 = vmatpush1.msra.mxu0 %v1336
        %1582 = vmatprep.subr.mxu0 %v1341
        %1583 = vmatpush1.msra.mxu0 %v1340
        %1584 = vmatprep.subr.mxu0 %v1345
        %1585 = vmatpush1.msra.mxu0 %v1344
        %1586 = vmatprep.subr.mxu0 0.0
        %1587 = vmatpush1.msra.mxu0 0.0
        %1588 = vmatprep.subr.mxu0 0.0
        %1589 = vmatpush1.msra.mxu0 0.0
        %1590 = vmatprep.subr.mxu0 0.0
        %1591 = vmatpush1.msra.mxu0 0.0
        %1592 = vmatprep.subr.mxu0 0.0
        %1593 = vmatpush1.msra.mxu0 0.0
        %1594 = vmatprep.subr.mxu0 0.0
        %1595 = vmatpush1.msra.mxu0 0.0
        %1596 = vmatprep.subr.mxu0 0.0
        %1597 = vmatpush1.msra.mxu0 0.0
        %1598 = vmatprep.subr.mxu0 0.0
        %1599 = vmatpush1.msra.mxu0 0.0
        %1600 = vmatprep.subr.mxu0 0.0
        %1601 = vmatpush1.msra.mxu0 0.0
        %1602 = vmatprep.subr.mxu0 0.0
        %1603 = vmatpush1.msra.mxu0 0.0
        %1604 = vmatprep.subr.mxu0 0.0
        %1605 = vmatpush1.msra.mxu0 0.0
        %1606 = vmatprep.subr.mxu0 0.0
        %1607 = vmatpush1.msra.mxu0 0.0
        %1608 = vmatprep.subr.mxu0 0.0
        %1609 = vmatpush1.msra.mxu0 0.0
        %1610 = vmatprep.subr.mxu0 0.0
        %1611 = vmatpush1.msra.mxu0 0.0
        %1612 = vmatprep.subr.mxu0 0.0
        %1613 = vmatpush1.msra.mxu0 0.0
        %1614 = vmatprep.subr.mxu0 0.0
        %1615 = vmatpush1.msra.mxu0 0.0
        %1616 = vmatprep.subr.mxu0 0.0
        %1617 = vmatpush1.msra.mxu0 0.0
        %1618 = vmatprep.mubr.f32.mxu0 0.0
        %1619 = vmatmul.mubr.f32.gmra.mrb[0].mxu0 %v1281
        %v1620 = vpop.f32.mrb[0].mxu0
        %v1621 = vadd.f32 %v1479, %v1620
        %v1622 = vpop.f32.mrb[0].mxu0
        %v1623 = vadd.f32 %v1481, %v1622
        %1624 = vdwg.mxu0
        %1625 = vmatprep.subr.mxu0 %v1287
        %1626 = vmatpush1.msra.mxu0 %v1286
        %1627 = vmatprep.subr.mxu0 %v1291
        %1628 = vmatpush1.msra.mxu0 %v1290
        %1629 = vmatprep.subr.mxu0 %v1295
        %1630 = vmatpush1.msra.mxu0 %v1294
        %1631 = vmatprep.subr.mxu0 %v1299
        %1632 = vmatpush1.msra.mxu0 %v1298
        %1633 = vmatprep.subr.mxu0 %v1303
        %1634 = vmatpush1.msra.mxu0 %v1302
        %1635 = vmatprep.subr.mxu0 %v1307
        %1636 = vmatpush1.msra.mxu0 %v1306
        %1637 = vmatprep.subr.mxu0 %v1311
        %1638 = vmatpush1.msra.mxu0 %v1310
        %1639 = vmatprep.subr.mxu0 %v1315
        %1640 = vmatpush1.msra.mxu0 %v1314
        %1641 = vmatprep.subr.mxu0 %v1319
        %1642 = vmatpush1.msra.mxu0 %v1318
        %1643 = vmatprep.subr.mxu0 %v1323
        %1644 = vmatpush1.msra.mxu0 %v1322
        %1645 = vmatprep.subr.mxu0 %v1327
        %1646 = vmatpush1.msra.mxu0 %v1326
        %1647 = vmatprep.subr.mxu0 %v1331
        %1648 = vmatpush1.msra.mxu0 %v1330
        %1649 = vmatprep.subr.mxu0 %v1335
        %1650 = vmatpush1.msra.mxu0 %v1334
        %1651 = vmatprep.subr.mxu0 %v1339
        %1652 = vmatpush1.msra.mxu0 %v1338
        %1653 = vmatprep.subr.mxu0 %v1343
        %1654 = vmatpush1.msra.mxu0 %v1342
        %1655 = vmatprep.subr.mxu0 %v1347
        %1656 = vmatpush1.msra.mxu0 %v1346
        %1657 = vmatprep.subr.mxu0 0.0
        %1658 = vmatpush1.msra.mxu0 0.0
        %1659 = vmatprep.subr.mxu0 0.0
        %1660 = vmatpush1.msra.mxu0 0.0
        %1661 = vmatprep.subr.mxu0 0.0
        %1662 = vmatpush1.msra.mxu0 0.0
        %1663 = vmatprep.subr.mxu0 0.0
        %1664 = vmatpush1.msra.mxu0 0.0
        %1665 = vmatprep.subr.mxu0 0.0
        %1666 = vmatpush1.msra.mxu0 0.0
        %1667 = vmatprep.subr.mxu0 0.0
        %1668 = vmatpush1.msra.mxu0 0.0
        %1669 = vmatprep.subr.mxu0 0.0
        %1670 = vmatpush1.msra.mxu0 0.0
        %1671 = vmatprep.subr.mxu0 0.0
        %1672 = vmatpush1.msra.mxu0 0.0
        %1673 = vmatprep.subr.mxu0 0.0
        %1674 = vmatpush1.msra.mxu0 0.0
        %1675 = vmatprep.subr.mxu0 0.0
        %1676 = vmatpush1.msra.mxu0 0.0
        %1677 = vmatprep.subr.mxu0 0.0
        %1678 = vmatpush1.msra.mxu0 0.0
        %1679 = vmatprep.subr.mxu0 0.0
        %1680 = vmatpush1.msra.mxu0 0.0
        %1681 = vmatprep.subr.mxu0 0.0
        %1682 = vmatpush1.msra.mxu0 0.0
        %1683 = vmatprep.subr.mxu0 0.0
        %1684 = vmatpush1.msra.mxu0 0.0
        %1685 = vmatprep.subr.mxu0 0.0
        %1686 = vmatpush1.msra.mxu0 0.0
        %1687 = vmatprep.subr.mxu0 0.0
        %1688 = vmatpush1.msra.mxu0 0.0
        %1689 = vmatprep.mubr.f32.mxu0 0.0
        %1690 = vmatmul.mubr.f32.gmra.mrb[0].mxu0 %v1281
        %v1691 = vpop.f32.mrb[0].mxu0
        %v1692 = vadd.f32 %v1550, %v1691
        %v1693 = vpop.f32.mrb[0].mxu0
        %v1694 = vadd.f32 %v1552, %v1693
        %1695 = vdwg.mxu0
        %v1696 = vxor.u32 %v1621, 2147483648
        %v1697 = vmul.f32 %v1696, 1.442695
        %v1698 = vpow.pop %v1697
        %v1699 = vadd.f32 %v1698, 1.0
        %v1700 = vrcp.pop %v1699
        %v1701 = vmul.f32 1.0, %v1700
        %v1702 = vxor.u32 %v1623, 2147483648
        %v1703 = vmul.f32 %v1702, 1.442695
        %v1704 = vpow.pop %v1703
        %v1705 = vadd.f32 %v1704, 1.0
        %v1706 = vrcp.pop %v1705
        %v1707 = vmul.f32 1.0, %v1706
        %v1708 = vtanh.pop %v1692
        %v1709 = vxor.u32 %v1694, 2147483648
        %v1710 = vmul.f32 %v1709, 1.442695
        %v1711 = vpow.pop %v1710
        %v1712 = vadd.f32 %v1711, 1.0
        %v1713 = vrcp.pop %v1712
        %v1714 = vmul.f32 1.0, %v1713
        %v1715 = vmul.f32 %v1707, %v1283
        %v1716 = vmul.f32 %v1701, %v1708
        %v1717 = vadd.f32 %v1715, %v1716
        %v1718 = vtanh.pop %v1717
        %v1719 = vmul.f32 %v1714, %v1718
        %1720 = vst [vmem:[#allocation2] sm:$0xff] %v1719
        %1721 = vst [vmem:[#allocation4] sm:$0xff] %v1717
        %v1722 = vld [vmem:[#allocation3] sm:$0xff]
        %v1723 = vld [vmem:[#allocation5] sm:$0xff]
        %v1724 = vld [vmem:[#allocation11] sm:$0xff]
        %v1725 = vld [vmem:[#allocation11 + $0x8] sm:$0xff]
        %v1726 = vld [vmem:[#allocation11 + $0x10] sm:$0xff]
        %v1727 = vld [vmem:[#allocation11 + $0x18] sm:$0xff]
        %v1728 = vld [vmem:[#allocation11 + $0x20] sm:$0xff]
        %v1729 = vld [vmem:[#allocation11 + $0x28] sm:$0xff]
        %v1730 = vld [vmem:[#allocation11 + $0x30] sm:$0xff]
        %v1731 = vld [vmem:[#allocation11 + $0x38] sm:$0xff]
        %v1732 = vld [vmem:[#allocation11 + $0x40] sm:$0xff]
        %v1733 = vld [vmem:[#allocation11 + $0x48] sm:$0xff]
        %v1734 = vld [vmem:[#allocation11 + $0x50] sm:$0xff]
        %v1735 = vld [vmem:[#allocation11 + $0x58] sm:$0xff]
        %v1736 = vld [vmem:[#allocation11 + $0x60] sm:$0xff]
        %v1737 = vld [vmem:[#allocation11 + $0x68] sm:$0xff]
        %v1738 = vld [vmem:[#allocation11 + $0x70] sm:$0xff]
        %v1739 = vld [vmem:[#allocation11 + $0x78] sm:$0xff]
        %v1740 = vld [vmem:[#allocation11 + $0x80] sm:$0xff]
        %v1741 = vld [vmem:[#allocation11 + $0x88] sm:$0xff]
        %v1742 = vld [vmem:[#allocation11 + $0x90] sm:$0xff]
        %v1743 = vld [vmem:[#allocation11 + $0x98] sm:$0xff]
        %v1744 = vld [vmem:[#allocation11 + $0xa0] sm:$0xff]
        %v1745 = vld [vmem:[#allocation11 + $0xa8] sm:$0xff]
        %v1746 = vld [vmem:[#allocation11 + $0xb0] sm:$0xff]
        %v1747 = vld [vmem:[#allocation11 + $0xb8] sm:$0xff]
        %v1748 = vld [vmem:[#allocation11 + $0xc0] sm:$0xff]
        %v1749 = vld [vmem:[#allocation11 + $0xc8] sm:$0xff]
        %v1750 = vld [vmem:[#allocation11 + $0xd0] sm:$0xff]
        %v1751 = vld [vmem:[#allocation11 + $0xd8] sm:$0xff]
        %v1752 = vld [vmem:[#allocation11 + $0xe0] sm:$0xff]
        %v1753 = vld [vmem:[#allocation11 + $0xe8] sm:$0xff]
        %v1754 = vld [vmem:[#allocation11 + $0xf0] sm:$0xff]
        %v1755 = vld [vmem:[#allocation11 + $0xf8] sm:$0xff]
        %v1756 = vld [vmem:[#allocation11 + $0x100] sm:$0xff]
        %v1757 = vld [vmem:[#allocation11 + $0x108] sm:$0xff]
        %v1758 = vld [vmem:[#allocation11 + $0x110] sm:$0xff]
        %v1759 = vld [vmem:[#allocation11 + $0x118] sm:$0xff]
        %v1760 = vld [vmem:[#allocation11 + $0x120] sm:$0xff]
        %v1761 = vld [vmem:[#allocation11 + $0x128] sm:$0xff]
        %v1762 = vld [vmem:[#allocation11 + $0x130] sm:$0xff]
        %v1763 = vld [vmem:[#allocation11 + $0x138] sm:$0xff]
        %v1764 = vld [vmem:[#allocation11 + $0x140] sm:$0xff]
        %v1765 = vld [vmem:[#allocation11 + $0x148] sm:$0xff]
        %v1766 = vld [vmem:[#allocation11 + $0x150] sm:$0xff]
        %v1767 = vld [vmem:[#allocation11 + $0x158] sm:$0xff]
        %v1768 = vld [vmem:[#allocation11 + $0x160] sm:$0xff]
        %v1769 = vld [vmem:[#allocation11 + $0x168] sm:$0xff]
        %v1770 = vld [vmem:[#allocation11 + $0x170] sm:$0xff]
        %v1771 = vld [vmem:[#allocation11 + $0x178] sm:$0xff]
        %v1772 = vld [vmem:[#allocation11 + $0x180] sm:$0xff]
        %v1773 = vld [vmem:[#allocation11 + $0x188] sm:$0xff]
        %v1774 = vld [vmem:[#allocation11 + $0x190] sm:$0xff]
        %v1775 = vld [vmem:[#allocation11 + $0x198] sm:$0xff]
        %v1776 = vld [vmem:[#allocation11 + $0x1a0] sm:$0xff]
        %v1777 = vld [vmem:[#allocation11 + $0x1a8] sm:$0xff]
        %v1778 = vld [vmem:[#allocation11 + $0x1b0] sm:$0xff]
        %v1779 = vld [vmem:[#allocation11 + $0x1b8] sm:$0xff]
        %v1780 = vld [vmem:[#allocation11 + $0x1c0] sm:$0xff]
        %v1781 = vld [vmem:[#allocation11 + $0x1c8] sm:$0xff]
        %v1782 = vld [vmem:[#allocation11 + $0x1d0] sm:$0xff]
        %v1783 = vld [vmem:[#allocation11 + $0x1d8] sm:$0xff]
        %v1784 = vld [vmem:[#allocation11 + $0x1e0] sm:$0xff]
        %v1785 = vld [vmem:[#allocation11 + $0x1e8] sm:$0xff]
        %v1786 = vld [vmem:[#allocation11 + $0x1f0] sm:$0xff]
        %v1787 = vld [vmem:[#allocation11 + $0x1f8] sm:$0xff]
        %v1788 = vld [vmem:[#allocation12] sm:$0xff]
        %v1789 = vld [vmem:[#allocation12 + $0x8] sm:$0xff]
        %v1790 = vld [vmem:[#allocation12 + $0x10] sm:$0xff]
        %v1791 = vld [vmem:[#allocation12 + $0x18] sm:$0xff]
        %v1792 = vld [vmem:[#allocation12 + $0x20] sm:$0xff]
        %v1793 = vld [vmem:[#allocation12 + $0x28] sm:$0xff]
        %v1794 = vld [vmem:[#allocation12 + $0x30] sm:$0xff]
        %v1795 = vld [vmem:[#allocation12 + $0x38] sm:$0xff]
        %v1796 = vld [vmem:[#allocation12 + $0x40] sm:$0xff]
        %v1797 = vld [vmem:[#allocation12 + $0x48] sm:$0xff]
        %v1798 = vld [vmem:[#allocation12 + $0x50] sm:$0xff]
        %v1799 = vld [vmem:[#allocation12 + $0x58] sm:$0xff]
        %v1800 = vld [vmem:[#allocation12 + $0x60] sm:$0xff]
        %v1801 = vld [vmem:[#allocation12 + $0x68] sm:$0xff]
        %v1802 = vld [vmem:[#allocation12 + $0x70] sm:$0xff]
        %v1803 = vld [vmem:[#allocation12 + $0x78] sm:$0xff]
        %v1804 = vld [vmem:[#allocation12 + $0x80] sm:$0xff]
        %v1805 = vld [vmem:[#allocation12 + $0x88] sm:$0xff]
        %v1806 = vld [vmem:[#allocation12 + $0x90] sm:$0xff]
        %v1807 = vld [vmem:[#allocation12 + $0x98] sm:$0xff]
        %v1808 = vld [vmem:[#allocation12 + $0xa0] sm:$0xff]
        %v1809 = vld [vmem:[#allocation12 + $0xa8] sm:$0xff]
        %v1810 = vld [vmem:[#allocation12 + $0xb0] sm:$0xff]
        %v1811 = vld [vmem:[#allocation12 + $0xb8] sm:$0xff]
        %v1812 = vld [vmem:[#allocation12 + $0xc0] sm:$0xff]
        %v1813 = vld [vmem:[#allocation12 + $0xc8] sm:$0xff]
        %v1814 = vld [vmem:[#allocation12 + $0xd0] sm:$0xff]
        %v1815 = vld [vmem:[#allocation12 + $0xd8] sm:$0xff]
        %v1816 = vld [vmem:[#allocation12 + $0xe0] sm:$0xff]
        %v1817 = vld [vmem:[#allocation12 + $0xe8] sm:$0xff]
        %v1818 = vld [vmem:[#allocation12 + $0xf0] sm:$0xff]
        %v1819 = vld [vmem:[#allocation12 + $0xf8] sm:$0xff]
        %v1820 = vld [vmem:[#allocation12 + $0x100] sm:$0xff]
        %v1821 = vld [vmem:[#allocation12 + $0x108] sm:$0xff]
        %v1822 = vld [vmem:[#allocation12 + $0x110] sm:$0xff]
        %v1823 = vld [vmem:[#allocation12 + $0x118] sm:$0xff]
        %v1824 = vld [vmem:[#allocation12 + $0x120] sm:$0xff]
        %v1825 = vld [vmem:[#allocation12 + $0x128] sm:$0xff]
        %v1826 = vld [vmem:[#allocation12 + $0x130] sm:$0xff]
        %v1827 = vld [vmem:[#allocation12 + $0x138] sm:$0xff]
        %v1828 = vld [vmem:[#allocation12 + $0x140] sm:$0xff]
        %v1829 = vld [vmem:[#allocation12 + $0x148] sm:$0xff]
        %v1830 = vld [vmem:[#allocation12 + $0x150] sm:$0xff]
        %v1831 = vld [vmem:[#allocation12 + $0x158] sm:$0xff]
        %v1832 = vld [vmem:[#allocation12 + $0x160] sm:$0xff]
        %v1833 = vld [vmem:[#allocation12 + $0x168] sm:$0xff]
        %v1834 = vld [vmem:[#allocation12 + $0x170] sm:$0xff]
        %v1835 = vld [vmem:[#allocation12 + $0x178] sm:$0xff]
        %v1836 = vld [vmem:[#allocation12 + $0x180] sm:$0xff]
        %v1837 = vld [vmem:[#allocation12 + $0x188] sm:$0xff]
        %v1838 = vld [vmem:[#allocation12 + $0x190] sm:$0xff]
        %v1839 = vld [vmem:[#allocation12 + $0x198] sm:$0xff]
        %v1840 = vld [vmem:[#allocation12 + $0x1a0] sm:$0xff]
        %v1841 = vld [vmem:[#allocation12 + $0x1a8] sm:$0xff]
        %v1842 = vld [vmem:[#allocation12 + $0x1b0] sm:$0xff]
        %v1843 = vld [vmem:[#allocation12 + $0x1b8] sm:$0xff]
        %v1844 = vld [vmem:[#allocation12 + $0x1c0] sm:$0xff]
        %v1845 = vld [vmem:[#allocation12 + $0x1c8] sm:$0xff]
        %v1846 = vld [vmem:[#allocation12 + $0x1d0] sm:$0xff]
        %v1847 = vld [vmem:[#allocation12 + $0x1d8] sm:$0xff]
        %v1848 = vld [vmem:[#allocation12 + $0x1e0] sm:$0xff]
        %v1849 = vld [vmem:[#allocation12 + $0x1e8] sm:$0xff]
        %v1850 = vld [vmem:[#allocation12 + $0x1f0] sm:$0xff]
        %v1851 = vld [vmem:[#allocation12 + $0x1f8] sm:$0xff]
        %1852 = vmatprep.subr.mxu0 %v1789
        %1853 = vmatpush1.msra.mxu0 %v1788
        %1854 = vmatprep.subr.mxu0 %v1793
        %1855 = vmatpush1.msra.mxu0 %v1792
        %1856 = vmatprep.subr.mxu0 %v1797
        %1857 = vmatpush1.msra.mxu0 %v1796
        %1858 = vmatprep.subr.mxu0 %v1801
        %1859 = vmatpush1.msra.mxu0 %v1800
        %1860 = vmatprep.subr.mxu0 %v1805
        %1861 = vmatpush1.msra.mxu0 %v1804
        %1862 = vmatprep.subr.mxu0 %v1809
        %1863 = vmatpush1.msra.mxu0 %v1808
        %1864 = vmatprep.subr.mxu0 %v1813
        %1865 = vmatpush1.msra.mxu0 %v1812
        %1866 = vmatprep.subr.mxu0 %v1817
        %1867 = vmatpush1.msra.mxu0 %v1816
        %1868 = vmatprep.subr.mxu0 %v1821
        %1869 = vmatpush1.msra.mxu0 %v1820
        %1870 = vmatprep.subr.mxu0 %v1825
        %1871 = vmatpush1.msra.mxu0 %v1824
        %1872 = vmatprep.subr.mxu0 %v1829
        %1873 = vmatpush1.msra.mxu0 %v1828
        %1874 = vmatprep.subr.mxu0 %v1833
        %1875 = vmatpush1.msra.mxu0 %v1832
        %1876 = vmatprep.subr.mxu0 %v1837
        %1877 = vmatpush1.msra.mxu0 %v1836
        %1878 = vmatprep.subr.mxu0 %v1841
        %1879 = vmatpush1.msra.mxu0 %v1840
        %1880 = vmatprep.subr.mxu0 %v1845
        %1881 = vmatpush1.msra.mxu0 %v1844
        %1882 = vmatprep.subr.mxu0 %v1849
        %1883 = vmatpush1.msra.mxu0 %v1848
        %1884 = vmatprep.subr.mxu0 0.0
        %1885 = vmatpush1.msra.mxu0 0.0
        %1886 = vmatprep.subr.mxu0 0.0
        %1887 = vmatpush1.msra.mxu0 0.0
        %1888 = vmatprep.subr.mxu0 0.0
        %1889 = vmatpush1.msra.mxu0 0.0
        %1890 = vmatprep.subr.mxu0 0.0
        %1891 = vmatpush1.msra.mxu0 0.0
        %1892 = vmatprep.subr.mxu0 0.0
        %1893 = vmatpush1.msra.mxu0 0.0
        %1894 = vmatprep.subr.mxu0 0.0
        %1895 = vmatpush1.msra.mxu0 0.0
        %1896 = vmatprep.subr.mxu0 0.0
        %1897 = vmatpush1.msra.mxu0 0.0
        %1898 = vmatprep.subr.mxu0 0.0
        %1899 = vmatpush1.msra.mxu0 0.0
        %1900 = vmatprep.subr.mxu0 0.0
        %1901 = vmatpush1.msra.mxu0 0.0
        %1902 = vmatprep.subr.mxu0 0.0
        %1903 = vmatpush1.msra.mxu0 0.0
        %1904 = vmatprep.subr.mxu0 0.0
        %1905 = vmatpush1.msra.mxu0 0.0
        %1906 = vmatprep.subr.mxu0 0.0
        %1907 = vmatpush1.msra.mxu0 0.0
        %1908 = vmatprep.subr.mxu0 0.0
        %1909 = vmatpush1.msra.mxu0 0.0
        %1910 = vmatprep.subr.mxu0 0.0
        %1911 = vmatpush1.msra.mxu0 0.0
        %1912 = vmatprep.subr.mxu0 0.0
        %1913 = vmatpush1.msra.mxu0 0.0
        %1914 = vmatprep.subr.mxu0 0.0
        %1915 = vmatpush1.msra.mxu0 0.0
        %1916 = vmatprep.mubr.f32.mxu0 0.0
        %1917 = vmatmul.mubr.f32.gmra.mrb[0].mxu0 %v1722
        %v1918 = vpop.f32.mrb[0].mxu0
        %v1919 = vadd.f32 0.0, %v1918
        %v1920 = vpop.f32.mrb[0].mxu0
        %v1921 = vadd.f32 0.0, %v1920
        %1922 = vdwg.mxu0
        %1923 = vmatprep.subr.mxu0 %v1791
        %1924 = vmatpush1.msra.mxu0 %v1790
        %1925 = vmatprep.subr.mxu0 %v1795
        %1926 = vmatpush1.msra.mxu0 %v1794
        %1927 = vmatprep.subr.mxu0 %v1799
        %1928 = vmatpush1.msra.mxu0 %v1798
        %1929 = vmatprep.subr.mxu0 %v1803
        %1930 = vmatpush1.msra.mxu0 %v1802
        %1931 = vmatprep.subr.mxu0 %v1807
        %1932 = vmatpush1.msra.mxu0 %v1806
        %1933 = vmatprep.subr.mxu0 %v1811
        %1934 = vmatpush1.msra.mxu0 %v1810
        %1935 = vmatprep.subr.mxu0 %v1815
        %1936 = vmatpush1.msra.mxu0 %v1814
        %1937 = vmatprep.subr.mxu0 %v1819
        %1938 = vmatpush1.msra.mxu0 %v1818
        %1939 = vmatprep.subr.mxu0 %v1823
        %1940 = vmatpush1.msra.mxu0 %v1822
        %1941 = vmatprep.subr.mxu0 %v1827
        %1942 = vmatpush1.msra.mxu0 %v1826
        %1943 = vmatprep.subr.mxu0 %v1831
        %1944 = vmatpush1.msra.mxu0 %v1830
        %1945 = vmatprep.subr.mxu0 %v1835
        %1946 = vmatpush1.msra.mxu0 %v1834
        %1947 = vmatprep.subr.mxu0 %v1839
        %1948 = vmatpush1.msra.mxu0 %v1838
        %1949 = vmatprep.subr.mxu0 %v1843
        %1950 = vmatpush1.msra.mxu0 %v1842
        %1951 = vmatprep.subr.mxu0 %v1847
        %1952 = vmatpush1.msra.mxu0 %v1846
        %1953 = vmatprep.subr.mxu0 %v1851
        %1954 = vmatpush1.msra.mxu0 %v1850
        %1955 = vmatprep.subr.mxu0 0.0
        %1956 = vmatpush1.msra.mxu0 0.0
        %1957 = vmatprep.subr.mxu0 0.0
        %1958 = vmatpush1.msra.mxu0 0.0
        %1959 = vmatprep.subr.mxu0 0.0
        %1960 = vmatpush1.msra.mxu0 0.0
        %1961 = vmatprep.subr.mxu0 0.0
        %1962 = vmatpush1.msra.mxu0 0.0
        %1963 = vmatprep.subr.mxu0 0.0
        %1964 = vmatpush1.msra.mxu0 0.0
        %1965 = vmatprep.subr.mxu0 0.0
        %1966 = vmatpush1.msra.mxu0 0.0
        %1967 = vmatprep.subr.mxu0 0.0
        %1968 = vmatpush1.msra.mxu0 0.0
        %1969 = vmatprep.subr.mxu0 0.0
        %1970 = vmatpush1.msra.mxu0 0.0
        %1971 = vmatprep.subr.mxu0 0.0
        %1972 = vmatpush1.msra.mxu0 0.0
        %1973 = vmatprep.subr.mxu0 0.0
        %1974 = vmatpush1.msra.mxu0 0.0
        %1975 = vmatprep.subr.mxu0 0.0
        %1976 = vmatpush1.msra.mxu0 0.0
        %1977 = vmatprep.subr.mxu0 0.0
        %1978 = vmatpush1.msra.mxu0 0.0
        %1979 = vmatprep.subr.mxu0 0.0
        %1980 = vmatpush1.msra.mxu0 0.0
        %1981 = vmatprep.subr.mxu0 0.0
        %1982 = vmatpush1.msra.mxu0 0.0
        %1983 = vmatprep.subr.mxu0 0.0
        %1984 = vmatpush1.msra.mxu0 0.0
        %1985 = vmatprep.subr.mxu0 0.0
        %1986 = vmatpush1.msra.mxu0 0.0
        %1987 = vmatprep.mubr.f32.mxu0 0.0
        %1988 = vmatmul.mubr.f32.gmra.mrb[0].mxu0 %v1722
        %v1989 = vpop.f32.mrb[0].mxu0
        %v1990 = vadd.f32 0.0, %v1989
        %v1991 = vpop.f32.mrb[0].mxu0
        %v1992 = vadd.f32 0.0, %v1991
        %1993 = vdwg.mxu0
        %1994 = vmatprep.subr.mxu0 %v1725
        %1995 = vmatpush1.msra.mxu0 %v1724
        %1996 = vmatprep.subr.mxu0 %v1729
        %1997 = vmatpush1.msra.mxu0 %v1728
        %1998 = vmatprep.subr.mxu0 %v1733
        %1999 = vmatpush1.msra.mxu0 %v1732
        %2000 = vmatprep.subr.mxu0 %v1737
        %2001 = vmatpush1.msra.mxu0 %v1736
        %2002 = vmatprep.subr.mxu0 %v1741
        %2003 = vmatpush1.msra.mxu0 %v1740
        %2004 = vmatprep.subr.mxu0 %v1745
        %2005 = vmatpush1.msra.mxu0 %v1744
        %2006 = vmatprep.subr.mxu0 %v1749
        %2007 = vmatpush1.msra.mxu0 %v1748
        %2008 = vmatprep.subr.mxu0 %v1753
        %2009 = vmatpush1.msra.mxu0 %v1752
        %2010 = vmatprep.subr.mxu0 %v1757
        %2011 = vmatpush1.msra.mxu0 %v1756
        %2012 = vmatprep.subr.mxu0 %v1761
        %2013 = vmatpush1.msra.mxu0 %v1760
        %2014 = vmatprep.subr.mxu0 %v1765
        %2015 = vmatpush1.msra.mxu0 %v1764
        %2016 = vmatprep.subr.mxu0 %v1769
        %2017 = vmatpush1.msra.mxu0 %v1768
        %2018 = vmatprep.subr.mxu0 %v1773
        %2019 = vmatpush1.msra.mxu0 %v1772
        %2020 = vmatprep.subr.mxu0 %v1777
        %2021 = vmatpush1.msra.mxu0 %v1776
        %2022 = vmatprep.subr.mxu0 %v1781
        %2023 = vmatpush1.msra.mxu0 %v1780
        %2024 = vmatprep.subr.mxu0 %v1785
        %2025 = vmatpush1.msra.mxu0 %v1784
        %2026 = vmatprep.subr.mxu0 0.0
        %2027 = vmatpush1.msra.mxu0 0.0
        %2028 = vmatprep.subr.mxu0 0.0
        %2029 = vmatpush1.msra.mxu0 0.0
        %2030 = vmatprep.subr.mxu0 0.0
        %2031 = vmatpush1.msra.mxu0 0.0
        %2032 = vmatprep.subr.mxu0 0.0
        %2033 = vmatpush1.msra.mxu0 0.0
        %2034 = vmatprep.subr.mxu0 0.0
        %2035 = vmatpush1.msra.mxu0 0.0
        %2036 = vmatprep.subr.mxu0 0.0
        %2037 = vmatpush1.msra.mxu0 0.0
        %2038 = vmatprep.subr.mxu0 0.0
        %2039 = vmatpush1.msra.mxu0 0.0
        %2040 = vmatprep.subr.mxu0 0.0
        %2041 = vmatpush1.msra.mxu0 0.0
        %2042 = vmatprep.subr.mxu0 0.0
        %2043 = vmatpush1.msra.mxu0 0.0
        %2044 = vmatprep.subr.mxu0 0.0
        %2045 = vmatpush1.msra.mxu0 0.0
        %2046 = vmatprep.subr.mxu0 0.0
        %2047 = vmatpush1.msra.mxu0 0.0
        %2048 = vmatprep.subr.mxu0 0.0
        %2049 = vmatpush1.msra.mxu0 0.0
        %2050 = vmatprep.subr.mxu0 0.0
        %2051 = vmatpush1.msra.mxu0 0.0
        %2052 = vmatprep.subr.mxu0 0.0
        %2053 = vmatpush1.msra.mxu0 0.0
        %2054 = vmatprep.subr.mxu0 0.0
        %2055 = vmatpush1.msra.mxu0 0.0
        %2056 = vmatprep.subr.mxu0 0.0
        %2057 = vmatpush1.msra.mxu0 0.0
        %2058 = vmatprep.mubr.f32.mxu0 0.0
        %2059 = vmatmul.mubr.f32.gmra.mrb[0].mxu0 %v1719
        %v2060 = vpop.f32.mrb[0].mxu0
        %v2061 = vadd.f32 %v1919, %v2060
        %v2062 = vpop.f32.mrb[0].mxu0
        %v2063 = vadd.f32 %v1921, %v2062
        %2064 = vdwg.mxu0
        %2065 = vmatprep.subr.mxu0 %v1727
        %2066 = vmatpush1.msra.mxu0 %v1726
        %2067 = vmatprep.subr.mxu0 %v1731
        %2068 = vmatpush1.msra.mxu0 %v1730
        %2069 = vmatprep.subr.mxu0 %v1735
        %2070 = vmatpush1.msra.mxu0 %v1734
        %2071 = vmatprep.subr.mxu0 %v1739
        %2072 = vmatpush1.msra.mxu0 %v1738
        %2073 = vmatprep.subr.mxu0 %v1743
        %2074 = vmatpush1.msra.mxu0 %v1742
        %2075 = vmatprep.subr.mxu0 %v1747
        %2076 = vmatpush1.msra.mxu0 %v1746
        %2077 = vmatprep.subr.mxu0 %v1751
        %2078 = vmatpush1.msra.mxu0 %v1750
        %2079 = vmatprep.subr.mxu0 %v1755
        %2080 = vmatpush1.msra.mxu0 %v1754
        %2081 = vmatprep.subr.mxu0 %v1759
        %2082 = vmatpush1.msra.mxu0 %v1758
        %2083 = vmatprep.subr.mxu0 %v1763
        %2084 = vmatpush1.msra.mxu0 %v1762
        %2085 = vmatprep.subr.mxu0 %v1767
        %2086 = vmatpush1.msra.mxu0 %v1766
        %2087 = vmatprep.subr.mxu0 %v1771
        %2088 = vmatpush1.msra.mxu0 %v1770
        %2089 = vmatprep.subr.mxu0 %v1775
        %2090 = vmatpush1.msra.mxu0 %v1774
        %2091 = vmatprep.subr.mxu0 %v1779
        %2092 = vmatpush1.msra.mxu0 %v1778
        %2093 = vmatprep.subr.mxu0 %v1783
        %2094 = vmatpush1.msra.mxu0 %v1782
        %2095 = vmatprep.subr.mxu0 %v1787
        %2096 = vmatpush1.msra.mxu0 %v1786
        %2097 = vmatprep.subr.mxu0 0.0
        %2098 = vmatpush1.msra.mxu0 0.0
        %2099 = vmatprep.subr.mxu0 0.0
        %2100 = vmatpush1.msra.mxu0 0.0
        %2101 = vmatprep.subr.mxu0 0.0
        %2102 = vmatpush1.msra.mxu0 0.0
        %2103 = vmatprep.subr.mxu0 0.0
        %2104 = vmatpush1.msra.mxu0 0.0
        %2105 = vmatprep.subr.mxu0 0.0
        %2106 = vmatpush1.msra.mxu0 0.0
        %2107 = vmatprep.subr.mxu0 0.0
        %2108 = vmatpush1.msra.mxu0 0.0
        %2109 = vmatprep.subr.mxu0 0.0
        %2110 = vmatpush1.msra.mxu0 0.0
        %2111 = vmatprep.subr.mxu0 0.0
        %2112 = vmatpush1.msra.mxu0 0.0
        %2113 = vmatprep.subr.mxu0 0.0
        %2114 = vmatpush1.msra.mxu0 0.0
        %2115 = vmatprep.subr.mxu0 0.0
        %2116 = vmatpush1.msra.mxu0 0.0
        %2117 = vmatprep.subr.mxu0 0.0
        %2118 = vmatpush1.msra.mxu0 0.0
        %2119 = vmatprep.subr.mxu0 0.0
        %2120 = vmatpush1.msra.mxu0 0.0
        %2121 = vmatprep.subr.mxu0 0.0
        %2122 = vmatpush1.msra.mxu0 0.0
        %2123 = vmatprep.subr.mxu0 0.0
        %2124 = vmatpush1.msra.mxu0 0.0
        %2125 = vmatprep.subr.mxu0 0.0
        %2126 = vmatpush1.msra.mxu0 0.0
        %2127 = vmatprep.subr.mxu0 0.0
        %2128 = vmatpush1.msra.mxu0 0.0
        %2129 = vmatprep.mubr.f32.mxu0 0.0
        %2130 = vmatmul.mubr.f32.gmra.mrb[0].mxu0 %v1719
        %v2131 = vpop.f32.mrb[0].mxu0
        %v2132 = vadd.f32 %v1990, %v2131
        %v2133 = vpop.f32.mrb[0].mxu0
        %v2134 = vadd.f32 %v1992, %v2133
        %2135 = vdwg.mxu0
        %v2136 = vxor.u32 %v2061, 2147483648
        %v2137 = vmul.f32 %v2136, 1.442695
        %v2138 = vpow.pop %v2137
        %v2139 = vadd.f32 %v2138, 1.0
        %v2140 = vrcp.pop %v2139
        %v2141 = vmul.f32 1.0, %v2140
        %v2142 = vxor.u32 %v2063, 2147483648
        %v2143 = vmul.f32 %v2142, 1.442695
        %v2144 = vpow.pop %v2143
        %v2145 = vadd.f32 %v2144, 1.0
        %v2146 = vrcp.pop %v2145
        %v2147 = vmul.f32 1.0, %v2146
        %v2148 = vtanh.pop %v2132
        %v2149 = vxor.u32 %v2134, 2147483648
        %v2150 = vmul.f32 %v2149, 1.442695
        %v2151 = vpow.pop %v2150
        %v2152 = vadd.f32 %v2151, 1.0
        %v2153 = vrcp.pop %v2152
        %v2154 = vmul.f32 1.0, %v2153
        %v2155 = vmul.f32 %v2147, %v1723
        %v2156 = vmul.f32 %v2141, %v2148
        %v2157 = vadd.f32 %v2155, %v2156
        %v2158 = vtanh.pop %v2157
        %v2159 = vmul.f32 %v2154, %v2158
        %2160 = vst [vmem:[#allocation3] sm:$0xff] %v2159
        %2161 = vst [vmem:[#allocation5] sm:$0xff] %v2157
        %s2162 = scalar_lea.vmem [#allocation6], 8
        %2163 = vst [vmem:[%s2162] sm:$0xff] %v2159
        %s2164 = scalar_lea.vmem %s382, 16
        %v2165 = vld [vmem:[%s2164] sm:$0xff]
        %v2166 = vld [vmem:[#allocation2] sm:$0xff]
        %v2167 = vld [vmem:[#allocation4] sm:$0xff]
        %v2168 = vld [vmem:[#allocation7] sm:$0xff]
        %v2169 = vld [vmem:[#allocation7 + $0x8] sm:$0xff]
        %v2170 = vld [vmem:[#allocation7 + $0x10] sm:$0xff]
        %v2171 = vld [vmem:[#allocation7 + $0x18] sm:$0xff]
        %v2172 = vld [vmem:[#allocation7 + $0x20] sm:$0xff]
        %v2173 = vld [vmem:[#allocation7 + $0x28] sm:$0xff]
        %v2174 = vld [vmem:[#allocation7 + $0x30] sm:$0xff]
        %v2175 = vld [vmem:[#allocation7 + $0x38] sm:$0xff]
        %v2176 = vld [vmem:[#allocation7 + $0x40] sm:$0xff]
        %v2177 = vld [vmem:[#allocation7 + $0x48] sm:$0xff]
        %v2178 = vld [vmem:[#allocation7 + $0x50] sm:$0xff]
        %v2179 = vld [vmem:[#allocation7 + $0x58] sm:$0xff]
        %v2180 = vld [vmem:[#allocation7 + $0x60] sm:$0xff]
        %v2181 = vld [vmem:[#allocation7 + $0x68] sm:$0xff]
        %v2182 = vld [vmem:[#allocation7 + $0x70] sm:$0xff]
        %v2183 = vld [vmem:[#allocation7 + $0x78] sm:$0xff]
        %v2184 = vld [vmem:[#allocation7 + $0x80] sm:$0xff]
        %v2185 = vld [vmem:[#allocation7 + $0x88] sm:$0xff]
        %v2186 = vld [vmem:[#allocation7 + $0x90] sm:$0xff]
        %v2187 = vld [vmem:[#allocation7 + $0x98] sm:$0xff]
        %v2188 = vld [vmem:[#allocation7 + $0xa0] sm:$0xff]
        %v2189 = vld [vmem:[#allocation7 + $0xa8] sm:$0xff]
        %v2190 = vld [vmem:[#allocation7 + $0xb0] sm:$0xff]
        %v2191 = vld [vmem:[#allocation7 + $0xb8] sm:$0xff]
        %v2192 = vld [vmem:[#allocation7 + $0xc0] sm:$0xff]
        %v2193 = vld [vmem:[#allocation7 + $0xc8] sm:$0xff]
        %v2194 = vld [vmem:[#allocation7 + $0xd0] sm:$0xff]
        %v2195 = vld [vmem:[#allocation7 + $0xd8] sm:$0xff]
        %v2196 = vld [vmem:[#allocation7 + $0xe0] sm:$0xff]
        %v2197 = vld [vmem:[#allocation7 + $0xe8] sm:$0xff]
        %v2198 = vld [vmem:[#allocation7 + $0xf0] sm:$0xff]
        %v2199 = vld [vmem:[#allocation7 + $0xf8] sm:$0xff]
        %v2200 = vld [vmem:[#allocation7 + $0x100] sm:$0xff]
        %v2201 = vld [vmem:[#allocation7 + $0x108] sm:$0xff]
        %v2202 = vld [vmem:[#allocation7 + $0x110] sm:$0xff]
        %v2203 = vld [vmem:[#allocation7 + $0x118] sm:$0xff]
        %v2204 = vld [vmem:[#allocation7 + $0x120] sm:$0xff]
        %v2205 = vld [vmem:[#allocation7 + $0x128] sm:$0xff]
        %v2206 = vld [vmem:[#allocation7 + $0x130] sm:$0xff]
        %v2207 = vld [vmem:[#allocation7 + $0x138] sm:$0xff]
        %v2208 = vld [vmem:[#allocation7 + $0x140] sm:$0xff]
        %v2209 = vld [vmem:[#allocation7 + $0x148] sm:$0xff]
        %v2210 = vld [vmem:[#allocation7 + $0x150] sm:$0xff]
        %v2211 = vld [vmem:[#allocation7 + $0x158] sm:$0xff]
        %v2212 = vld [vmem:[#allocation7 + $0x160] sm:$0xff]
        %v2213 = vld [vmem:[#allocation7 + $0x168] sm:$0xff]
        %v2214 = vld [vmem:[#allocation7 + $0x170] sm:$0xff]
        %v2215 = vld [vmem:[#allocation7 + $0x178] sm:$0xff]
        %v2216 = vld [vmem:[#allocation7 + $0x180] sm:$0xff]
        %v2217 = vld [vmem:[#allocation7 + $0x188] sm:$0xff]
        %v2218 = vld [vmem:[#allocation7 + $0x190] sm:$0xff]
        %v2219 = vld [vmem:[#allocation7 + $0x198] sm:$0xff]
        %v2220 = vld [vmem:[#allocation7 + $0x1a0] sm:$0xff]
        %v2221 = vld [vmem:[#allocation7 + $0x1a8] sm:$0xff]
        %v2222 = vld [vmem:[#allocation7 + $0x1b0] sm:$0xff]
        %v2223 = vld [vmem:[#allocation7 + $0x1b8] sm:$0xff]
        %v2224 = vld [vmem:[#allocation7 + $0x1c0] sm:$0xff]
        %v2225 = vld [vmem:[#allocation7 + $0x1c8] sm:$0xff]
        %v2226 = vld [vmem:[#allocation7 + $0x1d0] sm:$0xff]
        %v2227 = vld [vmem:[#allocation7 + $0x1d8] sm:$0xff]
        %v2228 = vld [vmem:[#allocation7 + $0x1e0] sm:$0xff]
        %v2229 = vld [vmem:[#allocation7 + $0x1e8] sm:$0xff]
        %v2230 = vld [vmem:[#allocation7 + $0x1f0] sm:$0xff]
        %v2231 = vld [vmem:[#allocation7 + $0x1f8] sm:$0xff]
        %v2232 = vld [vmem:[#allocation9] sm:$0xff]
        %v2233 = vld [vmem:[#allocation9 + $0x8] sm:$0xff]
        %v2234 = vld [vmem:[#allocation9 + $0x10] sm:$0xff]
        %v2235 = vld [vmem:[#allocation9 + $0x18] sm:$0xff]
        %v2236 = vld [vmem:[#allocation9 + $0x20] sm:$0xff]
        %v2237 = vld [vmem:[#allocation9 + $0x28] sm:$0xff]
        %v2238 = vld [vmem:[#allocation9 + $0x30] sm:$0xff]
        %v2239 = vld [vmem:[#allocation9 + $0x38] sm:$0xff]
        %v2240 = vld [vmem:[#allocation9 + $0x40] sm:$0xff]
        %v2241 = vld [vmem:[#allocation9 + $0x48] sm:$0xff]
        %v2242 = vld [vmem:[#allocation9 + $0x50] sm:$0xff]
        %v2243 = vld [vmem:[#allocation9 + $0x58] sm:$0xff]
        %v2244 = vld [vmem:[#allocation9 + $0x60] sm:$0xff]
        %v2245 = vld [vmem:[#allocation9 + $0x68] sm:$0xff]
        %v2246 = vld [vmem:[#allocation9 + $0x70] sm:$0xff]
        %v2247 = vld [vmem:[#allocation9 + $0x78] sm:$0xff]
        %v2248 = vld [vmem:[#allocation9 + $0x80] sm:$0xff]
        %v2249 = vld [vmem:[#allocation9 + $0x88] sm:$0xff]
        %v2250 = vld [vmem:[#allocation9 + $0x90] sm:$0xff]
        %v2251 = vld [vmem:[#allocation9 + $0x98] sm:$0xff]
        %v2252 = vld [vmem:[#allocation9 + $0xa0] sm:$0xff]
        %v2253 = vld [vmem:[#allocation9 + $0xa8] sm:$0xff]
        %v2254 = vld [vmem:[#allocation9 + $0xb0] sm:$0xff]
        %v2255 = vld [vmem:[#allocation9 + $0xb8] sm:$0xff]
        %v2256 = vld [vmem:[#allocation9 + $0xc0] sm:$0xff]
        %v2257 = vld [vmem:[#allocation9 + $0xc8] sm:$0xff]
        %v2258 = vld [vmem:[#allocation9 + $0xd0] sm:$0xff]
        %v2259 = vld [vmem:[#allocation9 + $0xd8] sm:$0xff]
        %v2260 = vld [vmem:[#allocation9 + $0xe0] sm:$0xff]
        %v2261 = vld [vmem:[#allocation9 + $0xe8] sm:$0xff]
        %v2262 = vld [vmem:[#allocation9 + $0xf0] sm:$0xff]
        %v2263 = vld [vmem:[#allocation9 + $0xf8] sm:$0xff]
        %v2264 = vld [vmem:[#allocation9 + $0x100] sm:$0xff]
        %v2265 = vld [vmem:[#allocation9 + $0x108] sm:$0xff]
        %v2266 = vld [vmem:[#allocation9 + $0x110] sm:$0xff]
        %v2267 = vld [vmem:[#allocation9 + $0x118] sm:$0xff]
        %v2268 = vld [vmem:[#allocation9 + $0x120] sm:$0xff]
        %v2269 = vld [vmem:[#allocation9 + $0x128] sm:$0xff]
        %v2270 = vld [vmem:[#allocation9 + $0x130] sm:$0xff]
        %v2271 = vld [vmem:[#allocation9 + $0x138] sm:$0xff]
        %v2272 = vld [vmem:[#allocation9 + $0x140] sm:$0xff]
        %v2273 = vld [vmem:[#allocation9 + $0x148] sm:$0xff]
        %v2274 = vld [vmem:[#allocation9 + $0x150] sm:$0xff]
        %v2275 = vld [vmem:[#allocation9 + $0x158] sm:$0xff]
        %v2276 = vld [vmem:[#allocation9 + $0x160] sm:$0xff]
        %v2277 = vld [vmem:[#allocation9 + $0x168] sm:$0xff]
        %v2278 = vld [vmem:[#allocation9 + $0x170] sm:$0xff]
        %v2279 = vld [vmem:[#allocation9 + $0x178] sm:$0xff]
        %v2280 = vld [vmem:[#allocation9 + $0x180] sm:$0xff]
        %v2281 = vld [vmem:[#allocation9 + $0x188] sm:$0xff]
        %v2282 = vld [vmem:[#allocation9 + $0x190] sm:$0xff]
        %v2283 = vld [vmem:[#allocation9 + $0x198] sm:$0xff]
        %v2284 = vld [vmem:[#allocation9 + $0x1a0] sm:$0xff]
        %v2285 = vld [vmem:[#allocation9 + $0x1a8] sm:$0xff]
        %v2286 = vld [vmem:[#allocation9 + $0x1b0] sm:$0xff]
        %v2287 = vld [vmem:[#allocation9 + $0x1b8] sm:$0xff]
        %v2288 = vld [vmem:[#allocation9 + $0x1c0] sm:$0xff]
        %v2289 = vld [vmem:[#allocation9 + $0x1c8] sm:$0xff]
        %v2290 = vld [vmem:[#allocation9 + $0x1d0] sm:$0xff]
        %v2291 = vld [vmem:[#allocation9 + $0x1d8] sm:$0xff]
        %v2292 = vld [vmem:[#allocation9 + $0x1e0] sm:$0xff]
        %v2293 = vld [vmem:[#allocation9 + $0x1e8] sm:$0xff]
        %v2294 = vld [vmem:[#allocation9 + $0x1f0] sm:$0xff]
        %v2295 = vld [vmem:[#allocation9 + $0x1f8] sm:$0xff]
        %2296 = vmatprep.subr.mxu0 %v2233
        %2297 = vmatpush1.msra.mxu0 %v2232
        %2298 = vmatprep.subr.mxu0 %v2237
        %2299 = vmatpush1.msra.mxu0 %v2236
        %2300 = vmatprep.subr.mxu0 %v2241
        %2301 = vmatpush1.msra.mxu0 %v2240
        %2302 = vmatprep.subr.mxu0 %v2245
        %2303 = vmatpush1.msra.mxu0 %v2244
        %2304 = vmatprep.subr.mxu0 %v2249
        %2305 = vmatpush1.msra.mxu0 %v2248
        %2306 = vmatprep.subr.mxu0 %v2253
        %2307 = vmatpush1.msra.mxu0 %v2252
        %2308 = vmatprep.subr.mxu0 %v2257
        %2309 = vmatpush1.msra.mxu0 %v2256
        %2310 = vmatprep.subr.mxu0 %v2261
        %2311 = vmatpush1.msra.mxu0 %v2260
        %2312 = vmatprep.subr.mxu0 %v2265
        %2313 = vmatpush1.msra.mxu0 %v2264
        %2314 = vmatprep.subr.mxu0 %v2269
        %2315 = vmatpush1.msra.mxu0 %v2268
        %2316 = vmatprep.subr.mxu0 %v2273
        %2317 = vmatpush1.msra.mxu0 %v2272
        %2318 = vmatprep.subr.mxu0 %v2277
        %2319 = vmatpush1.msra.mxu0 %v2276
        %2320 = vmatprep.subr.mxu0 %v2281
        %2321 = vmatpush1.msra.mxu0 %v2280
        %2322 = vmatprep.subr.mxu0 %v2285
        %2323 = vmatpush1.msra.mxu0 %v2284
        %2324 = vmatprep.subr.mxu0 %v2289
        %2325 = vmatpush1.msra.mxu0 %v2288
        %2326 = vmatprep.subr.mxu0 %v2293
        %2327 = vmatpush1.msra.mxu0 %v2292
        %2328 = vmatprep.subr.mxu0 0.0
        %2329 = vmatpush1.msra.mxu0 0.0
        %2330 = vmatprep.subr.mxu0 0.0
        %2331 = vmatpush1.msra.mxu0 0.0
        %2332 = vmatprep.subr.mxu0 0.0
        %2333 = vmatpush1.msra.mxu0 0.0
        %2334 = vmatprep.subr.mxu0 0.0
        %2335 = vmatpush1.msra.mxu0 0.0
        %2336 = vmatprep.subr.mxu0 0.0
        %2337 = vmatpush1.msra.mxu0 0.0
        %2338 = vmatprep.subr.mxu0 0.0
        %2339 = vmatpush1.msra.mxu0 0.0
        %2340 = vmatprep.subr.mxu0 0.0
        %2341 = vmatpush1.msra.mxu0 0.0
        %2342 = vmatprep.subr.mxu0 0.0
        %2343 = vmatpush1.msra.mxu0 0.0
        %2344 = vmatprep.subr.mxu0 0.0
        %2345 = vmatpush1.msra.mxu0 0.0
        %2346 = vmatprep.subr.mxu0 0.0
        %2347 = vmatpush1.msra.mxu0 0.0
        %2348 = vmatprep.subr.mxu0 0.0
        %2349 = vmatpush1.msra.mxu0 0.0
        %2350 = vmatprep.subr.mxu0 0.0
        %2351 = vmatpush1.msra.mxu0 0.0
        %2352 = vmatprep.subr.mxu0 0.0
        %2353 = vmatpush1.msra.mxu0 0.0
        %2354 = vmatprep.subr.mxu0 0.0
        %2355 = vmatpush1.msra.mxu0 0.0
        %2356 = vmatprep.subr.mxu0 0.0
        %2357 = vmatpush1.msra.mxu0 0.0
        %2358 = vmatprep.subr.mxu0 0.0
        %2359 = vmatpush1.msra.mxu0 0.0
        %2360 = vmatprep.mubr.f32.mxu0 0.0
        %2361 = vmatmul.mubr.f32.gmra.mrb[0].mxu0 %v2166
        %v2362 = vpop.f32.mrb[0].mxu0
        %v2363 = vadd.f32 0.0, %v2362
        %v2364 = vpop.f32.mrb[0].mxu0
        %v2365 = vadd.f32 0.0, %v2364
        %2366 = vdwg.mxu0
        %2367 = vmatprep.subr.mxu0 %v2235
        %2368 = vmatpush1.msra.mxu0 %v2234
        %2369 = vmatprep.subr.mxu0 %v2239
        %2370 = vmatpush1.msra.mxu0 %v2238
        %2371 = vmatprep.subr.mxu0 %v2243
        %2372 = vmatpush1.msra.mxu0 %v2242
        %2373 = vmatprep.subr.mxu0 %v2247
        %2374 = vmatpush1.msra.mxu0 %v2246
        %2375 = vmatprep.subr.mxu0 %v2251
        %2376 = vmatpush1.msra.mxu0 %v2250
        %2377 = vmatprep.subr.mxu0 %v2255
        %2378 = vmatpush1.msra.mxu0 %v2254
        %2379 = vmatprep.subr.mxu0 %v2259
        %2380 = vmatpush1.msra.mxu0 %v2258
        %2381 = vmatprep.subr.mxu0 %v2263
        %2382 = vmatpush1.msra.mxu0 %v2262
        %2383 = vmatprep.subr.mxu0 %v2267
        %2384 = vmatpush1.msra.mxu0 %v2266
        %2385 = vmatprep.subr.mxu0 %v2271
        %2386 = vmatpush1.msra.mxu0 %v2270
        %2387 = vmatprep.subr.mxu0 %v2275
        %2388 = vmatpush1.msra.mxu0 %v2274
        %2389 = vmatprep.subr.mxu0 %v2279
        %2390 = vmatpush1.msra.mxu0 %v2278
        %2391 = vmatprep.subr.mxu0 %v2283
        %2392 = vmatpush1.msra.mxu0 %v2282
        %2393 = vmatprep.subr.mxu0 %v2287
        %2394 = vmatpush1.msra.mxu0 %v2286
        %2395 = vmatprep.subr.mxu0 %v2291
        %2396 = vmatpush1.msra.mxu0 %v2290
        %2397 = vmatprep.subr.mxu0 %v2295
        %2398 = vmatpush1.msra.mxu0 %v2294
        %2399 = vmatprep.subr.mxu0 0.0
        %2400 = vmatpush1.msra.mxu0 0.0
        %2401 = vmatprep.subr.mxu0 0.0
        %2402 = vmatpush1.msra.mxu0 0.0
        %2403 = vmatprep.subr.mxu0 0.0
        %2404 = vmatpush1.msra.mxu0 0.0
        %2405 = vmatprep.subr.mxu0 0.0
        %2406 = vmatpush1.msra.mxu0 0.0
        %2407 = vmatprep.subr.mxu0 0.0
        %2408 = vmatpush1.msra.mxu0 0.0
        %2409 = vmatprep.subr.mxu0 0.0
        %2410 = vmatpush1.msra.mxu0 0.0
        %2411 = vmatprep.subr.mxu0 0.0
        %2412 = vmatpush1.msra.mxu0 0.0
        %2413 = vmatprep.subr.mxu0 0.0
        %2414 = vmatpush1.msra.mxu0 0.0
        %2415 = vmatprep.subr.mxu0 0.0
        %2416 = vmatpush1.msra.mxu0 0.0
        %2417 = vmatprep.subr.mxu0 0.0
        %2418 = vmatpush1.msra.mxu0 0.0
        %2419 = vmatprep.subr.mxu0 0.0
        %2420 = vmatpush1.msra.mxu0 0.0
        %2421 = vmatprep.subr.mxu0 0.0
        %2422 = vmatpush1.msra.mxu0 0.0
        %2423 = vmatprep.subr.mxu0 0.0
        %2424 = vmatpush1.msra.mxu0 0.0
        %2425 = vmatprep.subr.mxu0 0.0
        %2426 = vmatpush1.msra.mxu0 0.0
        %2427 = vmatprep.subr.mxu0 0.0
        %2428 = vmatpush1.msra.mxu0 0.0
        %2429 = vmatprep.subr.mxu0 0.0
        %2430 = vmatpush1.msra.mxu0 0.0
        %2431 = vmatprep.mubr.f32.mxu0 0.0
        %2432 = vmatmul.mubr.f32.gmra.mrb[0].mxu0 %v2166
        %v2433 = vpop.f32.mrb[0].mxu0
        %v2434 = vadd.f32 0.0, %v2433
        %v2435 = vpop.f32.mrb[0].mxu0
        %v2436 = vadd.f32 0.0, %v2435
        %2437 = vdwg.mxu0
        %2438 = vmatprep.subr.mxu0 %v2169
        %2439 = vmatpush1.msra.mxu0 %v2168
        %2440 = vmatprep.subr.mxu0 %v2173
        %2441 = vmatpush1.msra.mxu0 %v2172
        %2442 = vmatprep.subr.mxu0 %v2177
        %2443 = vmatpush1.msra.mxu0 %v2176
        %2444 = vmatprep.subr.mxu0 %v2181
        %2445 = vmatpush1.msra.mxu0 %v2180
        %2446 = vmatprep.subr.mxu0 %v2185
        %2447 = vmatpush1.msra.mxu0 %v2184
        %2448 = vmatprep.subr.mxu0 %v2189
        %2449 = vmatpush1.msra.mxu0 %v2188
        %2450 = vmatprep.subr.mxu0 %v2193
        %2451 = vmatpush1.msra.mxu0 %v2192
        %2452 = vmatprep.subr.mxu0 %v2197
        %2453 = vmatpush1.msra.mxu0 %v2196
        %2454 = vmatprep.subr.mxu0 %v2201
        %2455 = vmatpush1.msra.mxu0 %v2200
        %2456 = vmatprep.subr.mxu0 %v2205
        %2457 = vmatpush1.msra.mxu0 %v2204
        %2458 = vmatprep.subr.mxu0 %v2209
        %2459 = vmatpush1.msra.mxu0 %v2208
        %2460 = vmatprep.subr.mxu0 %v2213
        %2461 = vmatpush1.msra.mxu0 %v2212
        %2462 = vmatprep.subr.mxu0 %v2217
        %2463 = vmatpush1.msra.mxu0 %v2216
        %2464 = vmatprep.subr.mxu0 %v2221
        %2465 = vmatpush1.msra.mxu0 %v2220
        %2466 = vmatprep.subr.mxu0 %v2225
        %2467 = vmatpush1.msra.mxu0 %v2224
        %2468 = vmatprep.subr.mxu0 %v2229
        %2469 = vmatpush1.msra.mxu0 %v2228
        %2470 = vmatprep.subr.mxu0 0.0
        %2471 = vmatpush1.msra.mxu0 0.0
        %2472 = vmatprep.subr.mxu0 0.0
        %2473 = vmatpush1.msra.mxu0 0.0
        %2474 = vmatprep.subr.mxu0 0.0
        %2475 = vmatpush1.msra.mxu0 0.0
        %2476 = vmatprep.subr.mxu0 0.0
        %2477 = vmatpush1.msra.mxu0 0.0
        %2478 = vmatprep.subr.mxu0 0.0
        %2479 = vmatpush1.msra.mxu0 0.0
        %2480 = vmatprep.subr.mxu0 0.0
        %2481 = vmatpush1.msra.mxu0 0.0
        %2482 = vmatprep.subr.mxu0 0.0
        %2483 = vmatpush1.msra.mxu0 0.0
        %2484 = vmatprep.subr.mxu0 0.0
        %2485 = vmatpush1.msra.mxu0 0.0
        %2486 = vmatprep.subr.mxu0 0.0
        %2487 = vmatpush1.msra.mxu0 0.0
        %2488 = vmatprep.subr.mxu0 0.0
        %2489 = vmatpush1.msra.mxu0 0.0
        %2490 = vmatprep.subr.mxu0 0.0
        %2491 = vmatpush1.msra.mxu0 0.0
        %2492 = vmatprep.subr.mxu0 0.0
        %2493 = vmatpush1.msra.mxu0 0.0
        %2494 = vmatprep.subr.mxu0 0.0
        %2495 = vmatpush1.msra.mxu0 0.0
        %2496 = vmatprep.subr.mxu0 0.0
        %2497 = vmatpush1.msra.mxu0 0.0
        %2498 = vmatprep.subr.mxu0 0.0
        %2499 = vmatpush1.msra.mxu0 0.0
        %2500 = vmatprep.subr.mxu0 0.0
        %2501 = vmatpush1.msra.mxu0 0.0
        %2502 = vmatprep.mubr.f32.mxu0 0.0
        %2503 = vmatmul.mubr.f32.gmra.mrb[0].mxu0 %v2165
        %v2504 = vpop.f32.mrb[0].mxu0
        %v2505 = vadd.f32 %v2363, %v2504
        %v2506 = vpop.f32.mrb[0].mxu0
        %v2507 = vadd.f32 %v2365, %v2506
        %2508 = vdwg.mxu0
        %2509 = vmatprep.subr.mxu0 %v2171
        %2510 = vmatpush1.msra.mxu0 %v2170
        %2511 = vmatprep.subr.mxu0 %v2175
        %2512 = vmatpush1.msra.mxu0 %v2174
        %2513 = vmatprep.subr.mxu0 %v2179
        %2514 = vmatpush1.msra.mxu0 %v2178
        %2515 = vmatprep.subr.mxu0 %v2183
        %2516 = vmatpush1.msra.mxu0 %v2182
        %2517 = vmatprep.subr.mxu0 %v2187
        %2518 = vmatpush1.msra.mxu0 %v2186
        %2519 = vmatprep.subr.mxu0 %v2191
        %2520 = vmatpush1.msra.mxu0 %v2190
        %2521 = vmatprep.subr.mxu0 %v2195
        %2522 = vmatpush1.msra.mxu0 %v2194
        %2523 = vmatprep.subr.mxu0 %v2199
        %2524 = vmatpush1.msra.mxu0 %v2198
        %2525 = vmatprep.subr.mxu0 %v2203
        %2526 = vmatpush1.msra.mxu0 %v2202
        %2527 = vmatprep.subr.mxu0 %v2207
        %2528 = vmatpush1.msra.mxu0 %v2206
        %2529 = vmatprep.subr.mxu0 %v2211
        %2530 = vmatpush1.msra.mxu0 %v2210
        %2531 = vmatprep.subr.mxu0 %v2215
        %2532 = vmatpush1.msra.mxu0 %v2214
        %2533 = vmatprep.subr.mxu0 %v2219
        %2534 = vmatpush1.msra.mxu0 %v2218
        %2535 = vmatprep.subr.mxu0 %v2223
        %2536 = vmatpush1.msra.mxu0 %v2222
        %2537 = vmatprep.subr.mxu0 %v2227
        %2538 = vmatpush1.msra.mxu0 %v2226
        %2539 = vmatprep.subr.mxu0 %v2231
        %2540 = vmatpush1.msra.mxu0 %v2230
        %2541 = vmatprep.subr.mxu0 0.0
        %2542 = vmatpush1.msra.mxu0 0.0
        %2543 = vmatprep.subr.mxu0 0.0
        %2544 = vmatpush1.msra.mxu0 0.0
        %2545 = vmatprep.subr.mxu0 0.0
        %2546 = vmatpush1.msra.mxu0 0.0
        %2547 = vmatprep.subr.mxu0 0.0
        %2548 = vmatpush1.msra.mxu0 0.0
        %2549 = vmatprep.subr.mxu0 0.0
        %2550 = vmatpush1.msra.mxu0 0.0
        %2551 = vmatprep.subr.mxu0 0.0
        %2552 = vmatpush1.msra.mxu0 0.0
        %2553 = vmatprep.subr.mxu0 0.0
        %2554 = vmatpush1.msra.mxu0 0.0
        %2555 = vmatprep.subr.mxu0 0.0
        %2556 = vmatpush1.msra.mxu0 0.0
        %2557 = vmatprep.subr.mxu0 0.0
        %2558 = vmatpush1.msra.mxu0 0.0
        %2559 = vmatprep.subr.mxu0 0.0
        %2560 = vmatpush1.msra.mxu0 0.0
        %2561 = vmatprep.subr.mxu0 0.0
        %2562 = vmatpush1.msra.mxu0 0.0
        %2563 = vmatprep.subr.mxu0 0.0
        %2564 = vmatpush1.msra.mxu0 0.0
        %2565 = vmatprep.subr.mxu0 0.0
        %2566 = vmatpush1.msra.mxu0 0.0
        %2567 = vmatprep.subr.mxu0 0.0
        %2568 = vmatpush1.msra.mxu0 0.0
        %2569 = vmatprep.subr.mxu0 0.0
        %2570 = vmatpush1.msra.mxu0 0.0
        %2571 = vmatprep.subr.mxu0 0.0
        %2572 = vmatpush1.msra.mxu0 0.0
        %2573 = vmatprep.mubr.f32.mxu0 0.0
        %2574 = vmatmul.mubr.f32.gmra.mrb[0].mxu0 %v2165
        %v2575 = vpop.f32.mrb[0].mxu0
        %v2576 = vadd.f32 %v2434, %v2575
        %v2577 = vpop.f32.mrb[0].mxu0
        %v2578 = vadd.f32 %v2436, %v2577
        %2579 = vdwg.mxu0
        %v2580 = vxor.u32 %v2505, 2147483648
        %v2581 = vmul.f32 %v2580, 1.442695
        %v2582 = vpow.pop %v2581
        %v2583 = vadd.f32 %v2582, 1.0
        %v2584 = vrcp.pop %v2583
        %v2585 = vmul.f32 1.0, %v2584
        %v2586 = vxor.u32 %v2507, 2147483648
        %v2587 = vmul.f32 %v2586, 1.442695
        %v2588 = vpow.pop %v2587
        %v2589 = vadd.f32 %v2588, 1.0
        %v2590 = vrcp.pop %v2589
        %v2591 = vmul.f32 1.0, %v2590
        %v2592 = vtanh.pop %v2576
        %v2593 = vxor.u32 %v2578, 2147483648
        %v2594 = vmul.f32 %v2593, 1.442695
        %v2595 = vpow.pop %v2594
        %v2596 = vadd.f32 %v2595, 1.0
        %v2597 = vrcp.pop %v2596
        %v2598 = vmul.f32 1.0, %v2597
        %v2599 = vmul.f32 %v2591, %v2167
        %v2600 = vmul.f32 %v2585, %v2592
        %v2601 = vadd.f32 %v2599, %v2600
        %v2602 = vtanh.pop %v2601
        %v2603 = vmul.f32 %v2598, %v2602
        %2604 = vst [vmem:[#allocation2] sm:$0xff] %v2603
        %2605 = vst [vmem:[#allocation4] sm:$0xff] %v2601
        %v2606 = vld [vmem:[#allocation3] sm:$0xff]
        %v2607 = vld [vmem:[#allocation5] sm:$0xff]
        %v2608 = vld [vmem:[#allocation11] sm:$0xff]
        %v2609 = vld [vmem:[#allocation11 + $0x8] sm:$0xff]
        %v2610 = vld [vmem:[#allocation11 + $0x10] sm:$0xff]
        %v2611 = vld [vmem:[#allocation11 + $0x18] sm:$0xff]
        %v2612 = vld [vmem:[#allocation11 + $0x20] sm:$0xff]
        %v2613 = vld [vmem:[#allocation11 + $0x28] sm:$0xff]
        %v2614 = vld [vmem:[#allocation11 + $0x30] sm:$0xff]
        %v2615 = vld [vmem:[#allocation11 + $0x38] sm:$0xff]
        %v2616 = vld [vmem:[#allocation11 + $0x40] sm:$0xff]
        %v2617 = vld [vmem:[#allocation11 + $0x48] sm:$0xff]
        %v2618 = vld [vmem:[#allocation11 + $0x50] sm:$0xff]
        %v2619 = vld [vmem:[#allocation11 + $0x58] sm:$0xff]
        %v2620 = vld [vmem:[#allocation11 + $0x60] sm:$0xff]
        %v2621 = vld [vmem:[#allocation11 + $0x68] sm:$0xff]
        %v2622 = vld [vmem:[#allocation11 + $0x70] sm:$0xff]
        %v2623 = vld [vmem:[#allocation11 + $0x78] sm:$0xff]
        %v2624 = vld [vmem:[#allocation11 + $0x80] sm:$0xff]
        %v2625 = vld [vmem:[#allocation11 + $0x88] sm:$0xff]
        %v2626 = vld [vmem:[#allocation11 + $0x90] sm:$0xff]
        %v2627 = vld [vmem:[#allocation11 + $0x98] sm:$0xff]
        %v2628 = vld [vmem:[#allocation11 + $0xa0] sm:$0xff]
        %v2629 = vld [vmem:[#allocation11 + $0xa8] sm:$0xff]
        %v2630 = vld [vmem:[#allocation11 + $0xb0] sm:$0xff]
        %v2631 = vld [vmem:[#allocation11 + $0xb8] sm:$0xff]
        %v2632 = vld [vmem:[#allocation11 + $0xc0] sm:$0xff]
        %v2633 = vld [vmem:[#allocation11 + $0xc8] sm:$0xff]
        %v2634 = vld [vmem:[#allocation11 + $0xd0] sm:$0xff]
        %v2635 = vld [vmem:[#allocation11 + $0xd8] sm:$0xff]
        %v2636 = vld [vmem:[#allocation11 + $0xe0] sm:$0xff]
        %v2637 = vld [vmem:[#allocation11 + $0xe8] sm:$0xff]
        %v2638 = vld [vmem:[#allocation11 + $0xf0] sm:$0xff]
        %v2639 = vld [vmem:[#allocation11 + $0xf8] sm:$0xff]
        %v2640 = vld [vmem:[#allocation11 + $0x100] sm:$0xff]
        %v2641 = vld [vmem:[#allocation11 + $0x108] sm:$0xff]
        %v2642 = vld [vmem:[#allocation11 + $0x110] sm:$0xff]
        %v2643 = vld [vmem:[#allocation11 + $0x118] sm:$0xff]
        %v2644 = vld [vmem:[#allocation11 + $0x120] sm:$0xff]
        %v2645 = vld [vmem:[#allocation11 + $0x128] sm:$0xff]
        %v2646 = vld [vmem:[#allocation11 + $0x130] sm:$0xff]
        %v2647 = vld [vmem:[#allocation11 + $0x138] sm:$0xff]
        %v2648 = vld [vmem:[#allocation11 + $0x140] sm:$0xff]
        %v2649 = vld [vmem:[#allocation11 + $0x148] sm:$0xff]
        %v2650 = vld [vmem:[#allocation11 + $0x150] sm:$0xff]
        %v2651 = vld [vmem:[#allocation11 + $0x158] sm:$0xff]
        %v2652 = vld [vmem:[#allocation11 + $0x160] sm:$0xff]
        %v2653 = vld [vmem:[#allocation11 + $0x168] sm:$0xff]
        %v2654 = vld [vmem:[#allocation11 + $0x170] sm:$0xff]
        %v2655 = vld [vmem:[#allocation11 + $0x178] sm:$0xff]
        %v2656 = vld [vmem:[#allocation11 + $0x180] sm:$0xff]
        %v2657 = vld [vmem:[#allocation11 + $0x188] sm:$0xff]
        %v2658 = vld [vmem:[#allocation11 + $0x190] sm:$0xff]
        %v2659 = vld [vmem:[#allocation11 + $0x198] sm:$0xff]
        %v2660 = vld [vmem:[#allocation11 + $0x1a0] sm:$0xff]
        %v2661 = vld [vmem:[#allocation11 + $0x1a8] sm:$0xff]
        %v2662 = vld [vmem:[#allocation11 + $0x1b0] sm:$0xff]
        %v2663 = vld [vmem:[#allocation11 + $0x1b8] sm:$0xff]
        %v2664 = vld [vmem:[#allocation11 + $0x1c0] sm:$0xff]
        %v2665 = vld [vmem:[#allocation11 + $0x1c8] sm:$0xff]
        %v2666 = vld [vmem:[#allocation11 + $0x1d0] sm:$0xff]
        %v2667 = vld [vmem:[#allocation11 + $0x1d8] sm:$0xff]
        %v2668 = vld [vmem:[#allocation11 + $0x1e0] sm:$0xff]
        %v2669 = vld [vmem:[#allocation11 + $0x1e8] sm:$0xff]
        %v2670 = vld [vmem:[#allocation11 + $0x1f0] sm:$0xff]
        %v2671 = vld [vmem:[#allocation11 + $0x1f8] sm:$0xff]
        %v2672 = vld [vmem:[#allocation12] sm:$0xff]
        %v2673 = vld [vmem:[#allocation12 + $0x8] sm:$0xff]
        %v2674 = vld [vmem:[#allocation12 + $0x10] sm:$0xff]
        %v2675 = vld [vmem:[#allocation12 + $0x18] sm:$0xff]
        %v2676 = vld [vmem:[#allocation12 + $0x20] sm:$0xff]
        %v2677 = vld [vmem:[#allocation12 + $0x28] sm:$0xff]
        %v2678 = vld [vmem:[#allocation12 + $0x30] sm:$0xff]
        %v2679 = vld [vmem:[#allocation12 + $0x38] sm:$0xff]
        %v2680 = vld [vmem:[#allocation12 + $0x40] sm:$0xff]
        %v2681 = vld [vmem:[#allocation12 + $0x48] sm:$0xff]
        %v2682 = vld [vmem:[#allocation12 + $0x50] sm:$0xff]
        %v2683 = vld [vmem:[#allocation12 + $0x58] sm:$0xff]
        %v2684 = vld [vmem:[#allocation12 + $0x60] sm:$0xff]
        %v2685 = vld [vmem:[#allocation12 + $0x68] sm:$0xff]
        %v2686 = vld [vmem:[#allocation12 + $0x70] sm:$0xff]
        %v2687 = vld [vmem:[#allocation12 + $0x78] sm:$0xff]
        %v2688 = vld [vmem:[#allocation12 + $0x80] sm:$0xff]
        %v2689 = vld [vmem:[#allocation12 + $0x88] sm:$0xff]
        %v2690 = vld [vmem:[#allocation12 + $0x90] sm:$0xff]
        %v2691 = vld [vmem:[#allocation12 + $0x98] sm:$0xff]
        %v2692 = vld [vmem:[#allocation12 + $0xa0] sm:$0xff]
        %v2693 = vld [vmem:[#allocation12 + $0xa8] sm:$0xff]
        %v2694 = vld [vmem:[#allocation12 + $0xb0] sm:$0xff]
        %v2695 = vld [vmem:[#allocation12 + $0xb8] sm:$0xff]
        %v2696 = vld [vmem:[#allocation12 + $0xc0] sm:$0xff]
        %v2697 = vld [vmem:[#allocation12 + $0xc8] sm:$0xff]
        %v2698 = vld [vmem:[#allocation12 + $0xd0] sm:$0xff]
        %v2699 = vld [vmem:[#allocation12 + $0xd8] sm:$0xff]
        %v2700 = vld [vmem:[#allocation12 + $0xe0] sm:$0xff]
        %v2701 = vld [vmem:[#allocation12 + $0xe8] sm:$0xff]
        %v2702 = vld [vmem:[#allocation12 + $0xf0] sm:$0xff]
        %v2703 = vld [vmem:[#allocation12 + $0xf8] sm:$0xff]
        %v2704 = vld [vmem:[#allocation12 + $0x100] sm:$0xff]
        %v2705 = vld [vmem:[#allocation12 + $0x108] sm:$0xff]
        %v2706 = vld [vmem:[#allocation12 + $0x110] sm:$0xff]
        %v2707 = vld [vmem:[#allocation12 + $0x118] sm:$0xff]
        %v2708 = vld [vmem:[#allocation12 + $0x120] sm:$0xff]
        %v2709 = vld [vmem:[#allocation12 + $0x128] sm:$0xff]
        %v2710 = vld [vmem:[#allocation12 + $0x130] sm:$0xff]
        %v2711 = vld [vmem:[#allocation12 + $0x138] sm:$0xff]
        %v2712 = vld [vmem:[#allocation12 + $0x140] sm:$0xff]
        %v2713 = vld [vmem:[#allocation12 + $0x148] sm:$0xff]
        %v2714 = vld [vmem:[#allocation12 + $0x150] sm:$0xff]
        %v2715 = vld [vmem:[#allocation12 + $0x158] sm:$0xff]
        %v2716 = vld [vmem:[#allocation12 + $0x160] sm:$0xff]
        %v2717 = vld [vmem:[#allocation12 + $0x168] sm:$0xff]
        %v2718 = vld [vmem:[#allocation12 + $0x170] sm:$0xff]
        %v2719 = vld [vmem:[#allocation12 + $0x178] sm:$0xff]
        %v2720 = vld [vmem:[#allocation12 + $0x180] sm:$0xff]
        %v2721 = vld [vmem:[#allocation12 + $0x188] sm:$0xff]
        %v2722 = vld [vmem:[#allocation12 + $0x190] sm:$0xff]
        %v2723 = vld [vmem:[#allocation12 + $0x198] sm:$0xff]
        %v2724 = vld [vmem:[#allocation12 + $0x1a0] sm:$0xff]
        %v2725 = vld [vmem:[#allocation12 + $0x1a8] sm:$0xff]
        %v2726 = vld [vmem:[#allocation12 + $0x1b0] sm:$0xff]
        %v2727 = vld [vmem:[#allocation12 + $0x1b8] sm:$0xff]
        %v2728 = vld [vmem:[#allocation12 + $0x1c0] sm:$0xff]
        %v2729 = vld [vmem:[#allocation12 + $0x1c8] sm:$0xff]
        %v2730 = vld [vmem:[#allocation12 + $0x1d0] sm:$0xff]
        %v2731 = vld [vmem:[#allocation12 + $0x1d8] sm:$0xff]
        %v2732 = vld [vmem:[#allocation12 + $0x1e0] sm:$0xff]
        %v2733 = vld [vmem:[#allocation12 + $0x1e8] sm:$0xff]
        %v2734 = vld [vmem:[#allocation12 + $0x1f0] sm:$0xff]
        %v2735 = vld [vmem:[#allocation12 + $0x1f8] sm:$0xff]
        %2736 = vmatprep.subr.mxu0 %v2673
        %2737 = vmatpush1.msra.mxu0 %v2672
        %2738 = vmatprep.subr.mxu0 %v2677
        %2739 = vmatpush1.msra.mxu0 %v2676
        %2740 = vmatprep.subr.mxu0 %v2681
        %2741 = vmatpush1.msra.mxu0 %v2680
        %2742 = vmatprep.subr.mxu0 %v2685
        %2743 = vmatpush1.msra.mxu0 %v2684
        %2744 = vmatprep.subr.mxu0 %v2689
        %2745 = vmatpush1.msra.mxu0 %v2688
        %2746 = vmatprep.subr.mxu0 %v2693
        %2747 = vmatpush1.msra.mxu0 %v2692
        %2748 = vmatprep.subr.mxu0 %v2697
        %2749 = vmatpush1.msra.mxu0 %v2696
        %2750 = vmatprep.subr.mxu0 %v2701
        %2751 = vmatpush1.msra.mxu0 %v2700
        %2752 = vmatprep.subr.mxu0 %v2705
        %2753 = vmatpush1.msra.mxu0 %v2704
        %2754 = vmatprep.subr.mxu0 %v2709
        %2755 = vmatpush1.msra.mxu0 %v2708
        %2756 = vmatprep.subr.mxu0 %v2713
        %2757 = vmatpush1.msra.mxu0 %v2712
        %2758 = vmatprep.subr.mxu0 %v2717
        %2759 = vmatpush1.msra.mxu0 %v2716
        %2760 = vmatprep.subr.mxu0 %v2721
        %2761 = vmatpush1.msra.mxu0 %v2720
        %2762 = vmatprep.subr.mxu0 %v2725
        %2763 = vmatpush1.msra.mxu0 %v2724
        %2764 = vmatprep.subr.mxu0 %v2729
        %2765 = vmatpush1.msra.mxu0 %v2728
        %2766 = vmatprep.subr.mxu0 %v2733
        %2767 = vmatpush1.msra.mxu0 %v2732
        %2768 = vmatprep.subr.mxu0 0.0
        %2769 = vmatpush1.msra.mxu0 0.0
        %2770 = vmatprep.subr.mxu0 0.0
        %2771 = vmatpush1.msra.mxu0 0.0
        %2772 = vmatprep.subr.mxu0 0.0
        %2773 = vmatpush1.msra.mxu0 0.0
        %2774 = vmatprep.subr.mxu0 0.0
        %2775 = vmatpush1.msra.mxu0 0.0
        %2776 = vmatprep.subr.mxu0 0.0
        %2777 = vmatpush1.msra.mxu0 0.0
        %2778 = vmatprep.subr.mxu0 0.0
        %2779 = vmatpush1.msra.mxu0 0.0
        %2780 = vmatprep.subr.mxu0 0.0
        %2781 = vmatpush1.msra.mxu0 0.0
        %2782 = vmatprep.subr.mxu0 0.0
        %2783 = vmatpush1.msra.mxu0 0.0
        %2784 = vmatprep.subr.mxu0 0.0
        %2785 = vmatpush1.msra.mxu0 0.0
        %2786 = vmatprep.subr.mxu0 0.0
        %2787 = vmatpush1.msra.mxu0 0.0
        %2788 = vmatprep.subr.mxu0 0.0
        %2789 = vmatpush1.msra.mxu0 0.0
        %2790 = vmatprep.subr.mxu0 0.0
        %2791 = vmatpush1.msra.mxu0 0.0
        %2792 = vmatprep.subr.mxu0 0.0
        %2793 = vmatpush1.msra.mxu0 0.0
        %2794 = vmatprep.subr.mxu0 0.0
        %2795 = vmatpush1.msra.mxu0 0.0
        %2796 = vmatprep.subr.mxu0 0.0
        %2797 = vmatpush1.msra.mxu0 0.0
        %2798 = vmatprep.subr.mxu0 0.0
        %2799 = vmatpush1.msra.mxu0 0.0
        %2800 = vmatprep.mubr.f32.mxu0 0.0
        %2801 = vmatmul.mubr.f32.gmra.mrb[0].mxu0 %v2606
        %v2802 = vpop.f32.mrb[0].mxu0
        %v2803 = vadd.f32 0.0, %v2802
        %v2804 = vpop.f32.mrb[0].mxu0
        %v2805 = vadd.f32 0.0, %v2804
        %2806 = vdwg.mxu0
        %2807 = vmatprep.subr.mxu0 %v2675
        %2808 = vmatpush1.msra.mxu0 %v2674
        %2809 = vmatprep.subr.mxu0 %v2679
        %2810 = vmatpush1.msra.mxu0 %v2678
        %2811 = vmatprep.subr.mxu0 %v2683
        %2812 = vmatpush1.msra.mxu0 %v2682
        %2813 = vmatprep.subr.mxu0 %v2687
        %2814 = vmatpush1.msra.mxu0 %v2686
        %2815 = vmatprep.subr.mxu0 %v2691
        %2816 = vmatpush1.msra.mxu0 %v2690
        %2817 = vmatprep.subr.mxu0 %v2695
        %2818 = vmatpush1.msra.mxu0 %v2694
        %2819 = vmatprep.subr.mxu0 %v2699
        %2820 = vmatpush1.msra.mxu0 %v2698
        %2821 = vmatprep.subr.mxu0 %v2703
        %2822 = vmatpush1.msra.mxu0 %v2702
        %2823 = vmatprep.subr.mxu0 %v2707
        %2824 = vmatpush1.msra.mxu0 %v2706
        %2825 = vmatprep.subr.mxu0 %v2711
        %2826 = vmatpush1.msra.mxu0 %v2710
        %2827 = vmatprep.subr.mxu0 %v2715
        %2828 = vmatpush1.msra.mxu0 %v2714
        %2829 = vmatprep.subr.mxu0 %v2719
        %2830 = vmatpush1.msra.mxu0 %v2718
        %2831 = vmatprep.subr.mxu0 %v2723
        %2832 = vmatpush1.msra.mxu0 %v2722
        %2833 = vmatprep.subr.mxu0 %v2727
        %2834 = vmatpush1.msra.mxu0 %v2726
        %2835 = vmatprep.subr.mxu0 %v2731
        %2836 = vmatpush1.msra.mxu0 %v2730
        %2837 = vmatprep.subr.mxu0 %v2735
        %2838 = vmatpush1.msra.mxu0 %v2734
        %2839 = vmatprep.subr.mxu0 0.0
        %2840 = vmatpush1.msra.mxu0 0.0
        %2841 = vmatprep.subr.mxu0 0.0
        %2842 = vmatpush1.msra.mxu0 0.0
        %2843 = vmatprep.subr.mxu0 0.0
        %2844 = vmatpush1.msra.mxu0 0.0
        %2845 = vmatprep.subr.mxu0 0.0
        %2846 = vmatpush1.msra.mxu0 0.0
        %2847 = vmatprep.subr.mxu0 0.0
        %2848 = vmatpush1.msra.mxu0 0.0
        %2849 = vmatprep.subr.mxu0 0.0
        %2850 = vmatpush1.msra.mxu0 0.0
        %2851 = vmatprep.subr.mxu0 0.0
        %2852 = vmatpush1.msra.mxu0 0.0
        %2853 = vmatprep.subr.mxu0 0.0
        %2854 = vmatpush1.msra.mxu0 0.0
        %2855 = vmatprep.subr.mxu0 0.0
        %2856 = vmatpush1.msra.mxu0 0.0
        %2857 = vmatprep.subr.mxu0 0.0
        %2858 = vmatpush1.msra.mxu0 0.0
        %2859 = vmatprep.subr.mxu0 0.0
        %2860 = vmatpush1.msra.mxu0 0.0
        %2861 = vmatprep.subr.mxu0 0.0
        %2862 = vmatpush1.msra.mxu0 0.0
        %2863 = vmatprep.subr.mxu0 0.0
        %2864 = vmatpush1.msra.mxu0 0.0
        %2865 = vmatprep.subr.mxu0 0.0
        %2866 = vmatpush1.msra.mxu0 0.0
        %2867 = vmatprep.subr.mxu0 0.0
        %2868 = vmatpush1.msra.mxu0 0.0
        %2869 = vmatprep.subr.mxu0 0.0
        %2870 = vmatpush1.msra.mxu0 0.0
        %2871 = vmatprep.mubr.f32.mxu0 0.0
        %2872 = vmatmul.mubr.f32.gmra.mrb[0].mxu0 %v2606
        %v2873 = vpop.f32.mrb[0].mxu0
        %v2874 = vadd.f32 0.0, %v2873
        %v2875 = vpop.f32.mrb[0].mxu0
        %v2876 = vadd.f32 0.0, %v2875
        %2877 = vdwg.mxu0
        %2878 = vmatprep.subr.mxu0 %v2609
        %2879 = vmatpush1.msra.mxu0 %v2608
        %2880 = vmatprep.subr.mxu0 %v2613
        %2881 = vmatpush1.msra.mxu0 %v2612
        %2882 = vmatprep.subr.mxu0 %v2617
        %2883 = vmatpush1.msra.mxu0 %v2616
        %2884 = vmatprep.subr.mxu0 %v2621
        %2885 = vmatpush1.msra.mxu0 %v2620
        %2886 = vmatprep.subr.mxu0 %v2625
        %2887 = vmatpush1.msra.mxu0 %v2624
        %2888 = vmatprep.subr.mxu0 %v2629
        %2889 = vmatpush1.msra.mxu0 %v2628
        %2890 = vmatprep.subr.mxu0 %v2633
        %2891 = vmatpush1.msra.mxu0 %v2632
        %2892 = vmatprep.subr.mxu0 %v2637
        %2893 = vmatpush1.msra.mxu0 %v2636
        %2894 = vmatprep.subr.mxu0 %v2641
        %2895 = vmatpush1.msra.mxu0 %v2640
        %2896 = vmatprep.subr.mxu0 %v2645
        %2897 = vmatpush1.msra.mxu0 %v2644
        %2898 = vmatprep.subr.mxu0 %v2649
        %2899 = vmatpush1.msra.mxu0 %v2648
        %2900 = vmatprep.subr.mxu0 %v2653
        %2901 = vmatpush1.msra.mxu0 %v2652
        %2902 = vmatprep.subr.mxu0 %v2657
        %2903 = vmatpush1.msra.mxu0 %v2656
        %2904 = vmatprep.subr.mxu0 %v2661
        %2905 = vmatpush1.msra.mxu0 %v2660
        %2906 = vmatprep.subr.mxu0 %v2665
        %2907 = vmatpush1.msra.mxu0 %v2664
        %2908 = vmatprep.subr.mxu0 %v2669
        %2909 = vmatpush1.msra.mxu0 %v2668
        %2910 = vmatprep.subr.mxu0 0.0
        %2911 = vmatpush1.msra.mxu0 0.0
        %2912 = vmatprep.subr.mxu0 0.0
        %2913 = vmatpush1.msra.mxu0 0.0
        %2914 = vmatprep.subr.mxu0 0.0
        %2915 = vmatpush1.msra.mxu0 0.0
        %2916 = vmatprep.subr.mxu0 0.0
        %2917 = vmatpush1.msra.mxu0 0.0
        %2918 = vmatprep.subr.mxu0 0.0
        %2919 = vmatpush1.msra.mxu0 0.0
        %2920 = vmatprep.subr.mxu0 0.0
        %2921 = vmatpush1.msra.mxu0 0.0
        %2922 = vmatprep.subr.mxu0 0.0
        %2923 = vmatpush1.msra.mxu0 0.0
        %2924 = vmatprep.subr.mxu0 0.0
        %2925 = vmatpush1.msra.mxu0 0.0
        %2926 = vmatprep.subr.mxu0 0.0
        %2927 = vmatpush1.msra.mxu0 0.0
        %2928 = vmatprep.subr.mxu0 0.0
        %2929 = vmatpush1.msra.mxu0 0.0
        %2930 = vmatprep.subr.mxu0 0.0
        %2931 = vmatpush1.msra.mxu0 0.0
        %2932 = vmatprep.subr.mxu0 0.0
        %2933 = vmatpush1.msra.mxu0 0.0
        %2934 = vmatprep.subr.mxu0 0.0
        %2935 = vmatpush1.msra.mxu0 0.0
        %2936 = vmatprep.subr.mxu0 0.0
        %2937 = vmatpush1.msra.mxu0 0.0
        %2938 = vmatprep.subr.mxu0 0.0
        %2939 = vmatpush1.msra.mxu0 0.0
        %2940 = vmatprep.subr.mxu0 0.0
        %2941 = vmatpush1.msra.mxu0 0.0
        %2942 = vmatprep.mubr.f32.mxu0 0.0
        %2943 = vmatmul.mubr.f32.gmra.mrb[0].mxu0 %v2603
        %v2944 = vpop.f32.mrb[0].mxu0
        %v2945 = vadd.f32 %v2803, %v2944
        %v2946 = vpop.f32.mrb[0].mxu0
        %v2947 = vadd.f32 %v2805, %v2946
        %2948 = vdwg.mxu0
        %2949 = vmatprep.subr.mxu0 %v2611
        %2950 = vmatpush1.msra.mxu0 %v2610
        %2951 = vmatprep.subr.mxu0 %v2615
        %2952 = vmatpush1.msra.mxu0 %v2614
        %2953 = vmatprep.subr.mxu0 %v2619
        %2954 = vmatpush1.msra.mxu0 %v2618
        %2955 = vmatprep.subr.mxu0 %v2623
        %2956 = vmatpush1.msra.mxu0 %v2622
        %2957 = vmatprep.subr.mxu0 %v2627
        %2958 = vmatpush1.msra.mxu0 %v2626
        %2959 = vmatprep.subr.mxu0 %v2631
        %2960 = vmatpush1.msra.mxu0 %v2630
        %2961 = vmatprep.subr.mxu0 %v2635
        %2962 = vmatpush1.msra.mxu0 %v2634
        %2963 = vmatprep.subr.mxu0 %v2639
        %2964 = vmatpush1.msra.mxu0 %v2638
        %2965 = vmatprep.subr.mxu0 %v2643
        %2966 = vmatpush1.msra.mxu0 %v2642
        %2967 = vmatprep.subr.mxu0 %v2647
        %2968 = vmatpush1.msra.mxu0 %v2646
        %2969 = vmatprep.subr.mxu0 %v2651
        %2970 = vmatpush1.msra.mxu0 %v2650
        %2971 = vmatprep.subr.mxu0 %v2655
        %2972 = vmatpush1.msra.mxu0 %v2654
        %2973 = vmatprep.subr.mxu0 %v2659
        %2974 = vmatpush1.msra.mxu0 %v2658
        %2975 = vmatprep.subr.mxu0 %v2663
        %2976 = vmatpush1.msra.mxu0 %v2662
        %2977 = vmatprep.subr.mxu0 %v2667
        %2978 = vmatpush1.msra.mxu0 %v2666
        %2979 = vmatprep.subr.mxu0 %v2671
        %2980 = vmatpush1.msra.mxu0 %v2670
        %2981 = vmatprep.subr.mxu0 0.0
        %2982 = vmatpush1.msra.mxu0 0.0
        %2983 = vmatprep.subr.mxu0 0.0
        %2984 = vmatpush1.msra.mxu0 0.0
        %2985 = vmatprep.subr.mxu0 0.0
        %2986 = vmatpush1.msra.mxu0 0.0
        %2987 = vmatprep.subr.mxu0 0.0
        %2988 = vmatpush1.msra.mxu0 0.0
        %2989 = vmatprep.subr.mxu0 0.0
        %2990 = vmatpush1.msra.mxu0 0.0
        %2991 = vmatprep.subr.mxu0 0.0
        %2992 = vmatpush1.msra.mxu0 0.0
        %2993 = vmatprep.subr.mxu0 0.0
        %2994 = vmatpush1.msra.mxu0 0.0
        %2995 = vmatprep.subr.mxu0 0.0
        %2996 = vmatpush1.msra.mxu0 0.0
        %2997 = vmatprep.subr.mxu0 0.0
        %2998 = vmatpush1.msra.mxu0 0.0
        %2999 = vmatprep.subr.mxu0 0.0
        %3000 = vmatpush1.msra.mxu0 0.0
        %3001 = vmatprep.subr.mxu0 0.0
        %3002 = vmatpush1.msra.mxu0 0.0
        %3003 = vmatprep.subr.mxu0 0.0
        %3004 = vmatpush1.msra.mxu0 0.0
        %3005 = vmatprep.subr.mxu0 0.0
        %3006 = vmatpush1.msra.mxu0 0.0
        %3007 = vmatprep.subr.mxu0 0.0
        %3008 = vmatpush1.msra.mxu0 0.0
        %3009 = vmatprep.subr.mxu0 0.0
        %3010 = vmatpush1.msra.mxu0 0.0
        %3011 = vmatprep.subr.mxu0 0.0
        %3012 = vmatpush1.msra.mxu0 0.0
        %3013 = vmatprep.mubr.f32.mxu0 0.0
        %3014 = vmatmul.mubr.f32.gmra.mrb[0].mxu0 %v2603
        %v3015 = vpop.f32.mrb[0].mxu0
        %v3016 = vadd.f32 %v2874, %v3015
        %v3017 = vpop.f32.mrb[0].mxu0
        %v3018 = vadd.f32 %v2876, %v3017
        %3019 = vdwg.mxu0
        %v3020 = vxor.u32 %v2945, 2147483648
        %v3021 = vmul.f32 %v3020, 1.442695
        %v3022 = vpow.pop %v3021
        %v3023 = vadd.f32 %v3022, 1.0
        %v3024 = vrcp.pop %v3023
        %v3025 = vmul.f32 1.0, %v3024
        %v3026 = vxor.u32 %v2947, 2147483648
        %v3027 = vmul.f32 %v3026, 1.442695
        %v3028 = vpow.pop %v3027
        %v3029 = vadd.f32 %v3028, 1.0
        %v3030 = vrcp.pop %v3029
        %v3031 = vmul.f32 1.0, %v3030
        %v3032 = vtanh.pop %v3016
        %v3033 = vxor.u32 %v3018, 2147483648
        %v3034 = vmul.f32 %v3033, 1.442695
        %v3035 = vpow.pop %v3034
        %v3036 = vadd.f32 %v3035, 1.0
        %v3037 = vrcp.pop %v3036
        %v3038 = vmul.f32 1.0, %v3037
        %v3039 = vmul.f32 %v3031, %v2607
        %v3040 = vmul.f32 %v3025, %v3032
        %v3041 = vadd.f32 %v3039, %v3040
        %v3042 = vtanh.pop %v3041
        %v3043 = vmul.f32 %v3038, %v3042
        %3044 = vst [vmem:[#allocation3] sm:$0xff] %v3043
        %3045 = vst [vmem:[#allocation5] sm:$0xff] %v3041
        %s3046 = scalar_lea.vmem [#allocation6], 16
        %3047 = vst [vmem:[%s3046] sm:$0xff] %v3043
        %s3048 = scalar_lea.vmem %s382, 24
        %v3049 = vld [vmem:[%s3048] sm:$0xff]
        %v3050 = vld [vmem:[#allocation2] sm:$0xff]
        %v3051 = vld [vmem:[#allocation4] sm:$0xff]
        %v3052 = vld [vmem:[#allocation7] sm:$0xff]
        %v3053 = vld [vmem:[#allocation7 + $0x8] sm:$0xff]
        %v3054 = vld [vmem:[#allocation7 + $0x10] sm:$0xff]
        %v3055 = vld [vmem:[#allocation7 + $0x18] sm:$0xff]
        %v3056 = vld [vmem:[#allocation7 + $0x20] sm:$0xff]
        %v3057 = vld [vmem:[#allocation7 + $0x28] sm:$0xff]
        %v3058 = vld [vmem:[#allocation7 + $0x30] sm:$0xff]
        %v3059 = vld [vmem:[#allocation7 + $0x38] sm:$0xff]
        %v3060 = vld [vmem:[#allocation7 + $0x40] sm:$0xff]
        %v3061 = vld [vmem:[#allocation7 + $0x48] sm:$0xff]
        %v3062 = vld [vmem:[#allocation7 + $0x50] sm:$0xff]
        %v3063 = vld [vmem:[#allocation7 + $0x58] sm:$0xff]
        %v3064 = vld [vmem:[#allocation7 + $0x60] sm:$0xff]
        %v3065 = vld [vmem:[#allocation7 + $0x68] sm:$0xff]
        %v3066 = vld [vmem:[#allocation7 + $0x70] sm:$0xff]
        %v3067 = vld [vmem:[#allocation7 + $0x78] sm:$0xff]
        %v3068 = vld [vmem:[#allocation7 + $0x80] sm:$0xff]
        %v3069 = vld [vmem:[#allocation7 + $0x88] sm:$0xff]
        %v3070 = vld [vmem:[#allocation7 + $0x90] sm:$0xff]
        %v3071 = vld [vmem:[#allocation7 + $0x98] sm:$0xff]
        %v3072 = vld [vmem:[#allocation7 + $0xa0] sm:$0xff]
        %v3073 = vld [vmem:[#allocation7 + $0xa8] sm:$0xff]
        %v3074 = vld [vmem:[#allocation7 + $0xb0] sm:$0xff]
        %v3075 = vld [vmem:[#allocation7 + $0xb8] sm:$0xff]
        %v3076 = vld [vmem:[#allocation7 + $0xc0] sm:$0xff]
        %v3077 = vld [vmem:[#allocation7 + $0xc8] sm:$0xff]
        %v3078 = vld [vmem:[#allocation7 + $0xd0] sm:$0xff]
        %v3079 = vld [vmem:[#allocation7 + $0xd8] sm:$0xff]
        %v3080 = vld [vmem:[#allocation7 + $0xe0] sm:$0xff]
        %v3081 = vld [vmem:[#allocation7 + $0xe8] sm:$0xff]
        %v3082 = vld [vmem:[#allocation7 + $0xf0] sm:$0xff]
        %v3083 = vld [vmem:[#allocation7 + $0xf8] sm:$0xff]
        %v3084 = vld [vmem:[#allocation7 + $0x100] sm:$0xff]
        %v3085 = vld [vmem:[#allocation7 + $0x108] sm:$0xff]
        %v3086 = vld [vmem:[#allocation7 + $0x110] sm:$0xff]
        %v3087 = vld [vmem:[#allocation7 + $0x118] sm:$0xff]
        %v3088 = vld [vmem:[#allocation7 + $0x120] sm:$0xff]
        %v3089 = vld [vmem:[#allocation7 + $0x128] sm:$0xff]
        %v3090 = vld [vmem:[#allocation7 + $0x130] sm:$0xff]
        %v3091 = vld [vmem:[#allocation7 + $0x138] sm:$0xff]
        %v3092 = vld [vmem:[#allocation7 + $0x140] sm:$0xff]
        %v3093 = vld [vmem:[#allocation7 + $0x148] sm:$0xff]
        %v3094 = vld [vmem:[#allocation7 + $0x150] sm:$0xff]
        %v3095 = vld [vmem:[#allocation7 + $0x158] sm:$0xff]
        %v3096 = vld [vmem:[#allocation7 + $0x160] sm:$0xff]
        %v3097 = vld [vmem:[#allocation7 + $0x168] sm:$0xff]
        %v3098 = vld [vmem:[#allocation7 + $0x170] sm:$0xff]
        %v3099 = vld [vmem:[#allocation7 + $0x178] sm:$0xff]
        %v3100 = vld [vmem:[#allocation7 + $0x180] sm:$0xff]
        %v3101 = vld [vmem:[#allocation7 + $0x188] sm:$0xff]
        %v3102 = vld [vmem:[#allocation7 + $0x190] sm:$0xff]
        %v3103 = vld [vmem:[#allocation7 + $0x198] sm:$0xff]
        %v3104 = vld [vmem:[#allocation7 + $0x1a0] sm:$0xff]
        %v3105 = vld [vmem:[#allocation7 + $0x1a8] sm:$0xff]
        %v3106 = vld [vmem:[#allocation7 + $0x1b0] sm:$0xff]
        %v3107 = vld [vmem:[#allocation7 + $0x1b8] sm:$0xff]
        %v3108 = vld [vmem:[#allocation7 + $0x1c0] sm:$0xff]
        %v3109 = vld [vmem:[#allocation7 + $0x1c8] sm:$0xff]
        %v3110 = vld [vmem:[#allocation7 + $0x1d0] sm:$0xff]
        %v3111 = vld [vmem:[#allocation7 + $0x1d8] sm:$0xff]
        %v3112 = vld [vmem:[#allocation7 + $0x1e0] sm:$0xff]
        %v3113 = vld [vmem:[#allocation7 + $0x1e8] sm:$0xff]
        %v3114 = vld [vmem:[#allocation7 + $0x1f0] sm:$0xff]
        %v3115 = vld [vmem:[#allocation7 + $0x1f8] sm:$0xff]
        %v3116 = vld [vmem:[#allocation9] sm:$0xff]
        %v3117 = vld [vmem:[#allocation9 + $0x8] sm:$0xff]
        %v3118 = vld [vmem:[#allocation9 + $0x10] sm:$0xff]
        %v3119 = vld [vmem:[#allocation9 + $0x18] sm:$0xff]
        %v3120 = vld [vmem:[#allocation9 + $0x20] sm:$0xff]
        %v3121 = vld [vmem:[#allocation9 + $0x28] sm:$0xff]
        %v3122 = vld [vmem:[#allocation9 + $0x30] sm:$0xff]
        %v3123 = vld [vmem:[#allocation9 + $0x38] sm:$0xff]
        %v3124 = vld [vmem:[#allocation9 + $0x40] sm:$0xff]
        %v3125 = vld [vmem:[#allocation9 + $0x48] sm:$0xff]
        %v3126 = vld [vmem:[#allocation9 + $0x50] sm:$0xff]
        %v3127 = vld [vmem:[#allocation9 + $0x58] sm:$0xff]
        %v3128 = vld [vmem:[#allocation9 + $0x60] sm:$0xff]
        %v3129 = vld [vmem:[#allocation9 + $0x68] sm:$0xff]
        %v3130 = vld [vmem:[#allocation9 + $0x70] sm:$0xff]
        %v3131 = vld [vmem:[#allocation9 + $0x78] sm:$0xff]
        %v3132 = vld [vmem:[#allocation9 + $0x80] sm:$0xff]
        %v3133 = vld [vmem:[#allocation9 + $0x88] sm:$0xff]
        %v3134 = vld [vmem:[#allocation9 + $0x90] sm:$0xff]
        %v3135 = vld [vmem:[#allocation9 + $0x98] sm:$0xff]
        %v3136 = vld [vmem:[#allocation9 + $0xa0] sm:$0xff]
        %v3137 = vld [vmem:[#allocation9 + $0xa8] sm:$0xff]
        %v3138 = vld [vmem:[#allocation9 + $0xb0] sm:$0xff]
        %v3139 = vld [vmem:[#allocation9 + $0xb8] sm:$0xff]
        %v3140 = vld [vmem:[#allocation9 + $0xc0] sm:$0xff]
        %v3141 = vld [vmem:[#allocation9 + $0xc8] sm:$0xff]
        %v3142 = vld [vmem:[#allocation9 + $0xd0] sm:$0xff]
        %v3143 = vld [vmem:[#allocation9 + $0xd8] sm:$0xff]
        %v3144 = vld [vmem:[#allocation9 + $0xe0] sm:$0xff]
        %v3145 = vld [vmem:[#allocation9 + $0xe8] sm:$0xff]
        %v3146 = vld [vmem:[#allocation9 + $0xf0] sm:$0xff]
        %v3147 = vld [vmem:[#allocation9 + $0xf8] sm:$0xff]
        %v3148 = vld [vmem:[#allocation9 + $0x100] sm:$0xff]
        %v3149 = vld [vmem:[#allocation9 + $0x108] sm:$0xff]
        %v3150 = vld [vmem:[#allocation9 + $0x110] sm:$0xff]
        %v3151 = vld [vmem:[#allocation9 + $0x118] sm:$0xff]
        %v3152 = vld [vmem:[#allocation9 + $0x120] sm:$0xff]
        %v3153 = vld [vmem:[#allocation9 + $0x128] sm:$0xff]
        %v3154 = vld [vmem:[#allocation9 + $0x130] sm:$0xff]
        %v3155 = vld [vmem:[#allocation9 + $0x138] sm:$0xff]
        %v3156 = vld [vmem:[#allocation9 + $0x140] sm:$0xff]
        %v3157 = vld [vmem:[#allocation9 + $0x148] sm:$0xff]
        %v3158 = vld [vmem:[#allocation9 + $0x150] sm:$0xff]
        %v3159 = vld [vmem:[#allocation9 + $0x158] sm:$0xff]
        %v3160 = vld [vmem:[#allocation9 + $0x160] sm:$0xff]
        %v3161 = vld [vmem:[#allocation9 + $0x168] sm:$0xff]
        %v3162 = vld [vmem:[#allocation9 + $0x170] sm:$0xff]
        %v3163 = vld [vmem:[#allocation9 + $0x178] sm:$0xff]
        %v3164 = vld [vmem:[#allocation9 + $0x180] sm:$0xff]
        %v3165 = vld [vmem:[#allocation9 + $0x188] sm:$0xff]
        %v3166 = vld [vmem:[#allocation9 + $0x190] sm:$0xff]
        %v3167 = vld [vmem:[#allocation9 + $0x198] sm:$0xff]
        %v3168 = vld [vmem:[#allocation9 + $0x1a0] sm:$0xff]
        %v3169 = vld [vmem:[#allocation9 + $0x1a8] sm:$0xff]
        %v3170 = vld [vmem:[#allocation9 + $0x1b0] sm:$0xff]
        %v3171 = vld [vmem:[#allocation9 + $0x1b8] sm:$0xff]
        %v3172 = vld [vmem:[#allocation9 + $0x1c0] sm:$0xff]
        %v3173 = vld [vmem:[#allocation9 + $0x1c8] sm:$0xff]
        %v3174 = vld [vmem:[#allocation9 + $0x1d0] sm:$0xff]
        %v3175 = vld [vmem:[#allocation9 + $0x1d8] sm:$0xff]
        %v3176 = vld [vmem:[#allocation9 + $0x1e0] sm:$0xff]
        %v3177 = vld [vmem:[#allocation9 + $0x1e8] sm:$0xff]
        %v3178 = vld [vmem:[#allocation9 + $0x1f0] sm:$0xff]
        %v3179 = vld [vmem:[#allocation9 + $0x1f8] sm:$0xff]
        %3180 = vmatprep.subr.mxu0 %v3117
        %3181 = vmatpush1.msra.mxu0 %v3116
        %3182 = vmatprep.subr.mxu0 %v3121
        %3183 = vmatpush1.msra.mxu0 %v3120
        %3184 = vmatprep.subr.mxu0 %v3125
        %3185 = vmatpush1.msra.mxu0 %v3124
        %3186 = vmatprep.subr.mxu0 %v3129
        %3187 = vmatpush1.msra.mxu0 %v3128
        %3188 = vmatprep.subr.mxu0 %v3133
        %3189 = vmatpush1.msra.mxu0 %v3132
        %3190 = vmatprep.subr.mxu0 %v3137
        %3191 = vmatpush1.msra.mxu0 %v3136
        %3192 = vmatprep.subr.mxu0 %v3141
        %3193 = vmatpush1.msra.mxu0 %v3140
        %3194 = vmatprep.subr.mxu0 %v3145
        %3195 = vmatpush1.msra.mxu0 %v3144
        %3196 = vmatprep.subr.mxu0 %v3149
        %3197 = vmatpush1.msra.mxu0 %v3148
        %3198 = vmatprep.subr.mxu0 %v3153
        %3199 = vmatpush1.msra.mxu0 %v3152
        %3200 = vmatprep.subr.mxu0 %v3157
        %3201 = vmatpush1.msra.mxu0 %v3156
        %3202 = vmatprep.subr.mxu0 %v3161
        %3203 = vmatpush1.msra.mxu0 %v3160
        %3204 = vmatprep.subr.mxu0 %v3165
        %3205 = vmatpush1.msra.mxu0 %v3164
        %3206 = vmatprep.subr.mxu0 %v3169
        %3207 = vmatpush1.msra.mxu0 %v3168
        %3208 = vmatprep.subr.mxu0 %v3173
        %3209 = vmatpush1.msra.mxu0 %v3172
        %3210 = vmatprep.subr.mxu0 %v3177
        %3211 = vmatpush1.msra.mxu0 %v3176
        %3212 = vmatprep.subr.mxu0 0.0
        %3213 = vmatpush1.msra.mxu0 0.0
        %3214 = vmatprep.subr.mxu0 0.0
        %3215 = vmatpush1.msra.mxu0 0.0
        %3216 = vmatprep.subr.mxu0 0.0
        %3217 = vmatpush1.msra.mxu0 0.0
        %3218 = vmatprep.subr.mxu0 0.0
        %3219 = vmatpush1.msra.mxu0 0.0
        %3220 = vmatprep.subr.mxu0 0.0
        %3221 = vmatpush1.msra.mxu0 0.0
        %3222 = vmatprep.subr.mxu0 0.0
        %3223 = vmatpush1.msra.mxu0 0.0
        %3224 = vmatprep.subr.mxu0 0.0
        %3225 = vmatpush1.msra.mxu0 0.0
        %3226 = vmatprep.subr.mxu0 0.0
        %3227 = vmatpush1.msra.mxu0 0.0
        %3228 = vmatprep.subr.mxu0 0.0
        %3229 = vmatpush1.msra.mxu0 0.0
        %3230 = vmatprep.subr.mxu0 0.0
        %3231 = vmatpush1.msra.mxu0 0.0
        %3232 = vmatprep.subr.mxu0 0.0
        %3233 = vmatpush1.msra.mxu0 0.0
        %3234 = vmatprep.subr.mxu0 0.0
        %3235 = vmatpush1.msra.mxu0 0.0
        %3236 = vmatprep.subr.mxu0 0.0
        %3237 = vmatpush1.msra.mxu0 0.0
        %3238 = vmatprep.subr.mxu0 0.0
        %3239 = vmatpush1.msra.mxu0 0.0
        %3240 = vmatprep.subr.mxu0 0.0
        %3241 = vmatpush1.msra.mxu0 0.0
        %3242 = vmatprep.subr.mxu0 0.0
        %3243 = vmatpush1.msra.mxu0 0.0
        %3244 = vmatprep.mubr.f32.mxu0 0.0
        %3245 = vmatmul.mubr.f32.gmra.mrb[0].mxu0 %v3050
        %v3246 = vpop.f32.mrb[0].mxu0
        %v3247 = vadd.f32 0.0, %v3246
        %v3248 = vpop.f32.mrb[0].mxu0
        %v3249 = vadd.f32 0.0, %v3248
        %3250 = vdwg.mxu0
        %3251 = vmatprep.subr.mxu0 %v3119
        %3252 = vmatpush1.msra.mxu0 %v3118
        %3253 = vmatprep.subr.mxu0 %v3123
        %3254 = vmatpush1.msra.mxu0 %v3122
        %3255 = vmatprep.subr.mxu0 %v3127
        %3256 = vmatpush1.msra.mxu0 %v3126
        %3257 = vmatprep.subr.mxu0 %v3131
        %3258 = vmatpush1.msra.mxu0 %v3130
        %3259 = vmatprep.subr.mxu0 %v3135
        %3260 = vmatpush1.msra.mxu0 %v3134
        %3261 = vmatprep.subr.mxu0 %v3139
        %3262 = vmatpush1.msra.mxu0 %v3138
        %3263 = vmatprep.subr.mxu0 %v3143
        %3264 = vmatpush1.msra.mxu0 %v3142
        %3265 = vmatprep.subr.mxu0 %v3147
        %3266 = vmatpush1.msra.mxu0 %v3146
        %3267 = vmatprep.subr.mxu0 %v3151
        %3268 = vmatpush1.msra.mxu0 %v3150
        %3269 = vmatprep.subr.mxu0 %v3155
        %3270 = vmatpush1.msra.mxu0 %v3154
        %3271 = vmatprep.subr.mxu0 %v3159
        %3272 = vmatpush1.msra.mxu0 %v3158
        %3273 = vmatprep.subr.mxu0 %v3163
        %3274 = vmatpush1.msra.mxu0 %v3162
        %3275 = vmatprep.subr.mxu0 %v3167
        %3276 = vmatpush1.msra.mxu0 %v3166
        %3277 = vmatprep.subr.mxu0 %v3171
        %3278 = vmatpush1.msra.mxu0 %v3170
        %3279 = vmatprep.subr.mxu0 %v3175
        %3280 = vmatpush1.msra.mxu0 %v3174
        %3281 = vmatprep.subr.mxu0 %v3179
        %3282 = vmatpush1.msra.mxu0 %v3178
        %3283 = vmatprep.subr.mxu0 0.0
        %3284 = vmatpush1.msra.mxu0 0.0
        %3285 = vmatprep.subr.mxu0 0.0
        %3286 = vmatpush1.msra.mxu0 0.0
        %3287 = vmatprep.subr.mxu0 0.0
        %3288 = vmatpush1.msra.mxu0 0.0
        %3289 = vmatprep.subr.mxu0 0.0
        %3290 = vmatpush1.msra.mxu0 0.0
        %3291 = vmatprep.subr.mxu0 0.0
        %3292 = vmatpush1.msra.mxu0 0.0
        %3293 = vmatprep.subr.mxu0 0.0
        %3294 = vmatpush1.msra.mxu0 0.0
        %3295 = vmatprep.subr.mxu0 0.0
        %3296 = vmatpush1.msra.mxu0 0.0
        %3297 = vmatprep.subr.mxu0 0.0
        %3298 = vmatpush1.msra.mxu0 0.0
        %3299 = vmatprep.subr.mxu0 0.0
        %3300 = vmatpush1.msra.mxu0 0.0
        %3301 = vmatprep.subr.mxu0 0.0
        %3302 = vmatpush1.msra.mxu0 0.0
        %3303 = vmatprep.subr.mxu0 0.0
        %3304 = vmatpush1.msra.mxu0 0.0
        %3305 = vmatprep.subr.mxu0 0.0
        %3306 = vmatpush1.msra.mxu0 0.0
        %3307 = vmatprep.subr.mxu0 0.0
        %3308 = vmatpush1.msra.mxu0 0.0
        %3309 = vmatprep.subr.mxu0 0.0
        %3310 = vmatpush1.msra.mxu0 0.0
        %3311 = vmatprep.subr.mxu0 0.0
        %3312 = vmatpush1.msra.mxu0 0.0
        %3313 = vmatprep.subr.mxu0 0.0
        %3314 = vmatpush1.msra.mxu0 0.0
        %3315 = vmatprep.mubr.f32.mxu0 0.0
        %3316 = vmatmul.mubr.f32.gmra.mrb[0].mxu0 %v3050
        %v3317 = vpop.f32.mrb[0].mxu0
        %v3318 = vadd.f32 0.0, %v3317
        %v3319 = vpop.f32.mrb[0].mxu0
        %v3320 = vadd.f32 0.0, %v3319
        %3321 = vdwg.mxu0
        %3322 = vmatprep.subr.mxu0 %v3053
        %3323 = vmatpush1.msra.mxu0 %v3052
        %3324 = vmatprep.subr.mxu0 %v3057
        %3325 = vmatpush1.msra.mxu0 %v3056
        %3326 = vmatprep.subr.mxu0 %v3061
        %3327 = vmatpush1.msra.mxu0 %v3060
        %3328 = vmatprep.subr.mxu0 %v3065
        %3329 = vmatpush1.msra.mxu0 %v3064
        %3330 = vmatprep.subr.mxu0 %v3069
        %3331 = vmatpush1.msra.mxu0 %v3068
        %3332 = vmatprep.subr.mxu0 %v3073
        %3333 = vmatpush1.msra.mxu0 %v3072
        %3334 = vmatprep.subr.mxu0 %v3077
        %3335 = vmatpush1.msra.mxu0 %v3076
        %3336 = vmatprep.subr.mxu0 %v3081
        %3337 = vmatpush1.msra.mxu0 %v3080
        %3338 = vmatprep.subr.mxu0 %v3085
        %3339 = vmatpush1.msra.mxu0 %v3084
        %3340 = vmatprep.subr.mxu0 %v3089
        %3341 = vmatpush1.msra.mxu0 %v3088
        %3342 = vmatprep.subr.mxu0 %v3093
        %3343 = vmatpush1.msra.mxu0 %v3092
        %3344 = vmatprep.subr.mxu0 %v3097
        %3345 = vmatpush1.msra.mxu0 %v3096
        %3346 = vmatprep.subr.mxu0 %v3101
        %3347 = vmatpush1.msra.mxu0 %v3100
        %3348 = vmatprep.subr.mxu0 %v3105
        %3349 = vmatpush1.msra.mxu0 %v3104
        %3350 = vmatprep.subr.mxu0 %v3109
        %3351 = vmatpush1.msra.mxu0 %v3108
        %3352 = vmatprep.subr.mxu0 %v3113
        %3353 = vmatpush1.msra.mxu0 %v3112
        %3354 = vmatprep.subr.mxu0 0.0
        %3355 = vmatpush1.msra.mxu0 0.0
        %3356 = vmatprep.subr.mxu0 0.0
        %3357 = vmatpush1.msra.mxu0 0.0
        %3358 = vmatprep.subr.mxu0 0.0
        %3359 = vmatpush1.msra.mxu0 0.0
        %3360 = vmatprep.subr.mxu0 0.0
        %3361 = vmatpush1.msra.mxu0 0.0
        %3362 = vmatprep.subr.mxu0 0.0
        %3363 = vmatpush1.msra.mxu0 0.0
        %3364 = vmatprep.subr.mxu0 0.0
        %3365 = vmatpush1.msra.mxu0 0.0
        %3366 = vmatprep.subr.mxu0 0.0
        %3367 = vmatpush1.msra.mxu0 0.0
        %3368 = vmatprep.subr.mxu0 0.0
        %3369 = vmatpush1.msra.mxu0 0.0
        %3370 = vmatprep.subr.mxu0 0.0
        %3371 = vmatpush1.msra.mxu0 0.0
        %3372 = vmatprep.subr.mxu0 0.0
        %3373 = vmatpush1.msra.mxu0 0.0
        %3374 = vmatprep.subr.mxu0 0.0
        %3375 = vmatpush1.msra.mxu0 0.0
        %3376 = vmatprep.subr.mxu0 0.0
        %3377 = vmatpush1.msra.mxu0 0.0
        %3378 = vmatprep.subr.mxu0 0.0
        %3379 = vmatpush1.msra.mxu0 0.0
        %3380 = vmatprep.subr.mxu0 0.0
        %3381 = vmatpush1.msra.mxu0 0.0
        %3382 = vmatprep.subr.mxu0 0.0
        %3383 = vmatpush1.msra.mxu0 0.0
        %3384 = vmatprep.subr.mxu0 0.0
        %3385 = vmatpush1.msra.mxu0 0.0
        %3386 = vmatprep.mubr.f32.mxu0 0.0
        %3387 = vmatmul.mubr.f32.gmra.mrb[0].mxu0 %v3049
        %v3388 = vpop.f32.mrb[0].mxu0
        %v3389 = vadd.f32 %v3247, %v3388
        %v3390 = vpop.f32.mrb[0].mxu0
        %v3391 = vadd.f32 %v3249, %v3390
        %3392 = vdwg.mxu0
        %3393 = vmatprep.subr.mxu0 %v3055
        %3394 = vmatpush1.msra.mxu0 %v3054
        %3395 = vmatprep.subr.mxu0 %v3059
        %3396 = vmatpush1.msra.mxu0 %v3058
        %3397 = vmatprep.subr.mxu0 %v3063
        %3398 = vmatpush1.msra.mxu0 %v3062
        %3399 = vmatprep.subr.mxu0 %v3067
        %3400 = vmatpush1.msra.mxu0 %v3066
        %3401 = vmatprep.subr.mxu0 %v3071
        %3402 = vmatpush1.msra.mxu0 %v3070
        %3403 = vmatprep.subr.mxu0 %v3075
        %3404 = vmatpush1.msra.mxu0 %v3074
        %3405 = vmatprep.subr.mxu0 %v3079
        %3406 = vmatpush1.msra.mxu0 %v3078
        %3407 = vmatprep.subr.mxu0 %v3083
        %3408 = vmatpush1.msra.mxu0 %v3082
        %3409 = vmatprep.subr.mxu0 %v3087
        %3410 = vmatpush1.msra.mxu0 %v3086
        %3411 = vmatprep.subr.mxu0 %v3091
        %3412 = vmatpush1.msra.mxu0 %v3090
        %3413 = vmatprep.subr.mxu0 %v3095
        %3414 = vmatpush1.msra.mxu0 %v3094
        %3415 = vmatprep.subr.mxu0 %v3099
        %3416 = vmatpush1.msra.mxu0 %v3098
        %3417 = vmatprep.subr.mxu0 %v3103
        %3418 = vmatpush1.msra.mxu0 %v3102
        %3419 = vmatprep.subr.mxu0 %v3107
        %3420 = vmatpush1.msra.mxu0 %v3106
        %3421 = vmatprep.subr.mxu0 %v3111
        %3422 = vmatpush1.msra.mxu0 %v3110
        %3423 = vmatprep.subr.mxu0 %v3115
        %3424 = vmatpush1.msra.mxu0 %v3114
        %3425 = vmatprep.subr.mxu0 0.0
        %3426 = vmatpush1.msra.mxu0 0.0
        %3427 = vmatprep.subr.mxu0 0.0
        %3428 = vmatpush1.msra.mxu0 0.0
        %3429 = vmatprep.subr.mxu0 0.0
        %3430 = vmatpush1.msra.mxu0 0.0
        %3431 = vmatprep.subr.mxu0 0.0
        %3432 = vmatpush1.msra.mxu0 0.0
        %3433 = vmatprep.subr.mxu0 0.0
        %3434 = vmatpush1.msra.mxu0 0.0
        %3435 = vmatprep.subr.mxu0 0.0
        %3436 = vmatpush1.msra.mxu0 0.0
        %3437 = vmatprep.subr.mxu0 0.0
        %3438 = vmatpush1.msra.mxu0 0.0
        %3439 = vmatprep.subr.mxu0 0.0
        %3440 = vmatpush1.msra.mxu0 0.0
        %3441 = vmatprep.subr.mxu0 0.0
        %3442 = vmatpush1.msra.mxu0 0.0
        %3443 = vmatprep.subr.mxu0 0.0
        %3444 = vmatpush1.msra.mxu0 0.0
        %3445 = vmatprep.subr.mxu0 0.0
        %3446 = vmatpush1.msra.mxu0 0.0
        %3447 = vmatprep.subr.mxu0 0.0
        %3448 = vmatpush1.msra.mxu0 0.0
        %3449 = vmatprep.subr.mxu0 0.0
        %3450 = vmatpush1.msra.mxu0 0.0
        %3451 = vmatprep.subr.mxu0 0.0
        %3452 = vmatpush1.msra.mxu0 0.0
        %3453 = vmatprep.subr.mxu0 0.0
        %3454 = vmatpush1.msra.mxu0 0.0
        %3455 = vmatprep.subr.mxu0 0.0
        %3456 = vmatpush1.msra.mxu0 0.0
        %3457 = vmatprep.mubr.f32.mxu0 0.0
        %3458 = vmatmul.mubr.f32.gmra.mrb[0].mxu0 %v3049
        %v3459 = vpop.f32.mrb[0].mxu0
        %v3460 = vadd.f32 %v3318, %v3459
        %v3461 = vpop.f32.mrb[0].mxu0
        %v3462 = vadd.f32 %v3320, %v3461
        %3463 = vdwg.mxu0
        %v3464 = vxor.u32 %v3389, 2147483648
        %v3465 = vmul.f32 %v3464, 1.442695
        %v3466 = vpow.pop %v3465
        %v3467 = vadd.f32 %v3466, 1.0
        %v3468 = vrcp.pop %v3467
        %v3469 = vmul.f32 1.0, %v3468
        %v3470 = vxor.u32 %v3391, 2147483648
        %v3471 = vmul.f32 %v3470, 1.442695
        %v3472 = vpow.pop %v3471
        %v3473 = vadd.f32 %v3472, 1.0
        %v3474 = vrcp.pop %v3473
        %v3475 = vmul.f32 1.0, %v3474
        %v3476 = vtanh.pop %v3460
        %v3477 = vxor.u32 %v3462, 2147483648
        %v3478 = vmul.f32 %v3477, 1.442695
        %v3479 = vpow.pop %v3478
        %v3480 = vadd.f32 %v3479, 1.0
        %v3481 = vrcp.pop %v3480
        %v3482 = vmul.f32 1.0, %v3481
        %v3483 = vmul.f32 %v3475, %v3051
        %v3484 = vmul.f32 %v3469, %v3476
        %v3485 = vadd.f32 %v3483, %v3484
        %v3486 = vtanh.pop %v3485
        %v3487 = vmul.f32 %v3482, %v3486
        %3488 = vst [vmem:[#allocation2] sm:$0xff] %v3487
        %3489 = vst [vmem:[#allocation4] sm:$0xff] %v3485
        %v3490 = vld [vmem:[#allocation3] sm:$0xff]
        %v3491 = vld [vmem:[#allocation5] sm:$0xff]
        %v3492 = vld [vmem:[#allocation11] sm:$0xff]
        %v3493 = vld [vmem:[#allocation11 + $0x8] sm:$0xff]
        %v3494 = vld [vmem:[#allocation11 + $0x10] sm:$0xff]
        %v3495 = vld [vmem:[#allocation11 + $0x18] sm:$0xff]
        %v3496 = vld [vmem:[#allocation11 + $0x20] sm:$0xff]
        %v3497 = vld [vmem:[#allocation11 + $0x28] sm:$0xff]
        %v3498 = vld [vmem:[#allocation11 + $0x30] sm:$0xff]
        %v3499 = vld [vmem:[#allocation11 + $0x38] sm:$0xff]
        %v3500 = vld [vmem:[#allocation11 + $0x40] sm:$0xff]
        %v3501 = vld [vmem:[#allocation11 + $0x48] sm:$0xff]
        %v3502 = vld [vmem:[#allocation11 + $0x50] sm:$0xff]
        %v3503 = vld [vmem:[#allocation11 + $0x58] sm:$0xff]
        %v3504 = vld [vmem:[#allocation11 + $0x60] sm:$0xff]
        %v3505 = vld [vmem:[#allocation11 + $0x68] sm:$0xff]
        %v3506 = vld [vmem:[#allocation11 + $0x70] sm:$0xff]
        %v3507 = vld [vmem:[#allocation11 + $0x78] sm:$0xff]
        %v3508 = vld [vmem:[#allocation11 + $0x80] sm:$0xff]
        %v3509 = vld [vmem:[#allocation11 + $0x88] sm:$0xff]
        %v3510 = vld [vmem:[#allocation11 + $0x90] sm:$0xff]
        %v3511 = vld [vmem:[#allocation11 + $0x98] sm:$0xff]
        %v3512 = vld [vmem:[#allocation11 + $0xa0] sm:$0xff]
        %v3513 = vld [vmem:[#allocation11 + $0xa8] sm:$0xff]
        %v3514 = vld [vmem:[#allocation11 + $0xb0] sm:$0xff]
        %v3515 = vld [vmem:[#allocation11 + $0xb8] sm:$0xff]
        %v3516 = vld [vmem:[#allocation11 + $0xc0] sm:$0xff]
        %v3517 = vld [vmem:[#allocation11 + $0xc8] sm:$0xff]
        %v3518 = vld [vmem:[#allocation11 + $0xd0] sm:$0xff]
        %v3519 = vld [vmem:[#allocation11 + $0xd8] sm:$0xff]
        %v3520 = vld [vmem:[#allocation11 + $0xe0] sm:$0xff]
        %v3521 = vld [vmem:[#allocation11 + $0xe8] sm:$0xff]
        %v3522 = vld [vmem:[#allocation11 + $0xf0] sm:$0xff]
        %v3523 = vld [vmem:[#allocation11 + $0xf8] sm:$0xff]
        %v3524 = vld [vmem:[#allocation11 + $0x100] sm:$0xff]
        %v3525 = vld [vmem:[#allocation11 + $0x108] sm:$0xff]
        %v3526 = vld [vmem:[#allocation11 + $0x110] sm:$0xff]
        %v3527 = vld [vmem:[#allocation11 + $0x118] sm:$0xff]
        %v3528 = vld [vmem:[#allocation11 + $0x120] sm:$0xff]
        %v3529 = vld [vmem:[#allocation11 + $0x128] sm:$0xff]
        %v3530 = vld [vmem:[#allocation11 + $0x130] sm:$0xff]
        %v3531 = vld [vmem:[#allocation11 + $0x138] sm:$0xff]
        %v3532 = vld [vmem:[#allocation11 + $0x140] sm:$0xff]
        %v3533 = vld [vmem:[#allocation11 + $0x148] sm:$0xff]
        %v3534 = vld [vmem:[#allocation11 + $0x150] sm:$0xff]
        %v3535 = vld [vmem:[#allocation11 + $0x158] sm:$0xff]
        %v3536 = vld [vmem:[#allocation11 + $0x160] sm:$0xff]
        %v3537 = vld [vmem:[#allocation11 + $0x168] sm:$0xff]
        %v3538 = vld [vmem:[#allocation11 + $0x170] sm:$0xff]
        %v3539 = vld [vmem:[#allocation11 + $0x178] sm:$0xff]
        %v3540 = vld [vmem:[#allocation11 + $0x180] sm:$0xff]
        %v3541 = vld [vmem:[#allocation11 + $0x188] sm:$0xff]
        %v3542 = vld [vmem:[#allocation11 + $0x190] sm:$0xff]
        %v3543 = vld [vmem:[#allocation11 + $0x198] sm:$0xff]
        %v3544 = vld [vmem:[#allocation11 + $0x1a0] sm:$0xff]
        %v3545 = vld [vmem:[#allocation11 + $0x1a8] sm:$0xff]
        %v3546 = vld [vmem:[#allocation11 + $0x1b0] sm:$0xff]
        %v3547 = vld [vmem:[#allocation11 + $0x1b8] sm:$0xff]
        %v3548 = vld [vmem:[#allocation11 + $0x1c0] sm:$0xff]
        %v3549 = vld [vmem:[#allocation11 + $0x1c8] sm:$0xff]
        %v3550 = vld [vmem:[#allocation11 + $0x1d0] sm:$0xff]
        %v3551 = vld [vmem:[#allocation11 + $0x1d8] sm:$0xff]
        %v3552 = vld [vmem:[#allocation11 + $0x1e0] sm:$0xff]
        %v3553 = vld [vmem:[#allocation11 + $0x1e8] sm:$0xff]
        %v3554 = vld [vmem:[#allocation11 + $0x1f0] sm:$0xff]
        %v3555 = vld [vmem:[#allocation11 + $0x1f8] sm:$0xff]
        %v3556 = vld [vmem:[#allocation12] sm:$0xff]
        %v3557 = vld [vmem:[#allocation12 + $0x8] sm:$0xff]
        %v3558 = vld [vmem:[#allocation12 + $0x10] sm:$0xff]
        %v3559 = vld [vmem:[#allocation12 + $0x18] sm:$0xff]
        %v3560 = vld [vmem:[#allocation12 + $0x20] sm:$0xff]
        %v3561 = vld [vmem:[#allocation12 + $0x28] sm:$0xff]
        %v3562 = vld [vmem:[#allocation12 + $0x30] sm:$0xff]
        %v3563 = vld [vmem:[#allocation12 + $0x38] sm:$0xff]
        %v3564 = vld [vmem:[#allocation12 + $0x40] sm:$0xff]
        %v3565 = vld [vmem:[#allocation12 + $0x48] sm:$0xff]
        %v3566 = vld [vmem:[#allocation12 + $0x50] sm:$0xff]
        %v3567 = vld [vmem:[#allocation12 + $0x58] sm:$0xff]
        %v3568 = vld [vmem:[#allocation12 + $0x60] sm:$0xff]
        %v3569 = vld [vmem:[#allocation12 + $0x68] sm:$0xff]
        %v3570 = vld [vmem:[#allocation12 + $0x70] sm:$0xff]
        %v3571 = vld [vmem:[#allocation12 + $0x78] sm:$0xff]
        %v3572 = vld [vmem:[#allocation12 + $0x80] sm:$0xff]
        %v3573 = vld [vmem:[#allocation12 + $0x88] sm:$0xff]
        %v3574 = vld [vmem:[#allocation12 + $0x90] sm:$0xff]
        %v3575 = vld [vmem:[#allocation12 + $0x98] sm:$0xff]
        %v3576 = vld [vmem:[#allocation12 + $0xa0] sm:$0xff]
        %v3577 = vld [vmem:[#allocation12 + $0xa8] sm:$0xff]
        %v3578 = vld [vmem:[#allocation12 + $0xb0] sm:$0xff]
        %v3579 = vld [vmem:[#allocation12 + $0xb8] sm:$0xff]
        %v3580 = vld [vmem:[#allocation12 + $0xc0] sm:$0xff]
        %v3581 = vld [vmem:[#allocation12 + $0xc8] sm:$0xff]
        %v3582 = vld [vmem:[#allocation12 + $0xd0] sm:$0xff]
        %v3583 = vld [vmem:[#allocation12 + $0xd8] sm:$0xff]
        %v3584 = vld [vmem:[#allocation12 + $0xe0] sm:$0xff]
        %v3585 = vld [vmem:[#allocation12 + $0xe8] sm:$0xff]
        %v3586 = vld [vmem:[#allocation12 + $0xf0] sm:$0xff]
        %v3587 = vld [vmem:[#allocation12 + $0xf8] sm:$0xff]
        %v3588 = vld [vmem:[#allocation12 + $0x100] sm:$0xff]
        %v3589 = vld [vmem:[#allocation12 + $0x108] sm:$0xff]
        %v3590 = vld [vmem:[#allocation12 + $0x110] sm:$0xff]
        %v3591 = vld [vmem:[#allocation12 + $0x118] sm:$0xff]
        %v3592 = vld [vmem:[#allocation12 + $0x120] sm:$0xff]
        %v3593 = vld [vmem:[#allocation12 + $0x128] sm:$0xff]
        %v3594 = vld [vmem:[#allocation12 + $0x130] sm:$0xff]
        %v3595 = vld [vmem:[#allocation12 + $0x138] sm:$0xff]
        %v3596 = vld [vmem:[#allocation12 + $0x140] sm:$0xff]
        %v3597 = vld [vmem:[#allocation12 + $0x148] sm:$0xff]
        %v3598 = vld [vmem:[#allocation12 + $0x150] sm:$0xff]
        %v3599 = vld [vmem:[#allocation12 + $0x158] sm:$0xff]
        %v3600 = vld [vmem:[#allocation12 + $0x160] sm:$0xff]
        %v3601 = vld [vmem:[#allocation12 + $0x168] sm:$0xff]
        %v3602 = vld [vmem:[#allocation12 + $0x170] sm:$0xff]
        %v3603 = vld [vmem:[#allocation12 + $0x178] sm:$0xff]
        %v3604 = vld [vmem:[#allocation12 + $0x180] sm:$0xff]
        %v3605 = vld [vmem:[#allocation12 + $0x188] sm:$0xff]
        %v3606 = vld [vmem:[#allocation12 + $0x190] sm:$0xff]
        %v3607 = vld [vmem:[#allocation12 + $0x198] sm:$0xff]
        %v3608 = vld [vmem:[#allocation12 + $0x1a0] sm:$0xff]
        %v3609 = vld [vmem:[#allocation12 + $0x1a8] sm:$0xff]
        %v3610 = vld [vmem:[#allocation12 + $0x1b0] sm:$0xff]
        %v3611 = vld [vmem:[#allocation12 + $0x1b8] sm:$0xff]
        %v3612 = vld [vmem:[#allocation12 + $0x1c0] sm:$0xff]
        %v3613 = vld [vmem:[#allocation12 + $0x1c8] sm:$0xff]
        %v3614 = vld [vmem:[#allocation12 + $0x1d0] sm:$0xff]
        %v3615 = vld [vmem:[#allocation12 + $0x1d8] sm:$0xff]
        %v3616 = vld [vmem:[#allocation12 + $0x1e0] sm:$0xff]
        %v3617 = vld [vmem:[#allocation12 + $0x1e8] sm:$0xff]
        %v3618 = vld [vmem:[#allocation12 + $0x1f0] sm:$0xff]
        %v3619 = vld [vmem:[#allocation12 + $0x1f8] sm:$0xff]
        %3620 = vmatprep.subr.mxu0 %v3557
        %3621 = vmatpush1.msra.mxu0 %v3556
        %3622 = vmatprep.subr.mxu0 %v3561
        %3623 = vmatpush1.msra.mxu0 %v3560
        %3624 = vmatprep.subr.mxu0 %v3565
        %3625 = vmatpush1.msra.mxu0 %v3564
        %3626 = vmatprep.subr.mxu0 %v3569
        %3627 = vmatpush1.msra.mxu0 %v3568
        %3628 = vmatprep.subr.mxu0 %v3573
        %3629 = vmatpush1.msra.mxu0 %v3572
        %3630 = vmatprep.subr.mxu0 %v3577
        %3631 = vmatpush1.msra.mxu0 %v3576
        %3632 = vmatprep.subr.mxu0 %v3581
        %3633 = vmatpush1.msra.mxu0 %v3580
        %3634 = vmatprep.subr.mxu0 %v3585
        %3635 = vmatpush1.msra.mxu0 %v3584
        %3636 = vmatprep.subr.mxu0 %v3589
        %3637 = vmatpush1.msra.mxu0 %v3588
        %3638 = vmatprep.subr.mxu0 %v3593
        %3639 = vmatpush1.msra.mxu0 %v3592
        %3640 = vmatprep.subr.mxu0 %v3597
        %3641 = vmatpush1.msra.mxu0 %v3596
        %3642 = vmatprep.subr.mxu0 %v3601
        %3643 = vmatpush1.msra.mxu0 %v3600
        %3644 = vmatprep.subr.mxu0 %v3605
        %3645 = vmatpush1.msra.mxu0 %v3604
        %3646 = vmatprep.subr.mxu0 %v3609
        %3647 = vmatpush1.msra.mxu0 %v3608
        %3648 = vmatprep.subr.mxu0 %v3613
        %3649 = vmatpush1.msra.mxu0 %v3612
        %3650 = vmatprep.subr.mxu0 %v3617
        %3651 = vmatpush1.msra.mxu0 %v3616
        %3652 = vmatprep.subr.mxu0 0.0
        %3653 = vmatpush1.msra.mxu0 0.0
        %3654 = vmatprep.subr.mxu0 0.0
        %3655 = vmatpush1.msra.mxu0 0.0
        %3656 = vmatprep.subr.mxu0 0.0
        %3657 = vmatpush1.msra.mxu0 0.0
        %3658 = vmatprep.subr.mxu0 0.0
        %3659 = vmatpush1.msra.mxu0 0.0
        %3660 = vmatprep.subr.mxu0 0.0
        %3661 = vmatpush1.msra.mxu0 0.0
        %3662 = vmatprep.subr.mxu0 0.0
        %3663 = vmatpush1.msra.mxu0 0.0
        %3664 = vmatprep.subr.mxu0 0.0
        %3665 = vmatpush1.msra.mxu0 0.0
        %3666 = vmatprep.subr.mxu0 0.0
        %3667 = vmatpush1.msra.mxu0 0.0
        %3668 = vmatprep.subr.mxu0 0.0
        %3669 = vmatpush1.msra.mxu0 0.0
        %3670 = vmatprep.subr.mxu0 0.0
        %3671 = vmatpush1.msra.mxu0 0.0
        %3672 = vmatprep.subr.mxu0 0.0
        %3673 = vmatpush1.msra.mxu0 0.0
        %3674 = vmatprep.subr.mxu0 0.0
        %3675 = vmatpush1.msra.mxu0 0.0
        %3676 = vmatprep.subr.mxu0 0.0
        %3677 = vmatpush1.msra.mxu0 0.0
        %3678 = vmatprep.subr.mxu0 0.0
        %3679 = vmatpush1.msra.mxu0 0.0
        %3680 = vmatprep.subr.mxu0 0.0
        %3681 = vmatpush1.msra.mxu0 0.0
        %3682 = vmatprep.subr.mxu0 0.0
        %3683 = vmatpush1.msra.mxu0 0.0
        %3684 = vmatprep.mubr.f32.mxu0 0.0
        %3685 = vmatmul.mubr.f32.gmra.mrb[0].mxu0 %v3490
        %v3686 = vpop.f32.mrb[0].mxu0
        %v3687 = vadd.f32 0.0, %v3686
        %v3688 = vpop.f32.mrb[0].mxu0
        %v3689 = vadd.f32 0.0, %v3688
        %3690 = vdwg.mxu0
        %3691 = vmatprep.subr.mxu0 %v3559
        %3692 = vmatpush1.msra.mxu0 %v3558
        %3693 = vmatprep.subr.mxu0 %v3563
        %3694 = vmatpush1.msra.mxu0 %v3562
        %3695 = vmatprep.subr.mxu0 %v3567
        %3696 = vmatpush1.msra.mxu0 %v3566
        %3697 = vmatprep.subr.mxu0 %v3571
        %3698 = vmatpush1.msra.mxu0 %v3570
        %3699 = vmatprep.subr.mxu0 %v3575
        %3700 = vmatpush1.msra.mxu0 %v3574
        %3701 = vmatprep.subr.mxu0 %v3579
        %3702 = vmatpush1.msra.mxu0 %v3578
        %3703 = vmatprep.subr.mxu0 %v3583
        %3704 = vmatpush1.msra.mxu0 %v3582
        %3705 = vmatprep.subr.mxu0 %v3587
        %3706 = vmatpush1.msra.mxu0 %v3586
        %3707 = vmatprep.subr.mxu0 %v3591
        %3708 = vmatpush1.msra.mxu0 %v3590
        %3709 = vmatprep.subr.mxu0 %v3595
        %3710 = vmatpush1.msra.mxu0 %v3594
        %3711 = vmatprep.subr.mxu0 %v3599
        %3712 = vmatpush1.msra.mxu0 %v3598
        %3713 = vmatprep.subr.mxu0 %v3603
        %3714 = vmatpush1.msra.mxu0 %v3602
        %3715 = vmatprep.subr.mxu0 %v3607
        %3716 = vmatpush1.msra.mxu0 %v3606
        %3717 = vmatprep.subr.mxu0 %v3611
        %3718 = vmatpush1.msra.mxu0 %v3610
        %3719 = vmatprep.subr.mxu0 %v3615
        %3720 = vmatpush1.msra.mxu0 %v3614
        %3721 = vmatprep.subr.mxu0 %v3619
        %3722 = vmatpush1.msra.mxu0 %v3618
        %3723 = vmatprep.subr.mxu0 0.0
        %3724 = vmatpush1.msra.mxu0 0.0
        %3725 = vmatprep.subr.mxu0 0.0
        %3726 = vmatpush1.msra.mxu0 0.0
        %3727 = vmatprep.subr.mxu0 0.0
        %3728 = vmatpush1.msra.mxu0 0.0
        %3729 = vmatprep.subr.mxu0 0.0
        %3730 = vmatpush1.msra.mxu0 0.0
        %3731 = vmatprep.subr.mxu0 0.0
        %3732 = vmatpush1.msra.mxu0 0.0
        %3733 = vmatprep.subr.mxu0 0.0
        %3734 = vmatpush1.msra.mxu0 0.0
        %3735 = vmatprep.subr.mxu0 0.0
        %3736 = vmatpush1.msra.mxu0 0.0
        %3737 = vmatprep.subr.mxu0 0.0
        %3738 = vmatpush1.msra.mxu0 0.0
        %3739 = vmatprep.subr.mxu0 0.0
        %3740 = vmatpush1.msra.mxu0 0.0
        %3741 = vmatprep.subr.mxu0 0.0
        %3742 = vmatpush1.msra.mxu0 0.0
        %3743 = vmatprep.subr.mxu0 0.0
        %3744 = vmatpush1.msra.mxu0 0.0
        %3745 = vmatprep.subr.mxu0 0.0
        %3746 = vmatpush1.msra.mxu0 0.0
        %3747 = vmatprep.subr.mxu0 0.0
        %3748 = vmatpush1.msra.mxu0 0.0
        %3749 = vmatprep.subr.mxu0 0.0
        %3750 = vmatpush1.msra.mxu0 0.0
        %3751 = vmatprep.subr.mxu0 0.0
        %3752 = vmatpush1.msra.mxu0 0.0
        %3753 = vmatprep.subr.mxu0 0.0
        %3754 = vmatpush1.msra.mxu0 0.0
        %3755 = vmatprep.mubr.f32.mxu0 0.0
        %3756 = vmatmul.mubr.f32.gmra.mrb[0].mxu0 %v3490
        %v3757 = vpop.f32.mrb[0].mxu0
        %v3758 = vadd.f32 0.0, %v3757
        %v3759 = vpop.f32.mrb[0].mxu0
        %v3760 = vadd.f32 0.0, %v3759
        %3761 = vdwg.mxu0
        %3762 = vmatprep.subr.mxu0 %v3493
        %3763 = vmatpush1.msra.mxu0 %v3492
        %3764 = vmatprep.subr.mxu0 %v3497
        %3765 = vmatpush1.msra.mxu0 %v3496
        %3766 = vmatprep.subr.mxu0 %v3501
        %3767 = vmatpush1.msra.mxu0 %v3500
        %3768 = vmatprep.subr.mxu0 %v3505
        %3769 = vmatpush1.msra.mxu0 %v3504
        %3770 = vmatprep.subr.mxu0 %v3509
        %3771 = vmatpush1.msra.mxu0 %v3508
        %3772 = vmatprep.subr.mxu0 %v3513
        %3773 = vmatpush1.msra.mxu0 %v3512
        %3774 = vmatprep.subr.mxu0 %v3517
        %3775 = vmatpush1.msra.mxu0 %v3516
        %3776 = vmatprep.subr.mxu0 %v3521
        %3777 = vmatpush1.msra.mxu0 %v3520
        %3778 = vmatprep.subr.mxu0 %v3525
        %3779 = vmatpush1.msra.mxu0 %v3524
        %3780 = vmatprep.subr.mxu0 %v3529
        %3781 = vmatpush1.msra.mxu0 %v3528
        %3782 = vmatprep.subr.mxu0 %v3533
        %3783 = vmatpush1.msra.mxu0 %v3532
        %3784 = vmatprep.subr.mxu0 %v3537
        %3785 = vmatpush1.msra.mxu0 %v3536
        %3786 = vmatprep.subr.mxu0 %v3541
        %3787 = vmatpush1.msra.mxu0 %v3540
        %3788 = vmatprep.subr.mxu0 %v3545
        %3789 = vmatpush1.msra.mxu0 %v3544
        %3790 = vmatprep.subr.mxu0 %v3549
        %3791 = vmatpush1.msra.mxu0 %v3548
        %3792 = vmatprep.subr.mxu0 %v3553
        %3793 = vmatpush1.msra.mxu0 %v3552
        %3794 = vmatprep.subr.mxu0 0.0
        %3795 = vmatpush1.msra.mxu0 0.0
        %3796 = vmatprep.subr.mxu0 0.0
        %3797 = vmatpush1.msra.mxu0 0.0
        %3798 = vmatprep.subr.mxu0 0.0
        %3799 = vmatpush1.msra.mxu0 0.0
        %3800 = vmatprep.subr.mxu0 0.0
        %3801 = vmatpush1.msra.mxu0 0.0
        %3802 = vmatprep.subr.mxu0 0.0
        %3803 = vmatpush1.msra.mxu0 0.0
        %3804 = vmatprep.subr.mxu0 0.0
        %3805 = vmatpush1.msra.mxu0 0.0
        %3806 = vmatprep.subr.mxu0 0.0
        %3807 = vmatpush1.msra.mxu0 0.0
        %3808 = vmatprep.subr.mxu0 0.0
        %3809 = vmatpush1.msra.mxu0 0.0
        %3810 = vmatprep.subr.mxu0 0.0
        %3811 = vmatpush1.msra.mxu0 0.0
        %3812 = vmatprep.subr.mxu0 0.0
        %3813 = vmatpush1.msra.mxu0 0.0
        %3814 = vmatprep.subr.mxu0 0.0
        %3815 = vmatpush1.msra.mxu0 0.0
        %3816 = vmatprep.subr.mxu0 0.0
        %3817 = vmatpush1.msra.mxu0 0.0
        %3818 = vmatprep.subr.mxu0 0.0
        %3819 = vmatpush1.msra.mxu0 0.0
        %3820 = vmatprep.subr.mxu0 0.0
        %3821 = vmatpush1.msra.mxu0 0.0
        %3822 = vmatprep.subr.mxu0 0.0
        %3823 = vmatpush1.msra.mxu0 0.0
        %3824 = vmatprep.subr.mxu0 0.0
        %3825 = vmatpush1.msra.mxu0 0.0
        %3826 = vmatprep.mubr.f32.mxu0 0.0
        %3827 = vmatmul.mubr.f32.gmra.mrb[0].mxu0 %v3487
        %v3828 = vpop.f32.mrb[0].mxu0
        %v3829 = vadd.f32 %v3687, %v3828
        %v3830 = vpop.f32.mrb[0].mxu0
        %v3831 = vadd.f32 %v3689, %v3830
        %3832 = vdwg.mxu0
        %3833 = vmatprep.subr.mxu0 %v3495
        %3834 = vmatpush1.msra.mxu0 %v3494
        %3835 = vmatprep.subr.mxu0 %v3499
        %3836 = vmatpush1.msra.mxu0 %v3498
        %3837 = vmatprep.subr.mxu0 %v3503
        %3838 = vmatpush1.msra.mxu0 %v3502
        %3839 = vmatprep.subr.mxu0 %v3507
        %3840 = vmatpush1.msra.mxu0 %v3506
        %3841 = vmatprep.subr.mxu0 %v3511
        %3842 = vmatpush1.msra.mxu0 %v3510
        %3843 = vmatprep.subr.mxu0 %v3515
        %3844 = vmatpush1.msra.mxu0 %v3514
        %3845 = vmatprep.subr.mxu0 %v3519
        %3846 = vmatpush1.msra.mxu0 %v3518
        %3847 = vmatprep.subr.mxu0 %v3523
        %3848 = vmatpush1.msra.mxu0 %v3522
        %3849 = vmatprep.subr.mxu0 %v3527
        %3850 = vmatpush1.msra.mxu0 %v3526
        %3851 = vmatprep.subr.mxu0 %v3531
        %3852 = vmatpush1.msra.mxu0 %v3530
        %3853 = vmatprep.subr.mxu0 %v3535
        %3854 = vmatpush1.msra.mxu0 %v3534
        %3855 = vmatprep.subr.mxu0 %v3539
        %3856 = vmatpush1.msra.mxu0 %v3538
        %3857 = vmatprep.subr.mxu0 %v3543
        %3858 = vmatpush1.msra.mxu0 %v3542
        %3859 = vmatprep.subr.mxu0 %v3547
        %3860 = vmatpush1.msra.mxu0 %v3546
        %3861 = vmatprep.subr.mxu0 %v3551
        %3862 = vmatpush1.msra.mxu0 %v3550
        %3863 = vmatprep.subr.mxu0 %v3555
        %3864 = vmatpush1.msra.mxu0 %v3554
        %3865 = vmatprep.subr.mxu0 0.0
        %3866 = vmatpush1.msra.mxu0 0.0
        %3867 = vmatprep.subr.mxu0 0.0
        %3868 = vmatpush1.msra.mxu0 0.0
        %3869 = vmatprep.subr.mxu0 0.0
        %3870 = vmatpush1.msra.mxu0 0.0
        %3871 = vmatprep.subr.mxu0 0.0
        %3872 = vmatpush1.msra.mxu0 0.0
        %3873 = vmatprep.subr.mxu0 0.0
        %3874 = vmatpush1.msra.mxu0 0.0
        %3875 = vmatprep.subr.mxu0 0.0
        %3876 = vmatpush1.msra.mxu0 0.0
        %3877 = vmatprep.subr.mxu0 0.0
        %3878 = vmatpush1.msra.mxu0 0.0
        %3879 = vmatprep.subr.mxu0 0.0
        %3880 = vmatpush1.msra.mxu0 0.0
        %3881 = vmatprep.subr.mxu0 0.0
        %3882 = vmatpush1.msra.mxu0 0.0
        %3883 = vmatprep.subr.mxu0 0.0
        %3884 = vmatpush1.msra.mxu0 0.0
        %3885 = vmatprep.subr.mxu0 0.0
        %3886 = vmatpush1.msra.mxu0 0.0
        %3887 = vmatprep.subr.mxu0 0.0
        %3888 = vmatpush1.msra.mxu0 0.0
        %3889 = vmatprep.subr.mxu0 0.0
        %3890 = vmatpush1.msra.mxu0 0.0
        %3891 = vmatprep.subr.mxu0 0.0
        %3892 = vmatpush1.msra.mxu0 0.0
        %3893 = vmatprep.subr.mxu0 0.0
        %3894 = vmatpush1.msra.mxu0 0.0
        %3895 = vmatprep.subr.mxu0 0.0
        %3896 = vmatpush1.msra.mxu0 0.0
        %3897 = vmatprep.mubr.f32.mxu0 0.0
        %3898 = vmatmul.mubr.f32.gmra.mrb[0].mxu0 %v3487
        %v3899 = vpop.f32.mrb[0].mxu0
        %v3900 = vadd.f32 %v3758, %v3899
        %v3901 = vpop.f32.mrb[0].mxu0
        %v3902 = vadd.f32 %v3760, %v3901
        %3903 = vdwg.mxu0
        %v3904 = vxor.u32 %v3829, 2147483648
        %v3905 = vmul.f32 %v3904, 1.442695
        %v3906 = vpow.pop %v3905
        %v3907 = vadd.f32 %v3906, 1.0
        %v3908 = vrcp.pop %v3907
        %v3909 = vmul.f32 1.0, %v3908
        %v3910 = vxor.u32 %v3831, 2147483648
        %v3911 = vmul.f32 %v3910, 1.442695
        %v3912 = vpow.pop %v3911
        %v3913 = vadd.f32 %v3912, 1.0
        %v3914 = vrcp.pop %v3913
        %v3915 = vmul.f32 1.0, %v3914
        %v3916 = vtanh.pop %v3900
        %v3917 = vxor.u32 %v3902, 2147483648
        %v3918 = vmul.f32 %v3917, 1.442695
        %v3919 = vpow.pop %v3918
        %v3920 = vadd.f32 %v3919, 1.0
        %v3921 = vrcp.pop %v3920
        %v3922 = vmul.f32 1.0, %v3921
        %v3923 = vmul.f32 %v3915, %v3491
        %v3924 = vmul.f32 %v3909, %v3916
        %v3925 = vadd.f32 %v3923, %v3924
        %v3926 = vtanh.pop %v3925
        %v3927 = vmul.f32 %v3922, %v3926
        %3928 = vst [vmem:[#allocation3] sm:$0xff] %v3927
        %3929 = vst [vmem:[#allocation5] sm:$0xff] %v3925
        %s3930 = scalar_lea.vmem [#allocation6], 24
        %3931 = vst [vmem:[%s3930] sm:$0xff] %v3927
        %s3932 = scalar_lea.vmem %s382, 32
        %v3933 = vld [vmem:[%s3932] sm:$0xff]
        %v3934 = vld [vmem:[#allocation2] sm:$0xff]
        %v3935 = vld [vmem:[#allocation4] sm:$0xff]
        %v3936 = vld [vmem:[#allocation7] sm:$0xff]
        %v3937 = vld [vmem:[#allocation7 + $0x8] sm:$0xff]
        %v3938 = vld [vmem:[#allocation7 + $0x10] sm:$0xff]
        %v3939 = vld [vmem:[#allocation7 + $0x18] sm:$0xff]
        %v3940 = vld [vmem:[#allocation7 + $0x20] sm:$0xff]
        %v3941 = vld [vmem:[#allocation7 + $0x28] sm:$0xff]
        %v3942 = vld [vmem:[#allocation7 + $0x30] sm:$0xff]
        %v3943 = vld [vmem:[#allocation7 + $0x38] sm:$0xff]
        %v3944 = vld [vmem:[#allocation7 + $0x40] sm:$0xff]
        %v3945 = vld [vmem:[#allocation7 + $0x48] sm:$0xff]
        %v3946 = vld [vmem:[#allocation7 + $0x50] sm:$0xff]
        %v3947 = vld [vmem:[#allocation7 + $0x58] sm:$0xff]
        %v3948 = vld [vmem:[#allocation7 + $0x60] sm:$0xff]
        %v3949 = vld [vmem:[#allocation7 + $0x68] sm:$0xff]
        %v3950 = vld [vmem:[#allocation7 + $0x70] sm:$0xff]
        %v3951 = vld [vmem:[#allocation7 + $0x78] sm:$0xff]
        %v3952 = vld [vmem:[#allocation7 + $0x80] sm:$0xff]
        %v3953 = vld [vmem:[#allocation7 + $0x88] sm:$0xff]
        %v3954 = vld [vmem:[#allocation7 + $0x90] sm:$0xff]
        %v3955 = vld [vmem:[#allocation7 + $0x98] sm:$0xff]
        %v3956 = vld [vmem:[#allocation7 + $0xa0] sm:$0xff]
        %v3957 = vld [vmem:[#allocation7 + $0xa8] sm:$0xff]
        %v3958 = vld [vmem:[#allocation7 + $0xb0] sm:$0xff]
        %v3959 = vld [vmem:[#allocation7 + $0xb8] sm:$0xff]
        %v3960 = vld [vmem:[#allocation7 + $0xc0] sm:$0xff]
        %v3961 = vld [vmem:[#allocation7 + $0xc8] sm:$0xff]
        %v3962 = vld [vmem:[#allocation7 + $0xd0] sm:$0xff]
        %v3963 = vld [vmem:[#allocation7 + $0xd8] sm:$0xff]
        %v3964 = vld [vmem:[#allocation7 + $0xe0] sm:$0xff]
        %v3965 = vld [vmem:[#allocation7 + $0xe8] sm:$0xff]
        %v3966 = vld [vmem:[#allocation7 + $0xf0] sm:$0xff]
        %v3967 = vld [vmem:[#allocation7 + $0xf8] sm:$0xff]
        %v3968 = vld [vmem:[#allocation7 + $0x100] sm:$0xff]
        %v3969 = vld [vmem:[#allocation7 + $0x108] sm:$0xff]
        %v3970 = vld [vmem:[#allocation7 + $0x110] sm:$0xff]
        %v3971 = vld [vmem:[#allocation7 + $0x118] sm:$0xff]
        %v3972 = vld [vmem:[#allocation7 + $0x120] sm:$0xff]
        %v3973 = vld [vmem:[#allocation7 + $0x128] sm:$0xff]
        %v3974 = vld [vmem:[#allocation7 + $0x130] sm:$0xff]
        %v3975 = vld [vmem:[#allocation7 + $0x138] sm:$0xff]
        %v3976 = vld [vmem:[#allocation7 + $0x140] sm:$0xff]
        %v3977 = vld [vmem:[#allocation7 + $0x148] sm:$0xff]
        %v3978 = vld [vmem:[#allocation7 + $0x150] sm:$0xff]
        %v3979 = vld [vmem:[#allocation7 + $0x158] sm:$0xff]
        %v3980 = vld [vmem:[#allocation7 + $0x160] sm:$0xff]
        %v3981 = vld [vmem:[#allocation7 + $0x168] sm:$0xff]
        %v3982 = vld [vmem:[#allocation7 + $0x170] sm:$0xff]
        %v3983 = vld [vmem:[#allocation7 + $0x178] sm:$0xff]
        %v3984 = vld [vmem:[#allocation7 + $0x180] sm:$0xff]
        %v3985 = vld [vmem:[#allocation7 + $0x188] sm:$0xff]
        %v3986 = vld [vmem:[#allocation7 + $0x190] sm:$0xff]
        %v3987 = vld [vmem:[#allocation7 + $0x198] sm:$0xff]
        %v3988 = vld [vmem:[#allocation7 + $0x1a0] sm:$0xff]
        %v3989 = vld [vmem:[#allocation7 + $0x1a8] sm:$0xff]
        %v3990 = vld [vmem:[#allocation7 + $0x1b0] sm:$0xff]
        %v3991 = vld [vmem:[#allocation7 + $0x1b8] sm:$0xff]
        %v3992 = vld [vmem:[#allocation7 + $0x1c0] sm:$0xff]
        %v3993 = vld [vmem:[#allocation7 + $0x1c8] sm:$0xff]
        %v3994 = vld [vmem:[#allocation7 + $0x1d0] sm:$0xff]
        %v3995 = vld [vmem:[#allocation7 + $0x1d8] sm:$0xff]
        %v3996 = vld [vmem:[#allocation7 + $0x1e0] sm:$0xff]
        %v3997 = vld [vmem:[#allocation7 + $0x1e8] sm:$0xff]
        %v3998 = vld [vmem:[#allocation7 + $0x1f0] sm:$0xff]
        %v3999 = vld [vmem:[#allocation7 + $0x1f8] sm:$0xff]
        %v4000 = vld [vmem:[#allocation9] sm:$0xff]
        %v4001 = vld [vmem:[#allocation9 + $0x8] sm:$0xff]
        %v4002 = vld [vmem:[#allocation9 + $0x10] sm:$0xff]
        %v4003 = vld [vmem:[#allocation9 + $0x18] sm:$0xff]
        %v4004 = vld [vmem:[#allocation9 + $0x20] sm:$0xff]
        %v4005 = vld [vmem:[#allocation9 + $0x28] sm:$0xff]
        %v4006 = vld [vmem:[#allocation9 + $0x30] sm:$0xff]
        %v4007 = vld [vmem:[#allocation9 + $0x38] sm:$0xff]
        %v4008 = vld [vmem:[#allocation9 + $0x40] sm:$0xff]
        %v4009 = vld [vmem:[#allocation9 + $0x48] sm:$0xff]
        %v4010 = vld [vmem:[#allocation9 + $0x50] sm:$0xff]
        %v4011 = vld [vmem:[#allocation9 + $0x58] sm:$0xff]
        %v4012 = vld [vmem:[#allocation9 + $0x60] sm:$0xff]
        %v4013 = vld [vmem:[#allocation9 + $0x68] sm:$0xff]
        %v4014 = vld [vmem:[#allocation9 + $0x70] sm:$0xff]
        %v4015 = vld [vmem:[#allocation9 + $0x78] sm:$0xff]
        %v4016 = vld [vmem:[#allocation9 + $0x80] sm:$0xff]
        %v4017 = vld [vmem:[#allocation9 + $0x88] sm:$0xff]
        %v4018 = vld [vmem:[#allocation9 + $0x90] sm:$0xff]
        %v4019 = vld [vmem:[#allocation9 + $0x98] sm:$0xff]
        %v4020 = vld [vmem:[#allocation9 + $0xa0] sm:$0xff]
        %v4021 = vld [vmem:[#allocation9 + $0xa8] sm:$0xff]
        %v4022 = vld [vmem:[#allocation9 + $0xb0] sm:$0xff]
        %v4023 = vld [vmem:[#allocation9 + $0xb8] sm:$0xff]
        %v4024 = vld [vmem:[#allocation9 + $0xc0] sm:$0xff]
        %v4025 = vld [vmem:[#allocation9 + $0xc8] sm:$0xff]
        %v4026 = vld [vmem:[#allocation9 + $0xd0] sm:$0xff]
        %v4027 = vld [vmem:[#allocation9 + $0xd8] sm:$0xff]
        %v4028 = vld [vmem:[#allocation9 + $0xe0] sm:$0xff]
        %v4029 = vld [vmem:[#allocation9 + $0xe8] sm:$0xff]
        %v4030 = vld [vmem:[#allocation9 + $0xf0] sm:$0xff]
        %v4031 = vld [vmem:[#allocation9 + $0xf8] sm:$0xff]
        %v4032 = vld [vmem:[#allocation9 + $0x100] sm:$0xff]
        %v4033 = vld [vmem:[#allocation9 + $0x108] sm:$0xff]
        %v4034 = vld [vmem:[#allocation9 + $0x110] sm:$0xff]
        %v4035 = vld [vmem:[#allocation9 + $0x118] sm:$0xff]
        %v4036 = vld [vmem:[#allocation9 + $0x120] sm:$0xff]
        %v4037 = vld [vmem:[#allocation9 + $0x128] sm:$0xff]
        %v4038 = vld [vmem:[#allocation9 + $0x130] sm:$0xff]
        %v4039 = vld [vmem:[#allocation9 + $0x138] sm:$0xff]
        %v4040 = vld [vmem:[#allocation9 + $0x140] sm:$0xff]
        %v4041 = vld [vmem:[#allocation9 + $0x148] sm:$0xff]
        %v4042 = vld [vmem:[#allocation9 + $0x150] sm:$0xff]
        %v4043 = vld [vmem:[#allocation9 + $0x158] sm:$0xff]
        %v4044 = vld [vmem:[#allocation9 + $0x160] sm:$0xff]
        %v4045 = vld [vmem:[#allocation9 + $0x168] sm:$0xff]
        %v4046 = vld [vmem:[#allocation9 + $0x170] sm:$0xff]
        %v4047 = vld [vmem:[#allocation9 + $0x178] sm:$0xff]
        %v4048 = vld [vmem:[#allocation9 + $0x180] sm:$0xff]
        %v4049 = vld [vmem:[#allocation9 + $0x188] sm:$0xff]
        %v4050 = vld [vmem:[#allocation9 + $0x190] sm:$0xff]
        %v4051 = vld [vmem:[#allocation9 + $0x198] sm:$0xff]
        %v4052 = vld [vmem:[#allocation9 + $0x1a0] sm:$0xff]
        %v4053 = vld [vmem:[#allocation9 + $0x1a8] sm:$0xff]
        %v4054 = vld [vmem:[#allocation9 + $0x1b0] sm:$0xff]
        %v4055 = vld [vmem:[#allocation9 + $0x1b8] sm:$0xff]
        %v4056 = vld [vmem:[#allocation9 + $0x1c0] sm:$0xff]
        %v4057 = vld [vmem:[#allocation9 + $0x1c8] sm:$0xff]
        %v4058 = vld [vmem:[#allocation9 + $0x1d0] sm:$0xff]
        %v4059 = vld [vmem:[#allocation9 + $0x1d8] sm:$0xff]
        %v4060 = vld [vmem:[#allocation9 + $0x1e0] sm:$0xff]
        %v4061 = vld [vmem:[#allocation9 + $0x1e8] sm:$0xff]
        %v4062 = vld [vmem:[#allocation9 + $0x1f0] sm:$0xff]
        %v4063 = vld [vmem:[#allocation9 + $0x1f8] sm:$0xff]
        %4064 = vmatprep.subr.mxu0 %v4001
        %4065 = vmatpush1.msra.mxu0 %v4000
        %4066 = vmatprep.subr.mxu0 %v4005
        %4067 = vmatpush1.msra.mxu0 %v4004
        %4068 = vmatprep.subr.mxu0 %v4009
        %4069 = vmatpush1.msra.mxu0 %v4008
        %4070 = vmatprep.subr.mxu0 %v4013
        %4071 = vmatpush1.msra.mxu0 %v4012
        %4072 = vmatprep.subr.mxu0 %v4017
        %4073 = vmatpush1.msra.mxu0 %v4016
        %4074 = vmatprep.subr.mxu0 %v4021
        %4075 = vmatpush1.msra.mxu0 %v4020
        %4076 = vmatprep.subr.mxu0 %v4025
        %4077 = vmatpush1.msra.mxu0 %v4024
        %4078 = vmatprep.subr.mxu0 %v4029
        %4079 = vmatpush1.msra.mxu0 %v4028
        %4080 = vmatprep.subr.mxu0 %v4033
        %4081 = vmatpush1.msra.mxu0 %v4032
        %4082 = vmatprep.subr.mxu0 %v4037
        %4083 = vmatpush1.msra.mxu0 %v4036
        %4084 = vmatprep.subr.mxu0 %v4041
        %4085 = vmatpush1.msra.mxu0 %v4040
        %4086 = vmatprep.subr.mxu0 %v4045
        %4087 = vmatpush1.msra.mxu0 %v4044
        %4088 = vmatprep.subr.mxu0 %v4049
        %4089 = vmatpush1.msra.mxu0 %v4048
        %4090 = vmatprep.subr.mxu0 %v4053
        %4091 = vmatpush1.msra.mxu0 %v4052
        %4092 = vmatprep.subr.mxu0 %v4057
        %4093 = vmatpush1.msra.mxu0 %v4056
        %4094 = vmatprep.subr.mxu0 %v4061
        %4095 = vmatpush1.msra.mxu0 %v4060
        %4096 = vmatprep.subr.mxu0 0.0
        %4097 = vmatpush1.msra.mxu0 0.0
        %4098 = vmatprep.subr.mxu0 0.0
        %4099 = vmatpush1.msra.mxu0 0.0
        %4100 = vmatprep.subr.mxu0 0.0
        %4101 = vmatpush1.msra.mxu0 0.0
        %4102 = vmatprep.subr.mxu0 0.0
        %4103 = vmatpush1.msra.mxu0 0.0
        %4104 = vmatprep.subr.mxu0 0.0
        %4105 = vmatpush1.msra.mxu0 0.0
        %4106 = vmatprep.subr.mxu0 0.0
        %4107 = vmatpush1.msra.mxu0 0.0
        %4108 = vmatprep.subr.mxu0 0.0
        %4109 = vmatpush1.msra.mxu0 0.0
        %4110 = vmatprep.subr.mxu0 0.0
        %4111 = vmatpush1.msra.mxu0 0.0
        %4112 = vmatprep.subr.mxu0 0.0
        %4113 = vmatpush1.msra.mxu0 0.0
        %4114 = vmatprep.subr.mxu0 0.0
        %4115 = vmatpush1.msra.mxu0 0.0
        %4116 = vmatprep.subr.mxu0 0.0
        %4117 = vmatpush1.msra.mxu0 0.0
        %4118 = vmatprep.subr.mxu0 0.0
        %4119 = vmatpush1.msra.mxu0 0.0
        %4120 = vmatprep.subr.mxu0 0.0
        %4121 = vmatpush1.msra.mxu0 0.0
        %4122 = vmatprep.subr.mxu0 0.0
        %4123 = vmatpush1.msra.mxu0 0.0
        %4124 = vmatprep.subr.mxu0 0.0
        %4125 = vmatpush1.msra.mxu0 0.0
        %4126 = vmatprep.subr.mxu0 0.0
        %4127 = vmatpush1.msra.mxu0 0.0
        %4128 = vmatprep.mubr.f32.mxu0 0.0
        %4129 = vmatmul.mubr.f32.gmra.mrb[0].mxu0 %v3934
        %v4130 = vpop.f32.mrb[0].mxu0
        %v4131 = vadd.f32 0.0, %v4130
        %v4132 = vpop.f32.mrb[0].mxu0
        %v4133 = vadd.f32 0.0, %v4132
        %4134 = vdwg.mxu0
        %4135 = vmatprep.subr.mxu0 %v4003
        %4136 = vmatpush1.msra.mxu0 %v4002
        %4137 = vmatprep.subr.mxu0 %v4007
        %4138 = vmatpush1.msra.mxu0 %v4006
        %4139 = vmatprep.subr.mxu0 %v4011
        %4140 = vmatpush1.msra.mxu0 %v4010
        %4141 = vmatprep.subr.mxu0 %v4015
        %4142 = vmatpush1.msra.mxu0 %v4014
        %4143 = vmatprep.subr.mxu0 %v4019
        %4144 = vmatpush1.msra.mxu0 %v4018
        %4145 = vmatprep.subr.mxu0 %v4023
        %4146 = vmatpush1.msra.mxu0 %v4022
        %4147 = vmatprep.subr.mxu0 %v4027
        %4148 = vmatpush1.msra.mxu0 %v4026
        %4149 = vmatprep.subr.mxu0 %v4031
        %4150 = vmatpush1.msra.mxu0 %v4030
        %4151 = vmatprep.subr.mxu0 %v4035
        %4152 = vmatpush1.msra.mxu0 %v4034
        %4153 = vmatprep.subr.mxu0 %v4039
        %4154 = vmatpush1.msra.mxu0 %v4038
        %4155 = vmatprep.subr.mxu0 %v4043
        %4156 = vmatpush1.msra.mxu0 %v4042
        %4157 = vmatprep.subr.mxu0 %v4047
        %4158 = vmatpush1.msra.mxu0 %v4046
        %4159 = vmatprep.subr.mxu0 %v4051
        %4160 = vmatpush1.msra.mxu0 %v4050
        %4161 = vmatprep.subr.mxu0 %v4055
        %4162 = vmatpush1.msra.mxu0 %v4054
        %4163 = vmatprep.subr.mxu0 %v4059
        %4164 = vmatpush1.msra.mxu0 %v4058
        %4165 = vmatprep.subr.mxu0 %v4063
        %4166 = vmatpush1.msra.mxu0 %v4062
        %4167 = vmatprep.subr.mxu0 0.0
        %4168 = vmatpush1.msra.mxu0 0.0
        %4169 = vmatprep.subr.mxu0 0.0
        %4170 = vmatpush1.msra.mxu0 0.0
        %4171 = vmatprep.subr.mxu0 0.0
        %4172 = vmatpush1.msra.mxu0 0.0
        %4173 = vmatprep.subr.mxu0 0.0
        %4174 = vmatpush1.msra.mxu0 0.0
        %4175 = vmatprep.subr.mxu0 0.0
        %4176 = vmatpush1.msra.mxu0 0.0
        %4177 = vmatprep.subr.mxu0 0.0
        %4178 = vmatpush1.msra.mxu0 0.0
        %4179 = vmatprep.subr.mxu0 0.0
        %4180 = vmatpush1.msra.mxu0 0.0
        %4181 = vmatprep.subr.mxu0 0.0
        %4182 = vmatpush1.msra.mxu0 0.0
        %4183 = vmatprep.subr.mxu0 0.0
        %4184 = vmatpush1.msra.mxu0 0.0
        %4185 = vmatprep.subr.mxu0 0.0
        %4186 = vmatpush1.msra.mxu0 0.0
        %4187 = vmatprep.subr.mxu0 0.0
        %4188 = vmatpush1.msra.mxu0 0.0
        %4189 = vmatprep.subr.mxu0 0.0
        %4190 = vmatpush1.msra.mxu0 0.0
        %4191 = vmatprep.subr.mxu0 0.0
        %4192 = vmatpush1.msra.mxu0 0.0
        %4193 = vmatprep.subr.mxu0 0.0
        %4194 = vmatpush1.msra.mxu0 0.0
        %4195 = vmatprep.subr.mxu0 0.0
        %4196 = vmatpush1.msra.mxu0 0.0
        %4197 = vmatprep.subr.mxu0 0.0
        %4198 = vmatpush1.msra.mxu0 0.0
        %4199 = vmatprep.mubr.f32.mxu0 0.0
        %4200 = vmatmul.mubr.f32.gmra.mrb[0].mxu0 %v3934
        %v4201 = vpop.f32.mrb[0].mxu0
        %v4202 = vadd.f32 0.0, %v4201
        %v4203 = vpop.f32.mrb[0].mxu0
        %v4204 = vadd.f32 0.0, %v4203
        %4205 = vdwg.mxu0
        %4206 = vmatprep.subr.mxu0 %v3937
        %4207 = vmatpush1.msra.mxu0 %v3936
        %4208 = vmatprep.subr.mxu0 %v3941
        %4209 = vmatpush1.msra.mxu0 %v3940
        %4210 = vmatprep.subr.mxu0 %v3945
        %4211 = vmatpush1.msra.mxu0 %v3944
        %4212 = vmatprep.subr.mxu0 %v3949
        %4213 = vmatpush1.msra.mxu0 %v3948
        %4214 = vmatprep.subr.mxu0 %v3953
        %4215 = vmatpush1.msra.mxu0 %v3952
        %4216 = vmatprep.subr.mxu0 %v3957
        %4217 = vmatpush1.msra.mxu0 %v3956
        %4218 = vmatprep.subr.mxu0 %v3961
        %4219 = vmatpush1.msra.mxu0 %v3960
        %4220 = vmatprep.subr.mxu0 %v3965
        %4221 = vmatpush1.msra.mxu0 %v3964
        %4222 = vmatprep.subr.mxu0 %v3969
        %4223 = vmatpush1.msra.mxu0 %v3968
        %4224 = vmatprep.subr.mxu0 %v3973
        %4225 = vmatpush1.msra.mxu0 %v3972
        %4226 = vmatprep.subr.mxu0 %v3977
        %4227 = vmatpush1.msra.mxu0 %v3976
        %4228 = vmatprep.subr.mxu0 %v3981
        %4229 = vmatpush1.msra.mxu0 %v3980
        %4230 = vmatprep.subr.mxu0 %v3985
        %4231 = vmatpush1.msra.mxu0 %v3984
        %4232 = vmatprep.subr.mxu0 %v3989
        %4233 = vmatpush1.msra.mxu0 %v3988
        %4234 = vmatprep.subr.mxu0 %v3993
        %4235 = vmatpush1.msra.mxu0 %v3992
        %4236 = vmatprep.subr.mxu0 %v3997
        %4237 = vmatpush1.msra.mxu0 %v3996
        %4238 = vmatprep.subr.mxu0 0.0
        %4239 = vmatpush1.msra.mxu0 0.0
        %4240 = vmatprep.subr.mxu0 0.0
        %4241 = vmatpush1.msra.mxu0 0.0
        %4242 = vmatprep.subr.mxu0 0.0
        %4243 = vmatpush1.msra.mxu0 0.0
        %4244 = vmatprep.subr.mxu0 0.0
        %4245 = vmatpush1.msra.mxu0 0.0
        %4246 = vmatprep.subr.mxu0 0.0
        %4247 = vmatpush1.msra.mxu0 0.0
        %4248 = vmatprep.subr.mxu0 0.0
        %4249 = vmatpush1.msra.mxu0 0.0
        %4250 = vmatprep.subr.mxu0 0.0
        %4251 = vmatpush1.msra.mxu0 0.0
        %4252 = vmatprep.subr.mxu0 0.0
        %4253 = vmatpush1.msra.mxu0 0.0
        %4254 = vmatprep.subr.mxu0 0.0
        %4255 = vmatpush1.msra.mxu0 0.0
        %4256 = vmatprep.subr.mxu0 0.0
        %4257 = vmatpush1.msra.mxu0 0.0
        %4258 = vmatprep.subr.mxu0 0.0
        %4259 = vmatpush1.msra.mxu0 0.0
        %4260 = vmatprep.subr.mxu0 0.0
        %4261 = vmatpush1.msra.mxu0 0.0
        %4262 = vmatprep.subr.mxu0 0.0
        %4263 = vmatpush1.msra.mxu0 0.0
        %4264 = vmatprep.subr.mxu0 0.0
        %4265 = vmatpush1.msra.mxu0 0.0
        %4266 = vmatprep.subr.mxu0 0.0
        %4267 = vmatpush1.msra.mxu0 0.0
        %4268 = vmatprep.subr.mxu0 0.0
        %4269 = vmatpush1.msra.mxu0 0.0
        %4270 = vmatprep.mubr.f32.mxu0 0.0
        %4271 = vmatmul.mubr.f32.gmra.mrb[0].mxu0 %v3933
        %v4272 = vpop.f32.mrb[0].mxu0
        %v4273 = vadd.f32 %v4131, %v4272
        %v4274 = vpop.f32.mrb[0].mxu0
        %v4275 = vadd.f32 %v4133, %v4274
        %4276 = vdwg.mxu0
        %4277 = vmatprep.subr.mxu0 %v3939
        %4278 = vmatpush1.msra.mxu0 %v3938
        %4279 = vmatprep.subr.mxu0 %v3943
        %4280 = vmatpush1.msra.mxu0 %v3942
        %4281 = vmatprep.subr.mxu0 %v3947
        %4282 = vmatpush1.msra.mxu0 %v3946
        %4283 = vmatprep.subr.mxu0 %v3951
        %4284 = vmatpush1.msra.mxu0 %v3950
        %4285 = vmatprep.subr.mxu0 %v3955
        %4286 = vmatpush1.msra.mxu0 %v3954
        %4287 = vmatprep.subr.mxu0 %v3959
        %4288 = vmatpush1.msra.mxu0 %v3958
        %4289 = vmatprep.subr.mxu0 %v3963
        %4290 = vmatpush1.msra.mxu0 %v3962
        %4291 = vmatprep.subr.mxu0 %v3967
        %4292 = vmatpush1.msra.mxu0 %v3966
        %4293 = vmatprep.subr.mxu0 %v3971
        %4294 = vmatpush1.msra.mxu0 %v3970
        %4295 = vmatprep.subr.mxu0 %v3975
        %4296 = vmatpush1.msra.mxu0 %v3974
        %4297 = vmatprep.subr.mxu0 %v3979
        %4298 = vmatpush1.msra.mxu0 %v3978
        %4299 = vmatprep.subr.mxu0 %v3983
        %4300 = vmatpush1.msra.mxu0 %v3982
        %4301 = vmatprep.subr.mxu0 %v3987
        %4302 = vmatpush1.msra.mxu0 %v3986
        %4303 = vmatprep.subr.mxu0 %v3991
        %4304 = vmatpush1.msra.mxu0 %v3990
        %4305 = vmatprep.subr.mxu0 %v3995
        %4306 = vmatpush1.msra.mxu0 %v3994
        %4307 = vmatprep.subr.mxu0 %v3999
        %4308 = vmatpush1.msra.mxu0 %v3998
        %4309 = vmatprep.subr.mxu0 0.0
        %4310 = vmatpush1.msra.mxu0 0.0
        %4311 = vmatprep.subr.mxu0 0.0
        %4312 = vmatpush1.msra.mxu0 0.0
        %4313 = vmatprep.subr.mxu0 0.0
        %4314 = vmatpush1.msra.mxu0 0.0
        %4315 = vmatprep.subr.mxu0 0.0
        %4316 = vmatpush1.msra.mxu0 0.0
        %4317 = vmatprep.subr.mxu0 0.0
        %4318 = vmatpush1.msra.mxu0 0.0
        %4319 = vmatprep.subr.mxu0 0.0
        %4320 = vmatpush1.msra.mxu0 0.0
        %4321 = vmatprep.subr.mxu0 0.0
        %4322 = vmatpush1.msra.mxu0 0.0
        %4323 = vmatprep.subr.mxu0 0.0
        %4324 = vmatpush1.msra.mxu0 0.0
        %4325 = vmatprep.subr.mxu0 0.0
        %4326 = vmatpush1.msra.mxu0 0.0
        %4327 = vmatprep.subr.mxu0 0.0
        %4328 = vmatpush1.msra.mxu0 0.0
        %4329 = vmatprep.subr.mxu0 0.0
        %4330 = vmatpush1.msra.mxu0 0.0
        %4331 = vmatprep.subr.mxu0 0.0
        %4332 = vmatpush1.msra.mxu0 0.0
        %4333 = vmatprep.subr.mxu0 0.0
        %4334 = vmatpush1.msra.mxu0 0.0
        %4335 = vmatprep.subr.mxu0 0.0
        %4336 = vmatpush1.msra.mxu0 0.0
        %4337 = vmatprep.subr.mxu0 0.0
        %4338 = vmatpush1.msra.mxu0 0.0
        %4339 = vmatprep.subr.mxu0 0.0
        %4340 = vmatpush1.msra.mxu0 0.0
        %4341 = vmatprep.mubr.f32.mxu0 0.0
        %4342 = vmatmul.mubr.f32.gmra.mrb[0].mxu0 %v3933
        %v4343 = vpop.f32.mrb[0].mxu0
        %v4344 = vadd.f32 %v4202, %v4343
        %v4345 = vpop.f32.mrb[0].mxu0
        %v4346 = vadd.f32 %v4204, %v4345
        %4347 = vdwg.mxu0
        %v4348 = vxor.u32 %v4273, 2147483648
        %v4349 = vmul.f32 %v4348, 1.442695
        %v4350 = vpow.pop %v4349
        %v4351 = vadd.f32 %v4350, 1.0
        %v4352 = vrcp.pop %v4351
        %v4353 = vmul.f32 1.0, %v4352
        %v4354 = vxor.u32 %v4275, 2147483648
        %v4355 = vmul.f32 %v4354, 1.442695
        %v4356 = vpow.pop %v4355
        %v4357 = vadd.f32 %v4356, 1.0
        %v4358 = vrcp.pop %v4357
        %v4359 = vmul.f32 1.0, %v4358
        %v4360 = vtanh.pop %v4344
        %v4361 = vxor.u32 %v4346, 2147483648
        %v4362 = vmul.f32 %v4361, 1.442695
        %v4363 = vpow.pop %v4362
        %v4364 = vadd.f32 %v4363, 1.0
        %v4365 = vrcp.pop %v4364
        %v4366 = vmul.f32 1.0, %v4365
        %v4367 = vmul.f32 %v4359, %v3935
        %v4368 = vmul.f32 %v4353, %v4360
        %v4369 = vadd.f32 %v4367, %v4368
        %v4370 = vtanh.pop %v4369
        %v4371 = vmul.f32 %v4366, %v4370
        %4372 = vst [vmem:[#allocation2] sm:$0xff] %v4371
        %4373 = vst [vmem:[#allocation4] sm:$0xff] %v4369
        %v4374 = vld [vmem:[#allocation3] sm:$0xff]
        %v4375 = vld [vmem:[#allocation5] sm:$0xff]
        %v4376 = vld [vmem:[#allocation11] sm:$0xff]
        %v4377 = vld [vmem:[#allocation11 + $0x8] sm:$0xff]
        %v4378 = vld [vmem:[#allocation11 + $0x10] sm:$0xff]
        %v4379 = vld [vmem:[#allocation11 + $0x18] sm:$0xff]
        %v4380 = vld [vmem:[#allocation11 + $0x20] sm:$0xff]
        %v4381 = vld [vmem:[#allocation11 + $0x28] sm:$0xff]
        %v4382 = vld [vmem:[#allocation11 + $0x30] sm:$0xff]
        %v4383 = vld [vmem:[#allocation11 + $0x38] sm:$0xff]
        %v4384 = vld [vmem:[#allocation11 + $0x40] sm:$0xff]
        %v4385 = vld [vmem:[#allocation11 + $0x48] sm:$0xff]
        %v4386 = vld [vmem:[#allocation11 + $0x50] sm:$0xff]
        %v4387 = vld [vmem:[#allocation11 + $0x58] sm:$0xff]
        %v4388 = vld [vmem:[#allocation11 + $0x60] sm:$0xff]
        %v4389 = vld [vmem:[#allocation11 + $0x68] sm:$0xff]
        %v4390 = vld [vmem:[#allocation11 + $0x70] sm:$0xff]
        %v4391 = vld [vmem:[#allocation11 + $0x78] sm:$0xff]
        %v4392 = vld [vmem:[#allocation11 + $0x80] sm:$0xff]
        %v4393 = vld [vmem:[#allocation11 + $0x88] sm:$0xff]
        %v4394 = vld [vmem:[#allocation11 + $0x90] sm:$0xff]
        %v4395 = vld [vmem:[#allocation11 + $0x98] sm:$0xff]
        %v4396 = vld [vmem:[#allocation11 + $0xa0] sm:$0xff]
        %v4397 = vld [vmem:[#allocation11 + $0xa8] sm:$0xff]
        %v4398 = vld [vmem:[#allocation11 + $0xb0] sm:$0xff]
        %v4399 = vld [vmem:[#allocation11 + $0xb8] sm:$0xff]
        %v4400 = vld [vmem:[#allocation11 + $0xc0] sm:$0xff]
        %v4401 = vld [vmem:[#allocation11 + $0xc8] sm:$0xff]
        %v4402 = vld [vmem:[#allocation11 + $0xd0] sm:$0xff]
        %v4403 = vld [vmem:[#allocation11 + $0xd8] sm:$0xff]
        %v4404 = vld [vmem:[#allocation11 + $0xe0] sm:$0xff]
        %v4405 = vld [vmem:[#allocation11 + $0xe8] sm:$0xff]
        %v4406 = vld [vmem:[#allocation11 + $0xf0] sm:$0xff]
        %v4407 = vld [vmem:[#allocation11 + $0xf8] sm:$0xff]
        %v4408 = vld [vmem:[#allocation11 + $0x100] sm:$0xff]
        %v4409 = vld [vmem:[#allocation11 + $0x108] sm:$0xff]
        %v4410 = vld [vmem:[#allocation11 + $0x110] sm:$0xff]
        %v4411 = vld [vmem:[#allocation11 + $0x118] sm:$0xff]
        %v4412 = vld [vmem:[#allocation11 + $0x120] sm:$0xff]
        %v4413 = vld [vmem:[#allocation11 + $0x128] sm:$0xff]
        %v4414 = vld [vmem:[#allocation11 + $0x130] sm:$0xff]
        %v4415 = vld [vmem:[#allocation11 + $0x138] sm:$0xff]
        %v4416 = vld [vmem:[#allocation11 + $0x140] sm:$0xff]
        %v4417 = vld [vmem:[#allocation11 + $0x148] sm:$0xff]
        %v4418 = vld [vmem:[#allocation11 + $0x150] sm:$0xff]
        %v4419 = vld [vmem:[#allocation11 + $0x158] sm:$0xff]
        %v4420 = vld [vmem:[#allocation11 + $0x160] sm:$0xff]
        %v4421 = vld [vmem:[#allocation11 + $0x168] sm:$0xff]
        %v4422 = vld [vmem:[#allocation11 + $0x170] sm:$0xff]
        %v4423 = vld [vmem:[#allocation11 + $0x178] sm:$0xff]
        %v4424 = vld [vmem:[#allocation11 + $0x180] sm:$0xff]
        %v4425 = vld [vmem:[#allocation11 + $0x188] sm:$0xff]
        %v4426 = vld [vmem:[#allocation11 + $0x190] sm:$0xff]
        %v4427 = vld [vmem:[#allocation11 + $0x198] sm:$0xff]
        %v4428 = vld [vmem:[#allocation11 + $0x1a0] sm:$0xff]
        %v4429 = vld [vmem:[#allocation11 + $0x1a8] sm:$0xff]
        %v4430 = vld [vmem:[#allocation11 + $0x1b0] sm:$0xff]
        %v4431 = vld [vmem:[#allocation11 + $0x1b8] sm:$0xff]
        %v4432 = vld [vmem:[#allocation11 + $0x1c0] sm:$0xff]
        %v4433 = vld [vmem:[#allocation11 + $0x1c8] sm:$0xff]
        %v4434 = vld [vmem:[#allocation11 + $0x1d0] sm:$0xff]
        %v4435 = vld [vmem:[#allocation11 + $0x1d8] sm:$0xff]
        %v4436 = vld [vmem:[#allocation11 + $0x1e0] sm:$0xff]
        %v4437 = vld [vmem:[#allocation11 + $0x1e8] sm:$0xff]
        %v4438 = vld [vmem:[#allocation11 + $0x1f0] sm:$0xff]
        %v4439 = vld [vmem:[#allocation11 + $0x1f8] sm:$0xff]
        %v4440 = vld [vmem:[#allocation12] sm:$0xff]
        %v4441 = vld [vmem:[#allocation12 + $0x8] sm:$0xff]
        %v4442 = vld [vmem:[#allocation12 + $0x10] sm:$0xff]
        %v4443 = vld [vmem:[#allocation12 + $0x18] sm:$0xff]
        %v4444 = vld [vmem:[#allocation12 + $0x20] sm:$0xff]
        %v4445 = vld [vmem:[#allocation12 + $0x28] sm:$0xff]
        %v4446 = vld [vmem:[#allocation12 + $0x30] sm:$0xff]
        %v4447 = vld [vmem:[#allocation12 + $0x38] sm:$0xff]
        %v4448 = vld [vmem:[#allocation12 + $0x40] sm:$0xff]
        %v4449 = vld [vmem:[#allocation12 + $0x48] sm:$0xff]
        %v4450 = vld [vmem:[#allocation12 + $0x50] sm:$0xff]
        %v4451 = vld [vmem:[#allocation12 + $0x58] sm:$0xff]
        %v4452 = vld [vmem:[#allocation12 + $0x60] sm:$0xff]
        %v4453 = vld [vmem:[#allocation12 + $0x68] sm:$0xff]
        %v4454 = vld [vmem:[#allocation12 + $0x70] sm:$0xff]
        %v4455 = vld [vmem:[#allocation12 + $0x78] sm:$0xff]
        %v4456 = vld [vmem:[#allocation12 + $0x80] sm:$0xff]
        %v4457 = vld [vmem:[#allocation12 + $0x88] sm:$0xff]
        %v4458 = vld [vmem:[#allocation12 + $0x90] sm:$0xff]
        %v4459 = vld [vmem:[#allocation12 + $0x98] sm:$0xff]
        %v4460 = vld [vmem:[#allocation12 + $0xa0] sm:$0xff]
        %v4461 = vld [vmem:[#allocation12 + $0xa8] sm:$0xff]
        %v4462 = vld [vmem:[#allocation12 + $0xb0] sm:$0xff]
        %v4463 = vld [vmem:[#allocation12 + $0xb8] sm:$0xff]
        %v4464 = vld [vmem:[#allocation12 + $0xc0] sm:$0xff]
        %v4465 = vld [vmem:[#allocation12 + $0xc8] sm:$0xff]
        %v4466 = vld [vmem:[#allocation12 + $0xd0] sm:$0xff]
        %v4467 = vld [vmem:[#allocation12 + $0xd8] sm:$0xff]
        %v4468 = vld [vmem:[#allocation12 + $0xe0] sm:$0xff]
        %v4469 = vld [vmem:[#allocation12 + $0xe8] sm:$0xff]
        %v4470 = vld [vmem:[#allocation12 + $0xf0] sm:$0xff]
        %v4471 = vld [vmem:[#allocation12 + $0xf8] sm:$0xff]
        %v4472 = vld [vmem:[#allocation12 + $0x100] sm:$0xff]
        %v4473 = vld [vmem:[#allocation12 + $0x108] sm:$0xff]
        %v4474 = vld [vmem:[#allocation12 + $0x110] sm:$0xff]
        %v4475 = vld [vmem:[#allocation12 + $0x118] sm:$0xff]
        %v4476 = vld [vmem:[#allocation12 + $0x120] sm:$0xff]
        %v4477 = vld [vmem:[#allocation12 + $0x128] sm:$0xff]
        %v4478 = vld [vmem:[#allocation12 + $0x130] sm:$0xff]
        %v4479 = vld [vmem:[#allocation12 + $0x138] sm:$0xff]
        %v4480 = vld [vmem:[#allocation12 + $0x140] sm:$0xff]
        %v4481 = vld [vmem:[#allocation12 + $0x148] sm:$0xff]
        %v4482 = vld [vmem:[#allocation12 + $0x150] sm:$0xff]
        %v4483 = vld [vmem:[#allocation12 + $0x158] sm:$0xff]
        %v4484 = vld [vmem:[#allocation12 + $0x160] sm:$0xff]
        %v4485 = vld [vmem:[#allocation12 + $0x168] sm:$0xff]
        %v4486 = vld [vmem:[#allocation12 + $0x170] sm:$0xff]
        %v4487 = vld [vmem:[#allocation12 + $0x178] sm:$0xff]
        %v4488 = vld [vmem:[#allocation12 + $0x180] sm:$0xff]
        %v4489 = vld [vmem:[#allocation12 + $0x188] sm:$0xff]
        %v4490 = vld [vmem:[#allocation12 + $0x190] sm:$0xff]
        %v4491 = vld [vmem:[#allocation12 + $0x198] sm:$0xff]
        %v4492 = vld [vmem:[#allocation12 + $0x1a0] sm:$0xff]
        %v4493 = vld [vmem:[#allocation12 + $0x1a8] sm:$0xff]
        %v4494 = vld [vmem:[#allocation12 + $0x1b0] sm:$0xff]
        %v4495 = vld [vmem:[#allocation12 + $0x1b8] sm:$0xff]
        %v4496 = vld [vmem:[#allocation12 + $0x1c0] sm:$0xff]
        %v4497 = vld [vmem:[#allocation12 + $0x1c8] sm:$0xff]
        %v4498 = vld [vmem:[#allocation12 + $0x1d0] sm:$0xff]
        %v4499 = vld [vmem:[#allocation12 + $0x1d8] sm:$0xff]
        %v4500 = vld [vmem:[#allocation12 + $0x1e0] sm:$0xff]
        %v4501 = vld [vmem:[#allocation12 + $0x1e8] sm:$0xff]
        %v4502 = vld [vmem:[#allocation12 + $0x1f0] sm:$0xff]
        %v4503 = vld [vmem:[#allocation12 + $0x1f8] sm:$0xff]
        %4504 = vmatprep.subr.mxu0 %v4441
        %4505 = vmatpush1.msra.mxu0 %v4440
        %4506 = vmatprep.subr.mxu0 %v4445
        %4507 = vmatpush1.msra.mxu0 %v4444
        %4508 = vmatprep.subr.mxu0 %v4449
        %4509 = vmatpush1.msra.mxu0 %v4448
        %4510 = vmatprep.subr.mxu0 %v4453
        %4511 = vmatpush1.msra.mxu0 %v4452
        %4512 = vmatprep.subr.mxu0 %v4457
        %4513 = vmatpush1.msra.mxu0 %v4456
        %4514 = vmatprep.subr.mxu0 %v4461
        %4515 = vmatpush1.msra.mxu0 %v4460
        %4516 = vmatprep.subr.mxu0 %v4465
        %4517 = vmatpush1.msra.mxu0 %v4464
        %4518 = vmatprep.subr.mxu0 %v4469
        %4519 = vmatpush1.msra.mxu0 %v4468
        %4520 = vmatprep.subr.mxu0 %v4473
        %4521 = vmatpush1.msra.mxu0 %v4472
        %4522 = vmatprep.subr.mxu0 %v4477
        %4523 = vmatpush1.msra.mxu0 %v4476
        %4524 = vmatprep.subr.mxu0 %v4481
        %4525 = vmatpush1.msra.mxu0 %v4480
        %4526 = vmatprep.subr.mxu0 %v4485
        %4527 = vmatpush1.msra.mxu0 %v4484
        %4528 = vmatprep.subr.mxu0 %v4489
        %4529 = vmatpush1.msra.mxu0 %v4488
        %4530 = vmatprep.subr.mxu0 %v4493
        %4531 = vmatpush1.msra.mxu0 %v4492
        %4532 = vmatprep.subr.mxu0 %v4497
        %4533 = vmatpush1.msra.mxu0 %v4496
        %4534 = vmatprep.subr.mxu0 %v4501
        %4535 = vmatpush1.msra.mxu0 %v4500
        %4536 = vmatprep.subr.mxu0 0.0
        %4537 = vmatpush1.msra.mxu0 0.0
        %4538 = vmatprep.subr.mxu0 0.0
        %4539 = vmatpush1.msra.mxu0 0.0
        %4540 = vmatprep.subr.mxu0 0.0
        %4541 = vmatpush1.msra.mxu0 0.0
        %4542 = vmatprep.subr.mxu0 0.0
        %4543 = vmatpush1.msra.mxu0 0.0
        %4544 = vmatprep.subr.mxu0 0.0
        %4545 = vmatpush1.msra.mxu0 0.0
        %4546 = vmatprep.subr.mxu0 0.0
        %4547 = vmatpush1.msra.mxu0 0.0
        %4548 = vmatprep.subr.mxu0 0.0
        %4549 = vmatpush1.msra.mxu0 0.0
        %4550 = vmatprep.subr.mxu0 0.0
        %4551 = vmatpush1.msra.mxu0 0.0
        %4552 = vmatprep.subr.mxu0 0.0
        %4553 = vmatpush1.msra.mxu0 0.0
        %4554 = vmatprep.subr.mxu0 0.0
        %4555 = vmatpush1.msra.mxu0 0.0
        %4556 = vmatprep.subr.mxu0 0.0
        %4557 = vmatpush1.msra.mxu0 0.0
        %4558 = vmatprep.subr.mxu0 0.0
        %4559 = vmatpush1.msra.mxu0 0.0
        %4560 = vmatprep.subr.mxu0 0.0
        %4561 = vmatpush1.msra.mxu0 0.0
        %4562 = vmatprep.subr.mxu0 0.0
        %4563 = vmatpush1.msra.mxu0 0.0
        %4564 = vmatprep.subr.mxu0 0.0
        %4565 = vmatpush1.msra.mxu0 0.0
        %4566 = vmatprep.subr.mxu0 0.0
        %4567 = vmatpush1.msra.mxu0 0.0
        %4568 = vmatprep.mubr.f32.mxu0 0.0
        %4569 = vmatmul.mubr.f32.gmra.mrb[0].mxu0 %v4374
        %v4570 = vpop.f32.mrb[0].mxu0
        %v4571 = vadd.f32 0.0, %v4570
        %v4572 = vpop.f32.mrb[0].mxu0
        %v4573 = vadd.f32 0.0, %v4572
        %4574 = vdwg.mxu0
        %4575 = vmatprep.subr.mxu0 %v4443
        %4576 = vmatpush1.msra.mxu0 %v4442
        %4577 = vmatprep.subr.mxu0 %v4447
        %4578 = vmatpush1.msra.mxu0 %v4446
        %4579 = vmatprep.subr.mxu0 %v4451
        %4580 = vmatpush1.msra.mxu0 %v4450
        %4581 = vmatprep.subr.mxu0 %v4455
        %4582 = vmatpush1.msra.mxu0 %v4454
        %4583 = vmatprep.subr.mxu0 %v4459
        %4584 = vmatpush1.msra.mxu0 %v4458
        %4585 = vmatprep.subr.mxu0 %v4463
        %4586 = vmatpush1.msra.mxu0 %v4462
        %4587 = vmatprep.subr.mxu0 %v4467
        %4588 = vmatpush1.msra.mxu0 %v4466
        %4589 = vmatprep.subr.mxu0 %v4471
        %4590 = vmatpush1.msra.mxu0 %v4470
        %4591 = vmatprep.subr.mxu0 %v4475
        %4592 = vmatpush1.msra.mxu0 %v4474
        %4593 = vmatprep.subr.mxu0 %v4479
        %4594 = vmatpush1.msra.mxu0 %v4478
        %4595 = vmatprep.subr.mxu0 %v4483
        %4596 = vmatpush1.msra.mxu0 %v4482
        %4597 = vmatprep.subr.mxu0 %v4487
        %4598 = vmatpush1.msra.mxu0 %v4486
        %4599 = vmatprep.subr.mxu0 %v4491
        %4600 = vmatpush1.msra.mxu0 %v4490
        %4601 = vmatprep.subr.mxu0 %v4495
        %4602 = vmatpush1.msra.mxu0 %v4494
        %4603 = vmatprep.subr.mxu0 %v4499
        %4604 = vmatpush1.msra.mxu0 %v4498
        %4605 = vmatprep.subr.mxu0 %v4503
        %4606 = vmatpush1.msra.mxu0 %v4502
        %4607 = vmatprep.subr.mxu0 0.0
        %4608 = vmatpush1.msra.mxu0 0.0
        %4609 = vmatprep.subr.mxu0 0.0
        %4610 = vmatpush1.msra.mxu0 0.0
        %4611 = vmatprep.subr.mxu0 0.0
        %4612 = vmatpush1.msra.mxu0 0.0
        %4613 = vmatprep.subr.mxu0 0.0
        %4614 = vmatpush1.msra.mxu0 0.0
        %4615 = vmatprep.subr.mxu0 0.0
        %4616 = vmatpush1.msra.mxu0 0.0
        %4617 = vmatprep.subr.mxu0 0.0
        %4618 = vmatpush1.msra.mxu0 0.0
        %4619 = vmatprep.subr.mxu0 0.0
        %4620 = vmatpush1.msra.mxu0 0.0
        %4621 = vmatprep.subr.mxu0 0.0
        %4622 = vmatpush1.msra.mxu0 0.0
        %4623 = vmatprep.subr.mxu0 0.0
        %4624 = vmatpush1.msra.mxu0 0.0
        %4625 = vmatprep.subr.mxu0 0.0
        %4626 = vmatpush1.msra.mxu0 0.0
        %4627 = vmatprep.subr.mxu0 0.0
        %4628 = vmatpush1.msra.mxu0 0.0
        %4629 = vmatprep.subr.mxu0 0.0
        %4630 = vmatpush1.msra.mxu0 0.0
        %4631 = vmatprep.subr.mxu0 0.0
        %4632 = vmatpush1.msra.mxu0 0.0
        %4633 = vmatprep.subr.mxu0 0.0
        %4634 = vmatpush1.msra.mxu0 0.0
        %4635 = vmatprep.subr.mxu0 0.0
        %4636 = vmatpush1.msra.mxu0 0.0
        %4637 = vmatprep.subr.mxu0 0.0
        %4638 = vmatpush1.msra.mxu0 0.0
        %4639 = vmatprep.mubr.f32.mxu0 0.0
        %4640 = vmatmul.mubr.f32.gmra.mrb[0].mxu0 %v4374
        %v4641 = vpop.f32.mrb[0].mxu0
        %v4642 = vadd.f32 0.0, %v4641
        %v4643 = vpop.f32.mrb[0].mxu0
        %v4644 = vadd.f32 0.0, %v4643
        %4645 = vdwg.mxu0
        %4646 = vmatprep.subr.mxu0 %v4377
        %4647 = vmatpush1.msra.mxu0 %v4376
        %4648 = vmatprep.subr.mxu0 %v4381
        %4649 = vmatpush1.msra.mxu0 %v4380
        %4650 = vmatprep.subr.mxu0 %v4385
        %4651 = vmatpush1.msra.mxu0 %v4384
        %4652 = vmatprep.subr.mxu0 %v4389
        %4653 = vmatpush1.msra.mxu0 %v4388
        %4654 = vmatprep.subr.mxu0 %v4393
        %4655 = vmatpush1.msra.mxu0 %v4392
        %4656 = vmatprep.subr.mxu0 %v4397
        %4657 = vmatpush1.msra.mxu0 %v4396
        %4658 = vmatprep.subr.mxu0 %v4401
        %4659 = vmatpush1.msra.mxu0 %v4400
        %4660 = vmatprep.subr.mxu0 %v4405
        %4661 = vmatpush1.msra.mxu0 %v4404
        %4662 = vmatprep.subr.mxu0 %v4409
        %4663 = vmatpush1.msra.mxu0 %v4408
        %4664 = vmatprep.subr.mxu0 %v4413
        %4665 = vmatpush1.msra.mxu0 %v4412
        %4666 = vmatprep.subr.mxu0 %v4417
        %4667 = vmatpush1.msra.mxu0 %v4416
        %4668 = vmatprep.subr.mxu0 %v4421
        %4669 = vmatpush1.msra.mxu0 %v4420
        %4670 = vmatprep.subr.mxu0 %v4425
        %4671 = vmatpush1.msra.mxu0 %v4424
        %4672 = vmatprep.subr.mxu0 %v4429
        %4673 = vmatpush1.msra.mxu0 %v4428
        %4674 = vmatprep.subr.mxu0 %v4433
        %4675 = vmatpush1.msra.mxu0 %v4432
        %4676 = vmatprep.subr.mxu0 %v4437
        %4677 = vmatpush1.msra.mxu0 %v4436
        %4678 = vmatprep.subr.mxu0 0.0
        %4679 = vmatpush1.msra.mxu0 0.0
        %4680 = vmatprep.subr.mxu0 0.0
        %4681 = vmatpush1.msra.mxu0 0.0
        %4682 = vmatprep.subr.mxu0 0.0
        %4683 = vmatpush1.msra.mxu0 0.0
        %4684 = vmatprep.subr.mxu0 0.0
        %4685 = vmatpush1.msra.mxu0 0.0
        %4686 = vmatprep.subr.mxu0 0.0
        %4687 = vmatpush1.msra.mxu0 0.0
        %4688 = vmatprep.subr.mxu0 0.0
        %4689 = vmatpush1.msra.mxu0 0.0
        %4690 = vmatprep.subr.mxu0 0.0
        %4691 = vmatpush1.msra.mxu0 0.0
        %4692 = vmatprep.subr.mxu0 0.0
        %4693 = vmatpush1.msra.mxu0 0.0
        %4694 = vmatprep.subr.mxu0 0.0
        %4695 = vmatpush1.msra.mxu0 0.0
        %4696 = vmatprep.subr.mxu0 0.0
        %4697 = vmatpush1.msra.mxu0 0.0
        %4698 = vmatprep.subr.mxu0 0.0
        %4699 = vmatpush1.msra.mxu0 0.0
        %4700 = vmatprep.subr.mxu0 0.0
        %4701 = vmatpush1.msra.mxu0 0.0
        %4702 = vmatprep.subr.mxu0 0.0
        %4703 = vmatpush1.msra.mxu0 0.0
        %4704 = vmatprep.subr.mxu0 0.0
        %4705 = vmatpush1.msra.mxu0 0.0
        %4706 = vmatprep.subr.mxu0 0.0
        %4707 = vmatpush1.msra.mxu0 0.0
        %4708 = vmatprep.subr.mxu0 0.0
        %4709 = vmatpush1.msra.mxu0 0.0
        %4710 = vmatprep.mubr.f32.mxu0 0.0
        %4711 = vmatmul.mubr.f32.gmra.mrb[0].mxu0 %v4371
        %v4712 = vpop.f32.mrb[0].mxu0
        %v4713 = vadd.f32 %v4571, %v4712
        %v4714 = vpop.f32.mrb[0].mxu0
        %v4715 = vadd.f32 %v4573, %v4714
        %4716 = vdwg.mxu0
        %4717 = vmatprep.subr.mxu0 %v4379
        %4718 = vmatpush1.msra.mxu0 %v4378
        %4719 = vmatprep.subr.mxu0 %v4383
        %4720 = vmatpush1.msra.mxu0 %v4382
        %4721 = vmatprep.subr.mxu0 %v4387
        %4722 = vmatpush1.msra.mxu0 %v4386
        %4723 = vmatprep.subr.mxu0 %v4391
        %4724 = vmatpush1.msra.mxu0 %v4390
        %4725 = vmatprep.subr.mxu0 %v4395
        %4726 = vmatpush1.msra.mxu0 %v4394
        %4727 = vmatprep.subr.mxu0 %v4399
        %4728 = vmatpush1.msra.mxu0 %v4398
        %4729 = vmatprep.subr.mxu0 %v4403
        %4730 = vmatpush1.msra.mxu0 %v4402
        %4731 = vmatprep.subr.mxu0 %v4407
        %4732 = vmatpush1.msra.mxu0 %v4406
        %4733 = vmatprep.subr.mxu0 %v4411
        %4734 = vmatpush1.msra.mxu0 %v4410
        %4735 = vmatprep.subr.mxu0 %v4415
        %4736 = vmatpush1.msra.mxu0 %v4414
        %4737 = vmatprep.subr.mxu0 %v4419
        %4738 = vmatpush1.msra.mxu0 %v4418
        %4739 = vmatprep.subr.mxu0 %v4423
        %4740 = vmatpush1.msra.mxu0 %v4422
        %4741 = vmatprep.subr.mxu0 %v4427
        %4742 = vmatpush1.msra.mxu0 %v4426
        %4743 = vmatprep.subr.mxu0 %v4431
        %4744 = vmatpush1.msra.mxu0 %v4430
        %4745 = vmatprep.subr.mxu0 %v4435
        %4746 = vmatpush1.msra.mxu0 %v4434
        %4747 = vmatprep.subr.mxu0 %v4439
        %4748 = vmatpush1.msra.mxu0 %v4438
        %4749 = vmatprep.subr.mxu0 0.0
        %4750 = vmatpush1.msra.mxu0 0.0
        %4751 = vmatprep.subr.mxu0 0.0
        %4752 = vmatpush1.msra.mxu0 0.0
        %4753 = vmatprep.subr.mxu0 0.0
        %4754 = vmatpush1.msra.mxu0 0.0
        %4755 = vmatprep.subr.mxu0 0.0
        %4756 = vmatpush1.msra.mxu0 0.0
        %4757 = vmatprep.subr.mxu0 0.0
        %4758 = vmatpush1.msra.mxu0 0.0
        %4759 = vmatprep.subr.mxu0 0.0
        %4760 = vmatpush1.msra.mxu0 0.0
        %4761 = vmatprep.subr.mxu0 0.0
        %4762 = vmatpush1.msra.mxu0 0.0
        %4763 = vmatprep.subr.mxu0 0.0
        %4764 = vmatpush1.msra.mxu0 0.0
        %4765 = vmatprep.subr.mxu0 0.0
        %4766 = vmatpush1.msra.mxu0 0.0
        %4767 = vmatprep.subr.mxu0 0.0
        %4768 = vmatpush1.msra.mxu0 0.0
        %4769 = vmatprep.subr.mxu0 0.0
        %4770 = vmatpush1.msra.mxu0 0.0
        %4771 = vmatprep.subr.mxu0 0.0
        %4772 = vmatpush1.msra.mxu0 0.0
        %4773 = vmatprep.subr.mxu0 0.0
        %4774 = vmatpush1.msra.mxu0 0.0
        %4775 = vmatprep.subr.mxu0 0.0
        %4776 = vmatpush1.msra.mxu0 0.0
        %4777 = vmatprep.subr.mxu0 0.0
        %4778 = vmatpush1.msra.mxu0 0.0
        %4779 = vmatprep.subr.mxu0 0.0
        %4780 = vmatpush1.msra.mxu0 0.0
        %4781 = vmatprep.mubr.f32.mxu0 0.0
        %4782 = vmatmul.mubr.f32.gmra.mrb[0].mxu0 %v4371
        %v4783 = vpop.f32.mrb[0].mxu0
        %v4784 = vadd.f32 %v4642, %v4783
        %v4785 = vpop.f32.mrb[0].mxu0
        %v4786 = vadd.f32 %v4644, %v4785
        %4787 = vdwg.mxu0
        %v4788 = vxor.u32 %v4713, 2147483648
        %v4789 = vmul.f32 %v4788, 1.442695
        %v4790 = vpow.pop %v4789
        %v4791 = vadd.f32 %v4790, 1.0
        %v4792 = vrcp.pop %v4791
        %v4793 = vmul.f32 1.0, %v4792
        %v4794 = vxor.u32 %v4715, 2147483648
        %v4795 = vmul.f32 %v4794, 1.442695
        %v4796 = vpow.pop %v4795
        %v4797 = vadd.f32 %v4796, 1.0
        %v4798 = vrcp.pop %v4797
        %v4799 = vmul.f32 1.0, %v4798
        %v4800 = vtanh.pop %v4784
        %v4801 = vxor.u32 %v4786, 2147483648
        %v4802 = vmul.f32 %v4801, 1.442695
        %v4803 = vpow.pop %v4802
        %v4804 = vadd.f32 %v4803, 1.0
        %v4805 = vrcp.pop %v4804
        %v4806 = vmul.f32 1.0, %v4805
        %v4807 = vmul.f32 %v4799, %v4375
        %v4808 = vmul.f32 %v4793, %v4800
        %v4809 = vadd.f32 %v4807, %v4808
        %v4810 = vtanh.pop %v4809
        %v4811 = vmul.f32 %v4806, %v4810
        %4812 = vst [vmem:[#allocation3] sm:$0xff] %v4811
        %4813 = vst [vmem:[#allocation5] sm:$0xff] %v4809
        %s4814 = scalar_lea.vmem [#allocation6], 32
        %4815 = vst [vmem:[%s4814] sm:$0xff] %v4811
        %s4816 = scalar_lea.vmem %s382, 40
        %v4817 = vld [vmem:[%s4816] sm:$0xff]
        %v4818 = vld [vmem:[#allocation2] sm:$0xff]
        %v4819 = vld [vmem:[#allocation4] sm:$0xff]
        %v4820 = vld [vmem:[#allocation7] sm:$0xff]
        %v4821 = vld [vmem:[#allocation7 + $0x8] sm:$0xff]
        %v4822 = vld [vmem:[#allocation7 + $0x10] sm:$0xff]
        %v4823 = vld [vmem:[#allocation7 + $0x18] sm:$0xff]
        %v4824 = vld [vmem:[#allocation7 + $0x20] sm:$0xff]
        %v4825 = vld [vmem:[#allocation7 + $0x28] sm:$0xff]
        %v4826 = vld [vmem:[#allocation7 + $0x30] sm:$0xff]
        %v4827 = vld [vmem:[#allocation7 + $0x38] sm:$0xff]
        %v4828 = vld [vmem:[#allocation7 + $0x40] sm:$0xff]
        %v4829 = vld [vmem:[#allocation7 + $0x48] sm:$0xff]
        %v4830 = vld [vmem:[#allocation7 + $0x50] sm:$0xff]
        %v4831 = vld [vmem:[#allocation7 + $0x58] sm:$0xff]
        %v4832 = vld [vmem:[#allocation7 + $0x60] sm:$0xff]
        %v4833 = vld [vmem:[#allocation7 + $0x68] sm:$0xff]
        %v4834 = vld [vmem:[#allocation7 + $0x70] sm:$0xff]
        %v4835 = vld [vmem:[#allocation7 + $0x78] sm:$0xff]
        %v4836 = vld [vmem:[#allocation7 + $0x80] sm:$0xff]
        %v4837 = vld [vmem:[#allocation7 + $0x88] sm:$0xff]
        %v4838 = vld [vmem:[#allocation7 + $0x90] sm:$0xff]
        %v4839 = vld [vmem:[#allocation7 + $0x98] sm:$0xff]
        %v4840 = vld [vmem:[#allocation7 + $0xa0] sm:$0xff]
        %v4841 = vld [vmem:[#allocation7 + $0xa8] sm:$0xff]
        %v4842 = vld [vmem:[#allocation7 + $0xb0] sm:$0xff]
        %v4843 = vld [vmem:[#allocation7 + $0xb8] sm:$0xff]
        %v4844 = vld [vmem:[#allocation7 + $0xc0] sm:$0xff]
        %v4845 = vld [vmem:[#allocation7 + $0xc8] sm:$0xff]
        %v4846 = vld [vmem:[#allocation7 + $0xd0] sm:$0xff]
        %v4847 = vld [vmem:[#allocation7 + $0xd8] sm:$0xff]
        %v4848 = vld [vmem:[#allocation7 + $0xe0] sm:$0xff]
        %v4849 = vld [vmem:[#allocation7 + $0xe8] sm:$0xff]
        %v4850 = vld [vmem:[#allocation7 + $0xf0] sm:$0xff]
        %v4851 = vld [vmem:[#allocation7 + $0xf8] sm:$0xff]
        %v4852 = vld [vmem:[#allocation7 + $0x100] sm:$0xff]
        %v4853 = vld [vmem:[#allocation7 + $0x108] sm:$0xff]
        %v4854 = vld [vmem:[#allocation7 + $0x110] sm:$0xff]
        %v4855 = vld [vmem:[#allocation7 + $0x118] sm:$0xff]
        %v4856 = vld [vmem:[#allocation7 + $0x120] sm:$0xff]
        %v4857 = vld [vmem:[#allocation7 + $0x128] sm:$0xff]
        %v4858 = vld [vmem:[#allocation7 + $0x130] sm:$0xff]
        %v4859 = vld [vmem:[#allocation7 + $0x138] sm:$0xff]
        %v4860 = vld [vmem:[#allocation7 + $0x140] sm:$0xff]
        %v4861 = vld [vmem:[#allocation7 + $0x148] sm:$0xff]
        %v4862 = vld [vmem:[#allocation7 + $0x150] sm:$0xff]
        %v4863 = vld [vmem:[#allocation7 + $0x158] sm:$0xff]
        %v4864 = vld [vmem:[#allocation7 + $0x160] sm:$0xff]
        %v4865 = vld [vmem:[#allocation7 + $0x168] sm:$0xff]
        %v4866 = vld [vmem:[#allocation7 + $0x170] sm:$0xff]
        %v4867 = vld [vmem:[#allocation7 + $0x178] sm:$0xff]
        %v4868 = vld [vmem:[#allocation7 + $0x180] sm:$0xff]
        %v4869 = vld [vmem:[#allocation7 + $0x188] sm:$0xff]
        %v4870 = vld [vmem:[#allocation7 + $0x190] sm:$0xff]
        %v4871 = vld [vmem:[#allocation7 + $0x198] sm:$0xff]
        %v4872 = vld [vmem:[#allocation7 + $0x1a0] sm:$0xff]
        %v4873 = vld [vmem:[#allocation7 + $0x1a8] sm:$0xff]
        %v4874 = vld [vmem:[#allocation7 + $0x1b0] sm:$0xff]
        %v4875 = vld [vmem:[#allocation7 + $0x1b8] sm:$0xff]
        %v4876 = vld [vmem:[#allocation7 + $0x1c0] sm:$0xff]
        %v4877 = vld [vmem:[#allocation7 + $0x1c8] sm:$0xff]
        %v4878 = vld [vmem:[#allocation7 + $0x1d0] sm:$0xff]
        %v4879 = vld [vmem:[#allocation7 + $0x1d8] sm:$0xff]
        %v4880 = vld [vmem:[#allocation7 + $0x1e0] sm:$0xff]
        %v4881 = vld [vmem:[#allocation7 + $0x1e8] sm:$0xff]
        %v4882 = vld [vmem:[#allocation7 + $0x1f0] sm:$0xff]
        %v4883 = vld [vmem:[#allocation7 + $0x1f8] sm:$0xff]
        %v4884 = vld [vmem:[#allocation9] sm:$0xff]
        %v4885 = vld [vmem:[#allocation9 + $0x8] sm:$0xff]
        %v4886 = vld [vmem:[#allocation9 + $0x10] sm:$0xff]
        %v4887 = vld [vmem:[#allocation9 + $0x18] sm:$0xff]
        %v4888 = vld [vmem:[#allocation9 + $0x20] sm:$0xff]
        %v4889 = vld [vmem:[#allocation9 + $0x28] sm:$0xff]
        %v4890 = vld [vmem:[#allocation9 + $0x30] sm:$0xff]
        %v4891 = vld [vmem:[#allocation9 + $0x38] sm:$0xff]
        %v4892 = vld [vmem:[#allocation9 + $0x40] sm:$0xff]
        %v4893 = vld [vmem:[#allocation9 + $0x48] sm:$0xff]
        %v4894 = vld [vmem:[#allocation9 + $0x50] sm:$0xff]
        %v4895 = vld [vmem:[#allocation9 + $0x58] sm:$0xff]
        %v4896 = vld [vmem:[#allocation9 + $0x60] sm:$0xff]
        %v4897 = vld [vmem:[#allocation9 + $0x68] sm:$0xff]
        %v4898 = vld [vmem:[#allocation9 + $0x70] sm:$0xff]
        %v4899 = vld [vmem:[#allocation9 + $0x78] sm:$0xff]
        %v4900 = vld [vmem:[#allocation9 + $0x80] sm:$0xff]
        %v4901 = vld [vmem:[#allocation9 + $0x88] sm:$0xff]
        %v4902 = vld [vmem:[#allocation9 + $0x90] sm:$0xff]
        %v4903 = vld [vmem:[#allocation9 + $0x98] sm:$0xff]
        %v4904 = vld [vmem:[#allocation9 + $0xa0] sm:$0xff]
        %v4905 = vld [vmem:[#allocation9 + $0xa8] sm:$0xff]
        %v4906 = vld [vmem:[#allocation9 + $0xb0] sm:$0xff]
        %v4907 = vld [vmem:[#allocation9 + $0xb8] sm:$0xff]
        %v4908 = vld [vmem:[#allocation9 + $0xc0] sm:$0xff]
        %v4909 = vld [vmem:[#allocation9 + $0xc8] sm:$0xff]
        %v4910 = vld [vmem:[#allocation9 + $0xd0] sm:$0xff]
        %v4911 = vld [vmem:[#allocation9 + $0xd8] sm:$0xff]
        %v4912 = vld [vmem:[#allocation9 + $0xe0] sm:$0xff]
        %v4913 = vld [vmem:[#allocation9 + $0xe8] sm:$0xff]
        %v4914 = vld [vmem:[#allocation9 + $0xf0] sm:$0xff]
        %v4915 = vld [vmem:[#allocation9 + $0xf8] sm:$0xff]
        %v4916 = vld [vmem:[#allocation9 + $0x100] sm:$0xff]
        %v4917 = vld [vmem:[#allocation9 + $0x108] sm:$0xff]
        %v4918 = vld [vmem:[#allocation9 + $0x110] sm:$0xff]
        %v4919 = vld [vmem:[#allocation9 + $0x118] sm:$0xff]
        %v4920 = vld [vmem:[#allocation9 + $0x120] sm:$0xff]
        %v4921 = vld [vmem:[#allocation9 + $0x128] sm:$0xff]
        %v4922 = vld [vmem:[#allocation9 + $0x130] sm:$0xff]
        %v4923 = vld [vmem:[#allocation9 + $0x138] sm:$0xff]
        %v4924 = vld [vmem:[#allocation9 + $0x140] sm:$0xff]
        %v4925 = vld [vmem:[#allocation9 + $0x148] sm:$0xff]
        %v4926 = vld [vmem:[#allocation9 + $0x150] sm:$0xff]
        %v4927 = vld [vmem:[#allocation9 + $0x158] sm:$0xff]
        %v4928 = vld [vmem:[#allocation9 + $0x160] sm:$0xff]
        %v4929 = vld [vmem:[#allocation9 + $0x168] sm:$0xff]
        %v4930 = vld [vmem:[#allocation9 + $0x170] sm:$0xff]
        %v4931 = vld [vmem:[#allocation9 + $0x178] sm:$0xff]
        %v4932 = vld [vmem:[#allocation9 + $0x180] sm:$0xff]
        %v4933 = vld [vmem:[#allocation9 + $0x188] sm:$0xff]
        %v4934 = vld [vmem:[#allocation9 + $0x190] sm:$0xff]
        %v4935 = vld [vmem:[#allocation9 + $0x198] sm:$0xff]
        %v4936 = vld [vmem:[#allocation9 + $0x1a0] sm:$0xff]
        %v4937 = vld [vmem:[#allocation9 + $0x1a8] sm:$0xff]
        %v4938 = vld [vmem:[#allocation9 + $0x1b0] sm:$0xff]
        %v4939 = vld [vmem:[#allocation9 + $0x1b8] sm:$0xff]
        %v4940 = vld [vmem:[#allocation9 + $0x1c0] sm:$0xff]
        %v4941 = vld [vmem:[#allocation9 + $0x1c8] sm:$0xff]
        %v4942 = vld [vmem:[#allocation9 + $0x1d0] sm:$0xff]
        %v4943 = vld [vmem:[#allocation9 + $0x1d8] sm:$0xff]
        %v4944 = vld [vmem:[#allocation9 + $0x1e0] sm:$0xff]
        %v4945 = vld [vmem:[#allocation9 + $0x1e8] sm:$0xff]
        %v4946 = vld [vmem:[#allocation9 + $0x1f0] sm:$0xff]
        %v4947 = vld [vmem:[#allocation9 + $0x1f8] sm:$0xff]
        %4948 = vmatprep.subr.mxu0 %v4885
        %4949 = vmatpush1.msra.mxu0 %v4884
        %4950 = vmatprep.subr.mxu0 %v4889
        %4951 = vmatpush1.msra.mxu0 %v4888
        %4952 = vmatprep.subr.mxu0 %v4893
        %4953 = vmatpush1.msra.mxu0 %v4892
        %4954 = vmatprep.subr.mxu0 %v4897
        %4955 = vmatpush1.msra.mxu0 %v4896
        %4956 = vmatprep.subr.mxu0 %v4901
        %4957 = vmatpush1.msra.mxu0 %v4900
        %4958 = vmatprep.subr.mxu0 %v4905
        %4959 = vmatpush1.msra.mxu0 %v4904
        %4960 = vmatprep.subr.mxu0 %v4909
        %4961 = vmatpush1.msra.mxu0 %v4908
        %4962 = vmatprep.subr.mxu0 %v4913
        %4963 = vmatpush1.msra.mxu0 %v4912
        %4964 = vmatprep.subr.mxu0 %v4917
        %4965 = vmatpush1.msra.mxu0 %v4916
        %4966 = vmatprep.subr.mxu0 %v4921
        %4967 = vmatpush1.msra.mxu0 %v4920
        %4968 = vmatprep.subr.mxu0 %v4925
        %4969 = vmatpush1.msra.mxu0 %v4924
        %4970 = vmatprep.subr.mxu0 %v4929
        %4971 = vmatpush1.msra.mxu0 %v4928
        %4972 = vmatprep.subr.mxu0 %v4933
        %4973 = vmatpush1.msra.mxu0 %v4932
        %4974 = vmatprep.subr.mxu0 %v4937
        %4975 = vmatpush1.msra.mxu0 %v4936
        %4976 = vmatprep.subr.mxu0 %v4941
        %4977 = vmatpush1.msra.mxu0 %v4940
        %4978 = vmatprep.subr.mxu0 %v4945
        %4979 = vmatpush1.msra.mxu0 %v4944
        %4980 = vmatprep.subr.mxu0 0.0
        %4981 = vmatpush1.msra.mxu0 0.0
        %4982 = vmatprep.subr.mxu0 0.0
        %4983 = vmatpush1.msra.mxu0 0.0
        %4984 = vmatprep.subr.mxu0 0.0
        %4985 = vmatpush1.msra.mxu0 0.0
        %4986 = vmatprep.subr.mxu0 0.0
        %4987 = vmatpush1.msra.mxu0 0.0
        %4988 = vmatprep.subr.mxu0 0.0
        %4989 = vmatpush1.msra.mxu0 0.0
        %4990 = vmatprep.subr.mxu0 0.0
        %4991 = vmatpush1.msra.mxu0 0.0
        %4992 = vmatprep.subr.mxu0 0.0
        %4993 = vmatpush1.msra.mxu0 0.0
        %4994 = vmatprep.subr.mxu0 0.0
        %4995 = vmatpush1.msra.mxu0 0.0
        %4996 = vmatprep.subr.mxu0 0.0
        %4997 = vmatpush1.msra.mxu0 0.0
        %4998 = vmatprep.subr.mxu0 0.0
        %4999 = vmatpush1.msra.mxu0 0.0
        %5000 = vmatprep.subr.mxu0 0.0
        %5001 = vmatpush1.msra.mxu0 0.0
        %5002 = vmatprep.subr.mxu0 0.0
        %5003 = vmatpush1.msra.mxu0 0.0
        %5004 = vmatprep.subr.mxu0 0.0
        %5005 = vmatpush1.msra.mxu0 0.0
        %5006 = vmatprep.subr.mxu0 0.0
        %5007 = vmatpush1.msra.mxu0 0.0
        %5008 = vmatprep.subr.mxu0 0.0
        %5009 = vmatpush1.msra.mxu0 0.0
        %5010 = vmatprep.subr.mxu0 0.0
        %5011 = vmatpush1.msra.mxu0 0.0
        %5012 = vmatprep.mubr.f32.mxu0 0.0
        %5013 = vmatmul.mubr.f32.gmra.mrb[0].mxu0 %v4818
        %v5014 = vpop.f32.mrb[0].mxu0
        %v5015 = vadd.f32 0.0, %v5014
        %v5016 = vpop.f32.mrb[0].mxu0
        %v5017 = vadd.f32 0.0, %v5016
        %5018 = vdwg.mxu0
        %5019 = vmatprep.subr.mxu0 %v4887
        %5020 = vmatpush1.msra.mxu0 %v4886
        %5021 = vmatprep.subr.mxu0 %v4891
        %5022 = vmatpush1.msra.mxu0 %v4890
        %5023 = vmatprep.subr.mxu0 %v4895
        %5024 = vmatpush1.msra.mxu0 %v4894
        %5025 = vmatprep.subr.mxu0 %v4899
        %5026 = vmatpush1.msra.mxu0 %v4898
        %5027 = vmatprep.subr.mxu0 %v4903
        %5028 = vmatpush1.msra.mxu0 %v4902
        %5029 = vmatprep.subr.mxu0 %v4907
        %5030 = vmatpush1.msra.mxu0 %v4906
        %5031 = vmatprep.subr.mxu0 %v4911
        %5032 = vmatpush1.msra.mxu0 %v4910
        %5033 = vmatprep.subr.mxu0 %v4915
        %5034 = vmatpush1.msra.mxu0 %v4914
        %5035 = vmatprep.subr.mxu0 %v4919
        %5036 = vmatpush1.msra.mxu0 %v4918
        %5037 = vmatprep.subr.mxu0 %v4923
        %5038 = vmatpush1.msra.mxu0 %v4922
        %5039 = vmatprep.subr.mxu0 %v4927
        %5040 = vmatpush1.msra.mxu0 %v4926
        %5041 = vmatprep.subr.mxu0 %v4931
        %5042 = vmatpush1.msra.mxu0 %v4930
        %5043 = vmatprep.subr.mxu0 %v4935
        %5044 = vmatpush1.msra.mxu0 %v4934
        %5045 = vmatprep.subr.mxu0 %v4939
        %5046 = vmatpush1.msra.mxu0 %v4938
        %5047 = vmatprep.subr.mxu0 %v4943
        %5048 = vmatpush1.msra.mxu0 %v4942
        %5049 = vmatprep.subr.mxu0 %v4947
        %5050 = vmatpush1.msra.mxu0 %v4946
        %5051 = vmatprep.subr.mxu0 0.0
        %5052 = vmatpush1.msra.mxu0 0.0
        %5053 = vmatprep.subr.mxu0 0.0
        %5054 = vmatpush1.msra.mxu0 0.0
        %5055 = vmatprep.subr.mxu0 0.0
        %5056 = vmatpush1.msra.mxu0 0.0
        %5057 = vmatprep.subr.mxu0 0.0
        %5058 = vmatpush1.msra.mxu0 0.0
        %5059 = vmatprep.subr.mxu0 0.0
        %5060 = vmatpush1.msra.mxu0 0.0
        %5061 = vmatprep.subr.mxu0 0.0
        %5062 = vmatpush1.msra.mxu0 0.0
        %5063 = vmatprep.subr.mxu0 0.0
        %5064 = vmatpush1.msra.mxu0 0.0
        %5065 = vmatprep.subr.mxu0 0.0
        %5066 = vmatpush1.msra.mxu0 0.0
        %5067 = vmatprep.subr.mxu0 0.0
        %5068 = vmatpush1.msra.mxu0 0.0
        %5069 = vmatprep.subr.mxu0 0.0
        %5070 = vmatpush1.msra.mxu0 0.0
        %5071 = vmatprep.subr.mxu0 0.0
        %5072 = vmatpush1.msra.mxu0 0.0
        %5073 = vmatprep.subr.mxu0 0.0
        %5074 = vmatpush1.msra.mxu0 0.0
        %5075 = vmatprep.subr.mxu0 0.0
        %5076 = vmatpush1.msra.mxu0 0.0
        %5077 = vmatprep.subr.mxu0 0.0
        %5078 = vmatpush1.msra.mxu0 0.0
        %5079 = vmatprep.subr.mxu0 0.0
        %5080 = vmatpush1.msra.mxu0 0.0
        %5081 = vmatprep.subr.mxu0 0.0
        %5082 = vmatpush1.msra.mxu0 0.0
        %5083 = vmatprep.mubr.f32.mxu0 0.0
        %5084 = vmatmul.mubr.f32.gmra.mrb[0].mxu0 %v4818
        %v5085 = vpop.f32.mrb[0].mxu0
        %v5086 = vadd.f32 0.0, %v5085
        %v5087 = vpop.f32.mrb[0].mxu0
        %v5088 = vadd.f32 0.0, %v5087
        %5089 = vdwg.mxu0
        %5090 = vmatprep.subr.mxu0 %v4821
        %5091 = vmatpush1.msra.mxu0 %v4820
        %5092 = vmatprep.subr.mxu0 %v4825
        %5093 = vmatpush1.msra.mxu0 %v4824
        %5094 = vmatprep.subr.mxu0 %v4829
        %5095 = vmatpush1.msra.mxu0 %v4828
        %5096 = vmatprep.subr.mxu0 %v4833
        %5097 = vmatpush1.msra.mxu0 %v4832
        %5098 = vmatprep.subr.mxu0 %v4837
        %5099 = vmatpush1.msra.mxu0 %v4836
        %5100 = vmatprep.subr.mxu0 %v4841
        %5101 = vmatpush1.msra.mxu0 %v4840
        %5102 = vmatprep.subr.mxu0 %v4845
        %5103 = vmatpush1.msra.mxu0 %v4844
        %5104 = vmatprep.subr.mxu0 %v4849
        %5105 = vmatpush1.msra.mxu0 %v4848
        %5106 = vmatprep.subr.mxu0 %v4853
        %5107 = vmatpush1.msra.mxu0 %v4852
        %5108 = vmatprep.subr.mxu0 %v4857
        %5109 = vmatpush1.msra.mxu0 %v4856
        %5110 = vmatprep.subr.mxu0 %v4861
        %5111 = vmatpush1.msra.mxu0 %v4860
        %5112 = vmatprep.subr.mxu0 %v4865
        %5113 = vmatpush1.msra.mxu0 %v4864
        %5114 = vmatprep.subr.mxu0 %v4869
        %5115 = vmatpush1.msra.mxu0 %v4868
        %5116 = vmatprep.subr.mxu0 %v4873
        %5117 = vmatpush1.msra.mxu0 %v4872
        %5118 = vmatprep.subr.mxu0 %v4877
        %5119 = vmatpush1.msra.mxu0 %v4876
        %5120 = vmatprep.subr.mxu0 %v4881
        %5121 = vmatpush1.msra.mxu0 %v4880
        %5122 = vmatprep.subr.mxu0 0.0
        %5123 = vmatpush1.msra.mxu0 0.0
        %5124 = vmatprep.subr.mxu0 0.0
        %5125 = vmatpush1.msra.mxu0 0.0
        %5126 = vmatprep.subr.mxu0 0.0
        %5127 = vmatpush1.msra.mxu0 0.0
        %5128 = vmatprep.subr.mxu0 0.0
        %5129 = vmatpush1.msra.mxu0 0.0
        %5130 = vmatprep.subr.mxu0 0.0
        %5131 = vmatpush1.msra.mxu0 0.0
        %5132 = vmatprep.subr.mxu0 0.0
        %5133 = vmatpush1.msra.mxu0 0.0
        %5134 = vmatprep.subr.mxu0 0.0
        %5135 = vmatpush1.msra.mxu0 0.0
        %5136 = vmatprep.subr.mxu0 0.0
        %5137 = vmatpush1.msra.mxu0 0.0
        %5138 = vmatprep.subr.mxu0 0.0
        %5139 = vmatpush1.msra.mxu0 0.0
        %5140 = vmatprep.subr.mxu0 0.0
        %5141 = vmatpush1.msra.mxu0 0.0
        %5142 = vmatprep.subr.mxu0 0.0
        %5143 = vmatpush1.msra.mxu0 0.0
        %5144 = vmatprep.subr.mxu0 0.0
        %5145 = vmatpush1.msra.mxu0 0.0
        %5146 = vmatprep.subr.mxu0 0.0
        %5147 = vmatpush1.msra.mxu0 0.0
        %5148 = vmatprep.subr.mxu0 0.0
        %5149 = vmatpush1.msra.mxu0 0.0
        %5150 = vmatprep.subr.mxu0 0.0
        %5151 = vmatpush1.msra.mxu0 0.0
        %5152 = vmatprep.subr.mxu0 0.0
        %5153 = vmatpush1.msra.mxu0 0.0
        %5154 = vmatprep.mubr.f32.mxu0 0.0
        %5155 = vmatmul.mubr.f32.gmra.mrb[0].mxu0 %v4817
        %v5156 = vpop.f32.mrb[0].mxu0
        %v5157 = vadd.f32 %v5015, %v5156
        %v5158 = vpop.f32.mrb[0].mxu0
        %v5159 = vadd.f32 %v5017, %v5158
        %5160 = vdwg.mxu0
        %5161 = vmatprep.subr.mxu0 %v4823
        %5162 = vmatpush1.msra.mxu0 %v4822
        %5163 = vmatprep.subr.mxu0 %v4827
        %5164 = vmatpush1.msra.mxu0 %v4826
        %5165 = vmatprep.subr.mxu0 %v4831
        %5166 = vmatpush1.msra.mxu0 %v4830
        %5167 = vmatprep.subr.mxu0 %v4835
        %5168 = vmatpush1.msra.mxu0 %v4834
        %5169 = vmatprep.subr.mxu0 %v4839
        %5170 = vmatpush1.msra.mxu0 %v4838
        %5171 = vmatprep.subr.mxu0 %v4843
        %5172 = vmatpush1.msra.mxu0 %v4842
        %5173 = vmatprep.subr.mxu0 %v4847
        %5174 = vmatpush1.msra.mxu0 %v4846
        %5175 = vmatprep.subr.mxu0 %v4851
        %5176 = vmatpush1.msra.mxu0 %v4850
        %5177 = vmatprep.subr.mxu0 %v4855
        %5178 = vmatpush1.msra.mxu0 %v4854
        %5179 = vmatprep.subr.mxu0 %v4859
        %5180 = vmatpush1.msra.mxu0 %v4858
        %5181 = vmatprep.subr.mxu0 %v4863
        %5182 = vmatpush1.msra.mxu0 %v4862
        %5183 = vmatprep.subr.mxu0 %v4867
        %5184 = vmatpush1.msra.mxu0 %v4866
        %5185 = vmatprep.subr.mxu0 %v4871
        %5186 = vmatpush1.msra.mxu0 %v4870
        %5187 = vmatprep.subr.mxu0 %v4875
        %5188 = vmatpush1.msra.mxu0 %v4874
        %5189 = vmatprep.subr.mxu0 %v4879
        %5190 = vmatpush1.msra.mxu0 %v4878
        %5191 = vmatprep.subr.mxu0 %v4883
        %5192 = vmatpush1.msra.mxu0 %v4882
        %5193 = vmatprep.subr.mxu0 0.0
        %5194 = vmatpush1.msra.mxu0 0.0
        %5195 = vmatprep.subr.mxu0 0.0
        %5196 = vmatpush1.msra.mxu0 0.0
        %5197 = vmatprep.subr.mxu0 0.0
        %5198 = vmatpush1.msra.mxu0 0.0
        %5199 = vmatprep.subr.mxu0 0.0
        %5200 = vmatpush1.msra.mxu0 0.0
        %5201 = vmatprep.subr.mxu0 0.0
        %5202 = vmatpush1.msra.mxu0 0.0
        %5203 = vmatprep.subr.mxu0 0.0
        %5204 = vmatpush1.msra.mxu0 0.0
        %5205 = vmatprep.subr.mxu0 0.0
        %5206 = vmatpush1.msra.mxu0 0.0
        %5207 = vmatprep.subr.mxu0 0.0
        %5208 = vmatpush1.msra.mxu0 0.0
        %5209 = vmatprep.subr.mxu0 0.0
        %5210 = vmatpush1.msra.mxu0 0.0
        %5211 = vmatprep.subr.mxu0 0.0
        %5212 = vmatpush1.msra.mxu0 0.0
        %5213 = vmatprep.subr.mxu0 0.0
        %5214 = vmatpush1.msra.mxu0 0.0
        %5215 = vmatprep.subr.mxu0 0.0
        %5216 = vmatpush1.msra.mxu0 0.0
        %5217 = vmatprep.subr.mxu0 0.0
        %5218 = vmatpush1.msra.mxu0 0.0
        %5219 = vmatprep.subr.mxu0 0.0
        %5220 = vmatpush1.msra.mxu0 0.0
        %5221 = vmatprep.subr.mxu0 0.0
        %5222 = vmatpush1.msra.mxu0 0.0
        %5223 = vmatprep.subr.mxu0 0.0
        %5224 = vmatpush1.msra.mxu0 0.0
        %5225 = vmatprep.mubr.f32.mxu0 0.0
        %5226 = vmatmul.mubr.f32.gmra.mrb[0].mxu0 %v4817
        %v5227 = vpop.f32.mrb[0].mxu0
        %v5228 = vadd.f32 %v5086, %v5227
        %v5229 = vpop.f32.mrb[0].mxu0
        %v5230 = vadd.f32 %v5088, %v5229
        %5231 = vdwg.mxu0
        %v5232 = vxor.u32 %v5157, 2147483648
        %v5233 = vmul.f32 %v5232, 1.442695
        %v5234 = vpow.pop %v5233
        %v5235 = vadd.f32 %v5234, 1.0
        %v5236 = vrcp.pop %v5235
        %v5237 = vmul.f32 1.0, %v5236
        %v5238 = vxor.u32 %v5159, 2147483648
        %v5239 = vmul.f32 %v5238, 1.442695
        %v5240 = vpow.pop %v5239
        %v5241 = vadd.f32 %v5240, 1.0
        %v5242 = vrcp.pop %v5241
        %v5243 = vmul.f32 1.0, %v5242
        %v5244 = vtanh.pop %v5228
        %v5245 = vxor.u32 %v5230, 2147483648
        %v5246 = vmul.f32 %v5245, 1.442695
        %v5247 = vpow.pop %v5246
        %v5248 = vadd.f32 %v5247, 1.0
        %v5249 = vrcp.pop %v5248
        %v5250 = vmul.f32 1.0, %v5249
        %v5251 = vmul.f32 %v5243, %v4819
        %v5252 = vmul.f32 %v5237, %v5244
        %v5253 = vadd.f32 %v5251, %v5252
        %v5254 = vtanh.pop %v5253
        %v5255 = vmul.f32 %v5250, %v5254
        %5256 = vst [vmem:[#allocation2] sm:$0xff] %v5255
        %5257 = vst [vmem:[#allocation4] sm:$0xff] %v5253
        %v5258 = vld [vmem:[#allocation3] sm:$0xff]
        %v5259 = vld [vmem:[#allocation5] sm:$0xff]
        %v5260 = vld [vmem:[#allocation11] sm:$0xff]
        %v5261 = vld [vmem:[#allocation11 + $0x8] sm:$0xff]
        %v5262 = vld [vmem:[#allocation11 + $0x10] sm:$0xff]
        %v5263 = vld [vmem:[#allocation11 + $0x18] sm:$0xff]
        %v5264 = vld [vmem:[#allocation11 + $0x20] sm:$0xff]
        %v5265 = vld [vmem:[#allocation11 + $0x28] sm:$0xff]
        %v5266 = vld [vmem:[#allocation11 + $0x30] sm:$0xff]
        %v5267 = vld [vmem:[#allocation11 + $0x38] sm:$0xff]
        %v5268 = vld [vmem:[#allocation11 + $0x40] sm:$0xff]
        %v5269 = vld [vmem:[#allocation11 + $0x48] sm:$0xff]
        %v5270 = vld [vmem:[#allocation11 + $0x50] sm:$0xff]
        %v5271 = vld [vmem:[#allocation11 + $0x58] sm:$0xff]
        %v5272 = vld [vmem:[#allocation11 + $0x60] sm:$0xff]
        %v5273 = vld [vmem:[#allocation11 + $0x68] sm:$0xff]
        %v5274 = vld [vmem:[#allocation11 + $0x70] sm:$0xff]
        %v5275 = vld [vmem:[#allocation11 + $0x78] sm:$0xff]
        %v5276 = vld [vmem:[#allocation11 + $0x80] sm:$0xff]
        %v5277 = vld [vmem:[#allocation11 + $0x88] sm:$0xff]
        %v5278 = vld [vmem:[#allocation11 + $0x90] sm:$0xff]
        %v5279 = vld [vmem:[#allocation11 + $0x98] sm:$0xff]
        %v5280 = vld [vmem:[#allocation11 + $0xa0] sm:$0xff]
        %v5281 = vld [vmem:[#allocation11 + $0xa8] sm:$0xff]
        %v5282 = vld [vmem:[#allocation11 + $0xb0] sm:$0xff]
        %v5283 = vld [vmem:[#allocation11 + $0xb8] sm:$0xff]
        %v5284 = vld [vmem:[#allocation11 + $0xc0] sm:$0xff]
        %v5285 = vld [vmem:[#allocation11 + $0xc8] sm:$0xff]
        %v5286 = vld [vmem:[#allocation11 + $0xd0] sm:$0xff]
        %v5287 = vld [vmem:[#allocation11 + $0xd8] sm:$0xff]
        %v5288 = vld [vmem:[#allocation11 + $0xe0] sm:$0xff]
        %v5289 = vld [vmem:[#allocation11 + $0xe8] sm:$0xff]
        %v5290 = vld [vmem:[#allocation11 + $0xf0] sm:$0xff]
        %v5291 = vld [vmem:[#allocation11 + $0xf8] sm:$0xff]
        %v5292 = vld [vmem:[#allocation11 + $0x100] sm:$0xff]
        %v5293 = vld [vmem:[#allocation11 + $0x108] sm:$0xff]
        %v5294 = vld [vmem:[#allocation11 + $0x110] sm:$0xff]
        %v5295 = vld [vmem:[#allocation11 + $0x118] sm:$0xff]
        %v5296 = vld [vmem:[#allocation11 + $0x120] sm:$0xff]
        %v5297 = vld [vmem:[#allocation11 + $0x128] sm:$0xff]
        %v5298 = vld [vmem:[#allocation11 + $0x130] sm:$0xff]
        %v5299 = vld [vmem:[#allocation11 + $0x138] sm:$0xff]
        %v5300 = vld [vmem:[#allocation11 + $0x140] sm:$0xff]
        %v5301 = vld [vmem:[#allocation11 + $0x148] sm:$0xff]
        %v5302 = vld [vmem:[#allocation11 + $0x150] sm:$0xff]
        %v5303 = vld [vmem:[#allocation11 + $0x158] sm:$0xff]
        %v5304 = vld [vmem:[#allocation11 + $0x160] sm:$0xff]
        %v5305 = vld [vmem:[#allocation11 + $0x168] sm:$0xff]
        %v5306 = vld [vmem:[#allocation11 + $0x170] sm:$0xff]
        %v5307 = vld [vmem:[#allocation11 + $0x178] sm:$0xff]
        %v5308 = vld [vmem:[#allocation11 + $0x180] sm:$0xff]
        %v5309 = vld [vmem:[#allocation11 + $0x188] sm:$0xff]
        %v5310 = vld [vmem:[#allocation11 + $0x190] sm:$0xff]
        %v5311 = vld [vmem:[#allocation11 + $0x198] sm:$0xff]
        %v5312 = vld [vmem:[#allocation11 + $0x1a0] sm:$0xff]
        %v5313 = vld [vmem:[#allocation11 + $0x1a8] sm:$0xff]
        %v5314 = vld [vmem:[#allocation11 + $0x1b0] sm:$0xff]
        %v5315 = vld [vmem:[#allocation11 + $0x1b8] sm:$0xff]
        %v5316 = vld [vmem:[#allocation11 + $0x1c0] sm:$0xff]
        %v5317 = vld [vmem:[#allocation11 + $0x1c8] sm:$0xff]
        %v5318 = vld [vmem:[#allocation11 + $0x1d0] sm:$0xff]
        %v5319 = vld [vmem:[#allocation11 + $0x1d8] sm:$0xff]
        %v5320 = vld [vmem:[#allocation11 + $0x1e0] sm:$0xff]
        %v5321 = vld [vmem:[#allocation11 + $0x1e8] sm:$0xff]
        %v5322 = vld [vmem:[#allocation11 + $0x1f0] sm:$0xff]
        %v5323 = vld [vmem:[#allocation11 + $0x1f8] sm:$0xff]
        %v5324 = vld [vmem:[#allocation12] sm:$0xff]
        %v5325 = vld [vmem:[#allocation12 + $0x8] sm:$0xff]
        %v5326 = vld [vmem:[#allocation12 + $0x10] sm:$0xff]
        %v5327 = vld [vmem:[#allocation12 + $0x18] sm:$0xff]
        %v5328 = vld [vmem:[#allocation12 + $0x20] sm:$0xff]
        %v5329 = vld [vmem:[#allocation12 + $0x28] sm:$0xff]
        %v5330 = vld [vmem:[#allocation12 + $0x30] sm:$0xff]
        %v5331 = vld [vmem:[#allocation12 + $0x38] sm:$0xff]
        %v5332 = vld [vmem:[#allocation12 + $0x40] sm:$0xff]
        %v5333 = vld [vmem:[#allocation12 + $0x48] sm:$0xff]
        %v5334 = vld [vmem:[#allocation12 + $0x50] sm:$0xff]
        %v5335 = vld [vmem:[#allocation12 + $0x58] sm:$0xff]
        %v5336 = vld [vmem:[#allocation12 + $0x60] sm:$0xff]
        %v5337 = vld [vmem:[#allocation12 + $0x68] sm:$0xff]
        %v5338 = vld [vmem:[#allocation12 + $0x70] sm:$0xff]
        %v5339 = vld [vmem:[#allocation12 + $0x78] sm:$0xff]
        %v5340 = vld [vmem:[#allocation12 + $0x80] sm:$0xff]
        %v5341 = vld [vmem:[#allocation12 + $0x88] sm:$0xff]
        %v5342 = vld [vmem:[#allocation12 + $0x90] sm:$0xff]
        %v5343 = vld [vmem:[#allocation12 + $0x98] sm:$0xff]
        %v5344 = vld [vmem:[#allocation12 + $0xa0] sm:$0xff]
        %v5345 = vld [vmem:[#allocation12 + $0xa8] sm:$0xff]
        %v5346 = vld [vmem:[#allocation12 + $0xb0] sm:$0xff]
        %v5347 = vld [vmem:[#allocation12 + $0xb8] sm:$0xff]
        %v5348 = vld [vmem:[#allocation12 + $0xc0] sm:$0xff]
        %v5349 = vld [vmem:[#allocation12 + $0xc8] sm:$0xff]
        %v5350 = vld [vmem:[#allocation12 + $0xd0] sm:$0xff]
        %v5351 = vld [vmem:[#allocation12 + $0xd8] sm:$0xff]
        %v5352 = vld [vmem:[#allocation12 + $0xe0] sm:$0xff]
        %v5353 = vld [vmem:[#allocation12 + $0xe8] sm:$0xff]
        %v5354 = vld [vmem:[#allocation12 + $0xf0] sm:$0xff]
        %v5355 = vld [vmem:[#allocation12 + $0xf8] sm:$0xff]
        %v5356 = vld [vmem:[#allocation12 + $0x100] sm:$0xff]
        %v5357 = vld [vmem:[#allocation12 + $0x108] sm:$0xff]
        %v5358 = vld [vmem:[#allocation12 + $0x110] sm:$0xff]
        %v5359 = vld [vmem:[#allocation12 + $0x118] sm:$0xff]
        %v5360 = vld [vmem:[#allocation12 + $0x120] sm:$0xff]
        %v5361 = vld [vmem:[#allocation12 + $0x128] sm:$0xff]
        %v5362 = vld [vmem:[#allocation12 + $0x130] sm:$0xff]
        %v5363 = vld [vmem:[#allocation12 + $0x138] sm:$0xff]
        %v5364 = vld [vmem:[#allocation12 + $0x140] sm:$0xff]
        %v5365 = vld [vmem:[#allocation12 + $0x148] sm:$0xff]
        %v5366 = vld [vmem:[#allocation12 + $0x150] sm:$0xff]
        %v5367 = vld [vmem:[#allocation12 + $0x158] sm:$0xff]
        %v5368 = vld [vmem:[#allocation12 + $0x160] sm:$0xff]
        %v5369 = vld [vmem:[#allocation12 + $0x168] sm:$0xff]
        %v5370 = vld [vmem:[#allocation12 + $0x170] sm:$0xff]
        %v5371 = vld [vmem:[#allocation12 + $0x178] sm:$0xff]
        %v5372 = vld [vmem:[#allocation12 + $0x180] sm:$0xff]
        %v5373 = vld [vmem:[#allocation12 + $0x188] sm:$0xff]
        %v5374 = vld [vmem:[#allocation12 + $0x190] sm:$0xff]
        %v5375 = vld [vmem:[#allocation12 + $0x198] sm:$0xff]
        %v5376 = vld [vmem:[#allocation12 + $0x1a0] sm:$0xff]
        %v5377 = vld [vmem:[#allocation12 + $0x1a8] sm:$0xff]
        %v5378 = vld [vmem:[#allocation12 + $0x1b0] sm:$0xff]
        %v5379 = vld [vmem:[#allocation12 + $0x1b8] sm:$0xff]
        %v5380 = vld [vmem:[#allocation12 + $0x1c0] sm:$0xff]
        %v5381 = vld [vmem:[#allocation12 + $0x1c8] sm:$0xff]
        %v5382 = vld [vmem:[#allocation12 + $0x1d0] sm:$0xff]
        %v5383 = vld [vmem:[#allocation12 + $0x1d8] sm:$0xff]
        %v5384 = vld [vmem:[#allocation12 + $0x1e0] sm:$0xff]
        %v5385 = vld [vmem:[#allocation12 + $0x1e8] sm:$0xff]
        %v5386 = vld [vmem:[#allocation12 + $0x1f0] sm:$0xff]
        %v5387 = vld [vmem:[#allocation12 + $0x1f8] sm:$0xff]
        %5388 = vmatprep.subr.mxu0 %v5325
        %5389 = vmatpush1.msra.mxu0 %v5324
        %5390 = vmatprep.subr.mxu0 %v5329
        %5391 = vmatpush1.msra.mxu0 %v5328
        %5392 = vmatprep.subr.mxu0 %v5333
        %5393 = vmatpush1.msra.mxu0 %v5332
        %5394 = vmatprep.subr.mxu0 %v5337
        %5395 = vmatpush1.msra.mxu0 %v5336
        %5396 = vmatprep.subr.mxu0 %v5341
        %5397 = vmatpush1.msra.mxu0 %v5340
        %5398 = vmatprep.subr.mxu0 %v5345
        %5399 = vmatpush1.msra.mxu0 %v5344
        %5400 = vmatprep.subr.mxu0 %v5349
        %5401 = vmatpush1.msra.mxu0 %v5348
        %5402 = vmatprep.subr.mxu0 %v5353
        %5403 = vmatpush1.msra.mxu0 %v5352
        %5404 = vmatprep.subr.mxu0 %v5357
        %5405 = vmatpush1.msra.mxu0 %v5356
        %5406 = vmatprep.subr.mxu0 %v5361
        %5407 = vmatpush1.msra.mxu0 %v5360
        %5408 = vmatprep.subr.mxu0 %v5365
        %5409 = vmatpush1.msra.mxu0 %v5364
        %5410 = vmatprep.subr.mxu0 %v5369
        %5411 = vmatpush1.msra.mxu0 %v5368
        %5412 = vmatprep.subr.mxu0 %v5373
        %5413 = vmatpush1.msra.mxu0 %v5372
        %5414 = vmatprep.subr.mxu0 %v5377
        %5415 = vmatpush1.msra.mxu0 %v5376
        %5416 = vmatprep.subr.mxu0 %v5381
        %5417 = vmatpush1.msra.mxu0 %v5380
        %5418 = vmatprep.subr.mxu0 %v5385
        %5419 = vmatpush1.msra.mxu0 %v5384
        %5420 = vmatprep.subr.mxu0 0.0
        %5421 = vmatpush1.msra.mxu0 0.0
        %5422 = vmatprep.subr.mxu0 0.0
        %5423 = vmatpush1.msra.mxu0 0.0
        %5424 = vmatprep.subr.mxu0 0.0
        %5425 = vmatpush1.msra.mxu0 0.0
        %5426 = vmatprep.subr.mxu0 0.0
        %5427 = vmatpush1.msra.mxu0 0.0
        %5428 = vmatprep.subr.mxu0 0.0
        %5429 = vmatpush1.msra.mxu0 0.0
        %5430 = vmatprep.subr.mxu0 0.0
        %5431 = vmatpush1.msra.mxu0 0.0
        %5432 = vmatprep.subr.mxu0 0.0
        %5433 = vmatpush1.msra.mxu0 0.0
        %5434 = vmatprep.subr.mxu0 0.0
        %5435 = vmatpush1.msra.mxu0 0.0
        %5436 = vmatprep.subr.mxu0 0.0
        %5437 = vmatpush1.msra.mxu0 0.0
        %5438 = vmatprep.subr.mxu0 0.0
        %5439 = vmatpush1.msra.mxu0 0.0
        %5440 = vmatprep.subr.mxu0 0.0
        %5441 = vmatpush1.msra.mxu0 0.0
        %5442 = vmatprep.subr.mxu0 0.0
        %5443 = vmatpush1.msra.mxu0 0.0
        %5444 = vmatprep.subr.mxu0 0.0
        %5445 = vmatpush1.msra.mxu0 0.0
        %5446 = vmatprep.subr.mxu0 0.0
        %5447 = vmatpush1.msra.mxu0 0.0
        %5448 = vmatprep.subr.mxu0 0.0
        %5449 = vmatpush1.msra.mxu0 0.0
        %5450 = vmatprep.subr.mxu0 0.0
        %5451 = vmatpush1.msra.mxu0 0.0
        %5452 = vmatprep.mubr.f32.mxu0 0.0
        %5453 = vmatmul.mubr.f32.gmra.mrb[0].mxu0 %v5258
        %v5454 = vpop.f32.mrb[0].mxu0
        %v5455 = vadd.f32 0.0, %v5454
        %v5456 = vpop.f32.mrb[0].mxu0
        %v5457 = vadd.f32 0.0, %v5456
        %5458 = vdwg.mxu0
        %5459 = vmatprep.subr.mxu0 %v5327
        %5460 = vmatpush1.msra.mxu0 %v5326
        %5461 = vmatprep.subr.mxu0 %v5331
        %5462 = vmatpush1.msra.mxu0 %v5330
        %5463 = vmatprep.subr.mxu0 %v5335
        %5464 = vmatpush1.msra.mxu0 %v5334
        %5465 = vmatprep.subr.mxu0 %v5339
        %5466 = vmatpush1.msra.mxu0 %v5338
        %5467 = vmatprep.subr.mxu0 %v5343
        %5468 = vmatpush1.msra.mxu0 %v5342
        %5469 = vmatprep.subr.mxu0 %v5347
        %5470 = vmatpush1.msra.mxu0 %v5346
        %5471 = vmatprep.subr.mxu0 %v5351
        %5472 = vmatpush1.msra.mxu0 %v5350
        %5473 = vmatprep.subr.mxu0 %v5355
        %5474 = vmatpush1.msra.mxu0 %v5354
        %5475 = vmatprep.subr.mxu0 %v5359
        %5476 = vmatpush1.msra.mxu0 %v5358
        %5477 = vmatprep.subr.mxu0 %v5363
        %5478 = vmatpush1.msra.mxu0 %v5362
        %5479 = vmatprep.subr.mxu0 %v5367
        %5480 = vmatpush1.msra.mxu0 %v5366
        %5481 = vmatprep.subr.mxu0 %v5371
        %5482 = vmatpush1.msra.mxu0 %v5370
        %5483 = vmatprep.subr.mxu0 %v5375
        %5484 = vmatpush1.msra.mxu0 %v5374
        %5485 = vmatprep.subr.mxu0 %v5379
        %5486 = vmatpush1.msra.mxu0 %v5378
        %5487 = vmatprep.subr.mxu0 %v5383
        %5488 = vmatpush1.msra.mxu0 %v5382
        %5489 = vmatprep.subr.mxu0 %v5387
        %5490 = vmatpush1.msra.mxu0 %v5386
        %5491 = vmatprep.subr.mxu0 0.0
        %5492 = vmatpush1.msra.mxu0 0.0
        %5493 = vmatprep.subr.mxu0 0.0
        %5494 = vmatpush1.msra.mxu0 0.0
        %5495 = vmatprep.subr.mxu0 0.0
        %5496 = vmatpush1.msra.mxu0 0.0
        %5497 = vmatprep.subr.mxu0 0.0
        %5498 = vmatpush1.msra.mxu0 0.0
        %5499 = vmatprep.subr.mxu0 0.0
        %5500 = vmatpush1.msra.mxu0 0.0
        %5501 = vmatprep.subr.mxu0 0.0
        %5502 = vmatpush1.msra.mxu0 0.0
        %5503 = vmatprep.subr.mxu0 0.0
        %5504 = vmatpush1.msra.mxu0 0.0
        %5505 = vmatprep.subr.mxu0 0.0
        %5506 = vmatpush1.msra.mxu0 0.0
        %5507 = vmatprep.subr.mxu0 0.0
        %5508 = vmatpush1.msra.mxu0 0.0
        %5509 = vmatprep.subr.mxu0 0.0
        %5510 = vmatpush1.msra.mxu0 0.0
        %5511 = vmatprep.subr.mxu0 0.0
        %5512 = vmatpush1.msra.mxu0 0.0
        %5513 = vmatprep.subr.mxu0 0.0
        %5514 = vmatpush1.msra.mxu0 0.0
        %5515 = vmatprep.subr.mxu0 0.0
        %5516 = vmatpush1.msra.mxu0 0.0
        %5517 = vmatprep.subr.mxu0 0.0
        %5518 = vmatpush1.msra.mxu0 0.0
        %5519 = vmatprep.subr.mxu0 0.0
        %5520 = vmatpush1.msra.mxu0 0.0
        %5521 = vmatprep.subr.mxu0 0.0
        %5522 = vmatpush1.msra.mxu0 0.0
        %5523 = vmatprep.mubr.f32.mxu0 0.0
        %5524 = vmatmul.mubr.f32.gmra.mrb[0].mxu0 %v5258
        %v5525 = vpop.f32.mrb[0].mxu0
        %v5526 = vadd.f32 0.0, %v5525
        %v5527 = vpop.f32.mrb[0].mxu0
        %v5528 = vadd.f32 0.0, %v5527
        %5529 = vdwg.mxu0
        %5530 = vmatprep.subr.mxu0 %v5261
        %5531 = vmatpush1.msra.mxu0 %v5260
        %5532 = vmatprep.subr.mxu0 %v5265
        %5533 = vmatpush1.msra.mxu0 %v5264
        %5534 = vmatprep.subr.mxu0 %v5269
        %5535 = vmatpush1.msra.mxu0 %v5268
        %5536 = vmatprep.subr.mxu0 %v5273
        %5537 = vmatpush1.msra.mxu0 %v5272
        %5538 = vmatprep.subr.mxu0 %v5277
        %5539 = vmatpush1.msra.mxu0 %v5276
        %5540 = vmatprep.subr.mxu0 %v5281
        %5541 = vmatpush1.msra.mxu0 %v5280
        %5542 = vmatprep.subr.mxu0 %v5285
        %5543 = vmatpush1.msra.mxu0 %v5284
        %5544 = vmatprep.subr.mxu0 %v5289
        %5545 = vmatpush1.msra.mxu0 %v5288
        %5546 = vmatprep.subr.mxu0 %v5293
        %5547 = vmatpush1.msra.mxu0 %v5292
        %5548 = vmatprep.subr.mxu0 %v5297
        %5549 = vmatpush1.msra.mxu0 %v5296
        %5550 = vmatprep.subr.mxu0 %v5301
        %5551 = vmatpush1.msra.mxu0 %v5300
        %5552 = vmatprep.subr.mxu0 %v5305
        %5553 = vmatpush1.msra.mxu0 %v5304
        %5554 = vmatprep.subr.mxu0 %v5309
        %5555 = vmatpush1.msra.mxu0 %v5308
        %5556 = vmatprep.subr.mxu0 %v5313
        %5557 = vmatpush1.msra.mxu0 %v5312
        %5558 = vmatprep.subr.mxu0 %v5317
        %5559 = vmatpush1.msra.mxu0 %v5316
        %5560 = vmatprep.subr.mxu0 %v5321
        %5561 = vmatpush1.msra.mxu0 %v5320
        %5562 = vmatprep.subr.mxu0 0.0
        %5563 = vmatpush1.msra.mxu0 0.0
        %5564 = vmatprep.subr.mxu0 0.0
        %5565 = vmatpush1.msra.mxu0 0.0
        %5566 = vmatprep.subr.mxu0 0.0
        %5567 = vmatpush1.msra.mxu0 0.0
        %5568 = vmatprep.subr.mxu0 0.0
        %5569 = vmatpush1.msra.mxu0 0.0
        %5570 = vmatprep.subr.mxu0 0.0
        %5571 = vmatpush1.msra.mxu0 0.0
        %5572 = vmatprep.subr.mxu0 0.0
        %5573 = vmatpush1.msra.mxu0 0.0
        %5574 = vmatprep.subr.mxu0 0.0
        %5575 = vmatpush1.msra.mxu0 0.0
        %5576 = vmatprep.subr.mxu0 0.0
        %5577 = vmatpush1.msra.mxu0 0.0
        %5578 = vmatprep.subr.mxu0 0.0
        %5579 = vmatpush1.msra.mxu0 0.0
        %5580 = vmatprep.subr.mxu0 0.0
        %5581 = vmatpush1.msra.mxu0 0.0
        %5582 = vmatprep.subr.mxu0 0.0
        %5583 = vmatpush1.msra.mxu0 0.0
        %5584 = vmatprep.subr.mxu0 0.0
        %5585 = vmatpush1.msra.mxu0 0.0
        %5586 = vmatprep.subr.mxu0 0.0
        %5587 = vmatpush1.msra.mxu0 0.0
        %5588 = vmatprep.subr.mxu0 0.0
        %5589 = vmatpush1.msra.mxu0 0.0
        %5590 = vmatprep.subr.mxu0 0.0
        %5591 = vmatpush1.msra.mxu0 0.0
        %5592 = vmatprep.subr.mxu0 0.0
        %5593 = vmatpush1.msra.mxu0 0.0
        %5594 = vmatprep.mubr.f32.mxu0 0.0
        %5595 = vmatmul.mubr.f32.gmra.mrb[0].mxu0 %v5255
        %v5596 = vpop.f32.mrb[0].mxu0
        %v5597 = vadd.f32 %v5455, %v5596
        %v5598 = vpop.f32.mrb[0].mxu0
        %v5599 = vadd.f32 %v5457, %v5598
        %5600 = vdwg.mxu0
        %5601 = vmatprep.subr.mxu0 %v5263
        %5602 = vmatpush1.msra.mxu0 %v5262
        %5603 = vmatprep.subr.mxu0 %v5267
        %5604 = vmatpush1.msra.mxu0 %v5266
        %5605 = vmatprep.subr.mxu0 %v5271
        %5606 = vmatpush1.msra.mxu0 %v5270
        %5607 = vmatprep.subr.mxu0 %v5275
        %5608 = vmatpush1.msra.mxu0 %v5274
        %5609 = vmatprep.subr.mxu0 %v5279
        %5610 = vmatpush1.msra.mxu0 %v5278
        %5611 = vmatprep.subr.mxu0 %v5283
        %5612 = vmatpush1.msra.mxu0 %v5282
        %5613 = vmatprep.subr.mxu0 %v5287
        %5614 = vmatpush1.msra.mxu0 %v5286
        %5615 = vmatprep.subr.mxu0 %v5291
        %5616 = vmatpush1.msra.mxu0 %v5290
        %5617 = vmatprep.subr.mxu0 %v5295
        %5618 = vmatpush1.msra.mxu0 %v5294
        %5619 = vmatprep.subr.mxu0 %v5299
        %5620 = vmatpush1.msra.mxu0 %v5298
        %5621 = vmatprep.subr.mxu0 %v5303
        %5622 = vmatpush1.msra.mxu0 %v5302
        %5623 = vmatprep.subr.mxu0 %v5307
        %5624 = vmatpush1.msra.mxu0 %v5306
        %5625 = vmatprep.subr.mxu0 %v5311
        %5626 = vmatpush1.msra.mxu0 %v5310
        %5627 = vmatprep.subr.mxu0 %v5315
        %5628 = vmatpush1.msra.mxu0 %v5314
        %5629 = vmatprep.subr.mxu0 %v5319
        %5630 = vmatpush1.msra.mxu0 %v5318
        %5631 = vmatprep.subr.mxu0 %v5323
        %5632 = vmatpush1.msra.mxu0 %v5322
        %5633 = vmatprep.subr.mxu0 0.0
        %5634 = vmatpush1.msra.mxu0 0.0
        %5635 = vmatprep.subr.mxu0 0.0
        %5636 = vmatpush1.msra.mxu0 0.0
        %5637 = vmatprep.subr.mxu0 0.0
        %5638 = vmatpush1.msra.mxu0 0.0
        %5639 = vmatprep.subr.mxu0 0.0
        %5640 = vmatpush1.msra.mxu0 0.0
        %5641 = vmatprep.subr.mxu0 0.0
        %5642 = vmatpush1.msra.mxu0 0.0
        %5643 = vmatprep.subr.mxu0 0.0
        %5644 = vmatpush1.msra.mxu0 0.0
        %5645 = vmatprep.subr.mxu0 0.0
        %5646 = vmatpush1.msra.mxu0 0.0
        %5647 = vmatprep.subr.mxu0 0.0
        %5648 = vmatpush1.msra.mxu0 0.0
        %5649 = vmatprep.subr.mxu0 0.0
        %5650 = vmatpush1.msra.mxu0 0.0
        %5651 = vmatprep.subr.mxu0 0.0
        %5652 = vmatpush1.msra.mxu0 0.0
        %5653 = vmatprep.subr.mxu0 0.0
        %5654 = vmatpush1.msra.mxu0 0.0
        %5655 = vmatprep.subr.mxu0 0.0
        %5656 = vmatpush1.msra.mxu0 0.0
        %5657 = vmatprep.subr.mxu0 0.0
        %5658 = vmatpush1.msra.mxu0 0.0
        %5659 = vmatprep.subr.mxu0 0.0
        %5660 = vmatpush1.msra.mxu0 0.0
        %5661 = vmatprep.subr.mxu0 0.0
        %5662 = vmatpush1.msra.mxu0 0.0
        %5663 = vmatprep.subr.mxu0 0.0
        %5664 = vmatpush1.msra.mxu0 0.0
        %5665 = vmatprep.mubr.f32.mxu0 0.0
        %5666 = vmatmul.mubr.f32.gmra.mrb[0].mxu0 %v5255
        %v5667 = vpop.f32.mrb[0].mxu0
        %v5668 = vadd.f32 %v5526, %v5667
        %v5669 = vpop.f32.mrb[0].mxu0
        %v5670 = vadd.f32 %v5528, %v5669
        %5671 = vdwg.mxu0
        %v5672 = vxor.u32 %v5597, 2147483648
        %v5673 = vmul.f32 %v5672, 1.442695
        %v5674 = vpow.pop %v5673
        %v5675 = vadd.f32 %v5674, 1.0
        %v5676 = vrcp.pop %v5675
        %v5677 = vmul.f32 1.0, %v5676
        %v5678 = vxor.u32 %v5599, 2147483648
        %v5679 = vmul.f32 %v5678, 1.442695
        %v5680 = vpow.pop %v5679
        %v5681 = vadd.f32 %v5680, 1.0
        %v5682 = vrcp.pop %v5681
        %v5683 = vmul.f32 1.0, %v5682
        %v5684 = vtanh.pop %v5668
        %v5685 = vxor.u32 %v5670, 2147483648
        %v5686 = vmul.f32 %v5685, 1.442695
        %v5687 = vpow.pop %v5686
        %v5688 = vadd.f32 %v5687, 1.0
        %v5689 = vrcp.pop %v5688
        %v5690 = vmul.f32 1.0, %v5689
        %v5691 = vmul.f32 %v5683, %v5259
        %v5692 = vmul.f32 %v5677, %v5684
        %v5693 = vadd.f32 %v5691, %v5692
        %v5694 = vtanh.pop %v5693
        %v5695 = vmul.f32 %v5690, %v5694
        %5696 = vst [vmem:[#allocation3] sm:$0xff] %v5695
        %5697 = vst [vmem:[#allocation5] sm:$0xff] %v5693
        %s5698 = scalar_lea.vmem [#allocation6], 40
        %5699 = vst [vmem:[%s5698] sm:$0xff] %v5695
        %s5700 = scalar_lea.vmem %s382, 48
        %v5701 = vld [vmem:[%s5700] sm:$0xff]
        %v5702 = vld [vmem:[#allocation2] sm:$0xff]
        %v5703 = vld [vmem:[#allocation4] sm:$0xff]
        %v5704 = vld [vmem:[#allocation7] sm:$0xff]
        %v5705 = vld [vmem:[#allocation7 + $0x8] sm:$0xff]
        %v5706 = vld [vmem:[#allocation7 + $0x10] sm:$0xff]
        %v5707 = vld [vmem:[#allocation7 + $0x18] sm:$0xff]
        %v5708 = vld [vmem:[#allocation7 + $0x20] sm:$0xff]
        %v5709 = vld [vmem:[#allocation7 + $0x28] sm:$0xff]
        %v5710 = vld [vmem:[#allocation7 + $0x30] sm:$0xff]
        %v5711 = vld [vmem:[#allocation7 + $0x38] sm:$0xff]
        %v5712 = vld [vmem:[#allocation7 + $0x40] sm:$0xff]
        %v5713 = vld [vmem:[#allocation7 + $0x48] sm:$0xff]
        %v5714 = vld [vmem:[#allocation7 + $0x50] sm:$0xff]
        %v5715 = vld [vmem:[#allocation7 + $0x58] sm:$0xff]
        %v5716 = vld [vmem:[#allocation7 + $0x60] sm:$0xff]
        %v5717 = vld [vmem:[#allocation7 + $0x68] sm:$0xff]
        %v5718 = vld [vmem:[#allocation7 + $0x70] sm:$0xff]
        %v5719 = vld [vmem:[#allocation7 + $0x78] sm:$0xff]
        %v5720 = vld [vmem:[#allocation7 + $0x80] sm:$0xff]
        %v5721 = vld [vmem:[#allocation7 + $0x88] sm:$0xff]
        %v5722 = vld [vmem:[#allocation7 + $0x90] sm:$0xff]
        %v5723 = vld [vmem:[#allocation7 + $0x98] sm:$0xff]
        %v5724 = vld [vmem:[#allocation7 + $0xa0] sm:$0xff]
        %v5725 = vld [vmem:[#allocation7 + $0xa8] sm:$0xff]
        %v5726 = vld [vmem:[#allocation7 + $0xb0] sm:$0xff]
        %v5727 = vld [vmem:[#allocation7 + $0xb8] sm:$0xff]
        %v5728 = vld [vmem:[#allocation7 + $0xc0] sm:$0xff]
        %v5729 = vld [vmem:[#allocation7 + $0xc8] sm:$0xff]
        %v5730 = vld [vmem:[#allocation7 + $0xd0] sm:$0xff]
        %v5731 = vld [vmem:[#allocation7 + $0xd8] sm:$0xff]
        %v5732 = vld [vmem:[#allocation7 + $0xe0] sm:$0xff]
        %v5733 = vld [vmem:[#allocation7 + $0xe8] sm:$0xff]
        %v5734 = vld [vmem:[#allocation7 + $0xf0] sm:$0xff]
        %v5735 = vld [vmem:[#allocation7 + $0xf8] sm:$0xff]
        %v5736 = vld [vmem:[#allocation7 + $0x100] sm:$0xff]
        %v5737 = vld [vmem:[#allocation7 + $0x108] sm:$0xff]
        %v5738 = vld [vmem:[#allocation7 + $0x110] sm:$0xff]
        %v5739 = vld [vmem:[#allocation7 + $0x118] sm:$0xff]
        %v5740 = vld [vmem:[#allocation7 + $0x120] sm:$0xff]
        %v5741 = vld [vmem:[#allocation7 + $0x128] sm:$0xff]
        %v5742 = vld [vmem:[#allocation7 + $0x130] sm:$0xff]
        %v5743 = vld [vmem:[#allocation7 + $0x138] sm:$0xff]
        %v5744 = vld [vmem:[#allocation7 + $0x140] sm:$0xff]
        %v5745 = vld [vmem:[#allocation7 + $0x148] sm:$0xff]
        %v5746 = vld [vmem:[#allocation7 + $0x150] sm:$0xff]
        %v5747 = vld [vmem:[#allocation7 + $0x158] sm:$0xff]
        %v5748 = vld [vmem:[#allocation7 + $0x160] sm:$0xff]
        %v5749 = vld [vmem:[#allocation7 + $0x168] sm:$0xff]
        %v5750 = vld [vmem:[#allocation7 + $0x170] sm:$0xff]
        %v5751 = vld [vmem:[#allocation7 + $0x178] sm:$0xff]
        %v5752 = vld [vmem:[#allocation7 + $0x180] sm:$0xff]
        %v5753 = vld [vmem:[#allocation7 + $0x188] sm:$0xff]
        %v5754 = vld [vmem:[#allocation7 + $0x190] sm:$0xff]
        %v5755 = vld [vmem:[#allocation7 + $0x198] sm:$0xff]
        %v5756 = vld [vmem:[#allocation7 + $0x1a0] sm:$0xff]
        %v5757 = vld [vmem:[#allocation7 + $0x1a8] sm:$0xff]
        %v5758 = vld [vmem:[#allocation7 + $0x1b0] sm:$0xff]
        %v5759 = vld [vmem:[#allocation7 + $0x1b8] sm:$0xff]
        %v5760 = vld [vmem:[#allocation7 + $0x1c0] sm:$0xff]
        %v5761 = vld [vmem:[#allocation7 + $0x1c8] sm:$0xff]
        %v5762 = vld [vmem:[#allocation7 + $0x1d0] sm:$0xff]
        %v5763 = vld [vmem:[#allocation7 + $0x1d8] sm:$0xff]
        %v5764 = vld [vmem:[#allocation7 + $0x1e0] sm:$0xff]
        %v5765 = vld [vmem:[#allocation7 + $0x1e8] sm:$0xff]
        %v5766 = vld [vmem:[#allocation7 + $0x1f0] sm:$0xff]
        %v5767 = vld [vmem:[#allocation7 + $0x1f8] sm:$0xff]
        %v5768 = vld [vmem:[#allocation9] sm:$0xff]
        %v5769 = vld [vmem:[#allocation9 + $0x8] sm:$0xff]
        %v5770 = vld [vmem:[#allocation9 + $0x10] sm:$0xff]
        %v5771 = vld [vmem:[#allocation9 + $0x18] sm:$0xff]
        %v5772 = vld [vmem:[#allocation9 + $0x20] sm:$0xff]
        %v5773 = vld [vmem:[#allocation9 + $0x28] sm:$0xff]
        %v5774 = vld [vmem:[#allocation9 + $0x30] sm:$0xff]
        %v5775 = vld [vmem:[#allocation9 + $0x38] sm:$0xff]
        %v5776 = vld [vmem:[#allocation9 + $0x40] sm:$0xff]
        %v5777 = vld [vmem:[#allocation9 + $0x48] sm:$0xff]
        %v5778 = vld [vmem:[#allocation9 + $0x50] sm:$0xff]
        %v5779 = vld [vmem:[#allocation9 + $0x58] sm:$0xff]
        %v5780 = vld [vmem:[#allocation9 + $0x60] sm:$0xff]
        %v5781 = vld [vmem:[#allocation9 + $0x68] sm:$0xff]
        %v5782 = vld [vmem:[#allocation9 + $0x70] sm:$0xff]
        %v5783 = vld [vmem:[#allocation9 + $0x78] sm:$0xff]
        %v5784 = vld [vmem:[#allocation9 + $0x80] sm:$0xff]
        %v5785 = vld [vmem:[#allocation9 + $0x88] sm:$0xff]
        %v5786 = vld [vmem:[#allocation9 + $0x90] sm:$0xff]
        %v5787 = vld [vmem:[#allocation9 + $0x98] sm:$0xff]
        %v5788 = vld [vmem:[#allocation9 + $0xa0] sm:$0xff]
        %v5789 = vld [vmem:[#allocation9 + $0xa8] sm:$0xff]
        %v5790 = vld [vmem:[#allocation9 + $0xb0] sm:$0xff]
        %v5791 = vld [vmem:[#allocation9 + $0xb8] sm:$0xff]
        %v5792 = vld [vmem:[#allocation9 + $0xc0] sm:$0xff]
        %v5793 = vld [vmem:[#allocation9 + $0xc8] sm:$0xff]
        %v5794 = vld [vmem:[#allocation9 + $0xd0] sm:$0xff]
        %v5795 = vld [vmem:[#allocation9 + $0xd8] sm:$0xff]
        %v5796 = vld [vmem:[#allocation9 + $0xe0] sm:$0xff]
        %v5797 = vld [vmem:[#allocation9 + $0xe8] sm:$0xff]
        %v5798 = vld [vmem:[#allocation9 + $0xf0] sm:$0xff]
        %v5799 = vld [vmem:[#allocation9 + $0xf8] sm:$0xff]
        %v5800 = vld [vmem:[#allocation9 + $0x100] sm:$0xff]
        %v5801 = vld [vmem:[#allocation9 + $0x108] sm:$0xff]
        %v5802 = vld [vmem:[#allocation9 + $0x110] sm:$0xff]
        %v5803 = vld [vmem:[#allocation9 + $0x118] sm:$0xff]
        %v5804 = vld [vmem:[#allocation9 + $0x120] sm:$0xff]
        %v5805 = vld [vmem:[#allocation9 + $0x128] sm:$0xff]
        %v5806 = vld [vmem:[#allocation9 + $0x130] sm:$0xff]
        %v5807 = vld [vmem:[#allocation9 + $0x138] sm:$0xff]
        %v5808 = vld [vmem:[#allocation9 + $0x140] sm:$0xff]
        %v5809 = vld [vmem:[#allocation9 + $0x148] sm:$0xff]
        %v5810 = vld [vmem:[#allocation9 + $0x150] sm:$0xff]
        %v5811 = vld [vmem:[#allocation9 + $0x158] sm:$0xff]
        %v5812 = vld [vmem:[#allocation9 + $0x160] sm:$0xff]
        %v5813 = vld [vmem:[#allocation9 + $0x168] sm:$0xff]
        %v5814 = vld [vmem:[#allocation9 + $0x170] sm:$0xff]
        %v5815 = vld [vmem:[#allocation9 + $0x178] sm:$0xff]
        %v5816 = vld [vmem:[#allocation9 + $0x180] sm:$0xff]
        %v5817 = vld [vmem:[#allocation9 + $0x188] sm:$0xff]
        %v5818 = vld [vmem:[#allocation9 + $0x190] sm:$0xff]
        %v5819 = vld [vmem:[#allocation9 + $0x198] sm:$0xff]
        %v5820 = vld [vmem:[#allocation9 + $0x1a0] sm:$0xff]
        %v5821 = vld [vmem:[#allocation9 + $0x1a8] sm:$0xff]
        %v5822 = vld [vmem:[#allocation9 + $0x1b0] sm:$0xff]
        %v5823 = vld [vmem:[#allocation9 + $0x1b8] sm:$0xff]
        %v5824 = vld [vmem:[#allocation9 + $0x1c0] sm:$0xff]
        %v5825 = vld [vmem:[#allocation9 + $0x1c8] sm:$0xff]
        %v5826 = vld [vmem:[#allocation9 + $0x1d0] sm:$0xff]
        %v5827 = vld [vmem:[#allocation9 + $0x1d8] sm:$0xff]
        %v5828 = vld [vmem:[#allocation9 + $0x1e0] sm:$0xff]
        %v5829 = vld [vmem:[#allocation9 + $0x1e8] sm:$0xff]
        %v5830 = vld [vmem:[#allocation9 + $0x1f0] sm:$0xff]
        %v5831 = vld [vmem:[#allocation9 + $0x1f8] sm:$0xff]
        %5832 = vmatprep.subr.mxu0 %v5769
        %5833 = vmatpush1.msra.mxu0 %v5768
        %5834 = vmatprep.subr.mxu0 %v5773
        %5835 = vmatpush1.msra.mxu0 %v5772
        %5836 = vmatprep.subr.mxu0 %v5777
        %5837 = vmatpush1.msra.mxu0 %v5776
        %5838 = vmatprep.subr.mxu0 %v5781
        %5839 = vmatpush1.msra.mxu0 %v5780
        %5840 = vmatprep.subr.mxu0 %v5785
        %5841 = vmatpush1.msra.mxu0 %v5784
        %5842 = vmatprep.subr.mxu0 %v5789
        %5843 = vmatpush1.msra.mxu0 %v5788
        %5844 = vmatprep.subr.mxu0 %v5793
        %5845 = vmatpush1.msra.mxu0 %v5792
        %5846 = vmatprep.subr.mxu0 %v5797
        %5847 = vmatpush1.msra.mxu0 %v5796
        %5848 = vmatprep.subr.mxu0 %v5801
        %5849 = vmatpush1.msra.mxu0 %v5800
        %5850 = vmatprep.subr.mxu0 %v5805
        %5851 = vmatpush1.msra.mxu0 %v5804
        %5852 = vmatprep.subr.mxu0 %v5809
        %5853 = vmatpush1.msra.mxu0 %v5808
        %5854 = vmatprep.subr.mxu0 %v5813
        %5855 = vmatpush1.msra.mxu0 %v5812
        %5856 = vmatprep.subr.mxu0 %v5817
        %5857 = vmatpush1.msra.mxu0 %v5816
        %5858 = vmatprep.subr.mxu0 %v5821
        %5859 = vmatpush1.msra.mxu0 %v5820
        %5860 = vmatprep.subr.mxu0 %v5825
        %5861 = vmatpush1.msra.mxu0 %v5824
        %5862 = vmatprep.subr.mxu0 %v5829
        %5863 = vmatpush1.msra.mxu0 %v5828
        %5864 = vmatprep.subr.mxu0 0.0
        %5865 = vmatpush1.msra.mxu0 0.0
        %5866 = vmatprep.subr.mxu0 0.0
        %5867 = vmatpush1.msra.mxu0 0.0
        %5868 = vmatprep.subr.mxu0 0.0
        %5869 = vmatpush1.msra.mxu0 0.0
        %5870 = vmatprep.subr.mxu0 0.0
        %5871 = vmatpush1.msra.mxu0 0.0
        %5872 = vmatprep.subr.mxu0 0.0
        %5873 = vmatpush1.msra.mxu0 0.0
        %5874 = vmatprep.subr.mxu0 0.0
        %5875 = vmatpush1.msra.mxu0 0.0
        %5876 = vmatprep.subr.mxu0 0.0
        %5877 = vmatpush1.msra.mxu0 0.0
        %5878 = vmatprep.subr.mxu0 0.0
        %5879 = vmatpush1.msra.mxu0 0.0
        %5880 = vmatprep.subr.mxu0 0.0
        %5881 = vmatpush1.msra.mxu0 0.0
        %5882 = vmatprep.subr.mxu0 0.0
        %5883 = vmatpush1.msra.mxu0 0.0
        %5884 = vmatprep.subr.mxu0 0.0
        %5885 = vmatpush1.msra.mxu0 0.0
        %5886 = vmatprep.subr.mxu0 0.0
        %5887 = vmatpush1.msra.mxu0 0.0
        %5888 = vmatprep.subr.mxu0 0.0
        %5889 = vmatpush1.msra.mxu0 0.0
        %5890 = vmatprep.subr.mxu0 0.0
        %5891 = vmatpush1.msra.mxu0 0.0
        %5892 = vmatprep.subr.mxu0 0.0
        %5893 = vmatpush1.msra.mxu0 0.0
        %5894 = vmatprep.subr.mxu0 0.0
        %5895 = vmatpush1.msra.mxu0 0.0
        %5896 = vmatprep.mubr.f32.mxu0 0.0
        %5897 = vmatmul.mubr.f32.gmra.mrb[0].mxu0 %v5702
        %v5898 = vpop.f32.mrb[0].mxu0
        %v5899 = vadd.f32 0.0, %v5898
        %v5900 = vpop.f32.mrb[0].mxu0
        %v5901 = vadd.f32 0.0, %v5900
        %5902 = vdwg.mxu0
        %5903 = vmatprep.subr.mxu0 %v5771
        %5904 = vmatpush1.msra.mxu0 %v5770
        %5905 = vmatprep.subr.mxu0 %v5775
        %5906 = vmatpush1.msra.mxu0 %v5774
        %5907 = vmatprep.subr.mxu0 %v5779
        %5908 = vmatpush1.msra.mxu0 %v5778
        %5909 = vmatprep.subr.mxu0 %v5783
        %5910 = vmatpush1.msra.mxu0 %v5782
        %5911 = vmatprep.subr.mxu0 %v5787
        %5912 = vmatpush1.msra.mxu0 %v5786
        %5913 = vmatprep.subr.mxu0 %v5791
        %5914 = vmatpush1.msra.mxu0 %v5790
        %5915 = vmatprep.subr.mxu0 %v5795
        %5916 = vmatpush1.msra.mxu0 %v5794
        %5917 = vmatprep.subr.mxu0 %v5799
        %5918 = vmatpush1.msra.mxu0 %v5798
        %5919 = vmatprep.subr.mxu0 %v5803
        %5920 = vmatpush1.msra.mxu0 %v5802
        %5921 = vmatprep.subr.mxu0 %v5807
        %5922 = vmatpush1.msra.mxu0 %v5806
        %5923 = vmatprep.subr.mxu0 %v5811
        %5924 = vmatpush1.msra.mxu0 %v5810
        %5925 = vmatprep.subr.mxu0 %v5815
        %5926 = vmatpush1.msra.mxu0 %v5814
        %5927 = vmatprep.subr.mxu0 %v5819
        %5928 = vmatpush1.msra.mxu0 %v5818
        %5929 = vmatprep.subr.mxu0 %v5823
        %5930 = vmatpush1.msra.mxu0 %v5822
        %5931 = vmatprep.subr.mxu0 %v5827
        %5932 = vmatpush1.msra.mxu0 %v5826
        %5933 = vmatprep.subr.mxu0 %v5831
        %5934 = vmatpush1.msra.mxu0 %v5830
        %5935 = vmatprep.subr.mxu0 0.0
        %5936 = vmatpush1.msra.mxu0 0.0
        %5937 = vmatprep.subr.mxu0 0.0
        %5938 = vmatpush1.msra.mxu0 0.0
        %5939 = vmatprep.subr.mxu0 0.0
        %5940 = vmatpush1.msra.mxu0 0.0
        %5941 = vmatprep.subr.mxu0 0.0
        %5942 = vmatpush1.msra.mxu0 0.0
        %5943 = vmatprep.subr.mxu0 0.0
        %5944 = vmatpush1.msra.mxu0 0.0
        %5945 = vmatprep.subr.mxu0 0.0
        %5946 = vmatpush1.msra.mxu0 0.0
        %5947 = vmatprep.subr.mxu0 0.0
        %5948 = vmatpush1.msra.mxu0 0.0
        %5949 = vmatprep.subr.mxu0 0.0
        %5950 = vmatpush1.msra.mxu0 0.0
        %5951 = vmatprep.subr.mxu0 0.0
        %5952 = vmatpush1.msra.mxu0 0.0
        %5953 = vmatprep.subr.mxu0 0.0
        %5954 = vmatpush1.msra.mxu0 0.0
        %5955 = vmatprep.subr.mxu0 0.0
        %5956 = vmatpush1.msra.mxu0 0.0
        %5957 = vmatprep.subr.mxu0 0.0
        %5958 = vmatpush1.msra.mxu0 0.0
        %5959 = vmatprep.subr.mxu0 0.0
        %5960 = vmatpush1.msra.mxu0 0.0
        %5961 = vmatprep.subr.mxu0 0.0
        %5962 = vmatpush1.msra.mxu0 0.0
        %5963 = vmatprep.subr.mxu0 0.0
        %5964 = vmatpush1.msra.mxu0 0.0
        %5965 = vmatprep.subr.mxu0 0.0
        %5966 = vmatpush1.msra.mxu0 0.0
        %5967 = vmatprep.mubr.f32.mxu0 0.0
        %5968 = vmatmul.mubr.f32.gmra.mrb[0].mxu0 %v5702
        %v5969 = vpop.f32.mrb[0].mxu0
        %v5970 = vadd.f32 0.0, %v5969
        %v5971 = vpop.f32.mrb[0].mxu0
        %v5972 = vadd.f32 0.0, %v5971
        %5973 = vdwg.mxu0
        %5974 = vmatprep.subr.mxu0 %v5705
        %5975 = vmatpush1.msra.mxu0 %v5704
        %5976 = vmatprep.subr.mxu0 %v5709
        %5977 = vmatpush1.msra.mxu0 %v5708
        %5978 = vmatprep.subr.mxu0 %v5713
        %5979 = vmatpush1.msra.mxu0 %v5712
        %5980 = vmatprep.subr.mxu0 %v5717
        %5981 = vmatpush1.msra.mxu0 %v5716
        %5982 = vmatprep.subr.mxu0 %v5721
        %5983 = vmatpush1.msra.mxu0 %v5720
        %5984 = vmatprep.subr.mxu0 %v5725
        %5985 = vmatpush1.msra.mxu0 %v5724
        %5986 = vmatprep.subr.mxu0 %v5729
        %5987 = vmatpush1.msra.mxu0 %v5728
        %5988 = vmatprep.subr.mxu0 %v5733
        %5989 = vmatpush1.msra.mxu0 %v5732
        %5990 = vmatprep.subr.mxu0 %v5737
        %5991 = vmatpush1.msra.mxu0 %v5736
        %5992 = vmatprep.subr.mxu0 %v5741
        %5993 = vmatpush1.msra.mxu0 %v5740
        %5994 = vmatprep.subr.mxu0 %v5745
        %5995 = vmatpush1.msra.mxu0 %v5744
        %5996 = vmatprep.subr.mxu0 %v5749
        %5997 = vmatpush1.msra.mxu0 %v5748
        %5998 = vmatprep.subr.mxu0 %v5753
        %5999 = vmatpush1.msra.mxu0 %v5752
        %6000 = vmatprep.subr.mxu0 %v5757
        %6001 = vmatpush1.msra.mxu0 %v5756
        %6002 = vmatprep.subr.mxu0 %v5761
        %6003 = vmatpush1.msra.mxu0 %v5760
        %6004 = vmatprep.subr.mxu0 %v5765
        %6005 = vmatpush1.msra.mxu0 %v5764
        %6006 = vmatprep.subr.mxu0 0.0
        %6007 = vmatpush1.msra.mxu0 0.0
        %6008 = vmatprep.subr.mxu0 0.0
        %6009 = vmatpush1.msra.mxu0 0.0
        %6010 = vmatprep.subr.mxu0 0.0
        %6011 = vmatpush1.msra.mxu0 0.0
        %6012 = vmatprep.subr.mxu0 0.0
        %6013 = vmatpush1.msra.mxu0 0.0
        %6014 = vmatprep.subr.mxu0 0.0
        %6015 = vmatpush1.msra.mxu0 0.0
        %6016 = vmatprep.subr.mxu0 0.0
        %6017 = vmatpush1.msra.mxu0 0.0
        %6018 = vmatprep.subr.mxu0 0.0
        %6019 = vmatpush1.msra.mxu0 0.0
        %6020 = vmatprep.subr.mxu0 0.0
        %6021 = vmatpush1.msra.mxu0 0.0
        %6022 = vmatprep.subr.mxu0 0.0
        %6023 = vmatpush1.msra.mxu0 0.0
        %6024 = vmatprep.subr.mxu0 0.0
        %6025 = vmatpush1.msra.mxu0 0.0
        %6026 = vmatprep.subr.mxu0 0.0
        %6027 = vmatpush1.msra.mxu0 0.0
        %6028 = vmatprep.subr.mxu0 0.0
        %6029 = vmatpush1.msra.mxu0 0.0
        %6030 = vmatprep.subr.mxu0 0.0
        %6031 = vmatpush1.msra.mxu0 0.0
        %6032 = vmatprep.subr.mxu0 0.0
        %6033 = vmatpush1.msra.mxu0 0.0
        %6034 = vmatprep.subr.mxu0 0.0
        %6035 = vmatpush1.msra.mxu0 0.0
        %6036 = vmatprep.subr.mxu0 0.0
        %6037 = vmatpush1.msra.mxu0 0.0
        %6038 = vmatprep.mubr.f32.mxu0 0.0
        %6039 = vmatmul.mubr.f32.gmra.mrb[0].mxu0 %v5701
        %v6040 = vpop.f32.mrb[0].mxu0
        %v6041 = vadd.f32 %v5899, %v6040
        %v6042 = vpop.f32.mrb[0].mxu0
        %v6043 = vadd.f32 %v5901, %v6042
        %6044 = vdwg.mxu0
        %6045 = vmatprep.subr.mxu0 %v5707
        %6046 = vmatpush1.msra.mxu0 %v5706
        %6047 = vmatprep.subr.mxu0 %v5711
        %6048 = vmatpush1.msra.mxu0 %v5710
        %6049 = vmatprep.subr.mxu0 %v5715
        %6050 = vmatpush1.msra.mxu0 %v5714
        %6051 = vmatprep.subr.mxu0 %v5719
        %6052 = vmatpush1.msra.mxu0 %v5718
        %6053 = vmatprep.subr.mxu0 %v5723
        %6054 = vmatpush1.msra.mxu0 %v5722
        %6055 = vmatprep.subr.mxu0 %v5727
        %6056 = vmatpush1.msra.mxu0 %v5726
        %6057 = vmatprep.subr.mxu0 %v5731
        %6058 = vmatpush1.msra.mxu0 %v5730
        %6059 = vmatprep.subr.mxu0 %v5735
        %6060 = vmatpush1.msra.mxu0 %v5734
        %6061 = vmatprep.subr.mxu0 %v5739
        %6062 = vmatpush1.msra.mxu0 %v5738
        %6063 = vmatprep.subr.mxu0 %v5743
        %6064 = vmatpush1.msra.mxu0 %v5742
        %6065 = vmatprep.subr.mxu0 %v5747
        %6066 = vmatpush1.msra.mxu0 %v5746
        %6067 = vmatprep.subr.mxu0 %v5751
        %6068 = vmatpush1.msra.mxu0 %v5750
        %6069 = vmatprep.subr.mxu0 %v5755
        %6070 = vmatpush1.msra.mxu0 %v5754
        %6071 = vmatprep.subr.mxu0 %v5759
        %6072 = vmatpush1.msra.mxu0 %v5758
        %6073 = vmatprep.subr.mxu0 %v5763
        %6074 = vmatpush1.msra.mxu0 %v5762
        %6075 = vmatprep.subr.mxu0 %v5767
        %6076 = vmatpush1.msra.mxu0 %v5766
        %6077 = vmatprep.subr.mxu0 0.0
        %6078 = vmatpush1.msra.mxu0 0.0
        %6079 = vmatprep.subr.mxu0 0.0
        %6080 = vmatpush1.msra.mxu0 0.0
        %6081 = vmatprep.subr.mxu0 0.0
        %6082 = vmatpush1.msra.mxu0 0.0
        %6083 = vmatprep.subr.mxu0 0.0
        %6084 = vmatpush1.msra.mxu0 0.0
        %6085 = vmatprep.subr.mxu0 0.0
        %6086 = vmatpush1.msra.mxu0 0.0
        %6087 = vmatprep.subr.mxu0 0.0
        %6088 = vmatpush1.msra.mxu0 0.0
        %6089 = vmatprep.subr.mxu0 0.0
        %6090 = vmatpush1.msra.mxu0 0.0
        %6091 = vmatprep.subr.mxu0 0.0
        %6092 = vmatpush1.msra.mxu0 0.0
        %6093 = vmatprep.subr.mxu0 0.0
        %6094 = vmatpush1.msra.mxu0 0.0
        %6095 = vmatprep.subr.mxu0 0.0
        %6096 = vmatpush1.msra.mxu0 0.0
        %6097 = vmatprep.subr.mxu0 0.0
        %6098 = vmatpush1.msra.mxu0 0.0
        %6099 = vmatprep.subr.mxu0 0.0
        %6100 = vmatpush1.msra.mxu0 0.0
        %6101 = vmatprep.subr.mxu0 0.0
        %6102 = vmatpush1.msra.mxu0 0.0
        %6103 = vmatprep.subr.mxu0 0.0
        %6104 = vmatpush1.msra.mxu0 0.0
        %6105 = vmatprep.subr.mxu0 0.0
        %6106 = vmatpush1.msra.mxu0 0.0
        %6107 = vmatprep.subr.mxu0 0.0
        %6108 = vmatpush1.msra.mxu0 0.0
        %6109 = vmatprep.mubr.f32.mxu0 0.0
        %6110 = vmatmul.mubr.f32.gmra.mrb[0].mxu0 %v5701
        %v6111 = vpop.f32.mrb[0].mxu0
        %v6112 = vadd.f32 %v5970, %v6111
        %v6113 = vpop.f32.mrb[0].mxu0
        %v6114 = vadd.f32 %v5972, %v6113
        %6115 = vdwg.mxu0
        %v6116 = vxor.u32 %v6041, 2147483648
        %v6117 = vmul.f32 %v6116, 1.442695
        %v6118 = vpow.pop %v6117
        %v6119 = vadd.f32 %v6118, 1.0
        %v6120 = vrcp.pop %v6119
        %v6121 = vmul.f32 1.0, %v6120
        %v6122 = vxor.u32 %v6043, 2147483648
        %v6123 = vmul.f32 %v6122, 1.442695
        %v6124 = vpow.pop %v6123
        %v6125 = vadd.f32 %v6124, 1.0
        %v6126 = vrcp.pop %v6125
        %v6127 = vmul.f32 1.0, %v6126
        %v6128 = vtanh.pop %v6112
        %v6129 = vxor.u32 %v6114, 2147483648
        %v6130 = vmul.f32 %v6129, 1.442695
        %v6131 = vpow.pop %v6130
        %v6132 = vadd.f32 %v6131, 1.0
        %v6133 = vrcp.pop %v6132
        %v6134 = vmul.f32 1.0, %v6133
        %v6135 = vmul.f32 %v6127, %v5703
        %v6136 = vmul.f32 %v6121, %v6128
        %v6137 = vadd.f32 %v6135, %v6136
        %v6138 = vtanh.pop %v6137
        %v6139 = vmul.f32 %v6134, %v6138
        %6140 = vst [vmem:[#allocation2] sm:$0xff] %v6139
        %6141 = vst [vmem:[#allocation4] sm:$0xff] %v6137
        %v6142 = vld [vmem:[#allocation3] sm:$0xff]
        %v6143 = vld [vmem:[#allocation5] sm:$0xff]
        %v6144 = vld [vmem:[#allocation11] sm:$0xff]
        %v6145 = vld [vmem:[#allocation11 + $0x8] sm:$0xff]
        %v6146 = vld [vmem:[#allocation11 + $0x10] sm:$0xff]
        %v6147 = vld [vmem:[#allocation11 + $0x18] sm:$0xff]
        %v6148 = vld [vmem:[#allocation11 + $0x20] sm:$0xff]
        %v6149 = vld [vmem:[#allocation11 + $0x28] sm:$0xff]
        %v6150 = vld [vmem:[#allocation11 + $0x30] sm:$0xff]
        %v6151 = vld [vmem:[#allocation11 + $0x38] sm:$0xff]
        %v6152 = vld [vmem:[#allocation11 + $0x40] sm:$0xff]
        %v6153 = vld [vmem:[#allocation11 + $0x48] sm:$0xff]
        %v6154 = vld [vmem:[#allocation11 + $0x50] sm:$0xff]
        %v6155 = vld [vmem:[#allocation11 + $0x58] sm:$0xff]
        %v6156 = vld [vmem:[#allocation11 + $0x60] sm:$0xff]
        %v6157 = vld [vmem:[#allocation11 + $0x68] sm:$0xff]
        %v6158 = vld [vmem:[#allocation11 + $0x70] sm:$0xff]
        %v6159 = vld [vmem:[#allocation11 + $0x78] sm:$0xff]
        %v6160 = vld [vmem:[#allocation11 + $0x80] sm:$0xff]
        %v6161 = vld [vmem:[#allocation11 + $0x88] sm:$0xff]
        %v6162 = vld [vmem:[#allocation11 + $0x90] sm:$0xff]
        %v6163 = vld [vmem:[#allocation11 + $0x98] sm:$0xff]
        %v6164 = vld [vmem:[#allocation11 + $0xa0] sm:$0xff]
        %v6165 = vld [vmem:[#allocation11 + $0xa8] sm:$0xff]
        %v6166 = vld [vmem:[#allocation11 + $0xb0] sm:$0xff]
        %v6167 = vld [vmem:[#allocation11 + $0xb8] sm:$0xff]
        %v6168 = vld [vmem:[#allocation11 + $0xc0] sm:$0xff]
        %v6169 = vld [vmem:[#allocation11 + $0xc8] sm:$0xff]
        %v6170 = vld [vmem:[#allocation11 + $0xd0] sm:$0xff]
        %v6171 = vld [vmem:[#allocation11 + $0xd8] sm:$0xff]
        %v6172 = vld [vmem:[#allocation11 + $0xe0] sm:$0xff]
        %v6173 = vld [vmem:[#allocation11 + $0xe8] sm:$0xff]
        %v6174 = vld [vmem:[#allocation11 + $0xf0] sm:$0xff]
        %v6175 = vld [vmem:[#allocation11 + $0xf8] sm:$0xff]
        %v6176 = vld [vmem:[#allocation11 + $0x100] sm:$0xff]
        %v6177 = vld [vmem:[#allocation11 + $0x108] sm:$0xff]
        %v6178 = vld [vmem:[#allocation11 + $0x110] sm:$0xff]
        %v6179 = vld [vmem:[#allocation11 + $0x118] sm:$0xff]
        %v6180 = vld [vmem:[#allocation11 + $0x120] sm:$0xff]
        %v6181 = vld [vmem:[#allocation11 + $0x128] sm:$0xff]
        %v6182 = vld [vmem:[#allocation11 + $0x130] sm:$0xff]
        %v6183 = vld [vmem:[#allocation11 + $0x138] sm:$0xff]
        %v6184 = vld [vmem:[#allocation11 + $0x140] sm:$0xff]
        %v6185 = vld [vmem:[#allocation11 + $0x148] sm:$0xff]
        %v6186 = vld [vmem:[#allocation11 + $0x150] sm:$0xff]
        %v6187 = vld [vmem:[#allocation11 + $0x158] sm:$0xff]
        %v6188 = vld [vmem:[#allocation11 + $0x160] sm:$0xff]
        %v6189 = vld [vmem:[#allocation11 + $0x168] sm:$0xff]
        %v6190 = vld [vmem:[#allocation11 + $0x170] sm:$0xff]
        %v6191 = vld [vmem:[#allocation11 + $0x178] sm:$0xff]
        %v6192 = vld [vmem:[#allocation11 + $0x180] sm:$0xff]
        %v6193 = vld [vmem:[#allocation11 + $0x188] sm:$0xff]
        %v6194 = vld [vmem:[#allocation11 + $0x190] sm:$0xff]
        %v6195 = vld [vmem:[#allocation11 + $0x198] sm:$0xff]
        %v6196 = vld [vmem:[#allocation11 + $0x1a0] sm:$0xff]
        %v6197 = vld [vmem:[#allocation11 + $0x1a8] sm:$0xff]
        %v6198 = vld [vmem:[#allocation11 + $0x1b0] sm:$0xff]
        %v6199 = vld [vmem:[#allocation11 + $0x1b8] sm:$0xff]
        %v6200 = vld [vmem:[#allocation11 + $0x1c0] sm:$0xff]
        %v6201 = vld [vmem:[#allocation11 + $0x1c8] sm:$0xff]
        %v6202 = vld [vmem:[#allocation11 + $0x1d0] sm:$0xff]
        %v6203 = vld [vmem:[#allocation11 + $0x1d8] sm:$0xff]
        %v6204 = vld [vmem:[#allocation11 + $0x1e0] sm:$0xff]
        %v6205 = vld [vmem:[#allocation11 + $0x1e8] sm:$0xff]
        %v6206 = vld [vmem:[#allocation11 + $0x1f0] sm:$0xff]
        %v6207 = vld [vmem:[#allocation11 + $0x1f8] sm:$0xff]
        %v6208 = vld [vmem:[#allocation12] sm:$0xff]
        %v6209 = vld [vmem:[#allocation12 + $0x8] sm:$0xff]
        %v6210 = vld [vmem:[#allocation12 + $0x10] sm:$0xff]
        %v6211 = vld [vmem:[#allocation12 + $0x18] sm:$0xff]
        %v6212 = vld [vmem:[#allocation12 + $0x20] sm:$0xff]
        %v6213 = vld [vmem:[#allocation12 + $0x28] sm:$0xff]
        %v6214 = vld [vmem:[#allocation12 + $0x30] sm:$0xff]
        %v6215 = vld [vmem:[#allocation12 + $0x38] sm:$0xff]
        %v6216 = vld [vmem:[#allocation12 + $0x40] sm:$0xff]
        %v6217 = vld [vmem:[#allocation12 + $0x48] sm:$0xff]
        %v6218 = vld [vmem:[#allocation12 + $0x50] sm:$0xff]
        %v6219 = vld [vmem:[#allocation12 + $0x58] sm:$0xff]
        %v6220 = vld [vmem:[#allocation12 + $0x60] sm:$0xff]
        %v6221 = vld [vmem:[#allocation12 + $0x68] sm:$0xff]
        %v6222 = vld [vmem:[#allocation12 + $0x70] sm:$0xff]
        %v6223 = vld [vmem:[#allocation12 + $0x78] sm:$0xff]
        %v6224 = vld [vmem:[#allocation12 + $0x80] sm:$0xff]
        %v6225 = vld [vmem:[#allocation12 + $0x88] sm:$0xff]
        %v6226 = vld [vmem:[#allocation12 + $0x90] sm:$0xff]
        %v6227 = vld [vmem:[#allocation12 + $0x98] sm:$0xff]
        %v6228 = vld [vmem:[#allocation12 + $0xa0] sm:$0xff]
        %v6229 = vld [vmem:[#allocation12 + $0xa8] sm:$0xff]
        %v6230 = vld [vmem:[#allocation12 + $0xb0] sm:$0xff]
        %v6231 = vld [vmem:[#allocation12 + $0xb8] sm:$0xff]
        %v6232 = vld [vmem:[#allocation12 + $0xc0] sm:$0xff]
        %v6233 = vld [vmem:[#allocation12 + $0xc8] sm:$0xff]
        %v6234 = vld [vmem:[#allocation12 + $0xd0] sm:$0xff]
        %v6235 = vld [vmem:[#allocation12 + $0xd8] sm:$0xff]
        %v6236 = vld [vmem:[#allocation12 + $0xe0] sm:$0xff]
        %v6237 = vld [vmem:[#allocation12 + $0xe8] sm:$0xff]
        %v6238 = vld [vmem:[#allocation12 + $0xf0] sm:$0xff]
        %v6239 = vld [vmem:[#allocation12 + $0xf8] sm:$0xff]
        %v6240 = vld [vmem:[#allocation12 + $0x100] sm:$0xff]
        %v6241 = vld [vmem:[#allocation12 + $0x108] sm:$0xff]
        %v6242 = vld [vmem:[#allocation12 + $0x110] sm:$0xff]
        %v6243 = vld [vmem:[#allocation12 + $0x118] sm:$0xff]
        %v6244 = vld [vmem:[#allocation12 + $0x120] sm:$0xff]
        %v6245 = vld [vmem:[#allocation12 + $0x128] sm:$0xff]
        %v6246 = vld [vmem:[#allocation12 + $0x130] sm:$0xff]
        %v6247 = vld [vmem:[#allocation12 + $0x138] sm:$0xff]
        %v6248 = vld [vmem:[#allocation12 + $0x140] sm:$0xff]
        %v6249 = vld [vmem:[#allocation12 + $0x148] sm:$0xff]
        %v6250 = vld [vmem:[#allocation12 + $0x150] sm:$0xff]
        %v6251 = vld [vmem:[#allocation12 + $0x158] sm:$0xff]
        %v6252 = vld [vmem:[#allocation12 + $0x160] sm:$0xff]
        %v6253 = vld [vmem:[#allocation12 + $0x168] sm:$0xff]
        %v6254 = vld [vmem:[#allocation12 + $0x170] sm:$0xff]
        %v6255 = vld [vmem:[#allocation12 + $0x178] sm:$0xff]
        %v6256 = vld [vmem:[#allocation12 + $0x180] sm:$0xff]
        %v6257 = vld [vmem:[#allocation12 + $0x188] sm:$0xff]
        %v6258 = vld [vmem:[#allocation12 + $0x190] sm:$0xff]
        %v6259 = vld [vmem:[#allocation12 + $0x198] sm:$0xff]
        %v6260 = vld [vmem:[#allocation12 + $0x1a0] sm:$0xff]
        %v6261 = vld [vmem:[#allocation12 + $0x1a8] sm:$0xff]
        %v6262 = vld [vmem:[#allocation12 + $0x1b0] sm:$0xff]
        %v6263 = vld [vmem:[#allocation12 + $0x1b8] sm:$0xff]
        %v6264 = vld [vmem:[#allocation12 + $0x1c0] sm:$0xff]
        %v6265 = vld [vmem:[#allocation12 + $0x1c8] sm:$0xff]
        %v6266 = vld [vmem:[#allocation12 + $0x1d0] sm:$0xff]
        %v6267 = vld [vmem:[#allocation12 + $0x1d8] sm:$0xff]
        %v6268 = vld [vmem:[#allocation12 + $0x1e0] sm:$0xff]
        %v6269 = vld [vmem:[#allocation12 + $0x1e8] sm:$0xff]
        %v6270 = vld [vmem:[#allocation12 + $0x1f0] sm:$0xff]
        %v6271 = vld [vmem:[#allocation12 + $0x1f8] sm:$0xff]
        %6272 = vmatprep.subr.mxu0 %v6209
        %6273 = vmatpush1.msra.mxu0 %v6208
        %6274 = vmatprep.subr.mxu0 %v6213
        %6275 = vmatpush1.msra.mxu0 %v6212
        %6276 = vmatprep.subr.mxu0 %v6217
        %6277 = vmatpush1.msra.mxu0 %v6216
        %6278 = vmatprep.subr.mxu0 %v6221
        %6279 = vmatpush1.msra.mxu0 %v6220
        %6280 = vmatprep.subr.mxu0 %v6225
        %6281 = vmatpush1.msra.mxu0 %v6224
        %6282 = vmatprep.subr.mxu0 %v6229
        %6283 = vmatpush1.msra.mxu0 %v6228
        %6284 = vmatprep.subr.mxu0 %v6233
        %6285 = vmatpush1.msra.mxu0 %v6232
        %6286 = vmatprep.subr.mxu0 %v6237
        %6287 = vmatpush1.msra.mxu0 %v6236
        %6288 = vmatprep.subr.mxu0 %v6241
        %6289 = vmatpush1.msra.mxu0 %v6240
        %6290 = vmatprep.subr.mxu0 %v6245
        %6291 = vmatpush1.msra.mxu0 %v6244
        %6292 = vmatprep.subr.mxu0 %v6249
        %6293 = vmatpush1.msra.mxu0 %v6248
        %6294 = vmatprep.subr.mxu0 %v6253
        %6295 = vmatpush1.msra.mxu0 %v6252
        %6296 = vmatprep.subr.mxu0 %v6257
        %6297 = vmatpush1.msra.mxu0 %v6256
        %6298 = vmatprep.subr.mxu0 %v6261
        %6299 = vmatpush1.msra.mxu0 %v6260
        %6300 = vmatprep.subr.mxu0 %v6265
        %6301 = vmatpush1.msra.mxu0 %v6264
        %6302 = vmatprep.subr.mxu0 %v6269
        %6303 = vmatpush1.msra.mxu0 %v6268
        %6304 = vmatprep.subr.mxu0 0.0
        %6305 = vmatpush1.msra.mxu0 0.0
        %6306 = vmatprep.subr.mxu0 0.0
        %6307 = vmatpush1.msra.mxu0 0.0
        %6308 = vmatprep.subr.mxu0 0.0
        %6309 = vmatpush1.msra.mxu0 0.0
        %6310 = vmatprep.subr.mxu0 0.0
        %6311 = vmatpush1.msra.mxu0 0.0
        %6312 = vmatprep.subr.mxu0 0.0
        %6313 = vmatpush1.msra.mxu0 0.0
        %6314 = vmatprep.subr.mxu0 0.0
        %6315 = vmatpush1.msra.mxu0 0.0
        %6316 = vmatprep.subr.mxu0 0.0
        %6317 = vmatpush1.msra.mxu0 0.0
        %6318 = vmatprep.subr.mxu0 0.0
        %6319 = vmatpush1.msra.mxu0 0.0
        %6320 = vmatprep.subr.mxu0 0.0
        %6321 = vmatpush1.msra.mxu0 0.0
        %6322 = vmatprep.subr.mxu0 0.0
        %6323 = vmatpush1.msra.mxu0 0.0
        %6324 = vmatprep.subr.mxu0 0.0
        %6325 = vmatpush1.msra.mxu0 0.0
        %6326 = vmatprep.subr.mxu0 0.0
        %6327 = vmatpush1.msra.mxu0 0.0
        %6328 = vmatprep.subr.mxu0 0.0
        %6329 = vmatpush1.msra.mxu0 0.0
        %6330 = vmatprep.subr.mxu0 0.0
        %6331 = vmatpush1.msra.mxu0 0.0
        %6332 = vmatprep.subr.mxu0 0.0
        %6333 = vmatpush1.msra.mxu0 0.0
        %6334 = vmatprep.subr.mxu0 0.0
        %6335 = vmatpush1.msra.mxu0 0.0
        %6336 = vmatprep.mubr.f32.mxu0 0.0
        %6337 = vmatmul.mubr.f32.gmra.mrb[0].mxu0 %v6142
        %v6338 = vpop.f32.mrb[0].mxu0
        %v6339 = vadd.f32 0.0, %v6338
        %v6340 = vpop.f32.mrb[0].mxu0
        %v6341 = vadd.f32 0.0, %v6340
        %6342 = vdwg.mxu0
        %6343 = vmatprep.subr.mxu0 %v6211
        %6344 = vmatpush1.msra.mxu0 %v6210
        %6345 = vmatprep.subr.mxu0 %v6215
        %6346 = vmatpush1.msra.mxu0 %v6214
        %6347 = vmatprep.subr.mxu0 %v6219
        %6348 = vmatpush1.msra.mxu0 %v6218
        %6349 = vmatprep.subr.mxu0 %v6223
        %6350 = vmatpush1.msra.mxu0 %v6222
        %6351 = vmatprep.subr.mxu0 %v6227
        %6352 = vmatpush1.msra.mxu0 %v6226
        %6353 = vmatprep.subr.mxu0 %v6231
        %6354 = vmatpush1.msra.mxu0 %v6230
        %6355 = vmatprep.subr.mxu0 %v6235
        %6356 = vmatpush1.msra.mxu0 %v6234
        %6357 = vmatprep.subr.mxu0 %v6239
        %6358 = vmatpush1.msra.mxu0 %v6238
        %6359 = vmatprep.subr.mxu0 %v6243
        %6360 = vmatpush1.msra.mxu0 %v6242
        %6361 = vmatprep.subr.mxu0 %v6247
        %6362 = vmatpush1.msra.mxu0 %v6246
        %6363 = vmatprep.subr.mxu0 %v6251
        %6364 = vmatpush1.msra.mxu0 %v6250
        %6365 = vmatprep.subr.mxu0 %v6255
        %6366 = vmatpush1.msra.mxu0 %v6254
        %6367 = vmatprep.subr.mxu0 %v6259
        %6368 = vmatpush1.msra.mxu0 %v6258
        %6369 = vmatprep.subr.mxu0 %v6263
        %6370 = vmatpush1.msra.mxu0 %v6262
        %6371 = vmatprep.subr.mxu0 %v6267
        %6372 = vmatpush1.msra.mxu0 %v6266
        %6373 = vmatprep.subr.mxu0 %v6271
        %6374 = vmatpush1.msra.mxu0 %v6270
        %6375 = vmatprep.subr.mxu0 0.0
        %6376 = vmatpush1.msra.mxu0 0.0
        %6377 = vmatprep.subr.mxu0 0.0
        %6378 = vmatpush1.msra.mxu0 0.0
        %6379 = vmatprep.subr.mxu0 0.0
        %6380 = vmatpush1.msra.mxu0 0.0
        %6381 = vmatprep.subr.mxu0 0.0
        %6382 = vmatpush1.msra.mxu0 0.0
        %6383 = vmatprep.subr.mxu0 0.0
        %6384 = vmatpush1.msra.mxu0 0.0
        %6385 = vmatprep.subr.mxu0 0.0
        %6386 = vmatpush1.msra.mxu0 0.0
        %6387 = vmatprep.subr.mxu0 0.0
        %6388 = vmatpush1.msra.mxu0 0.0
        %6389 = vmatprep.subr.mxu0 0.0
        %6390 = vmatpush1.msra.mxu0 0.0
        %6391 = vmatprep.subr.mxu0 0.0
        %6392 = vmatpush1.msra.mxu0 0.0
        %6393 = vmatprep.subr.mxu0 0.0
        %6394 = vmatpush1.msra.mxu0 0.0
        %6395 = vmatprep.subr.mxu0 0.0
        %6396 = vmatpush1.msra.mxu0 0.0
        %6397 = vmatprep.subr.mxu0 0.0
        %6398 = vmatpush1.msra.mxu0 0.0
        %6399 = vmatprep.subr.mxu0 0.0
        %6400 = vmatpush1.msra.mxu0 0.0
        %6401 = vmatprep.subr.mxu0 0.0
        %6402 = vmatpush1.msra.mxu0 0.0
        %6403 = vmatprep.subr.mxu0 0.0
        %6404 = vmatpush1.msra.mxu0 0.0
        %6405 = vmatprep.subr.mxu0 0.0
        %6406 = vmatpush1.msra.mxu0 0.0
        %6407 = vmatprep.mubr.f32.mxu0 0.0
        %6408 = vmatmul.mubr.f32.gmra.mrb[0].mxu0 %v6142
        %v6409 = vpop.f32.mrb[0].mxu0
        %v6410 = vadd.f32 0.0, %v6409
        %v6411 = vpop.f32.mrb[0].mxu0
        %v6412 = vadd.f32 0.0, %v6411
        %6413 = vdwg.mxu0
        %6414 = vmatprep.subr.mxu0 %v6145
        %6415 = vmatpush1.msra.mxu0 %v6144
        %6416 = vmatprep.subr.mxu0 %v6149
        %6417 = vmatpush1.msra.mxu0 %v6148
        %6418 = vmatprep.subr.mxu0 %v6153
        %6419 = vmatpush1.msra.mxu0 %v6152
        %6420 = vmatprep.subr.mxu0 %v6157
        %6421 = vmatpush1.msra.mxu0 %v6156
        %6422 = vmatprep.subr.mxu0 %v6161
        %6423 = vmatpush1.msra.mxu0 %v6160
        %6424 = vmatprep.subr.mxu0 %v6165
        %6425 = vmatpush1.msra.mxu0 %v6164
        %6426 = vmatprep.subr.mxu0 %v6169
        %6427 = vmatpush1.msra.mxu0 %v6168
        %6428 = vmatprep.subr.mxu0 %v6173
        %6429 = vmatpush1.msra.mxu0 %v6172
        %6430 = vmatprep.subr.mxu0 %v6177
        %6431 = vmatpush1.msra.mxu0 %v6176
        %6432 = vmatprep.subr.mxu0 %v6181
        %6433 = vmatpush1.msra.mxu0 %v6180
        %6434 = vmatprep.subr.mxu0 %v6185
        %6435 = vmatpush1.msra.mxu0 %v6184
        %6436 = vmatprep.subr.mxu0 %v6189
        %6437 = vmatpush1.msra.mxu0 %v6188
        %6438 = vmatprep.subr.mxu0 %v6193
        %6439 = vmatpush1.msra.mxu0 %v6192
        %6440 = vmatprep.subr.mxu0 %v6197
        %6441 = vmatpush1.msra.mxu0 %v6196
        %6442 = vmatprep.subr.mxu0 %v6201
        %6443 = vmatpush1.msra.mxu0 %v6200
        %6444 = vmatprep.subr.mxu0 %v6205
        %6445 = vmatpush1.msra.mxu0 %v6204
        %6446 = vmatprep.subr.mxu0 0.0
        %6447 = vmatpush1.msra.mxu0 0.0
        %6448 = vmatprep.subr.mxu0 0.0
        %6449 = vmatpush1.msra.mxu0 0.0
        %6450 = vmatprep.subr.mxu0 0.0
        %6451 = vmatpush1.msra.mxu0 0.0
        %6452 = vmatprep.subr.mxu0 0.0
        %6453 = vmatpush1.msra.mxu0 0.0
        %6454 = vmatprep.subr.mxu0 0.0
        %6455 = vmatpush1.msra.mxu0 0.0
        %6456 = vmatprep.subr.mxu0 0.0
        %6457 = vmatpush1.msra.mxu0 0.0
        %6458 = vmatprep.subr.mxu0 0.0
        %6459 = vmatpush1.msra.mxu0 0.0
        %6460 = vmatprep.subr.mxu0 0.0
        %6461 = vmatpush1.msra.mxu0 0.0
        %6462 = vmatprep.subr.mxu0 0.0
        %6463 = vmatpush1.msra.mxu0 0.0
        %6464 = vmatprep.subr.mxu0 0.0
        %6465 = vmatpush1.msra.mxu0 0.0
        %6466 = vmatprep.subr.mxu0 0.0
        %6467 = vmatpush1.msra.mxu0 0.0
        %6468 = vmatprep.subr.mxu0 0.0
        %6469 = vmatpush1.msra.mxu0 0.0
        %6470 = vmatprep.subr.mxu0 0.0
        %6471 = vmatpush1.msra.mxu0 0.0
        %6472 = vmatprep.subr.mxu0 0.0
        %6473 = vmatpush1.msra.mxu0 0.0
        %6474 = vmatprep.subr.mxu0 0.0
        %6475 = vmatpush1.msra.mxu0 0.0
        %6476 = vmatprep.subr.mxu0 0.0
        %6477 = vmatpush1.msra.mxu0 0.0
        %6478 = vmatprep.mubr.f32.mxu0 0.0
        %6479 = vmatmul.mubr.f32.gmra.mrb[0].mxu0 %v6139
        %v6480 = vpop.f32.mrb[0].mxu0
        %v6481 = vadd.f32 %v6339, %v6480
        %v6482 = vpop.f32.mrb[0].mxu0
        %v6483 = vadd.f32 %v6341, %v6482
        %6484 = vdwg.mxu0
        %6485 = vmatprep.subr.mxu0 %v6147
        %6486 = vmatpush1.msra.mxu0 %v6146
        %6487 = vmatprep.subr.mxu0 %v6151
        %6488 = vmatpush1.msra.mxu0 %v6150
        %6489 = vmatprep.subr.mxu0 %v6155
        %6490 = vmatpush1.msra.mxu0 %v6154
        %6491 = vmatprep.subr.mxu0 %v6159
        %6492 = vmatpush1.msra.mxu0 %v6158
        %6493 = vmatprep.subr.mxu0 %v6163
        %6494 = vmatpush1.msra.mxu0 %v6162
        %6495 = vmatprep.subr.mxu0 %v6167
        %6496 = vmatpush1.msra.mxu0 %v6166
        %6497 = vmatprep.subr.mxu0 %v6171
        %6498 = vmatpush1.msra.mxu0 %v6170
        %6499 = vmatprep.subr.mxu0 %v6175
        %6500 = vmatpush1.msra.mxu0 %v6174
        %6501 = vmatprep.subr.mxu0 %v6179
        %6502 = vmatpush1.msra.mxu0 %v6178
        %6503 = vmatprep.subr.mxu0 %v6183
        %6504 = vmatpush1.msra.mxu0 %v6182
        %6505 = vmatprep.subr.mxu0 %v6187
        %6506 = vmatpush1.msra.mxu0 %v6186
        %6507 = vmatprep.subr.mxu0 %v6191
        %6508 = vmatpush1.msra.mxu0 %v6190
        %6509 = vmatprep.subr.mxu0 %v6195
        %6510 = vmatpush1.msra.mxu0 %v6194
        %6511 = vmatprep.subr.mxu0 %v6199
        %6512 = vmatpush1.msra.mxu0 %v6198
        %6513 = vmatprep.subr.mxu0 %v6203
        %6514 = vmatpush1.msra.mxu0 %v6202
        %6515 = vmatprep.subr.mxu0 %v6207
        %6516 = vmatpush1.msra.mxu0 %v6206
        %6517 = vmatprep.subr.mxu0 0.0
        %6518 = vmatpush1.msra.mxu0 0.0
        %6519 = vmatprep.subr.mxu0 0.0
        %6520 = vmatpush1.msra.mxu0 0.0
        %6521 = vmatprep.subr.mxu0 0.0
        %6522 = vmatpush1.msra.mxu0 0.0
        %6523 = vmatprep.subr.mxu0 0.0
        %6524 = vmatpush1.msra.mxu0 0.0
        %6525 = vmatprep.subr.mxu0 0.0
        %6526 = vmatpush1.msra.mxu0 0.0
        %6527 = vmatprep.subr.mxu0 0.0
        %6528 = vmatpush1.msra.mxu0 0.0
        %6529 = vmatprep.subr.mxu0 0.0
        %6530 = vmatpush1.msra.mxu0 0.0
        %6531 = vmatprep.subr.mxu0 0.0
        %6532 = vmatpush1.msra.mxu0 0.0
        %6533 = vmatprep.subr.mxu0 0.0
        %6534 = vmatpush1.msra.mxu0 0.0
        %6535 = vmatprep.subr.mxu0 0.0
        %6536 = vmatpush1.msra.mxu0 0.0
        %6537 = vmatprep.subr.mxu0 0.0
        %6538 = vmatpush1.msra.mxu0 0.0
        %6539 = vmatprep.subr.mxu0 0.0
        %6540 = vmatpush1.msra.mxu0 0.0
        %6541 = vmatprep.subr.mxu0 0.0
        %6542 = vmatpush1.msra.mxu0 0.0
        %6543 = vmatprep.subr.mxu0 0.0
        %6544 = vmatpush1.msra.mxu0 0.0
        %6545 = vmatprep.subr.mxu0 0.0
        %6546 = vmatpush1.msra.mxu0 0.0
        %6547 = vmatprep.subr.mxu0 0.0
        %6548 = vmatpush1.msra.mxu0 0.0
        %6549 = vmatprep.mubr.f32.mxu0 0.0
        %6550 = vmatmul.mubr.f32.gmra.mrb[0].mxu0 %v6139
        %v6551 = vpop.f32.mrb[0].mxu0
        %v6552 = vadd.f32 %v6410, %v6551
        %v6553 = vpop.f32.mrb[0].mxu0
        %v6554 = vadd.f32 %v6412, %v6553
        %6555 = vdwg.mxu0
        %v6556 = vxor.u32 %v6481, 2147483648
        %v6557 = vmul.f32 %v6556, 1.442695
        %v6558 = vpow.pop %v6557
        %v6559 = vadd.f32 %v6558, 1.0
        %v6560 = vrcp.pop %v6559
        %v6561 = vmul.f32 1.0, %v6560
        %v6562 = vxor.u32 %v6483, 2147483648
        %v6563 = vmul.f32 %v6562, 1.442695
        %v6564 = vpow.pop %v6563
        %v6565 = vadd.f32 %v6564, 1.0
        %v6566 = vrcp.pop %v6565
        %v6567 = vmul.f32 1.0, %v6566
        %v6568 = vtanh.pop %v6552
        %v6569 = vxor.u32 %v6554, 2147483648
        %v6570 = vmul.f32 %v6569, 1.442695
        %v6571 = vpow.pop %v6570
        %v6572 = vadd.f32 %v6571, 1.0
        %v6573 = vrcp.pop %v6572
        %v6574 = vmul.f32 1.0, %v6573
        %v6575 = vmul.f32 %v6567, %v6143
        %v6576 = vmul.f32 %v6561, %v6568
        %v6577 = vadd.f32 %v6575, %v6576
        %v6578 = vtanh.pop %v6577
        %v6579 = vmul.f32 %v6574, %v6578
        %6580 = vst [vmem:[#allocation3] sm:$0xff] %v6579
        %6581 = vst [vmem:[#allocation5] sm:$0xff] %v6577
        %s6582 = scalar_lea.vmem [#allocation6], 48
        %6583 = vst [vmem:[%s6582] sm:$0xff] %v6579
        %s6584 = scalar_lea.vmem %s382, 56
        %v6585 = vld [vmem:[%s6584] sm:$0xff]
        %v6586 = vld [vmem:[#allocation2] sm:$0xff]
        %v6587 = vld [vmem:[#allocation4] sm:$0xff]
        %v6588 = vld [vmem:[#allocation7] sm:$0xff]
        %v6589 = vld [vmem:[#allocation7 + $0x8] sm:$0xff]
        %v6590 = vld [vmem:[#allocation7 + $0x10] sm:$0xff]
        %v6591 = vld [vmem:[#allocation7 + $0x18] sm:$0xff]
        %v6592 = vld [vmem:[#allocation7 + $0x20] sm:$0xff]
        %v6593 = vld [vmem:[#allocation7 + $0x28] sm:$0xff]
        %v6594 = vld [vmem:[#allocation7 + $0x30] sm:$0xff]
        %v6595 = vld [vmem:[#allocation7 + $0x38] sm:$0xff]
        %v6596 = vld [vmem:[#allocation7 + $0x40] sm:$0xff]
        %v6597 = vld [vmem:[#allocation7 + $0x48] sm:$0xff]
        %v6598 = vld [vmem:[#allocation7 + $0x50] sm:$0xff]
        %v6599 = vld [vmem:[#allocation7 + $0x58] sm:$0xff]
        %v6600 = vld [vmem:[#allocation7 + $0x60] sm:$0xff]
        %v6601 = vld [vmem:[#allocation7 + $0x68] sm:$0xff]
        %v6602 = vld [vmem:[#allocation7 + $0x70] sm:$0xff]
        %v6603 = vld [vmem:[#allocation7 + $0x78] sm:$0xff]
        %v6604 = vld [vmem:[#allocation7 + $0x80] sm:$0xff]
        %v6605 = vld [vmem:[#allocation7 + $0x88] sm:$0xff]
        %v6606 = vld [vmem:[#allocation7 + $0x90] sm:$0xff]
        %v6607 = vld [vmem:[#allocation7 + $0x98] sm:$0xff]
        %v6608 = vld [vmem:[#allocation7 + $0xa0] sm:$0xff]
        %v6609 = vld [vmem:[#allocation7 + $0xa8] sm:$0xff]
        %v6610 = vld [vmem:[#allocation7 + $0xb0] sm:$0xff]
        %v6611 = vld [vmem:[#allocation7 + $0xb8] sm:$0xff]
        %v6612 = vld [vmem:[#allocation7 + $0xc0] sm:$0xff]
        %v6613 = vld [vmem:[#allocation7 + $0xc8] sm:$0xff]
        %v6614 = vld [vmem:[#allocation7 + $0xd0] sm:$0xff]
        %v6615 = vld [vmem:[#allocation7 + $0xd8] sm:$0xff]
        %v6616 = vld [vmem:[#allocation7 + $0xe0] sm:$0xff]
        %v6617 = vld [vmem:[#allocation7 + $0xe8] sm:$0xff]
        %v6618 = vld [vmem:[#allocation7 + $0xf0] sm:$0xff]
        %v6619 = vld [vmem:[#allocation7 + $0xf8] sm:$0xff]
        %v6620 = vld [vmem:[#allocation7 + $0x100] sm:$0xff]
        %v6621 = vld [vmem:[#allocation7 + $0x108] sm:$0xff]
        %v6622 = vld [vmem:[#allocation7 + $0x110] sm:$0xff]
        %v6623 = vld [vmem:[#allocation7 + $0x118] sm:$0xff]
        %v6624 = vld [vmem:[#allocation7 + $0x120] sm:$0xff]
        %v6625 = vld [vmem:[#allocation7 + $0x128] sm:$0xff]
        %v6626 = vld [vmem:[#allocation7 + $0x130] sm:$0xff]
        %v6627 = vld [vmem:[#allocation7 + $0x138] sm:$0xff]
        %v6628 = vld [vmem:[#allocation7 + $0x140] sm:$0xff]
        %v6629 = vld [vmem:[#allocation7 + $0x148] sm:$0xff]
        %v6630 = vld [vmem:[#allocation7 + $0x150] sm:$0xff]
        %v6631 = vld [vmem:[#allocation7 + $0x158] sm:$0xff]
        %v6632 = vld [vmem:[#allocation7 + $0x160] sm:$0xff]
        %v6633 = vld [vmem:[#allocation7 + $0x168] sm:$0xff]
        %v6634 = vld [vmem:[#allocation7 + $0x170] sm:$0xff]
        %v6635 = vld [vmem:[#allocation7 + $0x178] sm:$0xff]
        %v6636 = vld [vmem:[#allocation7 + $0x180] sm:$0xff]
        %v6637 = vld [vmem:[#allocation7 + $0x188] sm:$0xff]
        %v6638 = vld [vmem:[#allocation7 + $0x190] sm:$0xff]
        %v6639 = vld [vmem:[#allocation7 + $0x198] sm:$0xff]
        %v6640 = vld [vmem:[#allocation7 + $0x1a0] sm:$0xff]
        %v6641 = vld [vmem:[#allocation7 + $0x1a8] sm:$0xff]
        %v6642 = vld [vmem:[#allocation7 + $0x1b0] sm:$0xff]
        %v6643 = vld [vmem:[#allocation7 + $0x1b8] sm:$0xff]
        %v6644 = vld [vmem:[#allocation7 + $0x1c0] sm:$0xff]
        %v6645 = vld [vmem:[#allocation7 + $0x1c8] sm:$0xff]
        %v6646 = vld [vmem:[#allocation7 + $0x1d0] sm:$0xff]
        %v6647 = vld [vmem:[#allocation7 + $0x1d8] sm:$0xff]
        %v6648 = vld [vmem:[#allocation7 + $0x1e0] sm:$0xff]
        %v6649 = vld [vmem:[#allocation7 + $0x1e8] sm:$0xff]
        %v6650 = vld [vmem:[#allocation7 + $0x1f0] sm:$0xff]
        %v6651 = vld [vmem:[#allocation7 + $0x1f8] sm:$0xff]
        %v6652 = vld [vmem:[#allocation9] sm:$0xff]
        %v6653 = vld [vmem:[#allocation9 + $0x8] sm:$0xff]
        %v6654 = vld [vmem:[#allocation9 + $0x10] sm:$0xff]
        %v6655 = vld [vmem:[#allocation9 + $0x18] sm:$0xff]
        %v6656 = vld [vmem:[#allocation9 + $0x20] sm:$0xff]
        %v6657 = vld [vmem:[#allocation9 + $0x28] sm:$0xff]
        %v6658 = vld [vmem:[#allocation9 + $0x30] sm:$0xff]
        %v6659 = vld [vmem:[#allocation9 + $0x38] sm:$0xff]
        %v6660 = vld [vmem:[#allocation9 + $0x40] sm:$0xff]
        %v6661 = vld [vmem:[#allocation9 + $0x48] sm:$0xff]
        %v6662 = vld [vmem:[#allocation9 + $0x50] sm:$0xff]
        %v6663 = vld [vmem:[#allocation9 + $0x58] sm:$0xff]
        %v6664 = vld [vmem:[#allocation9 + $0x60] sm:$0xff]
        %v6665 = vld [vmem:[#allocation9 + $0x68] sm:$0xff]
        %v6666 = vld [vmem:[#allocation9 + $0x70] sm:$0xff]
        %v6667 = vld [vmem:[#allocation9 + $0x78] sm:$0xff]
        %v6668 = vld [vmem:[#allocation9 + $0x80] sm:$0xff]
        %v6669 = vld [vmem:[#allocation9 + $0x88] sm:$0xff]
        %v6670 = vld [vmem:[#allocation9 + $0x90] sm:$0xff]
        %v6671 = vld [vmem:[#allocation9 + $0x98] sm:$0xff]
        %v6672 = vld [vmem:[#allocation9 + $0xa0] sm:$0xff]
        %v6673 = vld [vmem:[#allocation9 + $0xa8] sm:$0xff]
        %v6674 = vld [vmem:[#allocation9 + $0xb0] sm:$0xff]
        %v6675 = vld [vmem:[#allocation9 + $0xb8] sm:$0xff]
        %v6676 = vld [vmem:[#allocation9 + $0xc0] sm:$0xff]
        %v6677 = vld [vmem:[#allocation9 + $0xc8] sm:$0xff]
        %v6678 = vld [vmem:[#allocation9 + $0xd0] sm:$0xff]
        %v6679 = vld [vmem:[#allocation9 + $0xd8] sm:$0xff]
        %v6680 = vld [vmem:[#allocation9 + $0xe0] sm:$0xff]
        %v6681 = vld [vmem:[#allocation9 + $0xe8] sm:$0xff]
        %v6682 = vld [vmem:[#allocation9 + $0xf0] sm:$0xff]
        %v6683 = vld [vmem:[#allocation9 + $0xf8] sm:$0xff]
        %v6684 = vld [vmem:[#allocation9 + $0x100] sm:$0xff]
        %v6685 = vld [vmem:[#allocation9 + $0x108] sm:$0xff]
        %v6686 = vld [vmem:[#allocation9 + $0x110] sm:$0xff]
        %v6687 = vld [vmem:[#allocation9 + $0x118] sm:$0xff]
        %v6688 = vld [vmem:[#allocation9 + $0x120] sm:$0xff]
        %v6689 = vld [vmem:[#allocation9 + $0x128] sm:$0xff]
        %v6690 = vld [vmem:[#allocation9 + $0x130] sm:$0xff]
        %v6691 = vld [vmem:[#allocation9 + $0x138] sm:$0xff]
        %v6692 = vld [vmem:[#allocation9 + $0x140] sm:$0xff]
        %v6693 = vld [vmem:[#allocation9 + $0x148] sm:$0xff]
        %v6694 = vld [vmem:[#allocation9 + $0x150] sm:$0xff]
        %v6695 = vld [vmem:[#allocation9 + $0x158] sm:$0xff]
        %v6696 = vld [vmem:[#allocation9 + $0x160] sm:$0xff]
        %v6697 = vld [vmem:[#allocation9 + $0x168] sm:$0xff]
        %v6698 = vld [vmem:[#allocation9 + $0x170] sm:$0xff]
        %v6699 = vld [vmem:[#allocation9 + $0x178] sm:$0xff]
        %v6700 = vld [vmem:[#allocation9 + $0x180] sm:$0xff]
        %v6701 = vld [vmem:[#allocation9 + $0x188] sm:$0xff]
        %v6702 = vld [vmem:[#allocation9 + $0x190] sm:$0xff]
        %v6703 = vld [vmem:[#allocation9 + $0x198] sm:$0xff]
        %v6704 = vld [vmem:[#allocation9 + $0x1a0] sm:$0xff]
        %v6705 = vld [vmem:[#allocation9 + $0x1a8] sm:$0xff]
        %v6706 = vld [vmem:[#allocation9 + $0x1b0] sm:$0xff]
        %v6707 = vld [vmem:[#allocation9 + $0x1b8] sm:$0xff]
        %v6708 = vld [vmem:[#allocation9 + $0x1c0] sm:$0xff]
        %v6709 = vld [vmem:[#allocation9 + $0x1c8] sm:$0xff]
        %v6710 = vld [vmem:[#allocation9 + $0x1d0] sm:$0xff]
        %v6711 = vld [vmem:[#allocation9 + $0x1d8] sm:$0xff]
        %v6712 = vld [vmem:[#allocation9 + $0x1e0] sm:$0xff]
        %v6713 = vld [vmem:[#allocation9 + $0x1e8] sm:$0xff]
        %v6714 = vld [vmem:[#allocation9 + $0x1f0] sm:$0xff]
        %v6715 = vld [vmem:[#allocation9 + $0x1f8] sm:$0xff]
        %6716 = vmatprep.subr.mxu0 %v6653
        %6717 = vmatpush1.msra.mxu0 %v6652
        %6718 = vmatprep.subr.mxu0 %v6657
        %6719 = vmatpush1.msra.mxu0 %v6656
        %6720 = vmatprep.subr.mxu0 %v6661
        %6721 = vmatpush1.msra.mxu0 %v6660
        %6722 = vmatprep.subr.mxu0 %v6665
        %6723 = vmatpush1.msra.mxu0 %v6664
        %6724 = vmatprep.subr.mxu0 %v6669
        %6725 = vmatpush1.msra.mxu0 %v6668
        %6726 = vmatprep.subr.mxu0 %v6673
        %6727 = vmatpush1.msra.mxu0 %v6672
        %6728 = vmatprep.subr.mxu0 %v6677
        %6729 = vmatpush1.msra.mxu0 %v6676
        %6730 = vmatprep.subr.mxu0 %v6681
        %6731 = vmatpush1.msra.mxu0 %v6680
        %6732 = vmatprep.subr.mxu0 %v6685
        %6733 = vmatpush1.msra.mxu0 %v6684
        %6734 = vmatprep.subr.mxu0 %v6689
        %6735 = vmatpush1.msra.mxu0 %v6688
        %6736 = vmatprep.subr.mxu0 %v6693
        %6737 = vmatpush1.msra.mxu0 %v6692
        %6738 = vmatprep.subr.mxu0 %v6697
        %6739 = vmatpush1.msra.mxu0 %v6696
        %6740 = vmatprep.subr.mxu0 %v6701
        %6741 = vmatpush1.msra.mxu0 %v6700
        %6742 = vmatprep.subr.mxu0 %v6705
        %6743 = vmatpush1.msra.mxu0 %v6704
        %6744 = vmatprep.subr.mxu0 %v6709
        %6745 = vmatpush1.msra.mxu0 %v6708
        %6746 = vmatprep.subr.mxu0 %v6713
        %6747 = vmatpush1.msra.mxu0 %v6712
        %6748 = vmatprep.subr.mxu0 0.0
        %6749 = vmatpush1.msra.mxu0 0.0
        %6750 = vmatprep.subr.mxu0 0.0
        %6751 = vmatpush1.msra.mxu0 0.0
        %6752 = vmatprep.subr.mxu0 0.0
        %6753 = vmatpush1.msra.mxu0 0.0
        %6754 = vmatprep.subr.mxu0 0.0
        %6755 = vmatpush1.msra.mxu0 0.0
        %6756 = vmatprep.subr.mxu0 0.0
        %6757 = vmatpush1.msra.mxu0 0.0
        %6758 = vmatprep.subr.mxu0 0.0
        %6759 = vmatpush1.msra.mxu0 0.0
        %6760 = vmatprep.subr.mxu0 0.0
        %6761 = vmatpush1.msra.mxu0 0.0
        %6762 = vmatprep.subr.mxu0 0.0
        %6763 = vmatpush1.msra.mxu0 0.0
        %6764 = vmatprep.subr.mxu0 0.0
        %6765 = vmatpush1.msra.mxu0 0.0
        %6766 = vmatprep.subr.mxu0 0.0
        %6767 = vmatpush1.msra.mxu0 0.0
        %6768 = vmatprep.subr.mxu0 0.0
        %6769 = vmatpush1.msra.mxu0 0.0
        %6770 = vmatprep.subr.mxu0 0.0
        %6771 = vmatpush1.msra.mxu0 0.0
        %6772 = vmatprep.subr.mxu0 0.0
        %6773 = vmatpush1.msra.mxu0 0.0
        %6774 = vmatprep.subr.mxu0 0.0
        %6775 = vmatpush1.msra.mxu0 0.0
        %6776 = vmatprep.subr.mxu0 0.0
        %6777 = vmatpush1.msra.mxu0 0.0
        %6778 = vmatprep.subr.mxu0 0.0
        %6779 = vmatpush1.msra.mxu0 0.0
        %6780 = vmatprep.mubr.f32.mxu0 0.0
        %6781 = vmatmul.mubr.f32.gmra.mrb[0].mxu0 %v6586
        %v6782 = vpop.f32.mrb[0].mxu0
        %v6783 = vadd.f32 0.0, %v6782
        %v6784 = vpop.f32.mrb[0].mxu0
        %v6785 = vadd.f32 0.0, %v6784
        %6786 = vdwg.mxu0
        %6787 = vmatprep.subr.mxu0 %v6655
        %6788 = vmatpush1.msra.mxu0 %v6654
        %6789 = vmatprep.subr.mxu0 %v6659
        %6790 = vmatpush1.msra.mxu0 %v6658
        %6791 = vmatprep.subr.mxu0 %v6663
        %6792 = vmatpush1.msra.mxu0 %v6662
        %6793 = vmatprep.subr.mxu0 %v6667
        %6794 = vmatpush1.msra.mxu0 %v6666
        %6795 = vmatprep.subr.mxu0 %v6671
        %6796 = vmatpush1.msra.mxu0 %v6670
        %6797 = vmatprep.subr.mxu0 %v6675
        %6798 = vmatpush1.msra.mxu0 %v6674
        %6799 = vmatprep.subr.mxu0 %v6679
        %6800 = vmatpush1.msra.mxu0 %v6678
        %6801 = vmatprep.subr.mxu0 %v6683
        %6802 = vmatpush1.msra.mxu0 %v6682
        %6803 = vmatprep.subr.mxu0 %v6687
        %6804 = vmatpush1.msra.mxu0 %v6686
        %6805 = vmatprep.subr.mxu0 %v6691
        %6806 = vmatpush1.msra.mxu0 %v6690
        %6807 = vmatprep.subr.mxu0 %v6695
        %6808 = vmatpush1.msra.mxu0 %v6694
        %6809 = vmatprep.subr.mxu0 %v6699
        %6810 = vmatpush1.msra.mxu0 %v6698
        %6811 = vmatprep.subr.mxu0 %v6703
        %6812 = vmatpush1.msra.mxu0 %v6702
        %6813 = vmatprep.subr.mxu0 %v6707
        %6814 = vmatpush1.msra.mxu0 %v6706
        %6815 = vmatprep.subr.mxu0 %v6711
        %6816 = vmatpush1.msra.mxu0 %v6710
        %6817 = vmatprep.subr.mxu0 %v6715
        %6818 = vmatpush1.msra.mxu0 %v6714
        %6819 = vmatprep.subr.mxu0 0.0
        %6820 = vmatpush1.msra.mxu0 0.0
        %6821 = vmatprep.subr.mxu0 0.0
        %6822 = vmatpush1.msra.mxu0 0.0
        %6823 = vmatprep.subr.mxu0 0.0
        %6824 = vmatpush1.msra.mxu0 0.0
        %6825 = vmatprep.subr.mxu0 0.0
        %6826 = vmatpush1.msra.mxu0 0.0
        %6827 = vmatprep.subr.mxu0 0.0
        %6828 = vmatpush1.msra.mxu0 0.0
        %6829 = vmatprep.subr.mxu0 0.0
        %6830 = vmatpush1.msra.mxu0 0.0
        %6831 = vmatprep.subr.mxu0 0.0
        %6832 = vmatpush1.msra.mxu0 0.0
        %6833 = vmatprep.subr.mxu0 0.0
        %6834 = vmatpush1.msra.mxu0 0.0
        %6835 = vmatprep.subr.mxu0 0.0
        %6836 = vmatpush1.msra.mxu0 0.0
        %6837 = vmatprep.subr.mxu0 0.0
        %6838 = vmatpush1.msra.mxu0 0.0
        %6839 = vmatprep.subr.mxu0 0.0
        %6840 = vmatpush1.msra.mxu0 0.0
        %6841 = vmatprep.subr.mxu0 0.0
        %6842 = vmatpush1.msra.mxu0 0.0
        %6843 = vmatprep.subr.mxu0 0.0
        %6844 = vmatpush1.msra.mxu0 0.0
        %6845 = vmatprep.subr.mxu0 0.0
        %6846 = vmatpush1.msra.mxu0 0.0
        %6847 = vmatprep.subr.mxu0 0.0
        %6848 = vmatpush1.msra.mxu0 0.0
        %6849 = vmatprep.subr.mxu0 0.0
        %6850 = vmatpush1.msra.mxu0 0.0
        %6851 = vmatprep.mubr.f32.mxu0 0.0
        %6852 = vmatmul.mubr.f32.gmra.mrb[0].mxu0 %v6586
        %v6853 = vpop.f32.mrb[0].mxu0
        %v6854 = vadd.f32 0.0, %v6853
        %v6855 = vpop.f32.mrb[0].mxu0
        %v6856 = vadd.f32 0.0, %v6855
        %6857 = vdwg.mxu0
        %6858 = vmatprep.subr.mxu0 %v6589
        %6859 = vmatpush1.msra.mxu0 %v6588
        %6860 = vmatprep.subr.mxu0 %v6593
        %6861 = vmatpush1.msra.mxu0 %v6592
        %6862 = vmatprep.subr.mxu0 %v6597
        %6863 = vmatpush1.msra.mxu0 %v6596
        %6864 = vmatprep.subr.mxu0 %v6601
        %6865 = vmatpush1.msra.mxu0 %v6600
        %6866 = vmatprep.subr.mxu0 %v6605
        %6867 = vmatpush1.msra.mxu0 %v6604
        %6868 = vmatprep.subr.mxu0 %v6609
        %6869 = vmatpush1.msra.mxu0 %v6608
        %6870 = vmatprep.subr.mxu0 %v6613
        %6871 = vmatpush1.msra.mxu0 %v6612
        %6872 = vmatprep.subr.mxu0 %v6617
        %6873 = vmatpush1.msra.mxu0 %v6616
        %6874 = vmatprep.subr.mxu0 %v6621
        %6875 = vmatpush1.msra.mxu0 %v6620
        %6876 = vmatprep.subr.mxu0 %v6625
        %6877 = vmatpush1.msra.mxu0 %v6624
        %6878 = vmatprep.subr.mxu0 %v6629
        %6879 = vmatpush1.msra.mxu0 %v6628
        %6880 = vmatprep.subr.mxu0 %v6633
        %6881 = vmatpush1.msra.mxu0 %v6632
        %6882 = vmatprep.subr.mxu0 %v6637
        %6883 = vmatpush1.msra.mxu0 %v6636
        %6884 = vmatprep.subr.mxu0 %v6641
        %6885 = vmatpush1.msra.mxu0 %v6640
        %6886 = vmatprep.subr.mxu0 %v6645
        %6887 = vmatpush1.msra.mxu0 %v6644
        %6888 = vmatprep.subr.mxu0 %v6649
        %6889 = vmatpush1.msra.mxu0 %v6648
        %6890 = vmatprep.subr.mxu0 0.0
        %6891 = vmatpush1.msra.mxu0 0.0
        %6892 = vmatprep.subr.mxu0 0.0
        %6893 = vmatpush1.msra.mxu0 0.0
        %6894 = vmatprep.subr.mxu0 0.0
        %6895 = vmatpush1.msra.mxu0 0.0
        %6896 = vmatprep.subr.mxu0 0.0
        %6897 = vmatpush1.msra.mxu0 0.0
        %6898 = vmatprep.subr.mxu0 0.0
        %6899 = vmatpush1.msra.mxu0 0.0
        %6900 = vmatprep.subr.mxu0 0.0
        %6901 = vmatpush1.msra.mxu0 0.0
        %6902 = vmatprep.subr.mxu0 0.0
        %6903 = vmatpush1.msra.mxu0 0.0
        %6904 = vmatprep.subr.mxu0 0.0
        %6905 = vmatpush1.msra.mxu0 0.0
        %6906 = vmatprep.subr.mxu0 0.0
        %6907 = vmatpush1.msra.mxu0 0.0
        %6908 = vmatprep.subr.mxu0 0.0
        %6909 = vmatpush1.msra.mxu0 0.0
        %6910 = vmatprep.subr.mxu0 0.0
        %6911 = vmatpush1.msra.mxu0 0.0
        %6912 = vmatprep.subr.mxu0 0.0
        %6913 = vmatpush1.msra.mxu0 0.0
        %6914 = vmatprep.subr.mxu0 0.0
        %6915 = vmatpush1.msra.mxu0 0.0
        %6916 = vmatprep.subr.mxu0 0.0
        %6917 = vmatpush1.msra.mxu0 0.0
        %6918 = vmatprep.subr.mxu0 0.0
        %6919 = vmatpush1.msra.mxu0 0.0
        %6920 = vmatprep.subr.mxu0 0.0
        %6921 = vmatpush1.msra.mxu0 0.0
        %6922 = vmatprep.mubr.f32.mxu0 0.0
        %6923 = vmatmul.mubr.f32.gmra.mrb[0].mxu0 %v6585
        %v6924 = vpop.f32.mrb[0].mxu0
        %v6925 = vadd.f32 %v6783, %v6924
        %v6926 = vpop.f32.mrb[0].mxu0
        %v6927 = vadd.f32 %v6785, %v6926
        %6928 = vdwg.mxu0
        %6929 = vmatprep.subr.mxu0 %v6591
        %6930 = vmatpush1.msra.mxu0 %v6590
        %6931 = vmatprep.subr.mxu0 %v6595
        %6932 = vmatpush1.msra.mxu0 %v6594
        %6933 = vmatprep.subr.mxu0 %v6599
        %6934 = vmatpush1.msra.mxu0 %v6598
        %6935 = vmatprep.subr.mxu0 %v6603
        %6936 = vmatpush1.msra.mxu0 %v6602
        %6937 = vmatprep.subr.mxu0 %v6607
        %6938 = vmatpush1.msra.mxu0 %v6606
        %6939 = vmatprep.subr.mxu0 %v6611
        %6940 = vmatpush1.msra.mxu0 %v6610
        %6941 = vmatprep.subr.mxu0 %v6615
        %6942 = vmatpush1.msra.mxu0 %v6614
        %6943 = vmatprep.subr.mxu0 %v6619
        %6944 = vmatpush1.msra.mxu0 %v6618
        %6945 = vmatprep.subr.mxu0 %v6623
        %6946 = vmatpush1.msra.mxu0 %v6622
        %6947 = vmatprep.subr.mxu0 %v6627
        %6948 = vmatpush1.msra.mxu0 %v6626
        %6949 = vmatprep.subr.mxu0 %v6631
        %6950 = vmatpush1.msra.mxu0 %v6630
        %6951 = vmatprep.subr.mxu0 %v6635
        %6952 = vmatpush1.msra.mxu0 %v6634
        %6953 = vmatprep.subr.mxu0 %v6639
        %6954 = vmatpush1.msra.mxu0 %v6638
        %6955 = vmatprep.subr.mxu0 %v6643
        %6956 = vmatpush1.msra.mxu0 %v6642
        %6957 = vmatprep.subr.mxu0 %v6647
        %6958 = vmatpush1.msra.mxu0 %v6646
        %6959 = vmatprep.subr.mxu0 %v6651
        %6960 = vmatpush1.msra.mxu0 %v6650
        %6961 = vmatprep.subr.mxu0 0.0
        %6962 = vmatpush1.msra.mxu0 0.0
        %6963 = vmatprep.subr.mxu0 0.0
        %6964 = vmatpush1.msra.mxu0 0.0
        %6965 = vmatprep.subr.mxu0 0.0
        %6966 = vmatpush1.msra.mxu0 0.0
        %6967 = vmatprep.subr.mxu0 0.0
        %6968 = vmatpush1.msra.mxu0 0.0
        %6969 = vmatprep.subr.mxu0 0.0
        %6970 = vmatpush1.msra.mxu0 0.0
        %6971 = vmatprep.subr.mxu0 0.0
        %6972 = vmatpush1.msra.mxu0 0.0
        %6973 = vmatprep.subr.mxu0 0.0
        %6974 = vmatpush1.msra.mxu0 0.0
        %6975 = vmatprep.subr.mxu0 0.0
        %6976 = vmatpush1.msra.mxu0 0.0
        %6977 = vmatprep.subr.mxu0 0.0
        %6978 = vmatpush1.msra.mxu0 0.0
        %6979 = vmatprep.subr.mxu0 0.0
        %6980 = vmatpush1.msra.mxu0 0.0
        %6981 = vmatprep.subr.mxu0 0.0
        %6982 = vmatpush1.msra.mxu0 0.0
        %6983 = vmatprep.subr.mxu0 0.0
        %6984 = vmatpush1.msra.mxu0 0.0
        %6985 = vmatprep.subr.mxu0 0.0
        %6986 = vmatpush1.msra.mxu0 0.0
        %6987 = vmatprep.subr.mxu0 0.0
        %6988 = vmatpush1.msra.mxu0 0.0
        %6989 = vmatprep.subr.mxu0 0.0
        %6990 = vmatpush1.msra.mxu0 0.0
        %6991 = vmatprep.subr.mxu0 0.0
        %6992 = vmatpush1.msra.mxu0 0.0
        %6993 = vmatprep.mubr.f32.mxu0 0.0
        %6994 = vmatmul.mubr.f32.gmra.mrb[0].mxu0 %v6585
        %v6995 = vpop.f32.mrb[0].mxu0
        %v6996 = vadd.f32 %v6854, %v6995
        %v6997 = vpop.f32.mrb[0].mxu0
        %v6998 = vadd.f32 %v6856, %v6997
        %6999 = vdwg.mxu0
        %v7000 = vxor.u32 %v6925, 2147483648
        %v7001 = vmul.f32 %v7000, 1.442695
        %v7002 = vpow.pop %v7001
        %v7003 = vadd.f32 %v7002, 1.0
        %v7004 = vrcp.pop %v7003
        %v7005 = vmul.f32 1.0, %v7004
        %v7006 = vxor.u32 %v6927, 2147483648
        %v7007 = vmul.f32 %v7006, 1.442695
        %v7008 = vpow.pop %v7007
        %v7009 = vadd.f32 %v7008, 1.0
        %v7010 = vrcp.pop %v7009
        %v7011 = vmul.f32 1.0, %v7010
        %v7012 = vtanh.pop %v6996
        %v7013 = vxor.u32 %v6998, 2147483648
        %v7014 = vmul.f32 %v7013, 1.442695
        %v7015 = vpow.pop %v7014
        %v7016 = vadd.f32 %v7015, 1.0
        %v7017 = vrcp.pop %v7016
        %v7018 = vmul.f32 1.0, %v7017
        %v7019 = vmul.f32 %v7011, %v6587
        %v7020 = vmul.f32 %v7005, %v7012
        %v7021 = vadd.f32 %v7019, %v7020
        %v7022 = vtanh.pop %v7021
        %v7023 = vmul.f32 %v7018, %v7022
        %7024 = vst [vmem:[#allocation2] sm:$0xff] %v7023
        %7025 = vst [vmem:[#allocation4] sm:$0xff] %v7021
        %v7026 = vld [vmem:[#allocation3] sm:$0xff]
        %v7027 = vld [vmem:[#allocation5] sm:$0xff]
        %v7028 = vld [vmem:[#allocation11] sm:$0xff]
        %v7029 = vld [vmem:[#allocation11 + $0x8] sm:$0xff]
        %v7030 = vld [vmem:[#allocation11 + $0x10] sm:$0xff]
        %v7031 = vld [vmem:[#allocation11 + $0x18] sm:$0xff]
        %v7032 = vld [vmem:[#allocation11 + $0x20] sm:$0xff]
        %v7033 = vld [vmem:[#allocation11 + $0x28] sm:$0xff]
        %v7034 = vld [vmem:[#allocation11 + $0x30] sm:$0xff]
        %v7035 = vld [vmem:[#allocation11 + $0x38] sm:$0xff]
        %v7036 = vld [vmem:[#allocation11 + $0x40] sm:$0xff]
        %v7037 = vld [vmem:[#allocation11 + $0x48] sm:$0xff]
        %v7038 = vld [vmem:[#allocation11 + $0x50] sm:$0xff]
        %v7039 = vld [vmem:[#allocation11 + $0x58] sm:$0xff]
        %v7040 = vld [vmem:[#allocation11 + $0x60] sm:$0xff]
        %v7041 = vld [vmem:[#allocation11 + $0x68] sm:$0xff]
        %v7042 = vld [vmem:[#allocation11 + $0x70] sm:$0xff]
        %v7043 = vld [vmem:[#allocation11 + $0x78] sm:$0xff]
        %v7044 = vld [vmem:[#allocation11 + $0x80] sm:$0xff]
        %v7045 = vld [vmem:[#allocation11 + $0x88] sm:$0xff]
        %v7046 = vld [vmem:[#allocation11 + $0x90] sm:$0xff]
        %v7047 = vld [vmem:[#allocation11 + $0x98] sm:$0xff]
        %v7048 = vld [vmem:[#allocation11 + $0xa0] sm:$0xff]
        %v7049 = vld [vmem:[#allocation11 + $0xa8] sm:$0xff]
        %v7050 = vld [vmem:[#allocation11 + $0xb0] sm:$0xff]
        %v7051 = vld [vmem:[#allocation11 + $0xb8] sm:$0xff]
        %v7052 = vld [vmem:[#allocation11 + $0xc0] sm:$0xff]
        %v7053 = vld [vmem:[#allocation11 + $0xc8] sm:$0xff]
        %v7054 = vld [vmem:[#allocation11 + $0xd0] sm:$0xff]
        %v7055 = vld [vmem:[#allocation11 + $0xd8] sm:$0xff]
        %v7056 = vld [vmem:[#allocation11 + $0xe0] sm:$0xff]
        %v7057 = vld [vmem:[#allocation11 + $0xe8] sm:$0xff]
        %v7058 = vld [vmem:[#allocation11 + $0xf0] sm:$0xff]
        %v7059 = vld [vmem:[#allocation11 + $0xf8] sm:$0xff]
        %v7060 = vld [vmem:[#allocation11 + $0x100] sm:$0xff]
        %v7061 = vld [vmem:[#allocation11 + $0x108] sm:$0xff]
        %v7062 = vld [vmem:[#allocation11 + $0x110] sm:$0xff]
        %v7063 = vld [vmem:[#allocation11 + $0x118] sm:$0xff]
        %v7064 = vld [vmem:[#allocation11 + $0x120] sm:$0xff]
        %v7065 = vld [vmem:[#allocation11 + $0x128] sm:$0xff]
        %v7066 = vld [vmem:[#allocation11 + $0x130] sm:$0xff]
        %v7067 = vld [vmem:[#allocation11 + $0x138] sm:$0xff]
        %v7068 = vld [vmem:[#allocation11 + $0x140] sm:$0xff]
        %v7069 = vld [vmem:[#allocation11 + $0x148] sm:$0xff]
        %v7070 = vld [vmem:[#allocation11 + $0x150] sm:$0xff]
        %v7071 = vld [vmem:[#allocation11 + $0x158] sm:$0xff]
        %v7072 = vld [vmem:[#allocation11 + $0x160] sm:$0xff]
        %v7073 = vld [vmem:[#allocation11 + $0x168] sm:$0xff]
        %v7074 = vld [vmem:[#allocation11 + $0x170] sm:$0xff]
        %v7075 = vld [vmem:[#allocation11 + $0x178] sm:$0xff]
        %v7076 = vld [vmem:[#allocation11 + $0x180] sm:$0xff]
        %v7077 = vld [vmem:[#allocation11 + $0x188] sm:$0xff]
        %v7078 = vld [vmem:[#allocation11 + $0x190] sm:$0xff]
        %v7079 = vld [vmem:[#allocation11 + $0x198] sm:$0xff]
        %v7080 = vld [vmem:[#allocation11 + $0x1a0] sm:$0xff]
        %v7081 = vld [vmem:[#allocation11 + $0x1a8] sm:$0xff]
        %v7082 = vld [vmem:[#allocation11 + $0x1b0] sm:$0xff]
        %v7083 = vld [vmem:[#allocation11 + $0x1b8] sm:$0xff]
        %v7084 = vld [vmem:[#allocation11 + $0x1c0] sm:$0xff]
        %v7085 = vld [vmem:[#allocation11 + $0x1c8] sm:$0xff]
        %v7086 = vld [vmem:[#allocation11 + $0x1d0] sm:$0xff]
        %v7087 = vld [vmem:[#allocation11 + $0x1d8] sm:$0xff]
        %v7088 = vld [vmem:[#allocation11 + $0x1e0] sm:$0xff]
        %v7089 = vld [vmem:[#allocation11 + $0x1e8] sm:$0xff]
        %v7090 = vld [vmem:[#allocation11 + $0x1f0] sm:$0xff]
        %v7091 = vld [vmem:[#allocation11 + $0x1f8] sm:$0xff]
        %v7092 = vld [vmem:[#allocation12] sm:$0xff]
        %v7093 = vld [vmem:[#allocation12 + $0x8] sm:$0xff]
        %v7094 = vld [vmem:[#allocation12 + $0x10] sm:$0xff]
        %v7095 = vld [vmem:[#allocation12 + $0x18] sm:$0xff]
        %v7096 = vld [vmem:[#allocation12 + $0x20] sm:$0xff]
        %v7097 = vld [vmem:[#allocation12 + $0x28] sm:$0xff]
        %v7098 = vld [vmem:[#allocation12 + $0x30] sm:$0xff]
        %v7099 = vld [vmem:[#allocation12 + $0x38] sm:$0xff]
        %v7100 = vld [vmem:[#allocation12 + $0x40] sm:$0xff]
        %v7101 = vld [vmem:[#allocation12 + $0x48] sm:$0xff]
        %v7102 = vld [vmem:[#allocation12 + $0x50] sm:$0xff]
        %v7103 = vld [vmem:[#allocation12 + $0x58] sm:$0xff]
        %v7104 = vld [vmem:[#allocation12 + $0x60] sm:$0xff]
        %v7105 = vld [vmem:[#allocation12 + $0x68] sm:$0xff]
        %v7106 = vld [vmem:[#allocation12 + $0x70] sm:$0xff]
        %v7107 = vld [vmem:[#allocation12 + $0x78] sm:$0xff]
        %v7108 = vld [vmem:[#allocation12 + $0x80] sm:$0xff]
        %v7109 = vld [vmem:[#allocation12 + $0x88] sm:$0xff]
        %v7110 = vld [vmem:[#allocation12 + $0x90] sm:$0xff]
        %v7111 = vld [vmem:[#allocation12 + $0x98] sm:$0xff]
        %v7112 = vld [vmem:[#allocation12 + $0xa0] sm:$0xff]
        %v7113 = vld [vmem:[#allocation12 + $0xa8] sm:$0xff]
        %v7114 = vld [vmem:[#allocation12 + $0xb0] sm:$0xff]
        %v7115 = vld [vmem:[#allocation12 + $0xb8] sm:$0xff]
        %v7116 = vld [vmem:[#allocation12 + $0xc0] sm:$0xff]
        %v7117 = vld [vmem:[#allocation12 + $0xc8] sm:$0xff]
        %v7118 = vld [vmem:[#allocation12 + $0xd0] sm:$0xff]
        %v7119 = vld [vmem:[#allocation12 + $0xd8] sm:$0xff]
        %v7120 = vld [vmem:[#allocation12 + $0xe0] sm:$0xff]
        %v7121 = vld [vmem:[#allocation12 + $0xe8] sm:$0xff]
        %v7122 = vld [vmem:[#allocation12 + $0xf0] sm:$0xff]
        %v7123 = vld [vmem:[#allocation12 + $0xf8] sm:$0xff]
        %v7124 = vld [vmem:[#allocation12 + $0x100] sm:$0xff]
        %v7125 = vld [vmem:[#allocation12 + $0x108] sm:$0xff]
        %v7126 = vld [vmem:[#allocation12 + $0x110] sm:$0xff]
        %v7127 = vld [vmem:[#allocation12 + $0x118] sm:$0xff]
        %v7128 = vld [vmem:[#allocation12 + $0x120] sm:$0xff]
        %v7129 = vld [vmem:[#allocation12 + $0x128] sm:$0xff]
        %v7130 = vld [vmem:[#allocation12 + $0x130] sm:$0xff]
        %v7131 = vld [vmem:[#allocation12 + $0x138] sm:$0xff]
        %v7132 = vld [vmem:[#allocation12 + $0x140] sm:$0xff]
        %v7133 = vld [vmem:[#allocation12 + $0x148] sm:$0xff]
        %v7134 = vld [vmem:[#allocation12 + $0x150] sm:$0xff]
        %v7135 = vld [vmem:[#allocation12 + $0x158] sm:$0xff]
        %v7136 = vld [vmem:[#allocation12 + $0x160] sm:$0xff]
        %v7137 = vld [vmem:[#allocation12 + $0x168] sm:$0xff]
        %v7138 = vld [vmem:[#allocation12 + $0x170] sm:$0xff]
        %v7139 = vld [vmem:[#allocation12 + $0x178] sm:$0xff]
        %v7140 = vld [vmem:[#allocation12 + $0x180] sm:$0xff]
        %v7141 = vld [vmem:[#allocation12 + $0x188] sm:$0xff]
        %v7142 = vld [vmem:[#allocation12 + $0x190] sm:$0xff]
        %v7143 = vld [vmem:[#allocation12 + $0x198] sm:$0xff]
        %v7144 = vld [vmem:[#allocation12 + $0x1a0] sm:$0xff]
        %v7145 = vld [vmem:[#allocation12 + $0x1a8] sm:$0xff]
        %v7146 = vld [vmem:[#allocation12 + $0x1b0] sm:$0xff]
        %v7147 = vld [vmem:[#allocation12 + $0x1b8] sm:$0xff]
        %v7148 = vld [vmem:[#allocation12 + $0x1c0] sm:$0xff]
        %v7149 = vld [vmem:[#allocation12 + $0x1c8] sm:$0xff]
        %v7150 = vld [vmem:[#allocation12 + $0x1d0] sm:$0xff]
        %v7151 = vld [vmem:[#allocation12 + $0x1d8] sm:$0xff]
        %v7152 = vld [vmem:[#allocation12 + $0x1e0] sm:$0xff]
        %v7153 = vld [vmem:[#allocation12 + $0x1e8] sm:$0xff]
        %v7154 = vld [vmem:[#allocation12 + $0x1f0] sm:$0xff]
        %v7155 = vld [vmem:[#allocation12 + $0x1f8] sm:$0xff]
        %7156 = vmatprep.subr.mxu0 %v7093
        %7157 = vmatpush1.msra.mxu0 %v7092
        %7158 = vmatprep.subr.mxu0 %v7097
        %7159 = vmatpush1.msra.mxu0 %v7096
        %7160 = vmatprep.subr.mxu0 %v7101
        %7161 = vmatpush1.msra.mxu0 %v7100
        %7162 = vmatprep.subr.mxu0 %v7105
        %7163 = vmatpush1.msra.mxu0 %v7104
        %7164 = vmatprep.subr.mxu0 %v7109
        %7165 = vmatpush1.msra.mxu0 %v7108
        %7166 = vmatprep.subr.mxu0 %v7113
        %7167 = vmatpush1.msra.mxu0 %v7112
        %7168 = vmatprep.subr.mxu0 %v7117
        %7169 = vmatpush1.msra.mxu0 %v7116
        %7170 = vmatprep.subr.mxu0 %v7121
        %7171 = vmatpush1.msra.mxu0 %v7120
        %7172 = vmatprep.subr.mxu0 %v7125
        %7173 = vmatpush1.msra.mxu0 %v7124
        %7174 = vmatprep.subr.mxu0 %v7129
        %7175 = vmatpush1.msra.mxu0 %v7128
        %7176 = vmatprep.subr.mxu0 %v7133
        %7177 = vmatpush1.msra.mxu0 %v7132
        %7178 = vmatprep.subr.mxu0 %v7137
        %7179 = vmatpush1.msra.mxu0 %v7136
        %7180 = vmatprep.subr.mxu0 %v7141
        %7181 = vmatpush1.msra.mxu0 %v7140
        %7182 = vmatprep.subr.mxu0 %v7145
        %7183 = vmatpush1.msra.mxu0 %v7144
        %7184 = vmatprep.subr.mxu0 %v7149
        %7185 = vmatpush1.msra.mxu0 %v7148
        %7186 = vmatprep.subr.mxu0 %v7153
        %7187 = vmatpush1.msra.mxu0 %v7152
        %7188 = vmatprep.subr.mxu0 0.0
        %7189 = vmatpush1.msra.mxu0 0.0
        %7190 = vmatprep.subr.mxu0 0.0
        %7191 = vmatpush1.msra.mxu0 0.0
        %7192 = vmatprep.subr.mxu0 0.0
        %7193 = vmatpush1.msra.mxu0 0.0
        %7194 = vmatprep.subr.mxu0 0.0
        %7195 = vmatpush1.msra.mxu0 0.0
        %7196 = vmatprep.subr.mxu0 0.0
        %7197 = vmatpush1.msra.mxu0 0.0
        %7198 = vmatprep.subr.mxu0 0.0
        %7199 = vmatpush1.msra.mxu0 0.0
        %7200 = vmatprep.subr.mxu0 0.0
        %7201 = vmatpush1.msra.mxu0 0.0
        %7202 = vmatprep.subr.mxu0 0.0
        %7203 = vmatpush1.msra.mxu0 0.0
        %7204 = vmatprep.subr.mxu0 0.0
        %7205 = vmatpush1.msra.mxu0 0.0
        %7206 = vmatprep.subr.mxu0 0.0
        %7207 = vmatpush1.msra.mxu0 0.0
        %7208 = vmatprep.subr.mxu0 0.0
        %7209 = vmatpush1.msra.mxu0 0.0
        %7210 = vmatprep.subr.mxu0 0.0
        %7211 = vmatpush1.msra.mxu0 0.0
        %7212 = vmatprep.subr.mxu0 0.0
        %7213 = vmatpush1.msra.mxu0 0.0
        %7214 = vmatprep.subr.mxu0 0.0
        %7215 = vmatpush1.msra.mxu0 0.0
        %7216 = vmatprep.subr.mxu0 0.0
        %7217 = vmatpush1.msra.mxu0 0.0
        %7218 = vmatprep.subr.mxu0 0.0
        %7219 = vmatpush1.msra.mxu0 0.0
        %7220 = vmatprep.mubr.f32.mxu0 0.0
        %7221 = vmatmul.mubr.f32.gmra.mrb[0].mxu0 %v7026
        %v7222 = vpop.f32.mrb[0].mxu0
        %v7223 = vadd.f32 0.0, %v7222
        %v7224 = vpop.f32.mrb[0].mxu0
        %v7225 = vadd.f32 0.0, %v7224
        %7226 = vdwg.mxu0
        %7227 = vmatprep.subr.mxu0 %v7095
        %7228 = vmatpush1.msra.mxu0 %v7094
        %7229 = vmatprep.subr.mxu0 %v7099
        %7230 = vmatpush1.msra.mxu0 %v7098
        %7231 = vmatprep.subr.mxu0 %v7103
        %7232 = vmatpush1.msra.mxu0 %v7102
        %7233 = vmatprep.subr.mxu0 %v7107
        %7234 = vmatpush1.msra.mxu0 %v7106
        %7235 = vmatprep.subr.mxu0 %v7111
        %7236 = vmatpush1.msra.mxu0 %v7110
        %7237 = vmatprep.subr.mxu0 %v7115
        %7238 = vmatpush1.msra.mxu0 %v7114
        %7239 = vmatprep.subr.mxu0 %v7119
        %7240 = vmatpush1.msra.mxu0 %v7118
        %7241 = vmatprep.subr.mxu0 %v7123
        %7242 = vmatpush1.msra.mxu0 %v7122
        %7243 = vmatprep.subr.mxu0 %v7127
        %7244 = vmatpush1.msra.mxu0 %v7126
        %7245 = vmatprep.subr.mxu0 %v7131
        %7246 = vmatpush1.msra.mxu0 %v7130
        %7247 = vmatprep.subr.mxu0 %v7135
        %7248 = vmatpush1.msra.mxu0 %v7134
        %7249 = vmatprep.subr.mxu0 %v7139
        %7250 = vmatpush1.msra.mxu0 %v7138
        %7251 = vmatprep.subr.mxu0 %v7143
        %7252 = vmatpush1.msra.mxu0 %v7142
        %7253 = vmatprep.subr.mxu0 %v7147
        %7254 = vmatpush1.msra.mxu0 %v7146
        %7255 = vmatprep.subr.mxu0 %v7151
        %7256 = vmatpush1.msra.mxu0 %v7150
        %7257 = vmatprep.subr.mxu0 %v7155
        %7258 = vmatpush1.msra.mxu0 %v7154
        %7259 = vmatprep.subr.mxu0 0.0
        %7260 = vmatpush1.msra.mxu0 0.0
        %7261 = vmatprep.subr.mxu0 0.0
        %7262 = vmatpush1.msra.mxu0 0.0
        %7263 = vmatprep.subr.mxu0 0.0
        %7264 = vmatpush1.msra.mxu0 0.0
        %7265 = vmatprep.subr.mxu0 0.0
        %7266 = vmatpush1.msra.mxu0 0.0
        %7267 = vmatprep.subr.mxu0 0.0
        %7268 = vmatpush1.msra.mxu0 0.0
        %7269 = vmatprep.subr.mxu0 0.0
        %7270 = vmatpush1.msra.mxu0 0.0
        %7271 = vmatprep.subr.mxu0 0.0
        %7272 = vmatpush1.msra.mxu0 0.0
        %7273 = vmatprep.subr.mxu0 0.0
        %7274 = vmatpush1.msra.mxu0 0.0
        %7275 = vmatprep.subr.mxu0 0.0
        %7276 = vmatpush1.msra.mxu0 0.0
        %7277 = vmatprep.subr.mxu0 0.0
        %7278 = vmatpush1.msra.mxu0 0.0
        %7279 = vmatprep.subr.mxu0 0.0
        %7280 = vmatpush1.msra.mxu0 0.0
        %7281 = vmatprep.subr.mxu0 0.0
        %7282 = vmatpush1.msra.mxu0 0.0
        %7283 = vmatprep.subr.mxu0 0.0
        %7284 = vmatpush1.msra.mxu0 0.0
        %7285 = vmatprep.subr.mxu0 0.0
        %7286 = vmatpush1.msra.mxu0 0.0
        %7287 = vmatprep.subr.mxu0 0.0
        %7288 = vmatpush1.msra.mxu0 0.0
        %7289 = vmatprep.subr.mxu0 0.0
        %7290 = vmatpush1.msra.mxu0 0.0
        %7291 = vmatprep.mubr.f32.mxu0 0.0
        %7292 = vmatmul.mubr.f32.gmra.mrb[0].mxu0 %v7026
        %v7293 = vpop.f32.mrb[0].mxu0
        %v7294 = vadd.f32 0.0, %v7293
        %v7295 = vpop.f32.mrb[0].mxu0
        %v7296 = vadd.f32 0.0, %v7295
        %7297 = vdwg.mxu0
        %7298 = vmatprep.subr.mxu0 %v7029
        %7299 = vmatpush1.msra.mxu0 %v7028
        %7300 = vmatprep.subr.mxu0 %v7033
        %7301 = vmatpush1.msra.mxu0 %v7032
        %7302 = vmatprep.subr.mxu0 %v7037
        %7303 = vmatpush1.msra.mxu0 %v7036
        %7304 = vmatprep.subr.mxu0 %v7041
        %7305 = vmatpush1.msra.mxu0 %v7040
        %7306 = vmatprep.subr.mxu0 %v7045
        %7307 = vmatpush1.msra.mxu0 %v7044
        %7308 = vmatprep.subr.mxu0 %v7049
        %7309 = vmatpush1.msra.mxu0 %v7048
        %7310 = vmatprep.subr.mxu0 %v7053
        %7311 = vmatpush1.msra.mxu0 %v7052
        %7312 = vmatprep.subr.mxu0 %v7057
        %7313 = vmatpush1.msra.mxu0 %v7056
        %7314 = vmatprep.subr.mxu0 %v7061
        %7315 = vmatpush1.msra.mxu0 %v7060
        %7316 = vmatprep.subr.mxu0 %v7065
        %7317 = vmatpush1.msra.mxu0 %v7064
        %7318 = vmatprep.subr.mxu0 %v7069
        %7319 = vmatpush1.msra.mxu0 %v7068
        %7320 = vmatprep.subr.mxu0 %v7073
        %7321 = vmatpush1.msra.mxu0 %v7072
        %7322 = vmatprep.subr.mxu0 %v7077
        %7323 = vmatpush1.msra.mxu0 %v7076
        %7324 = vmatprep.subr.mxu0 %v7081
        %7325 = vmatpush1.msra.mxu0 %v7080
        %7326 = vmatprep.subr.mxu0 %v7085
        %7327 = vmatpush1.msra.mxu0 %v7084
        %7328 = vmatprep.subr.mxu0 %v7089
        %7329 = vmatpush1.msra.mxu0 %v7088
        %7330 = vmatprep.subr.mxu0 0.0
        %7331 = vmatpush1.msra.mxu0 0.0
        %7332 = vmatprep.subr.mxu0 0.0
        %7333 = vmatpush1.msra.mxu0 0.0
        %7334 = vmatprep.subr.mxu0 0.0
        %7335 = vmatpush1.msra.mxu0 0.0
        %7336 = vmatprep.subr.mxu0 0.0
        %7337 = vmatpush1.msra.mxu0 0.0
        %7338 = vmatprep.subr.mxu0 0.0
        %7339 = vmatpush1.msra.mxu0 0.0
        %7340 = vmatprep.subr.mxu0 0.0
        %7341 = vmatpush1.msra.mxu0 0.0
        %7342 = vmatprep.subr.mxu0 0.0
        %7343 = vmatpush1.msra.mxu0 0.0
        %7344 = vmatprep.subr.mxu0 0.0
        %7345 = vmatpush1.msra.mxu0 0.0
        %7346 = vmatprep.subr.mxu0 0.0
        %7347 = vmatpush1.msra.mxu0 0.0
        %7348 = vmatprep.subr.mxu0 0.0
        %7349 = vmatpush1.msra.mxu0 0.0
        %7350 = vmatprep.subr.mxu0 0.0
        %7351 = vmatpush1.msra.mxu0 0.0
        %7352 = vmatprep.subr.mxu0 0.0
        %7353 = vmatpush1.msra.mxu0 0.0
        %7354 = vmatprep.subr.mxu0 0.0
        %7355 = vmatpush1.msra.mxu0 0.0
        %7356 = vmatprep.subr.mxu0 0.0
        %7357 = vmatpush1.msra.mxu0 0.0
        %7358 = vmatprep.subr.mxu0 0.0
        %7359 = vmatpush1.msra.mxu0 0.0
        %7360 = vmatprep.subr.mxu0 0.0
        %7361 = vmatpush1.msra.mxu0 0.0
        %7362 = vmatprep.mubr.f32.mxu0 0.0
        %7363 = vmatmul.mubr.f32.gmra.mrb[0].mxu0 %v7023
        %v7364 = vpop.f32.mrb[0].mxu0
        %v7365 = vadd.f32 %v7223, %v7364
        %v7366 = vpop.f32.mrb[0].mxu0
        %v7367 = vadd.f32 %v7225, %v7366
        %7368 = vdwg.mxu0
        %7369 = vmatprep.subr.mxu0 %v7031
        %7370 = vmatpush1.msra.mxu0 %v7030
        %7371 = vmatprep.subr.mxu0 %v7035
        %7372 = vmatpush1.msra.mxu0 %v7034
        %7373 = vmatprep.subr.mxu0 %v7039
        %7374 = vmatpush1.msra.mxu0 %v7038
        %7375 = vmatprep.subr.mxu0 %v7043
        %7376 = vmatpush1.msra.mxu0 %v7042
        %7377 = vmatprep.subr.mxu0 %v7047
        %7378 = vmatpush1.msra.mxu0 %v7046
        %7379 = vmatprep.subr.mxu0 %v7051
        %7380 = vmatpush1.msra.mxu0 %v7050
        %7381 = vmatprep.subr.mxu0 %v7055
        %7382 = vmatpush1.msra.mxu0 %v7054
        %7383 = vmatprep.subr.mxu0 %v7059
        %7384 = vmatpush1.msra.mxu0 %v7058
        %7385 = vmatprep.subr.mxu0 %v7063
        %7386 = vmatpush1.msra.mxu0 %v7062
        %7387 = vmatprep.subr.mxu0 %v7067
        %7388 = vmatpush1.msra.mxu0 %v7066
        %7389 = vmatprep.subr.mxu0 %v7071
        %7390 = vmatpush1.msra.mxu0 %v7070
        %7391 = vmatprep.subr.mxu0 %v7075
        %7392 = vmatpush1.msra.mxu0 %v7074
        %7393 = vmatprep.subr.mxu0 %v7079
        %7394 = vmatpush1.msra.mxu0 %v7078
        %7395 = vmatprep.subr.mxu0 %v7083
        %7396 = vmatpush1.msra.mxu0 %v7082
        %7397 = vmatprep.subr.mxu0 %v7087
        %7398 = vmatpush1.msra.mxu0 %v7086
        %7399 = vmatprep.subr.mxu0 %v7091
        %7400 = vmatpush1.msra.mxu0 %v7090
        %7401 = vmatprep.subr.mxu0 0.0
        %7402 = vmatpush1.msra.mxu0 0.0
        %7403 = vmatprep.subr.mxu0 0.0
        %7404 = vmatpush1.msra.mxu0 0.0
        %7405 = vmatprep.subr.mxu0 0.0
        %7406 = vmatpush1.msra.mxu0 0.0
        %7407 = vmatprep.subr.mxu0 0.0
        %7408 = vmatpush1.msra.mxu0 0.0
        %7409 = vmatprep.subr.mxu0 0.0
        %7410 = vmatpush1.msra.mxu0 0.0
        %7411 = vmatprep.subr.mxu0 0.0
        %7412 = vmatpush1.msra.mxu0 0.0
        %7413 = vmatprep.subr.mxu0 0.0
        %7414 = vmatpush1.msra.mxu0 0.0
        %7415 = vmatprep.subr.mxu0 0.0
        %7416 = vmatpush1.msra.mxu0 0.0
        %7417 = vmatprep.subr.mxu0 0.0
        %7418 = vmatpush1.msra.mxu0 0.0
        %7419 = vmatprep.subr.mxu0 0.0
        %7420 = vmatpush1.msra.mxu0 0.0
        %7421 = vmatprep.subr.mxu0 0.0
        %7422 = vmatpush1.msra.mxu0 0.0
        %7423 = vmatprep.subr.mxu0 0.0
        %7424 = vmatpush1.msra.mxu0 0.0
        %7425 = vmatprep.subr.mxu0 0.0
        %7426 = vmatpush1.msra.mxu0 0.0
        %7427 = vmatprep.subr.mxu0 0.0
        %7428 = vmatpush1.msra.mxu0 0.0
        %7429 = vmatprep.subr.mxu0 0.0
        %7430 = vmatpush1.msra.mxu0 0.0
        %7431 = vmatprep.subr.mxu0 0.0
        %7432 = vmatpush1.msra.mxu0 0.0
        %7433 = vmatprep.mubr.f32.mxu0 0.0
        %7434 = vmatmul.mubr.f32.gmra.mrb[0].mxu0 %v7023
        %v7435 = vpop.f32.mrb[0].mxu0
        %v7436 = vadd.f32 %v7294, %v7435
        %v7437 = vpop.f32.mrb[0].mxu0
        %v7438 = vadd.f32 %v7296, %v7437
        %7439 = vdwg.mxu0
        %v7440 = vxor.u32 %v7365, 2147483648
        %v7441 = vmul.f32 %v7440, 1.442695
        %v7442 = vpow.pop %v7441
        %v7443 = vadd.f32 %v7442, 1.0
        %v7444 = vrcp.pop %v7443
        %v7445 = vmul.f32 1.0, %v7444
        %v7446 = vxor.u32 %v7367, 2147483648
        %v7447 = vmul.f32 %v7446, 1.442695
        %v7448 = vpow.pop %v7447
        %v7449 = vadd.f32 %v7448, 1.0
        %v7450 = vrcp.pop %v7449
        %v7451 = vmul.f32 1.0, %v7450
        %v7452 = vtanh.pop %v7436
        %v7453 = vxor.u32 %v7438, 2147483648
        %v7454 = vmul.f32 %v7453, 1.442695
        %v7455 = vpow.pop %v7454
        %v7456 = vadd.f32 %v7455, 1.0
        %v7457 = vrcp.pop %v7456
        %v7458 = vmul.f32 1.0, %v7457
        %v7459 = vmul.f32 %v7451, %v7027
        %v7460 = vmul.f32 %v7445, %v7452
        %v7461 = vadd.f32 %v7459, %v7460
        %v7462 = vtanh.pop %v7461
        %v7463 = vmul.f32 %v7458, %v7462
        %7464 = vst [vmem:[#allocation3] sm:$0xff] %v7463
        %7465 = vst [vmem:[#allocation5] sm:$0xff] %v7461
        %s7466 = scalar_lea.vmem [#allocation6], 56
        %7467 = vst [vmem:[%s7466] sm:$0xff] %v7463
        %v7468 = vld [vmem:[#allocation6] sm:$0xff]
        %v7469 = vld [vmem:[#allocation6 + $0x8] sm:$0xff]
        %v7470 = vld [vmem:[#allocation6 + $0x10] sm:$0xff]
        %v7471 = vld [vmem:[#allocation6 + $0x18] sm:$0xff]
        %v7472 = vld [vmem:[#allocation6 + $0x20] sm:$0xff]
        %v7473 = vld [vmem:[#allocation6 + $0x28] sm:$0xff]
        %v7474 = vld [vmem:[#allocation6 + $0x30] sm:$0xff]
        %v7475 = vld [vmem:[#allocation6 + $0x38] sm:$0xff]
        %v7476 = vld [vmem:[%s5] sm:$0xff]
        %v7477 = vld [vmem:[%s5 + $0x8] sm:$0xff]
        %v7478 = vld [vmem:[%s5 + $0x10] sm:$0xff]
        %v7479 = vld [vmem:[%s5 + $0x18] sm:$0xff]
        %v7480 = vld [vmem:[%s5 + $0x20] sm:$0xff]
        %v7481 = vld [vmem:[%s5 + $0x28] sm:$0xff]
        %v7482 = vld [vmem:[%s5 + $0x30] sm:$0xff]
        %v7483 = vld [vmem:[%s5 + $0x38] sm:$0xff]
        %v7484 = vld [vmem:[%s5 + $0x40] sm:$0xff]
        %v7485 = vld [vmem:[%s5 + $0x48] sm:$0xff]
        %v7486 = vld [vmem:[%s5 + $0x50] sm:$0xff]
        %v7487 = vld [vmem:[%s5 + $0x58] sm:$0xff]
        %v7488 = vld [vmem:[%s5 + $0x60] sm:$0xff]
        %v7489 = vld [vmem:[%s5 + $0x68] sm:$0xff]
        %v7490 = vld [vmem:[%s5 + $0x70] sm:$0xff]
        %v7491 = vld [vmem:[%s5 + $0x78] sm:$0xff]
        %v7492 = vld [vmem:[%s6] sm:$0x1]
        %v7494 = vlaneseq
        %v7495 = vshrl.u32 %v7494, 7
        %v7496 = vsub.s32 0, %v7495
        %v7497 = vrot.slane %v7492, %v7496
        %7499 = vmatprep.subr.mxu0 0.0
        %7500 = vmatpush1.msra.mxu0 %v7476
        %7501 = vmatprep.subr.mxu0 0.0
        %7502 = vmatpush1.msra.mxu0 %v7477
        %7503 = vmatprep.subr.mxu0 0.0
        %7504 = vmatpush1.msra.mxu0 %v7478
        %7505 = vmatprep.subr.mxu0 0.0
        %7506 = vmatpush1.msra.mxu0 %v7479
        %7507 = vmatprep.subr.mxu0 0.0
        %7508 = vmatpush1.msra.mxu0 %v7480
        %7509 = vmatprep.subr.mxu0 0.0
        %7510 = vmatpush1.msra.mxu0 %v7481
        %7511 = vmatprep.subr.mxu0 0.0
        %7512 = vmatpush1.msra.mxu0 %v7482
        %7513 = vmatprep.subr.mxu0 0.0
        %7514 = vmatpush1.msra.mxu0 %v7483
        %7515 = vmatprep.subr.mxu0 0.0
        %7516 = vmatpush1.msra.mxu0 %v7484
        %7517 = vmatprep.subr.mxu0 0.0
        %7518 = vmatpush1.msra.mxu0 %v7485
        %7519 = vmatprep.subr.mxu0 0.0
        %7520 = vmatpush1.msra.mxu0 %v7486
        %7521 = vmatprep.subr.mxu0 0.0
        %7522 = vmatpush1.msra.mxu0 %v7487
        %7523 = vmatprep.subr.mxu0 0.0
        %7524 = vmatpush1.msra.mxu0 %v7488
        %7525 = vmatprep.subr.mxu0 0.0
        %7526 = vmatpush1.msra.mxu0 %v7489
        %7527 = vmatprep.subr.mxu0 0.0
        %7528 = vmatpush1.msra.mxu0 %v7490
        %7529 = vmatprep.subr.mxu0 0.0
        %7530 = vmatpush1.msra.mxu0 %v7491
        %7531 = vmatprep.subr.mxu0 0.0
        %7532 = vmatpush1.msra.mxu0 0.0
        %7533 = vmatprep.subr.mxu0 0.0
        %7534 = vmatpush1.msra.mxu0 0.0
        %7535 = vmatprep.subr.mxu0 0.0
        %7536 = vmatpush1.msra.mxu0 0.0
        %7537 = vmatprep.subr.mxu0 0.0
        %7538 = vmatpush1.msra.mxu0 0.0
        %7539 = vmatprep.subr.mxu0 0.0
        %7540 = vmatpush1.msra.mxu0 0.0
        %7541 = vmatprep.subr.mxu0 0.0
        %7542 = vmatpush1.msra.mxu0 0.0
        %7543 = vmatprep.subr.mxu0 0.0
        %7544 = vmatpush1.msra.mxu0 0.0
        %7545 = vmatprep.subr.mxu0 0.0
        %7546 = vmatpush1.msra.mxu0 0.0
        %7547 = vmatprep.subr.mxu0 0.0
        %7548 = vmatpush1.msra.mxu0 0.0
        %7549 = vmatprep.subr.mxu0 0.0
        %7550 = vmatpush1.msra.mxu0 0.0
        %7551 = vmatprep.subr.mxu0 0.0
        %7552 = vmatpush1.msra.mxu0 0.0
        %7553 = vmatprep.subr.mxu0 0.0
        %7554 = vmatpush1.msra.mxu0 0.0
        %7555 = vmatprep.subr.mxu0 0.0
        %7556 = vmatpush1.msra.mxu0 0.0
        %7557 = vmatprep.subr.mxu0 0.0
        %7558 = vmatpush1.msra.mxu0 0.0
        %7559 = vmatprep.subr.mxu0 0.0
        %7560 = vmatpush1.msra.mxu0 0.0
        %7561 = vmatprep.subr.mxu0 0.0
        %7562 = vmatpush1.msra.mxu0 0.0
        %7563 = vmatprep.mubr.f32.mxu0 0.0
        %7564 = vmatmul.mubr.f32.gmra.mrb[0].mxu0 %v7468
        %v7565 = vpop.f32.mrb[0].mxu0
        %v7566 = vadd.f32 %v7497, %v7565
        %v7567 = vpop.f32.mrb[0].mxu0
        %7568 = vmatprep.mubr.f32.mxu0 0.0
        %7569 = vmatmul.mubr.f32.gmra.mrb[0].mxu0 %v7469
        %v7570 = vpop.f32.mrb[0].mxu0
        %v7571 = vadd.f32 %v7497, %v7570
        %v7572 = vpop.f32.mrb[0].mxu0
        %7573 = vmatprep.mubr.f32.mxu0 0.0
        %7574 = vmatmul.mubr.f32.gmra.mrb[0].mxu0 %v7470
        %v7575 = vpop.f32.mrb[0].mxu0
        %v7576 = vadd.f32 %v7497, %v7575
        %v7577 = vpop.f32.mrb[0].mxu0
        %7578 = vmatprep.mubr.f32.mxu0 0.0
        %7579 = vmatmul.mubr.f32.gmra.mrb[0].mxu0 %v7471
        %v7580 = vpop.f32.mrb[0].mxu0
        %v7581 = vadd.f32 %v7497, %v7580
        %v7582 = vpop.f32.mrb[0].mxu0
        %7583 = vmatprep.mubr.f32.mxu0 0.0
        %7584 = vmatmul.mubr.f32.gmra.mrb[0].mxu0 %v7472
        %v7585 = vpop.f32.mrb[0].mxu0
        %v7586 = vadd.f32 %v7497, %v7585
        %v7587 = vpop.f32.mrb[0].mxu0
        %7588 = vmatprep.mubr.f32.mxu0 0.0
        %7589 = vmatmul.mubr.f32.gmra.mrb[0].mxu0 %v7473
        %v7590 = vpop.f32.mrb[0].mxu0
        %v7591 = vadd.f32 %v7497, %v7590
        %v7592 = vpop.f32.mrb[0].mxu0
        %7593 = vmatprep.mubr.f32.mxu0 0.0
        %7594 = vmatmul.mubr.f32.gmra.mrb[0].mxu0 %v7474
        %v7595 = vpop.f32.mrb[0].mxu0
        %v7596 = vadd.f32 %v7497, %v7595
        %v7597 = vpop.f32.mrb[0].mxu0
        %7598 = vmatprep.mubr.f32.mxu0 0.0
        %7599 = vmatmul.mubr.f32.gmra.mrb[0].mxu0 %v7475
        %v7600 = vpop.f32.mrb[0].mxu0
        %v7601 = vadd.f32 %v7497, %v7600
        %v7602 = vpop.f32.mrb[0].mxu0
        %7603 = vdwg.mxu0
        %7604 = vst [vmem:[%s388] sm:$0xff] %v7566
        %7605 = vst [vmem:[%s388 + $0x8] sm:$0xff] %v7571
        %7606 = vst [vmem:[%s388 + $0x10] sm:$0xff] %v7576
        %7607 = vst [vmem:[%s388 + $0x18] sm:$0xff] %v7581
        %7608 = vst [vmem:[%s388 + $0x20] sm:$0xff] %v7586
        %7609 = vst [vmem:[%s388 + $0x28] sm:$0xff] %v7591
        %7610 = vst [vmem:[%s388 + $0x30] sm:$0xff] %v7596
        %7611 = vst [vmem:[%s388 + $0x38] sm:$0xff] %v7601
        %p7612 = scmp.eq.s32.totalorder %s24, 1
        // Predicated region
        $region69: #{_lstm_forward_jit.1} parent=47 // pred_check
          %p7613 = pneg %p7612
        $region70: #{_lstm_forward_jit.1} parent=47 // pred_check_branch
          %7615 = sbr.rel (%p7613) target = $region72
        $region71: #{_lstm_forward_jit.1} parent=47 // pred_region
          %v7616 = vld [vmem:[#allocation2] sm:$0xff]
          %7617 = vst [vmem:[%s8] sm:$0xff] %v7616
          %v7618 = vld [vmem:[#allocation4] sm:$0xff]
          %7619 = vst [vmem:[%s9] sm:$0xff] %v7618
          %v7620 = vld [vmem:[#allocation3] sm:$0xff]
          %s7621 = scalar_lea.vmem %s8, 8
          %7622 = vst [vmem:[%s7621] sm:$0xff] %v7620
          %v7623 = vld [vmem:[#allocation5] sm:$0xff]
          %s7624 = scalar_lea.vmem %s9, 8
          %7625 = vst [vmem:[%s7624] sm:$0xff] %v7623
        $region72: #{_lstm_forward_jit.1} parent=47 // pred_fallthru
          _
        %s7626 = smul.u32 8, %s24
        %p7627 = scmp.lt.s32.totalorder %s7626, 15
        %s7628 = scalar_select %p7627, %s7626, 15
        %s7629 = smul.addr %s7628, 8
        %s7630 = scalar_lea.vmem %s7, %s7629
        // Predicated region
        $region73: #{_lstm_forward_jit.1} parent=47 // pred_check
          %p7631 = pneg %p194
        $region74: #{_lstm_forward_jit.1} parent=47 // pred_check_branch
          %7633 = sbr.rel (%p7631) target = $region76
        $region75: #{_lstm_forward_jit.1} parent=47 // pred_region
          %s7634 = smul.u32 8, %s24
        $region76: #{_lstm_forward_jit.1} parent=47 // pred_fallthru
          _
        // Predicated region
        $region77: #{_lstm_forward_jit.1} parent=47 // pred_check
          %p7635 = pneg %p215
        $region78: #{_lstm_forward_jit.1} parent=47 // pred_check_branch
          %7637 = sbr.rel (%p7635) target = $region80
        $region79: #{_lstm_forward_jit.1} parent=47 // pred_region
          _
        $region80: #{_lstm_forward_jit.1} parent=47 // pred_fallthru
          _
        // Predicated region
        $region81: #{_lstm_forward_jit.1} parent=47 // pred_check
          %p7638 = pneg %p236
        $region82: #{_lstm_forward_jit.1} parent=47 // pred_check_branch
          %7640 = sbr.rel (%p7638) target = $region84
        $region83: #{_lstm_forward_jit.1} parent=47 // pred_region
          _
        $region84: #{_lstm_forward_jit.1} parent=47 // pred_fallthru
          _
        // Predicated region
        $region85: #{_lstm_forward_jit.1} parent=47 // pred_check
          %p7641 = pneg %p215
        $region86: #{_lstm_forward_jit.1} parent=47 // pred_check_branch
          %7643 = sbr.rel (%p7641) target = $region88
        $region87: #{_lstm_forward_jit.1} parent=47 // pred_region
          _
        $region88: #{_lstm_forward_jit.1} parent=47 // pred_fallthru
          _
        // Predicated region
        $region89: #{_lstm_forward_jit.1} parent=47 // pred_check
          %p7644 = pneg %p236
        $region90: #{_lstm_forward_jit.1} parent=47 // pred_check_branch
          %7646 = sbr.rel (%p7644) target = $region92
        $region91: #{_lstm_forward_jit.1} parent=47 // pred_region
          _
        $region92: #{_lstm_forward_jit.1} parent=47 // pred_fallthru
          _
      $region48: #{_lstm_forward_jit.1} parent=5 // pred_fallthru
        _
      %p7647 = scmp.le.s32.totalorder 2, %s19
      // Predicated region
      $region93: #{_lstm_forward_jit.1} parent=5 // pred_check
        %p7648 = pneg %p7647
      $region94: #{_lstm_forward_jit.1} parent=5 // pred_check_branch
        %7650 = sbr.rel (%p7648) target = $region96
      $region95: #{_lstm_forward_jit.1} parent=5 // pred_region
        %s7651 = ssub.s32 %s19, 2
        // Predicated region
        $region97: #{_lstm_forward_jit.1} parent=95 // pred_check
          %p7652 = pneg %p200
        $region98: #{_lstm_forward_jit.1} parent=95 // pred_check_branch
          %7654 = sbr.rel (%p7652) target = $region100
        $region99: #{_lstm_forward_jit.1} parent=95 // pred_region
          %s7655 = smul.u32 8, %s25
          %p7656 = scmp.lt.s32.totalorder %s7655, 15
          %s7657 = scalar_select %p7656, %s7655, 15
          %s7658 = smul.addr %s7657, 8
          %s7659 = scalar_lea.vmem %s7, %s7658
        $region100: #{_lstm_forward_jit.1} parent=95 // pred_fallthru
          _
      $region96: #{_lstm_forward_jit.1} parent=5 // pred_fallthru
        _
    $region6: #{_lstm_forward_jit.1} parent=1 // loop_footer
      %s23 = sadd.s32 1, %s19
    $region7: #{_lstm_forward_jit.1} parent=1 // loop_footer_branch
      %18 = sbr.rel target = $region3
    $region8: #{_lstm_forward_jit.1} parent=1 // loop_exit
      _
    %7660 = vsyncpa [#allocation8], 1
    %s7661 = scalar_lea.sflag [#allocation8], 1
    %7662 = vsyncpa %s7661, 1
    %7663 = vsyncpa [#allocation10], 1
    %7664 = vsyncpa [#allocation13], 1

</llo_original>
